<compile_context>
chip_gen: v6e
topology: v6e:2x2x1
jax: 0.10.0
libtpu: 0.0.40
codegen_flags: <defaults>
</compile_context>

<pallas_src>
import math

import jax
import jax.numpy as jnp
from jax.experimental import pallas as pl
from jax.experimental.pallas import tpu as pltpu

# ----------------------------- configuration -------------------------------
B, CIN, H, W = 2, 3, 16, 16          # input images  [B, CIN, H, W] (NCHW)
C = 32                               # shared-feature channels
N_BOXES = 4                          # number of ROIs
ROI_H = 8                            # ROIRotate fixed output height
ROI_W = W                            # ROI width (padded to max width == W)
NUM_CLASSES = 37                     # modules.alphabet.NUM_OF_CLASSES stand-in
GEO_SCALE = 512.0                    # FOTS geo-map scale

HW = H * W
KTAPS = 9                            # 3x3 conv taps
DET_PAD = 8                          # detector head channels padded 6 -> 8
K_PAD = 128                          # recognizer classes padded 37 -> 128 (lane-dense)
NEG_INF = -1e30                      # bias for padded recognizer classes


# --------------------------- fused forward kernel ---------------------------
def _fused_kernel(idx_ref, bbox_ref,                                   # SMEM (scalar prefetch)
                  x_ref, cw_ref, cb_ref, dw_ref, db_ref, rw_ref, rb_ref,
                  det_ref, logp_ref,                                   # outputs
                  feat_ref):                                           # VMEM scratch
    """One grid step = one image (SharedConv + Detector).  The last grid step
    additionally runs ROIRotate + Recognizer on the now-complete VMEM-resident
    shared feature map, so the feature map never touches HBM."""
    b = pl.program_id(0)

    # ---- 1. SharedConv: 3x3 conv (pad=1, stride=1) + ReLU, CIN=3 -> C=32 ---
    # VPU broadcast-MAC over the 27 (tap, channel) pairs (MXU is wasted at K=3).
    acc = jnp.zeros((HW, C), jnp.float32)
    for k in range(KTAPS):                        # static 3x3 unroll
        dy, dx = k // 3, k % 3
        patch = x_ref[0, dy:dy + H, dx:dx + W, :].reshape(HW, CIN)     # [HW, 3]
        for c in range(CIN):
            col = patch[:, c:c + 1]                                    # [HW, 1]
            row = cw_ref[k * CIN + c:k * CIN + c + 1, :]               # [1, C]
            acc = acc + col * row                                      # VPU MAC
    feats = jnp.maximum(acc + cb_ref[0], 0.0)                          # [HW, C]
    feat_ref[b] = feats            # keep shared features resident in VMEM

    # ---- 2. Detector: fused 1x1-conv head, stored lane-dense as [8, HW] ----
    det = jnp.dot(feats, dw_ref[...], preferred_element_type=jnp.float32)
    det = jax.nn.sigmoid(det + db_ref[0])                              # [HW, 8]
    lane = jax.lax.broadcasted_iota(jnp.int32, (1, DET_PAD), 1)
    scale = jnp.where(lane == 0, 1.0,
                      jnp.where(lane <= 4, GEO_SCALE,
                                jnp.where(lane == 5, math.pi / 2.0, 0.0)))
    shift = jnp.where(lane == 5, -math.pi / 4.0, 0.0)
    det = det * scale + shift     # score | geo*512 | (sigmoid-0.5)*pi/2 | pad
    det_ref[0] = jnp.transpose(det)        # [8, HW]: unmasked, lane-dense store

    # ---- 3+4. ROIRotate + Recognizer: once, after all images are processed --
    @pl.when(b == B - 1)
    def _():
        # TODO(synk): full ROIRotate does rotated-quad affine grid sampling;
        #             this is an axis-aligned vertical crop (full width) per box.
        pooled = []
        for i in range(N_BOXES):                       # static unroll, N=4
            img = jnp.clip(idx_ref[i], 0, B - 1)
            y1 = jnp.clip(bbox_ref[i, 1], 0, H - ROI_H)
            row0 = pl.multiple_of(y1 * W, 8)           # sublane-aligned crop start
            crop = feat_ref[img, pl.ds(row0, ROI_H * W), :]            # [ROI_H*W, C]
            pooled.append(jnp.mean(crop.reshape(ROI_H, W, C), axis=0))  # [T, C]

        # TODO(synk): original Recognizer has a conv + BiLSTM stack before the
        #             class projection; modeled here as height-pool + linear.
        pooled_nm = jnp.concatenate(pooled, axis=0)                    # [N*T, C]
        logits = jnp.dot(pooled_nm, rw_ref[...],
                         preferred_element_type=jnp.float32) + rb_ref[0]  # [N*T, K_PAD]
        m = jnp.max(logits, axis=-1, keepdims=True)
        lse = jnp.log(jnp.sum(jnp.exp(logits - m), axis=-1, keepdims=True)) + m
        logp = logits - lse                     # log_softmax; pad classes ~ -1e30

        for i in range(N_BOXES):                # write directly in CTC [T, N, K]
            logp_ref[:, i, :] = logp[i * ROI_W:(i + 1) * ROI_W, :]


def _fused_forward(x_pad, conv_w, conv_b, det_w, det_b, rec_w, rec_b,
                   bboxes, bbox_to_img_idx):
    return pl.pallas_call(
        _fused_kernel,
        out_shape=(
            jax.ShapeDtypeStruct((B, DET_PAD, HW), jnp.float32),        # detector maps
            jax.ShapeDtypeStruct((ROI_W, N_BOXES, K_PAD), jnp.float32),  # log-probs
        ),
        grid_spec=pltpu.PrefetchScalarGridSpec(
            num_scalar_prefetch=2,
            grid=(B,),
            in_specs=[
                pl.BlockSpec((1, H + 2, W + 2, CIN), lambda b_, idx, bb: (b_, 0, 0, 0)),
                pl.BlockSpec((KTAPS * CIN, C), lambda b_, idx, bb: (0, 0)),
                pl.BlockSpec((1, C), lambda b_, idx, bb: (0, 0)),
                pl.BlockSpec((C, DET_PAD), lambda b_, idx, bb: (0, 0)),
                pl.BlockSpec((1, DET_PAD), lambda b_, idx, bb: (0, 0)),
                pl.BlockSpec((C, K_PAD), lambda b_, idx, bb: (0, 0)),
                pl.BlockSpec((1, K_PAD), lambda b_, idx, bb: (0, 0)),
            ],
            out_specs=[
                pl.BlockSpec((1, DET_PAD, HW), lambda b_, idx, bb: (b_, 0, 0)),
                pl.BlockSpec((ROI_W, N_BOXES, K_PAD), lambda b_, idx, bb: (0, 0, 0)),
            ],
            scratch_shapes=[pltpu.VMEM((B, HW, C), jnp.float32)],       # resident features
        ),
        # "arbitrary": the shared-feature scratch carries across grid steps and
        # the last step consumes every image's features, so the B axis cannot be
        # safely sharded across TensorCores (v7x) without breaking that dependency.
        compiler_params=pltpu.CompilerParams(dimension_semantics=("arbitrary",)),
    )(bbox_to_img_idx, bboxes, x_pad, conv_w, conv_b, det_w, det_b, rec_w, rec_b)


# ------------------------------ full model -----------------------------------
def init_params(key):
    k1, k2, k3, k4, k5, k6 = jax.random.split(key, 6)
    det_w = jnp.zeros((C, DET_PAD), jnp.float32)
    det_w = det_w.at[:, :6].set(jax.random.normal(k3, (C, 6), jnp.float32) * 0.1)
    det_b = jnp.zeros((1, DET_PAD), jnp.float32)
    det_b = det_b.at[:, :6].set(jax.random.normal(k4, (1, 6), jnp.float32) * 0.01)
    rec_w = jnp.zeros((C, K_PAD), jnp.float32)
    rec_w = rec_w.at[:, :NUM_CLASSES].set(
        jax.random.normal(k5, (C, NUM_CLASSES), jnp.float32) * 0.1)
    # padded classes get a huge negative bias -> excluded from the softmax.
    rec_b = jnp.full((1, K_PAD), NEG_INF, jnp.float32)
    rec_b = rec_b.at[:, :NUM_CLASSES].set(
        jax.random.normal(k6, (1, NUM_CLASSES), jnp.float32) * 0.01)
    return {
        "conv_w": jax.random.normal(k1, (KTAPS * CIN, C), jnp.float32) * 0.1,
        "conv_b": jax.random.normal(k2, (1, C), jnp.float32) * 0.01,
        "det_w": det_w,
        "det_b": det_b,
        "rec_w": rec_w,
        "rec_b": rec_b,
    }


@jax.jit
def sr_model_forward(params, imgs_nchw, bboxes, bbox_to_img_idx):
    # glue: NCHW -> NHWC + zero pad for the 3x3 conv (tiny, single XLA fusion).
    # TODO(synk): could be folded into the kernel by gathering NCHW planes.
    x_nhwc = jnp.transpose(imgs_nchw.astype(jnp.float32), (0, 2, 3, 1))
    x_pad = jnp.pad(x_nhwc, ((0, 0), (1, 1), (1, 1), (0, 0)))

    det_flat, logp_pad = _fused_forward(
        x_pad, params["conv_w"], params["conv_b"], params["det_w"],
        params["det_b"], params["rec_w"], params["rec_b"],
        bboxes, bbox_to_img_idx)

    # glue: split the lane-dense detector buffer back into PyTorch NCHW heads.
    det_maps = det_flat.reshape(B, DET_PAD, H, W)
    score_maps = det_maps[:, 0:1]                     # [B,1,H,W]
    geo_maps = det_maps[:, 1:5]                       # [B,4,H,W]
    angle_maps = det_maps[:, 5:6]                     # [B,1,H,W]
    log_probs = logp_pad[:, :, :NUM_CLASSES]          # [T, N, K] (CTC layout)
    seq_lens = jnp.clip(bboxes[:, 2] - bboxes[:, 0] + 1, 1, ROI_W).astype(jnp.int32)
    return (score_maps, geo_maps, angle_maps, bboxes, bbox_to_img_idx,
            log_probs, seq_lens)


if __name__ == "__main__":
    key = jax.random.PRNGKey(0)
    pkey, ikey = jax.random.split(key)
    params = init_params(pkey)

    imgs = jax.random.normal(ikey, (B, CIN, H, W), jnp.float32)
    bboxes = jnp.array([[0, 0, 7, 5],
                        [2, 3, 12, 9],
                        [1, 8, 15, 14],
                        [4, 2, 9, 7]], dtype=jnp.int32)          # [N,4] x1 y1 x2 y2
    bbox_to_img_idx = jnp.array([0, 0, 1, 1], dtype=jnp.int32)   # [N]

    outputs = sr_model_forward(params, imgs, bboxes, bbox_to_img_idx)
    outputs = jax.block_until_ready(outputs)

    (score_maps, geo_maps, angle_maps, _, _, log_probs, seq_lens) = outputs
    assert score_maps.shape == (B, 1, H, W)
    assert geo_maps.shape == (B, 4, H, W)
    assert angle_maps.shape == (B, 1, H, W)
    assert log_probs.shape == (ROI_W, N_BOXES, NUM_CLASSES)
    assert seq_lens.shape == (N_BOXES,)
    assert bool(jnp.isfinite(log_probs).all())
    print("KERNEL_OK")
</pallas_src>

<mosaic_0001>
module attributes {stable_mosaic.version = 11 : i64} {
  func.func @_fused_kernel(%arg0: i32, %arg1: memref<4xi32, #tpu.memory_space<smem>>, %arg2: memref<4x4xi32, #tpu.memory_space<smem>>, %arg3: memref<1x18x18x3xf32, #tpu.memory_space<vmem>>, %arg4: memref<27x32xf32, #tpu.memory_space<vmem>>, %arg5: memref<1x32xf32, #tpu.memory_space<vmem>>, %arg6: memref<32x8xf32, #tpu.memory_space<vmem>>, %arg7: memref<1x8xf32, #tpu.memory_space<vmem>>, %arg8: memref<32x128xf32, #tpu.memory_space<vmem>>, %arg9: memref<1x128xf32, #tpu.memory_space<vmem>>, %arg10: memref<1x8x256xf32, #tpu.memory_space<vmem>>, %arg11: memref<16x4x128xf32, #tpu.memory_space<vmem>>, %arg12: memref<2x256x32xf32, #tpu.memory_space<vmem>>) attributes {dimension_semantics = [#tpu.dimension_semantics<arbitrary>], iteration_bounds = array<i64: 2>, scalar_prefetch = 2 : i64, scratch_operands = 1 : i64, tpu.core_type = #tpu.core_type<tc>, window_params = [{transform_indices = @transform_0, window_bounds = array<i64: 1, 18, 18, 3>}, {pipeline_mode = #tpu.pipeline_mode<synchronous>, transform_indices = @transform_1, window_bounds = array<i64: 27, 32>}, {pipeline_mode = #tpu.pipeline_mode<synchronous>, transform_indices = @transform_2, window_bounds = array<i64: 1, 32>}, {pipeline_mode = #tpu.pipeline_mode<synchronous>, transform_indices = @transform_3, window_bounds = array<i64: 32, 8>}, {pipeline_mode = #tpu.pipeline_mode<synchronous>, transform_indices = @transform_4, window_bounds = array<i64: 1, 8>}, {pipeline_mode = #tpu.pipeline_mode<synchronous>, transform_indices = @transform_5, window_bounds = array<i64: 32, 128>}, {pipeline_mode = #tpu.pipeline_mode<synchronous>, transform_indices = @transform_6, window_bounds = array<i64: 1, 128>}, {transform_indices = @transform_7, window_bounds = array<i64: 1, 8, 256>}, {pipeline_mode = #tpu.pipeline_mode<synchronous>, transform_indices = @transform_8, window_bounds = array<i64: 16, 4, 128>}]} {
    %cst = arith.constant 0.000000e+00 : f32
    %0 = vector.broadcast %cst : f32 to vector<256x32xf32>
    %c0 = arith.constant 0 : index
    %c0_0 = arith.constant 0 : index
    %c0_1 = arith.constant 0 : index
    %c0_2 = arith.constant 0 : index
    %1 = vector.load %arg3[%c0, %c0_0, %c0_1, %c0_2] : memref<1x18x18x3xf32, #tpu.memory_space<vmem>>, vector<1x16x16x3xf32>
    %2 = vector.shape_cast %1 : vector<1x16x16x3xf32> to vector<16x16x3xf32>
    %3 = vector.shape_cast %2 : vector<16x16x3xf32> to vector<256x3xf32>
    %4 = vector.extract_strided_slice %3 {offsets = [0, 0], sizes = [256, 1], strides = [1, 1]} : vector<256x3xf32> to vector<256x1xf32>
    %c0_3 = arith.constant 0 : index
    %c0_4 = arith.constant 0 : index
    %5 = vector.load %arg4[%c0_3, %c0_4] : memref<27x32xf32, #tpu.memory_space<vmem>>, vector<1x32xf32>
    %6 = vector.broadcast %4 : vector<256x1xf32> to vector<256x32xf32>
    %7 = vector.broadcast %5 : vector<1x32xf32> to vector<256x32xf32>
    %8 = arith.mulf %6, %7 : vector<256x32xf32>
    %9 = arith.addf %0, %8 : vector<256x32xf32>
    %10 = vector.extract_strided_slice %3 {offsets = [0, 1], sizes = [256, 1], strides = [1, 1]} : vector<256x3xf32> to vector<256x1xf32>
    %c1 = arith.constant 1 : index
    %c0_5 = arith.constant 0 : index
    %11 = vector.load %arg4[%c1, %c0_5] : memref<27x32xf32, #tpu.memory_space<vmem>>, vector<1x32xf32>
    %12 = vector.broadcast %10 : vector<256x1xf32> to vector<256x32xf32>
    %13 = vector.broadcast %11 : vector<1x32xf32> to vector<256x32xf32>
    %14 = arith.mulf %12, %13 : vector<256x32xf32>
    %15 = arith.addf %9, %14 : vector<256x32xf32>
    %16 = vector.extract_strided_slice %3 {offsets = [0, 2], sizes = [256, 1], strides = [1, 1]} : vector<256x3xf32> to vector<256x1xf32>
    %c2 = arith.constant 2 : index
    %c0_6 = arith.constant 0 : index
    %17 = vector.load %arg4[%c2, %c0_6] : memref<27x32xf32, #tpu.memory_space<vmem>>, vector<1x32xf32>
    %18 = vector.broadcast %16 : vector<256x1xf32> to vector<256x32xf32>
    %19 = vector.broadcast %17 : vector<1x32xf32> to vector<256x32xf32>
    %20 = arith.mulf %18, %19 : vector<256x32xf32>
    %21 = arith.addf %15, %20 : vector<256x32xf32>
    %c0_7 = arith.constant 0 : index
    %c0_8 = arith.constant 0 : index
    %c1_9 = arith.constant 1 : index
    %c0_10 = arith.constant 0 : index
    %22 = vector.load %arg3[%c0_7, %c0_8, %c1_9, %c0_10] : memref<1x18x18x3xf32, #tpu.memory_space<vmem>>, vector<1x16x16x3xf32>
    %23 = vector.shape_cast %22 : vector<1x16x16x3xf32> to vector<16x16x3xf32>
    %24 = vector.shape_cast %23 : vector<16x16x3xf32> to vector<256x3xf32>
    %25 = vector.extract_strided_slice %24 {offsets = [0, 0], sizes = [256, 1], strides = [1, 1]} : vector<256x3xf32> to vector<256x1xf32>
    %c3 = arith.constant 3 : index
    %c0_11 = arith.constant 0 : index
    %26 = vector.load %arg4[%c3, %c0_11] : memref<27x32xf32, #tpu.memory_space<vmem>>, vector<1x32xf32>
    %27 = vector.broadcast %25 : vector<256x1xf32> to vector<256x32xf32>
    %28 = vector.broadcast %26 : vector<1x32xf32> to vector<256x32xf32>
    %29 = arith.mulf %27, %28 : vector<256x32xf32>
    %30 = arith.addf %21, %29 : vector<256x32xf32>
    %31 = vector.extract_strided_slice %24 {offsets = [0, 1], sizes = [256, 1], strides = [1, 1]} : vector<256x3xf32> to vector<256x1xf32>
    %c4 = arith.constant 4 : index
    %c0_12 = arith.constant 0 : index
    %32 = vector.load %arg4[%c4, %c0_12] : memref<27x32xf32, #tpu.memory_space<vmem>>, vector<1x32xf32>
    %33 = vector.broadcast %31 : vector<256x1xf32> to vector<256x32xf32>
    %34 = vector.broadcast %32 : vector<1x32xf32> to vector<256x32xf32>
    %35 = arith.mulf %33, %34 : vector<256x32xf32>
    %36 = arith.addf %30, %35 : vector<256x32xf32>
    %37 = vector.extract_strided_slice %24 {offsets = [0, 2], sizes = [256, 1], strides = [1, 1]} : vector<256x3xf32> to vector<256x1xf32>
    %c5 = arith.constant 5 : index
    %c0_13 = arith.constant 0 : index
    %38 = vector.load %arg4[%c5, %c0_13] : memref<27x32xf32, #tpu.memory_space<vmem>>, vector<1x32xf32>
    %39 = vector.broadcast %37 : vector<256x1xf32> to vector<256x32xf32>
    %40 = vector.broadcast %38 : vector<1x32xf32> to vector<256x32xf32>
    %41 = arith.mulf %39, %40 : vector<256x32xf32>
    %42 = arith.addf %36, %41 : vector<256x32xf32>
    %c0_14 = arith.constant 0 : index
    %c0_15 = arith.constant 0 : index
    %c2_16 = arith.constant 2 : index
    %c0_17 = arith.constant 0 : index
    %43 = vector.load %arg3[%c0_14, %c0_15, %c2_16, %c0_17] : memref<1x18x18x3xf32, #tpu.memory_space<vmem>>, vector<1x16x16x3xf32>
    %44 = vector.shape_cast %43 : vector<1x16x16x3xf32> to vector<16x16x3xf32>
    %45 = vector.shape_cast %44 : vector<16x16x3xf32> to vector<256x3xf32>
    %46 = vector.extract_strided_slice %45 {offsets = [0, 0], sizes = [256, 1], strides = [1, 1]} : vector<256x3xf32> to vector<256x1xf32>
    %c6 = arith.constant 6 : index
    %c0_18 = arith.constant 0 : index
    %47 = vector.load %arg4[%c6, %c0_18] : memref<27x32xf32, #tpu.memory_space<vmem>>, vector<1x32xf32>
    %48 = vector.broadcast %46 : vector<256x1xf32> to vector<256x32xf32>
    %49 = vector.broadcast %47 : vector<1x32xf32> to vector<256x32xf32>
    %50 = arith.mulf %48, %49 : vector<256x32xf32>
    %51 = arith.addf %42, %50 : vector<256x32xf32>
    %52 = vector.extract_strided_slice %45 {offsets = [0, 1], sizes = [256, 1], strides = [1, 1]} : vector<256x3xf32> to vector<256x1xf32>
    %c7 = arith.constant 7 : index
    %c0_19 = arith.constant 0 : index
    %53 = vector.load %arg4[%c7, %c0_19] : memref<27x32xf32, #tpu.memory_space<vmem>>, vector<1x32xf32>
    %54 = vector.broadcast %52 : vector<256x1xf32> to vector<256x32xf32>
    %55 = vector.broadcast %53 : vector<1x32xf32> to vector<256x32xf32>
    %56 = arith.mulf %54, %55 : vector<256x32xf32>
    %57 = arith.addf %51, %56 : vector<256x32xf32>
    %58 = vector.extract_strided_slice %45 {offsets = [0, 2], sizes = [256, 1], strides = [1, 1]} : vector<256x3xf32> to vector<256x1xf32>
    %c8 = arith.constant 8 : index
    %c0_20 = arith.constant 0 : index
    %59 = vector.load %arg4[%c8, %c0_20] : memref<27x32xf32, #tpu.memory_space<vmem>>, vector<1x32xf32>
    %60 = vector.broadcast %58 : vector<256x1xf32> to vector<256x32xf32>
    %61 = vector.broadcast %59 : vector<1x32xf32> to vector<256x32xf32>
    %62 = arith.mulf %60, %61 : vector<256x32xf32>
    %63 = arith.addf %57, %62 : vector<256x32xf32>
    %c0_21 = arith.constant 0 : index
    %c1_22 = arith.constant 1 : index
    %c0_23 = arith.constant 0 : index
    %c0_24 = arith.constant 0 : index
    %64 = vector.load %arg3[%c0_21, %c1_22, %c0_23, %c0_24] : memref<1x18x18x3xf32, #tpu.memory_space<vmem>>, vector<1x16x16x3xf32>
    %65 = vector.shape_cast %64 : vector<1x16x16x3xf32> to vector<16x16x3xf32>
    %66 = vector.shape_cast %65 : vector<16x16x3xf32> to vector<256x3xf32>
    %67 = vector.extract_strided_slice %66 {offsets = [0, 0], sizes = [256, 1], strides = [1, 1]} : vector<256x3xf32> to vector<256x1xf32>
    %c9 = arith.constant 9 : index
    %c0_25 = arith.constant 0 : index
    %68 = vector.load %arg4[%c9, %c0_25] : memref<27x32xf32, #tpu.memory_space<vmem>>, vector<1x32xf32>
    %69 = vector.broadcast %67 : vector<256x1xf32> to vector<256x32xf32>
    %70 = vector.broadcast %68 : vector<1x32xf32> to vector<256x32xf32>
    %71 = arith.mulf %69, %70 : vector<256x32xf32>
    %72 = arith.addf %63, %71 : vector<256x32xf32>
    %73 = vector.extract_strided_slice %66 {offsets = [0, 1], sizes = [256, 1], strides = [1, 1]} : vector<256x3xf32> to vector<256x1xf32>
    %c10 = arith.constant 10 : index
    %c0_26 = arith.constant 0 : index
    %74 = vector.load %arg4[%c10, %c0_26] : memref<27x32xf32, #tpu.memory_space<vmem>>, vector<1x32xf32>
    %75 = vector.broadcast %73 : vector<256x1xf32> to vector<256x32xf32>
    %76 = vector.broadcast %74 : vector<1x32xf32> to vector<256x32xf32>
    %77 = arith.mulf %75, %76 : vector<256x32xf32>
    %78 = arith.addf %72, %77 : vector<256x32xf32>
    %79 = vector.extract_strided_slice %66 {offsets = [0, 2], sizes = [256, 1], strides = [1, 1]} : vector<256x3xf32> to vector<256x1xf32>
    %c11 = arith.constant 11 : index
    %c0_27 = arith.constant 0 : index
    %80 = vector.load %arg4[%c11, %c0_27] : memref<27x32xf32, #tpu.memory_space<vmem>>, vector<1x32xf32>
    %81 = vector.broadcast %79 : vector<256x1xf32> to vector<256x32xf32>
    %82 = vector.broadcast %80 : vector<1x32xf32> to vector<256x32xf32>
    %83 = arith.mulf %81, %82 : vector<256x32xf32>
    %84 = arith.addf %78, %83 : vector<256x32xf32>
    %c0_28 = arith.constant 0 : index
    %c1_29 = arith.constant 1 : index
    %c1_30 = arith.constant 1 : index
    %c0_31 = arith.constant 0 : index
    %85 = vector.load %arg3[%c0_28, %c1_29, %c1_30, %c0_31] : memref<1x18x18x3xf32, #tpu.memory_space<vmem>>, vector<1x16x16x3xf32>
    %86 = vector.shape_cast %85 : vector<1x16x16x3xf32> to vector<16x16x3xf32>
    %87 = vector.shape_cast %86 : vector<16x16x3xf32> to vector<256x3xf32>
    %88 = vector.extract_strided_slice %87 {offsets = [0, 0], sizes = [256, 1], strides = [1, 1]} : vector<256x3xf32> to vector<256x1xf32>
    %c12 = arith.constant 12 : index
    %c0_32 = arith.constant 0 : index
    %89 = vector.load %arg4[%c12, %c0_32] : memref<27x32xf32, #tpu.memory_space<vmem>>, vector<1x32xf32>
    %90 = vector.broadcast %88 : vector<256x1xf32> to vector<256x32xf32>
    %91 = vector.broadcast %89 : vector<1x32xf32> to vector<256x32xf32>
    %92 = arith.mulf %90, %91 : vector<256x32xf32>
    %93 = arith.addf %84, %92 : vector<256x32xf32>
    %94 = vector.extract_strided_slice %87 {offsets = [0, 1], sizes = [256, 1], strides = [1, 1]} : vector<256x3xf32> to vector<256x1xf32>
    %c13 = arith.constant 13 : index
    %c0_33 = arith.constant 0 : index
    %95 = vector.load %arg4[%c13, %c0_33] : memref<27x32xf32, #tpu.memory_space<vmem>>, vector<1x32xf32>
    %96 = vector.broadcast %94 : vector<256x1xf32> to vector<256x32xf32>
    %97 = vector.broadcast %95 : vector<1x32xf32> to vector<256x32xf32>
    %98 = arith.mulf %96, %97 : vector<256x32xf32>
    %99 = arith.addf %93, %98 : vector<256x32xf32>
    %100 = vector.extract_strided_slice %87 {offsets = [0, 2], sizes = [256, 1], strides = [1, 1]} : vector<256x3xf32> to vector<256x1xf32>
    %c14 = arith.constant 14 : index
    %c0_34 = arith.constant 0 : index
    %101 = vector.load %arg4[%c14, %c0_34] : memref<27x32xf32, #tpu.memory_space<vmem>>, vector<1x32xf32>
    %102 = vector.broadcast %100 : vector<256x1xf32> to vector<256x32xf32>
    %103 = vector.broadcast %101 : vector<1x32xf32> to vector<256x32xf32>
    %104 = arith.mulf %102, %103 : vector<256x32xf32>
    %105 = arith.addf %99, %104 : vector<256x32xf32>
    %c0_35 = arith.constant 0 : index
    %c1_36 = arith.constant 1 : index
    %c2_37 = arith.constant 2 : index
    %c0_38 = arith.constant 0 : index
    %106 = vector.load %arg3[%c0_35, %c1_36, %c2_37, %c0_38] : memref<1x18x18x3xf32, #tpu.memory_space<vmem>>, vector<1x16x16x3xf32>
    %107 = vector.shape_cast %106 : vector<1x16x16x3xf32> to vector<16x16x3xf32>
    %108 = vector.shape_cast %107 : vector<16x16x3xf32> to vector<256x3xf32>
    %109 = vector.extract_strided_slice %108 {offsets = [0, 0], sizes = [256, 1], strides = [1, 1]} : vector<256x3xf32> to vector<256x1xf32>
    %c15 = arith.constant 15 : index
    %c0_39 = arith.constant 0 : index
    %110 = vector.load %arg4[%c15, %c0_39] : memref<27x32xf32, #tpu.memory_space<vmem>>, vector<1x32xf32>
    %111 = vector.broadcast %109 : vector<256x1xf32> to vector<256x32xf32>
    %112 = vector.broadcast %110 : vector<1x32xf32> to vector<256x32xf32>
    %113 = arith.mulf %111, %112 : vector<256x32xf32>
    %114 = arith.addf %105, %113 : vector<256x32xf32>
    %115 = vector.extract_strided_slice %108 {offsets = [0, 1], sizes = [256, 1], strides = [1, 1]} : vector<256x3xf32> to vector<256x1xf32>
    %c16 = arith.constant 16 : index
    %c0_40 = arith.constant 0 : index
    %116 = vector.load %arg4[%c16, %c0_40] : memref<27x32xf32, #tpu.memory_space<vmem>>, vector<1x32xf32>
    %117 = vector.broadcast %115 : vector<256x1xf32> to vector<256x32xf32>
    %118 = vector.broadcast %116 : vector<1x32xf32> to vector<256x32xf32>
    %119 = arith.mulf %117, %118 : vector<256x32xf32>
    %120 = arith.addf %114, %119 : vector<256x32xf32>
    %121 = vector.extract_strided_slice %108 {offsets = [0, 2], sizes = [256, 1], strides = [1, 1]} : vector<256x3xf32> to vector<256x1xf32>
    %c17 = arith.constant 17 : index
    %c0_41 = arith.constant 0 : index
    %122 = vector.load %arg4[%c17, %c0_41] : memref<27x32xf32, #tpu.memory_space<vmem>>, vector<1x32xf32>
    %123 = vector.broadcast %121 : vector<256x1xf32> to vector<256x32xf32>
    %124 = vector.broadcast %122 : vector<1x32xf32> to vector<256x32xf32>
    %125 = arith.mulf %123, %124 : vector<256x32xf32>
    %126 = arith.addf %120, %125 : vector<256x32xf32>
    %c0_42 = arith.constant 0 : index
    %c2_43 = arith.constant 2 : index
    %c0_44 = arith.constant 0 : index
    %c0_45 = arith.constant 0 : index
    %127 = vector.load %arg3[%c0_42, %c2_43, %c0_44, %c0_45] : memref<1x18x18x3xf32, #tpu.memory_space<vmem>>, vector<1x16x16x3xf32>
    %128 = vector.shape_cast %127 : vector<1x16x16x3xf32> to vector<16x16x3xf32>
    %129 = vector.shape_cast %128 : vector<16x16x3xf32> to vector<256x3xf32>
    %130 = vector.extract_strided_slice %129 {offsets = [0, 0], sizes = [256, 1], strides = [1, 1]} : vector<256x3xf32> to vector<256x1xf32>
    %c18 = arith.constant 18 : index
    %c0_46 = arith.constant 0 : index
    %131 = vector.load %arg4[%c18, %c0_46] : memref<27x32xf32, #tpu.memory_space<vmem>>, vector<1x32xf32>
    %132 = vector.broadcast %130 : vector<256x1xf32> to vector<256x32xf32>
    %133 = vector.broadcast %131 : vector<1x32xf32> to vector<256x32xf32>
    %134 = arith.mulf %132, %133 : vector<256x32xf32>
    %135 = arith.addf %126, %134 : vector<256x32xf32>
    %136 = vector.extract_strided_slice %129 {offsets = [0, 1], sizes = [256, 1], strides = [1, 1]} : vector<256x3xf32> to vector<256x1xf32>
    %c19 = arith.constant 19 : index
    %c0_47 = arith.constant 0 : index
    %137 = vector.load %arg4[%c19, %c0_47] : memref<27x32xf32, #tpu.memory_space<vmem>>, vector<1x32xf32>
    %138 = vector.broadcast %136 : vector<256x1xf32> to vector<256x32xf32>
    %139 = vector.broadcast %137 : vector<1x32xf32> to vector<256x32xf32>
    %140 = arith.mulf %138, %139 : vector<256x32xf32>
    %141 = arith.addf %135, %140 : vector<256x32xf32>
    %142 = vector.extract_strided_slice %129 {offsets = [0, 2], sizes = [256, 1], strides = [1, 1]} : vector<256x3xf32> to vector<256x1xf32>
    %c20 = arith.constant 20 : index
    %c0_48 = arith.constant 0 : index
    %143 = vector.load %arg4[%c20, %c0_48] : memref<27x32xf32, #tpu.memory_space<vmem>>, vector<1x32xf32>
    %144 = vector.broadcast %142 : vector<256x1xf32> to vector<256x32xf32>
    %145 = vector.broadcast %143 : vector<1x32xf32> to vector<256x32xf32>
    %146 = arith.mulf %144, %145 : vector<256x32xf32>
    %147 = arith.addf %141, %146 : vector<256x32xf32>
    %c0_49 = arith.constant 0 : index
    %c2_50 = arith.constant 2 : index
    %c1_51 = arith.constant 1 : index
    %c0_52 = arith.constant 0 : index
    %148 = vector.load %arg3[%c0_49, %c2_50, %c1_51, %c0_52] : memref<1x18x18x3xf32, #tpu.memory_space<vmem>>, vector<1x16x16x3xf32>
    %149 = vector.shape_cast %148 : vector<1x16x16x3xf32> to vector<16x16x3xf32>
    %150 = vector.shape_cast %149 : vector<16x16x3xf32> to vector<256x3xf32>
    %151 = vector.extract_strided_slice %150 {offsets = [0, 0], sizes = [256, 1], strides = [1, 1]} : vector<256x3xf32> to vector<256x1xf32>
    %c21 = arith.constant 21 : index
    %c0_53 = arith.constant 0 : index
    %152 = vector.load %arg4[%c21, %c0_53] : memref<27x32xf32, #tpu.memory_space<vmem>>, vector<1x32xf32>
    %153 = vector.broadcast %151 : vector<256x1xf32> to vector<256x32xf32>
    %154 = vector.broadcast %152 : vector<1x32xf32> to vector<256x32xf32>
    %155 = arith.mulf %153, %154 : vector<256x32xf32>
    %156 = arith.addf %147, %155 : vector<256x32xf32>
    %157 = vector.extract_strided_slice %150 {offsets = [0, 1], sizes = [256, 1], strides = [1, 1]} : vector<256x3xf32> to vector<256x1xf32>
    %c22 = arith.constant 22 : index
    %c0_54 = arith.constant 0 : index
    %158 = vector.load %arg4[%c22, %c0_54] : memref<27x32xf32, #tpu.memory_space<vmem>>, vector<1x32xf32>
    %159 = vector.broadcast %157 : vector<256x1xf32> to vector<256x32xf32>
    %160 = vector.broadcast %158 : vector<1x32xf32> to vector<256x32xf32>
    %161 = arith.mulf %159, %160 : vector<256x32xf32>
    %162 = arith.addf %156, %161 : vector<256x32xf32>
    %163 = vector.extract_strided_slice %150 {offsets = [0, 2], sizes = [256, 1], strides = [1, 1]} : vector<256x3xf32> to vector<256x1xf32>
    %c23 = arith.constant 23 : index
    %c0_55 = arith.constant 0 : index
    %164 = vector.load %arg4[%c23, %c0_55] : memref<27x32xf32, #tpu.memory_space<vmem>>, vector<1x32xf32>
    %165 = vector.broadcast %163 : vector<256x1xf32> to vector<256x32xf32>
    %166 = vector.broadcast %164 : vector<1x32xf32> to vector<256x32xf32>
    %167 = arith.mulf %165, %166 : vector<256x32xf32>
    %168 = arith.addf %162, %167 : vector<256x32xf32>
    %c0_56 = arith.constant 0 : index
    %c2_57 = arith.constant 2 : index
    %c2_58 = arith.constant 2 : index
    %c0_59 = arith.constant 0 : index
    %169 = vector.load %arg3[%c0_56, %c2_57, %c2_58, %c0_59] : memref<1x18x18x3xf32, #tpu.memory_space<vmem>>, vector<1x16x16x3xf32>
    %170 = vector.shape_cast %169 : vector<1x16x16x3xf32> to vector<16x16x3xf32>
    %171 = vector.shape_cast %170 : vector<16x16x3xf32> to vector<256x3xf32>
    %172 = vector.extract_strided_slice %171 {offsets = [0, 0], sizes = [256, 1], strides = [1, 1]} : vector<256x3xf32> to vector<256x1xf32>
    %c24 = arith.constant 24 : index
    %c0_60 = arith.constant 0 : index
    %173 = vector.load %arg4[%c24, %c0_60] : memref<27x32xf32, #tpu.memory_space<vmem>>, vector<1x32xf32>
    %174 = vector.broadcast %172 : vector<256x1xf32> to vector<256x32xf32>
    %175 = vector.broadcast %173 : vector<1x32xf32> to vector<256x32xf32>
    %176 = arith.mulf %174, %175 : vector<256x32xf32>
    %177 = arith.addf %168, %176 : vector<256x32xf32>
    %178 = vector.extract_strided_slice %171 {offsets = [0, 1], sizes = [256, 1], strides = [1, 1]} : vector<256x3xf32> to vector<256x1xf32>
    %c25 = arith.constant 25 : index
    %c0_61 = arith.constant 0 : index
    %179 = vector.load %arg4[%c25, %c0_61] : memref<27x32xf32, #tpu.memory_space<vmem>>, vector<1x32xf32>
    %180 = vector.broadcast %178 : vector<256x1xf32> to vector<256x32xf32>
    %181 = vector.broadcast %179 : vector<1x32xf32> to vector<256x32xf32>
    %182 = arith.mulf %180, %181 : vector<256x32xf32>
    %183 = arith.addf %177, %182 : vector<256x32xf32>
    %184 = vector.extract_strided_slice %171 {offsets = [0, 2], sizes = [256, 1], strides = [1, 1]} : vector<256x3xf32> to vector<256x1xf32>
    %c26 = arith.constant 26 : index
    %c0_62 = arith.constant 0 : index
    %185 = vector.load %arg4[%c26, %c0_62] : memref<27x32xf32, #tpu.memory_space<vmem>>, vector<1x32xf32>
    %186 = vector.broadcast %184 : vector<256x1xf32> to vector<256x32xf32>
    %187 = vector.broadcast %185 : vector<1x32xf32> to vector<256x32xf32>
    %188 = arith.mulf %186, %187 : vector<256x32xf32>
    %189 = arith.addf %183, %188 : vector<256x32xf32>
    %c0_63 = arith.constant 0 : index
    %c0_64 = arith.constant 0 : index
    %190 = vector.load %arg5[%c0_63, %c0_64] : memref<1x32xf32, #tpu.memory_space<vmem>>, vector<1x32xf32>
    %191 = vector.shape_cast %190 : vector<1x32xf32> to vector<32xf32>
    %192 = vector.shape_cast %191 : vector<32xf32> to vector<1x32xf32>
    %193 = vector.broadcast %192 : vector<1x32xf32> to vector<256x32xf32>
    %194 = arith.addf %189, %193 : vector<256x32xf32>
    %cst_65 = arith.constant 0.000000e+00 : f32
    %195 = vector.broadcast %cst_65 : f32 to vector<256x32xf32>
    %196 = arith.maximumf %194, %195 : vector<256x32xf32>
    %197 = arith.index_cast %arg0 : i32 to index
    %c0_66 = arith.constant 0 : index
    %c0_67 = arith.constant 0 : index
    %198 = vector.load %arg12[%197, %c0_66, %c0_67] : memref<2x256x32xf32, #tpu.memory_space<vmem>>, vector<1x256x32xf32>
    %199 = vector.shape_cast %198 : vector<1x256x32xf32> to vector<256x32xf32>
    %200 = vector.shape_cast %196 : vector<256x32xf32> to vector<1x256x32xf32>
    tpu.vector_store %arg12[%197, %c0_66, %c0_67], %200 {strides = array<i32>} : memref<2x256x32xf32, #tpu.memory_space<vmem>>, vector<1x256x32xf32>,
    %c0_68 = arith.constant 0 : index
    %c0_69 = arith.constant 0 : index
    %201 = vector.load %arg6[%c0_68, %c0_69] : memref<32x8xf32, #tpu.memory_space<vmem>>, vector<32x8xf32>
    %cst_70 = arith.constant dense<0.000000e+00> : vector<256x8xf32>
    %202 = tpu.matmul %196, %201, %cst_70 {dimension_numbers = #tpu.dot_dimension_numbers<[1], [0], [0], [1], [0, 0, 1, 1], [], []>} : vector<256x32xf32>, vector<32x8xf32>, vector<256x8xf32> -> vector<256x8xf32>
    %c0_71 = arith.constant 0 : index
    %c0_72 = arith.constant 0 : index
    %203 = vector.load %arg7[%c0_71, %c0_72] : memref<1x8xf32, #tpu.memory_space<vmem>>, vector<1x8xf32>
    %204 = vector.shape_cast %203 : vector<1x8xf32> to vector<8xf32>
    %205 = vector.shape_cast %204 : vector<8xf32> to vector<1x8xf32>
    %206 = vector.broadcast %205 : vector<1x8xf32> to vector<256x8xf32>
    %207 = arith.addf %202, %206 : vector<256x8xf32>
    %208 = arith.negf %207 : vector<256x8xf32>
    %209 = math.exp %208 : vector<256x8xf32>
    %cst_73 = arith.constant 1.000000e+00 : f32
    %210 = vector.broadcast %cst_73 : f32 to vector<256x8xf32>
    %211 = arith.addf %210, %209 : vector<256x8xf32>
    %212 = arith.divf %210, %211 : vector<256x8xf32>
    %213 = tpu.iota {dimensions = array<i32: 1>} : vector<1x8xi32>
    %c0_i32 = arith.constant 0 : i32
    %214 = vector.broadcast %c0_i32 : i32 to vector<1x8xi32>
    %215 = arith.cmpi eq, %213, %214 : vector<1x8xi32>
    %c4_i32 = arith.constant 4 : i32
    %216 = vector.broadcast %c4_i32 : i32 to vector<1x8xi32>
    %217 = arith.cmpi sle, %213, %216 : vector<1x8xi32>
    %c5_i32 = arith.constant 5 : i32
    %218 = vector.broadcast %c5_i32 : i32 to vector<1x8xi32>
    %219 = arith.cmpi eq, %213, %218 : vector<1x8xi32>
    %cst_74 = arith.constant 1.57079637 : f32
    %cst_75 = arith.constant 0.000000e+00 : f32
    %220 = vector.broadcast %cst_74 : f32 to vector<1x8xf32>
    %221 = vector.broadcast %cst_75 : f32 to vector<1x8xf32>
    %222 = arith.select %219, %220, %221 : vector<1x8xi1>, vector<1x8xf32>
    %cst_76 = arith.constant 5.120000e+02 : f32
    %223 = vector.broadcast %cst_76 : f32 to vector<1x8xf32>
    %224 = arith.select %217, %223, %222 : vector<1x8xi1>, vector<1x8xf32>
    %cst_77 = arith.constant 1.000000e+00 : f32
    %225 = vector.broadcast %cst_77 : f32 to vector<1x8xf32>
    %226 = arith.select %215, %225, %224 : vector<1x8xi1>, vector<1x8xf32>
    %c5_i32_78 = arith.constant 5 : i32
    %227 = vector.broadcast %c5_i32_78 : i32 to vector<1x8xi32>
    %228 = arith.cmpi eq, %213, %227 : vector<1x8xi32>
    %cst_79 = arith.constant -0.785398185 : f32
    %cst_80 = arith.constant 0.000000e+00 : f32
    %229 = vector.broadcast %cst_79 : f32 to vector<1x8xf32>
    %230 = vector.broadcast %cst_80 : f32 to vector<1x8xf32>
    %231 = arith.select %228, %229, %230 : vector<1x8xi1>, vector<1x8xf32>
    %232 = vector.broadcast %226 : vector<1x8xf32> to vector<256x8xf32>
    %233 = arith.mulf %212, %232 : vector<256x8xf32>
    %234 = vector.broadcast %231 : vector<1x8xf32> to vector<256x8xf32>
    %235 = arith.addf %233, %234 : vector<256x8xf32>
    %236 = tpu.transpose %235, [1, 0] : vector<256x8xf32> -> vector<8x256xf32>
    %c0_81 = arith.constant 0 : index
    %c0_82 = arith.constant 0 : index
    %c0_83 = arith.constant 0 : index
    %237 = vector.load %arg10[%c0_81, %c0_82, %c0_83] : memref<1x8x256xf32, #tpu.memory_space<vmem>>, vector<1x8x256xf32>
    %238 = vector.shape_cast %237 : vector<1x8x256xf32> to vector<8x256xf32>
    %239 = vector.shape_cast %236 : vector<8x256xf32> to vector<1x8x256xf32>
    tpu.vector_store %arg10[%c0_81, %c0_82, %c0_83], %239 {strides = array<i32>} : memref<1x8x256xf32, #tpu.memory_space<vmem>>, vector<1x8x256xf32>,
    %c1_i32 = arith.constant 1 : i32
    %240 = arith.cmpi eq, %arg0, %c1_i32 : i32
    %241 = arith.extui %240 : i1 to i32
    %c0_i32_84 = arith.constant 0 : i32
    %242 = arith.cmpi ne, %241, %c0_i32_84 : i32
    scf.if %242 {
      %c0_85 = arith.constant 0 : index
      %243 = memref.load %arg1[%c0_85] : memref<4xi32, #tpu.memory_space<smem>>
      %c0_i32_86 = arith.constant 0 : i32
      %c1_i32_87 = arith.constant 1 : i32
      %244 = arith.maxsi %c0_i32_86, %243 : i32
      %245 = arith.minsi %c1_i32_87, %244 : i32
      %c0_88 = arith.constant 0 : index
      %c1_89 = arith.constant 1 : index
      %246 = memref.load %arg2[%c0_88, %c1_89] : memref<4x4xi32, #tpu.memory_space<smem>>
      %c0_i32_90 = arith.constant 0 : i32
      %c8_i32 = arith.constant 8 : i32
      %247 = arith.maxsi %c0_i32_90, %246 : i32
      %248 = arith.minsi %c8_i32, %247 : i32
      %c16_i32 = arith.constant 16 : i32
      %249 = arith.muli %248, %c16_i32 : i32
      %250 = tpu.assume_multiple %249, 8 : i32
      %251 = arith.index_cast %245 : i32 to index
      %252 = arith.index_cast %250 : i32 to index
      %c0_91 = arith.constant 0 : index
      %253 = vector.load %arg12[%251, %252, %c0_91] : memref<2x256x32xf32, #tpu.memory_space<vmem>>, vector<1x128x32xf32>
      %254 = vector.shape_cast %253 : vector<1x128x32xf32> to vector<128x32xf32>
      %255 = vector.shape_cast %254 : vector<128x32xf32> to vector<8x16x32xf32>
      %cst_92 = arith.constant dense<0.000000e+00> : vector<16x32xf32>
      %256 = vector.multi_reduction <add>, %255, %cst_92 [0] : vector<8x16x32xf32> to vector<16x32xf32>
      %cst_93 = arith.constant 8.000000e+00 : f32
      %257 = vector.broadcast %cst_93 : f32 to vector<16x32xf32>
      %258 = arith.divf %256, %257 : vector<16x32xf32>
      %c1_94 = arith.constant 1 : index
      %259 = memref.load %arg1[%c1_94] : memref<4xi32, #tpu.memory_space<smem>>
      %c0_i32_95 = arith.constant 0 : i32
      %c1_i32_96 = arith.constant 1 : i32
      %260 = arith.maxsi %c0_i32_95, %259 : i32
      %261 = arith.minsi %c1_i32_96, %260 : i32
      %c1_97 = arith.constant 1 : index
      %c1_98 = arith.constant 1 : index
      %262 = memref.load %arg2[%c1_97, %c1_98] : memref<4x4xi32, #tpu.memory_space<smem>>
      %c0_i32_99 = arith.constant 0 : i32
      %c8_i32_100 = arith.constant 8 : i32
      %263 = arith.maxsi %c0_i32_99, %262 : i32
      %264 = arith.minsi %c8_i32_100, %263 : i32
      %c16_i32_101 = arith.constant 16 : i32
      %265 = arith.muli %264, %c16_i32_101 : i32
      %266 = tpu.assume_multiple %265, 8 : i32
      %267 = arith.index_cast %261 : i32 to index
      %268 = arith.index_cast %266 : i32 to index
      %c0_102 = arith.constant 0 : index
      %269 = vector.load %arg12[%267, %268, %c0_102] : memref<2x256x32xf32, #tpu.memory_space<vmem>>, vector<1x128x32xf32>
      %270 = vector.shape_cast %269 : vector<1x128x32xf32> to vector<128x32xf32>
      %271 = vector.shape_cast %270 : vector<128x32xf32> to vector<8x16x32xf32>
      %cst_103 = arith.constant dense<0.000000e+00> : vector<16x32xf32>
      %272 = vector.multi_reduction <add>, %271, %cst_103 [0] : vector<8x16x32xf32> to vector<16x32xf32>
      %cst_104 = arith.constant 8.000000e+00 : f32
      %273 = vector.broadcast %cst_104 : f32 to vector<16x32xf32>
      %274 = arith.divf %272, %273 : vector<16x32xf32>
      %c2_105 = arith.constant 2 : index
      %275 = memref.load %arg1[%c2_105] : memref<4xi32, #tpu.memory_space<smem>>
      %c0_i32_106 = arith.constant 0 : i32
      %c1_i32_107 = arith.constant 1 : i32
      %276 = arith.maxsi %c0_i32_106, %275 : i32
      %277 = arith.minsi %c1_i32_107, %276 : i32
      %c2_108 = arith.constant 2 : index
      %c1_109 = arith.constant 1 : index
      %278 = memref.load %arg2[%c2_108, %c1_109] : memref<4x4xi32, #tpu.memory_space<smem>>
      %c0_i32_110 = arith.constant 0 : i32
      %c8_i32_111 = arith.constant 8 : i32
      %279 = arith.maxsi %c0_i32_110, %278 : i32
      %280 = arith.minsi %c8_i32_111, %279 : i32
      %c16_i32_112 = arith.constant 16 : i32
      %281 = arith.muli %280, %c16_i32_112 : i32
      %282 = tpu.assume_multiple %281, 8 : i32
      %283 = arith.index_cast %277 : i32 to index
      %284 = arith.index_cast %282 : i32 to index
      %c0_113 = arith.constant 0 : index
      %285 = vector.load %arg12[%283, %284, %c0_113] : memref<2x256x32xf32, #tpu.memory_space<vmem>>, vector<1x128x32xf32>
      %286 = vector.shape_cast %285 : vector<1x128x32xf32> to vector<128x32xf32>
      %287 = vector.shape_cast %286 : vector<128x32xf32> to vector<8x16x32xf32>
      %cst_114 = arith.constant dense<0.000000e+00> : vector<16x32xf32>
      %288 = vector.multi_reduction <add>, %287, %cst_114 [0] : vector<8x16x32xf32> to vector<16x32xf32>
      %cst_115 = arith.constant 8.000000e+00 : f32
      %289 = vector.broadcast %cst_115 : f32 to vector<16x32xf32>
      %290 = arith.divf %288, %289 : vector<16x32xf32>
      %c3_116 = arith.constant 3 : index
      %291 = memref.load %arg1[%c3_116] : memref<4xi32, #tpu.memory_space<smem>>
      %c0_i32_117 = arith.constant 0 : i32
      %c1_i32_118 = arith.constant 1 : i32
      %292 = arith.maxsi %c0_i32_117, %291 : i32
      %293 = arith.minsi %c1_i32_118, %292 : i32
      %c3_119 = arith.constant 3 : index
      %c1_120 = arith.constant 1 : index
      %294 = memref.load %arg2[%c3_119, %c1_120] : memref<4x4xi32, #tpu.memory_space<smem>>
      %c0_i32_121 = arith.constant 0 : i32
      %c8_i32_122 = arith.constant 8 : i32
      %295 = arith.maxsi %c0_i32_121, %294 : i32
      %296 = arith.minsi %c8_i32_122, %295 : i32
      %c16_i32_123 = arith.constant 16 : i32
      %297 = arith.muli %296, %c16_i32_123 : i32
      %298 = tpu.assume_multiple %297, 8 : i32
      %299 = arith.index_cast %293 : i32 to index
      %300 = arith.index_cast %298 : i32 to index
      %c0_124 = arith.constant 0 : index
      %301 = vector.load %arg12[%299, %300, %c0_124] : memref<2x256x32xf32, #tpu.memory_space<vmem>>, vector<1x128x32xf32>
      %302 = vector.shape_cast %301 : vector<1x128x32xf32> to vector<128x32xf32>
      %303 = vector.shape_cast %302 : vector<128x32xf32> to vector<8x16x32xf32>
      %cst_125 = arith.constant dense<0.000000e+00> : vector<16x32xf32>
      %304 = vector.multi_reduction <add>, %303, %cst_125 [0] : vector<8x16x32xf32> to vector<16x32xf32>
      %cst_126 = arith.constant 8.000000e+00 : f32
      %305 = vector.broadcast %cst_126 : f32 to vector<16x32xf32>
      %306 = arith.divf %304, %305 : vector<16x32xf32>
      %307 = tpu.concatenate %258, %274, %290, %306 in 0 : vector<16x32xf32>, vector<16x32xf32>, vector<16x32xf32>, vector<16x32xf32> -> vector<64x32xf32>
      %c0_127 = arith.constant 0 : index
      %c0_128 = arith.constant 0 : index
      %308 = vector.load %arg8[%c0_127, %c0_128] : memref<32x128xf32, #tpu.memory_space<vmem>>, vector<32x128xf32>
      %cst_129 = arith.constant dense<0.000000e+00> : vector<64x128xf32>
      %309 = tpu.matmul %307, %308, %cst_129 {dimension_numbers = #tpu.dot_dimension_numbers<[1], [0], [0], [1], [0, 0, 1, 1], [], []>} : vector<64x32xf32>, vector<32x128xf32>, vector<64x128xf32> -> vector<64x128xf32>
      %c0_130 = arith.constant 0 : index
      %c0_131 = arith.constant 0 : index
      %310 = vector.load %arg9[%c0_130, %c0_131] : memref<1x128xf32, #tpu.memory_space<vmem>>, vector<1x128xf32>
      %311 = vector.shape_cast %310 : vector<1x128xf32> to vector<128xf32>
      %312 = vector.shape_cast %311 : vector<128xf32> to vector<1x128xf32>
      %313 = vector.broadcast %312 : vector<1x128xf32> to vector<64x128xf32>
      %314 = arith.addf %309, %313 : vector<64x128xf32>
      %cst_132 = arith.constant dense<0xFF800000> : vector<64xf32>
      %315 = vector.multi_reduction <maximumf>, %314, %cst_132 [1] : vector<64x128xf32> to vector<64xf32>
      %316 = vector.shape_cast %315 : vector<64xf32> to vector<64x1xf32>
      %317 = vector.broadcast %316 : vector<64x1xf32> to vector<64x128xf32>
      %318 = arith.subf %314, %317 : vector<64x128xf32>
      %319 = math.exp %318 : vector<64x128xf32>
      %cst_133 = arith.constant dense<0.000000e+00> : vector<64xf32>
      %320 = vector.multi_reduction <add>, %319, %cst_133 [1] : vector<64x128xf32> to vector<64xf32>
      %321 = vector.shape_cast %320 : vector<64xf32> to vector<64x1xf32>
      %322 = math.log %321 : vector<64x1xf32>
      %323 = arith.addf %322, %316 : vector<64x1xf32>
      %324 = vector.broadcast %323 : vector<64x1xf32> to vector<64x128xf32>
      %325 = arith.subf %314, %324 : vector<64x128xf32>
      %326 = vector.extract_strided_slice %325 {offsets = [0, 0], sizes = [16, 128], strides = [1, 1]} : vector<64x128xf32> to vector<16x128xf32>
      %c0_134 = arith.constant 0 : index
      %c0_135 = arith.constant 0 : index
      %c0_136 = arith.constant 0 : index
      %327 = vector.load %arg11[%c0_134, %c0_135, %c0_136] : memref<16x4x128xf32, #tpu.memory_space<vmem>>, vector<16x1x128xf32>
      %328 = vector.shape_cast %327 : vector<16x1x128xf32> to vector<16x128xf32>
      %329 = vector.shape_cast %326 : vector<16x128xf32> to vector<16x1x128xf32>
      tpu.vector_store %arg11[%c0_134, %c0_135, %c0_136], %329 {strides = array<i32>} : memref<16x4x128xf32, #tpu.memory_space<vmem>>, vector<16x1x128xf32>,
      %330 = vector.extract_strided_slice %325 {offsets = [16, 0], sizes = [16, 128], strides = [1, 1]} : vector<64x128xf32> to vector<16x128xf32>
      %c0_137 = arith.constant 0 : index
      %c1_138 = arith.constant 1 : index
      %c0_139 = arith.constant 0 : index
      %331 = vector.load %arg11[%c0_137, %c1_138, %c0_139] : memref<16x4x128xf32, #tpu.memory_space<vmem>>, vector<16x1x128xf32>
      %332 = vector.shape_cast %331 : vector<16x1x128xf32> to vector<16x128xf32>
      %333 = vector.shape_cast %330 : vector<16x128xf32> to vector<16x1x128xf32>
      tpu.vector_store %arg11[%c0_137, %c1_138, %c0_139], %333 {strides = array<i32>} : memref<16x4x128xf32, #tpu.memory_space<vmem>>, vector<16x1x128xf32>,
      %334 = vector.extract_strided_slice %325 {offsets = [32, 0], sizes = [16, 128], strides = [1, 1]} : vector<64x128xf32> to vector<16x128xf32>
      %c0_140 = arith.constant 0 : index
      %c2_141 = arith.constant 2 : index
      %c0_142 = arith.constant 0 : index
      %335 = vector.load %arg11[%c0_140, %c2_141, %c0_142] : memref<16x4x128xf32, #tpu.memory_space<vmem>>, vector<16x1x128xf32>
      %336 = vector.shape_cast %335 : vector<16x1x128xf32> to vector<16x128xf32>
      %337 = vector.shape_cast %334 : vector<16x128xf32> to vector<16x1x128xf32>
      tpu.vector_store %arg11[%c0_140, %c2_141, %c0_142], %337 {strides = array<i32>} : memref<16x4x128xf32, #tpu.memory_space<vmem>>, vector<16x1x128xf32>,
      %338 = vector.extract_strided_slice %325 {offsets = [48, 0], sizes = [16, 128], strides = [1, 1]} : vector<64x128xf32> to vector<16x128xf32>
      %c0_143 = arith.constant 0 : index
      %c3_144 = arith.constant 3 : index
      %c0_145 = arith.constant 0 : index
      %339 = vector.load %arg11[%c0_143, %c3_144, %c0_145] : memref<16x4x128xf32, #tpu.memory_space<vmem>>, vector<16x1x128xf32>
      %340 = vector.shape_cast %339 : vector<16x1x128xf32> to vector<16x128xf32>
      %341 = vector.shape_cast %338 : vector<16x128xf32> to vector<16x1x128xf32>
      tpu.vector_store %arg11[%c0_143, %c3_144, %c0_145], %341 {strides = array<i32>} : memref<16x4x128xf32, #tpu.memory_space<vmem>>, vector<16x1x128xf32>,
    } else {
    }
    return
  }
  func.func @transform_0(%arg0: i32, %arg1: memref<4xi32, #tpu.memory_space<smem>>, %arg2: memref<4x4xi32, #tpu.memory_space<smem>>) -> (i32, i32, i32, i32) {
    %c0_i32 = arith.constant 0 : i32
    %c0_i32_0 = arith.constant 0 : i32
    %c0_i32_1 = arith.constant 0 : i32
    %c0_i32_2 = arith.constant 0 : i32
    return %arg0, %c0_i32, %c0_i32_0, %c0_i32_1 : i32, i32, i32, i32
  }
  func.func @transform_1(%arg0: i32, %arg1: memref<4xi32, #tpu.memory_space<smem>>, %arg2: memref<4x4xi32, #tpu.memory_space<smem>>) -> (i32, i32) {
    %c0_i32 = arith.constant 0 : i32
    %c0_i32_0 = arith.constant 0 : i32
    %c0_i32_1 = arith.constant 0 : i32
    return %c0_i32, %c0_i32_0 : i32, i32
  }
  func.func @transform_2(%arg0: i32, %arg1: memref<4xi32, #tpu.memory_space<smem>>, %arg2: memref<4x4xi32, #tpu.memory_space<smem>>) -> (i32, i32) {
    %c0_i32 = arith.constant 0 : i32
    %c0_i32_0 = arith.constant 0 : i32
    %c0_i32_1 = arith.constant 0 : i32
    return %c0_i32, %c0_i32_0 : i32, i32
  }
  func.func @transform_3(%arg0: i32, %arg1: memref<4xi32, #tpu.memory_space<smem>>, %arg2: memref<4x4xi32, #tpu.memory_space<smem>>) -> (i32, i32) {
    %c0_i32 = arith.constant 0 : i32
    %c0_i32_0 = arith.constant 0 : i32
    %c0_i32_1 = arith.constant 0 : i32
    return %c0_i32, %c0_i32_0 : i32, i32
  }
  func.func @transform_4(%arg0: i32, %arg1: memref<4xi32, #tpu.memory_space<smem>>, %arg2: memref<4x4xi32, #tpu.memory_space<smem>>) -> (i32, i32) {
    %c0_i32 = arith.constant 0 : i32
    %c0_i32_0 = arith.constant 0 : i32
    %c0_i32_1 = arith.constant 0 : i32
    return %c0_i32, %c0_i32_0 : i32, i32
  }
  func.func @transform_5(%arg0: i32, %arg1: memref<4xi32, #tpu.memory_space<smem>>, %arg2: memref<4x4xi32, #tpu.memory_space<smem>>) -> (i32, i32) {
    %c0_i32 = arith.constant 0 : i32
    %c0_i32_0 = arith.constant 0 : i32
    %c0_i32_1 = arith.constant 0 : i32
    return %c0_i32, %c0_i32_0 : i32, i32
  }
  func.func @transform_6(%arg0: i32, %arg1: memref<4xi32, #tpu.memory_space<smem>>, %arg2: memref<4x4xi32, #tpu.memory_space<smem>>) -> (i32, i32) {
    %c0_i32 = arith.constant 0 : i32
    %c0_i32_0 = arith.constant 0 : i32
    %c0_i32_1 = arith.constant 0 : i32
    return %c0_i32, %c0_i32_0 : i32, i32
  }
  func.func @transform_7(%arg0: i32, %arg1: memref<4xi32, #tpu.memory_space<smem>>, %arg2: memref<4x4xi32, #tpu.memory_space<smem>>) -> (i32, i32, i32) {
    %c0_i32 = arith.constant 0 : i32
    %c0_i32_0 = arith.constant 0 : i32
    %c0_i32_1 = arith.constant 0 : i32
    return %arg0, %c0_i32, %c0_i32_0 : i32, i32, i32
  }
  func.func @transform_8(%arg0: i32, %arg1: memref<4xi32, #tpu.memory_space<smem>>, %arg2: memref<4x4xi32, #tpu.memory_space<smem>>) -> (i32, i32, i32) {
    %c0_i32 = arith.constant 0 : i32
    %c0_i32_0 = arith.constant 0 : i32
    %c0_i32_1 = arith.constant 0 : i32
    %c0_i32_2 = arith.constant 0 : i32
    return %c0_i32, %c0_i32_0, %c0_i32_1 : i32, i32, i32
  }
}

</mosaic_0001>

<llo_original>
// kernel: sr_model_forward.1
$region0: #{sr_model_forward.1}
  #allocation0 [shape = 'u32[]', space=smem, size = 0x4, offset = 0x4, fixed_abs, tag = 'smem constant byte address 0x4 - core index']
  #allocation1 [shape = 'u32[144,128]{1,0:T(1,128)}', space=vmem, size = 0x12000, scoped, tag = 'internal scratch']
  #allocation2 [shape = 'f32[2,256,32]{2,1,0:T(8,128)}', space=vmem, size = 0x40000, scoped, tag = 'scratch operand']
  #allocation3 [shape = 's32[1]{0}', space=sflag, size = 0x4, scoped, tag = 'scoped memory for sr_model_forward.1']
  #allocation4 [shape = 'u8[512]{0}', space=smem, size = 0x200, scoped, tag = 'prefetched SMEM operand 0']
  #allocation5 [shape = 'u8[2048]{0}', space=smem, size = 0x800, scoped, tag = 'prefetched SMEM operand 1']
  %s0 = inlined_call_operand.vmem [shape: s32[4], index: 0, kind: input, shape index: {}]
  %s1 = inlined_call_operand.vmem [shape: s32[4,4], index: 1, kind: input, shape index: {}]
  %s2 = inlined_call_operand.vmem [shape: f32[2,18,18,3], index: 2, kind: input, shape index: {}]
  %s3 = inlined_call_operand.vmem [shape: f32[27,32], index: 3, kind: input, shape index: {}]
  %s4 = inlined_call_operand.vmem [shape: f32[1,32], index: 4, kind: input, shape index: {}]
  %s5 = inlined_call_operand.vmem [shape: f32[32,8], index: 5, kind: input, shape index: {}]
  %s6 = inlined_call_operand.vmem [shape: f32[1,8], index: 6, kind: input, shape index: {}]
  %s7 = inlined_call_operand.vmem [shape: f32[32,128], index: 7, kind: input, shape index: {}]
  %s8 = inlined_call_operand.vmem [shape: f32[1,128], index: 8, kind: input, shape index: {}]
  %s9 = inlined_call_operand.vmem [shape: f32[2,8,256], index: 9, kind: output, shape index: {0}]
  %s10 = inlined_call_operand.hbm [shape: f32[16,4,128], index: 10, kind: output, shape index: {1}]
  %11 = xla_tuple %s9, %s10
  %s12 = sld [smem:[#allocation0]]
  $region73: #{sr_model_forward.1} parent=0
    _
  %s14 = ssub.s32 1, %s12
  %s15 = scalar_select 0, %s14, %s12
  %s16 = sshll.u32 %s0, 4
  %s17 = int_to_ptr.vmem [resolvable:$true] %s16
  %19 = dma.vmem_to_smem %s17, 16, [#allocation4], [#allocation3]
  %s20 = sshll.u32 %s1, 4
  %s21 = int_to_ptr.vmem [resolvable:$true] %s20
  %23 = dma.vmem_to_smem %s21, 64, [#allocation5], [#allocation3]
  %24 = dma.done [#allocation3], 80
  %25 = sfence
  $region1: #{sr_model_forward.1} parent=0
    #allocation6 [shape = 'u8[32768]{0}', space=vmem, size = 0x8000, scoped, tag = 'output window, operand 1, single buffered']
    #allocation7 [shape = 's32[2]{0}', space=sflag, size = 0x8, scoped, tag = 'scoped memory for sr_model_forward.1']
    %26 = vsyncpa [#allocation7], 0
    loop: start=0, step=1, limit=4
    $region2: #{sr_model_forward.1} parent=1 // loop_pre_header
      _
    $region3: #{sr_model_forward.1} parent=1 // loop_header
      %s28 = sphi 0, %s32
      %p29 = scmp.ge.s32.totalorder %s28, 4
      %s38 = sphi 0, %s40
      %s41 = sphi 0, %s38
      %s42 = sphi 0, %s41
      %s58 = sphi 0, %s42
      %s62 = sphi 0, %s62
      %s64 = sphi 0, %s62
      %s65 = sphi 0, %s64
      %s79 = sphi 0, %s65
      %s83 = sphi 0, %s83
      %s85 = sphi 0, %s83
      %s86 = sphi 0, %s85
      %s100 = sphi 0, %s86
      %s104 = sphi 0, %s104
      %s106 = sphi 0, %s104
      %s107 = sphi 0, %s106
      %s121 = sphi 0, %s107
      %s125 = sphi 0, %s125
      %s127 = sphi 0, %s125
      %s128 = sphi 0, %s127
      %s142 = sphi 0, %s128
      %s146 = sphi 0, %s146
      %s148 = sphi 0, %s146
      %s149 = sphi 0, %s148
      %s163 = sphi 0, %s149
      %s167 = sphi 0, %s167
      %s169 = sphi 0, %s167
      %s170 = sphi 0, %s169
      %s184 = sphi 0, %s170
      %s190 = sphi 0, %s192
      %s193 = sphi 0, %s190
      %s194 = sphi 0, %s193
      %s210 = sphi 0, %s194
      %s214 = sphi 0, %s214
      %s216 = sphi 0, %s214
      %s217 = sphi 0, %s216
      %s231 = sphi 0, %s217
    $region4: #{sr_model_forward.1} parent=1 // loop_header_branch
      %31 = sbr.rel (%p29) target = $region8
    $region5: #{sr_model_forward.1} parent=1 // loop_body
      %s33 = ssub.s32 %s28, 1
      %s34 = ssub.s32 %s28, 2
      %s35 = sadd.s32 %s28, 1
      %s36 = ssub.s32 %s28, %s35
      %p37 = scmp.eq.s32.totalorder %s36, 0
      %s39 = sadd.s32 %s38, 1
      %s40 = scalar_select %p37, %s38, %s39
      %p43 = pneg %p37
      %p44 = scmp.eq.s32.totalorder %s28, 1
      %p45 = por %p43, %p44
      %p46 = scmp.ne.s32.totalorder %s38, %s41
      %p47 = scmp.eq.s32.totalorder %s28, 0
      %p48 = por %p46, %p47
      %p49 = scmp.ne.s32.totalorder %s38, %s41
      %p50 = scmp.eq.s32.totalorder %s33, 1
      %p51 = por %p49, %p50
      %p52 = scmp.ne.s32.totalorder %s41, %s42
      %p53 = scmp.eq.s32.totalorder %s33, 0
      %p54 = por %p52, %p53
      %p55 = scmp.ne.s32.totalorder %s41, %s42
      %p56 = scmp.eq.s32.totalorder %s34, 1
      %p57 = por %p55, %p56
      %p59 = scmp.ne.s32.totalorder %s42, %s58
      %p60 = scmp.eq.s32.totalorder %s34, 0
      %p61 = por %p59, %p60
      %s63 = sadd.s32 %s62, 1
      %p66 = scmp.eq.s32.totalorder %s28, 1
      %p67 = scmp.ne.s32.totalorder %s62, %s64
      %p68 = scmp.eq.s32.totalorder %s28, 0
      %p69 = por %p67, %p68
      %p70 = scmp.ne.s32.totalorder %s62, %s64
      %p71 = scmp.eq.s32.totalorder %s33, 1
      %p72 = por %p70, %p71
      %p73 = scmp.ne.s32.totalorder %s64, %s65
      %p74 = scmp.eq.s32.totalorder %s33, 0
      %p75 = por %p73, %p74
      %p76 = scmp.ne.s32.totalorder %s64, %s65
      %p77 = scmp.eq.s32.totalorder %s34, 1
      %p78 = por %p76, %p77
      %p80 = scmp.ne.s32.totalorder %s65, %s79
      %p81 = scmp.eq.s32.totalorder %s34, 0
      %p82 = por %p80, %p81
      %s84 = sadd.s32 %s83, 1
      %p87 = scmp.eq.s32.totalorder %s28, 1
      %p88 = scmp.ne.s32.totalorder %s83, %s85
      %p89 = scmp.eq.s32.totalorder %s28, 0
      %p90 = por %p88, %p89
      %p91 = scmp.ne.s32.totalorder %s83, %s85
      %p92 = scmp.eq.s32.totalorder %s33, 1
      %p93 = por %p91, %p92
      %p94 = scmp.ne.s32.totalorder %s85, %s86
      %p95 = scmp.eq.s32.totalorder %s33, 0
      %p96 = por %p94, %p95
      %p97 = scmp.ne.s32.totalorder %s85, %s86
      %p98 = scmp.eq.s32.totalorder %s34, 1
      %p99 = por %p97, %p98
      %p101 = scmp.ne.s32.totalorder %s86, %s100
      %p102 = scmp.eq.s32.totalorder %s34, 0
      %p103 = por %p101, %p102
      %s105 = sadd.s32 %s104, 1
      %p108 = scmp.eq.s32.totalorder %s28, 1
      %p109 = scmp.ne.s32.totalorder %s104, %s106
      %p110 = scmp.eq.s32.totalorder %s28, 0
      %p111 = por %p109, %p110
      %p112 = scmp.ne.s32.totalorder %s104, %s106
      %p113 = scmp.eq.s32.totalorder %s33, 1
      %p114 = por %p112, %p113
      %p115 = scmp.ne.s32.totalorder %s106, %s107
      %p116 = scmp.eq.s32.totalorder %s33, 0
      %p117 = por %p115, %p116
      %p118 = scmp.ne.s32.totalorder %s106, %s107
      %p119 = scmp.eq.s32.totalorder %s34, 1
      %p120 = por %p118, %p119
      %p122 = scmp.ne.s32.totalorder %s107, %s121
      %p123 = scmp.eq.s32.totalorder %s34, 0
      %p124 = por %p122, %p123
      %s126 = sadd.s32 %s125, 1
      %p129 = scmp.eq.s32.totalorder %s28, 1
      %p130 = scmp.ne.s32.totalorder %s125, %s127
      %p131 = scmp.eq.s32.totalorder %s28, 0
      %p132 = por %p130, %p131
      %p133 = scmp.ne.s32.totalorder %s125, %s127
      %p134 = scmp.eq.s32.totalorder %s33, 1
      %p135 = por %p133, %p134
      %p136 = scmp.ne.s32.totalorder %s127, %s128
      %p137 = scmp.eq.s32.totalorder %s33, 0
      %p138 = por %p136, %p137
      %p139 = scmp.ne.s32.totalorder %s127, %s128
      %p140 = scmp.eq.s32.totalorder %s34, 1
      %p141 = por %p139, %p140
      %p143 = scmp.ne.s32.totalorder %s128, %s142
      %p144 = scmp.eq.s32.totalorder %s34, 0
      %p145 = por %p143, %p144
      %s147 = sadd.s32 %s146, 1
      %p150 = scmp.eq.s32.totalorder %s28, 1
      %p151 = scmp.ne.s32.totalorder %s146, %s148
      %p152 = scmp.eq.s32.totalorder %s28, 0
      %p153 = por %p151, %p152
      %p154 = scmp.ne.s32.totalorder %s146, %s148
      %p155 = scmp.eq.s32.totalorder %s33, 1
      %p156 = por %p154, %p155
      %p157 = scmp.ne.s32.totalorder %s148, %s149
      %p158 = scmp.eq.s32.totalorder %s33, 0
      %p159 = por %p157, %p158
      %p160 = scmp.ne.s32.totalorder %s148, %s149
      %p161 = scmp.eq.s32.totalorder %s34, 1
      %p162 = por %p160, %p161
      %p164 = scmp.ne.s32.totalorder %s149, %s163
      %p165 = scmp.eq.s32.totalorder %s34, 0
      %p166 = por %p164, %p165
      %s168 = sadd.s32 %s167, 1
      %p171 = scmp.eq.s32.totalorder %s28, 1
      %p172 = scmp.ne.s32.totalorder %s167, %s169
      %p173 = scmp.eq.s32.totalorder %s28, 0
      %p174 = por %p172, %p173
      %p175 = scmp.ne.s32.totalorder %s167, %s169
      %p176 = scmp.eq.s32.totalorder %s33, 1
      %p177 = por %p175, %p176
      %p178 = scmp.ne.s32.totalorder %s169, %s170
      %p179 = scmp.eq.s32.totalorder %s33, 0
      %p180 = por %p178, %p179
      %p181 = scmp.ne.s32.totalorder %s169, %s170
      %p182 = scmp.eq.s32.totalorder %s34, 1
      %p183 = por %p181, %p182
      %p185 = scmp.ne.s32.totalorder %s170, %s184
      %p186 = scmp.eq.s32.totalorder %s34, 0
      %p187 = por %p185, %p186
      %s188 = ssub.s32 %s28, %s35
      %p189 = scmp.eq.s32.totalorder %s188, 0
      %s191 = sadd.s32 %s190, 1
      %s192 = scalar_select %p189, %s190, %s191
      %p195 = pneg %p189
      %p196 = scmp.eq.s32.totalorder %s28, 1
      %p197 = por %p195, %p196
      %p198 = scmp.ne.s32.totalorder %s190, %s193
      %p199 = scmp.eq.s32.totalorder %s28, 0
      %p200 = por %p198, %p199
      %p201 = scmp.ne.s32.totalorder %s190, %s193
      %p202 = scmp.eq.s32.totalorder %s33, 1
      %p203 = por %p201, %p202
      %p204 = scmp.ne.s32.totalorder %s193, %s194
      %p205 = scmp.eq.s32.totalorder %s33, 0
      %p206 = por %p204, %p205
      %p207 = scmp.ne.s32.totalorder %s193, %s194
      %p208 = scmp.eq.s32.totalorder %s34, 1
      %p209 = por %p207, %p208
      %p211 = scmp.ne.s32.totalorder %s194, %s210
      %p212 = scmp.eq.s32.totalorder %s34, 0
      %p213 = por %p211, %p212
      %s215 = sadd.s32 %s214, 1
      %p218 = scmp.eq.s32.totalorder %s28, 1
      %p219 = scmp.ne.s32.totalorder %s214, %s216
      %p220 = scmp.eq.s32.totalorder %s28, 0
      %p221 = por %p219, %p220
      %p222 = scmp.ne.s32.totalorder %s214, %s216
      %p223 = scmp.eq.s32.totalorder %s33, 1
      %p224 = por %p222, %p223
      %p225 = scmp.ne.s32.totalorder %s216, %s217
      %p226 = scmp.eq.s32.totalorder %s33, 0
      %p227 = por %p225, %p226
      %p228 = scmp.ne.s32.totalorder %s216, %s217
      %p229 = scmp.eq.s32.totalorder %s34, 1
      %p230 = por %p228, %p229
      %p232 = scmp.ne.s32.totalorder %s217, %s231
      %p233 = scmp.eq.s32.totalorder %s34, 0
      %p234 = por %p232, %p233
      %p235 = scmp.le.s32.totalorder 1, %s28
      %p236 = scmp.lt.s32.totalorder %s28, 3
      %p237 = pnand %p235, %p236
      %p238 = pneg %p237
      // Predicated region
      $region9: #{sr_model_forward.1} parent=5 // pred_check
        _
      $region10: #{sr_model_forward.1} parent=5 // pred_check_branch
        %240 = sbr.rel (%p237) target = $region12
      $region11: #{sr_model_forward.1} parent=5 // pred_region
        %s241 = ssub.s32 %s28, 1
        // Predicated region
        $region13: #{sr_model_forward.1} parent=11 // pred_check
          %p242 = pneg %p75
        $region14: #{sr_model_forward.1} parent=11 // pred_check_branch
          %244 = sbr.rel (%p242) target = $region16
        $region15: #{sr_model_forward.1} parent=11 // pred_region
          _
        $region16: #{sr_model_forward.1} parent=11 // pred_fallthru
          _
        // Predicated region
        $region17: #{sr_model_forward.1} parent=11 // pred_check
          %p245 = pneg %p96
        $region18: #{sr_model_forward.1} parent=11 // pred_check_branch
          %247 = sbr.rel (%p245) target = $region20
        $region19: #{sr_model_forward.1} parent=11 // pred_region
          _
        $region20: #{sr_model_forward.1} parent=11 // pred_fallthru
          _
        // Predicated region
        $region21: #{sr_model_forward.1} parent=11 // pred_check
          %p248 = pneg %p117
        $region22: #{sr_model_forward.1} parent=11 // pred_check_branch
          %250 = sbr.rel (%p248) target = $region24
        $region23: #{sr_model_forward.1} parent=11 // pred_region
          _
        $region24: #{sr_model_forward.1} parent=11 // pred_fallthru
          _
        // Predicated region
        $region25: #{sr_model_forward.1} parent=11 // pred_check
          %p251 = pneg %p138
        $region26: #{sr_model_forward.1} parent=11 // pred_check_branch
          %253 = sbr.rel (%p251) target = $region28
        $region27: #{sr_model_forward.1} parent=11 // pred_region
          _
        $region28: #{sr_model_forward.1} parent=11 // pred_fallthru
          _
        // Predicated region
        $region29: #{sr_model_forward.1} parent=11 // pred_check
          %p254 = pneg %p159
        $region30: #{sr_model_forward.1} parent=11 // pred_check_branch
          %256 = sbr.rel (%p254) target = $region32
        $region31: #{sr_model_forward.1} parent=11 // pred_region
          _
        $region32: #{sr_model_forward.1} parent=11 // pred_fallthru
          _
        // Predicated region
        $region33: #{sr_model_forward.1} parent=11 // pred_check
          %p257 = pneg %p180
        $region34: #{sr_model_forward.1} parent=11 // pred_check_branch
          %259 = sbr.rel (%p257) target = $region36
        $region35: #{sr_model_forward.1} parent=11 // pred_region
          _
        $region36: #{sr_model_forward.1} parent=11 // pred_fallthru
          _
      $region12: #{sr_model_forward.1} parent=5 // pred_fallthru
        _
      %p260 = scmp.lt.s32.totalorder %s28, 2
      // Predicated region
      $region37: #{sr_model_forward.1} parent=5 // pred_check
        %p261 = pneg %p260
      $region38: #{sr_model_forward.1} parent=5 // pred_check_branch
        %263 = sbr.rel (%p261) target = $region40
      $region39: #{sr_model_forward.1} parent=5 // pred_region
        // Predicated region
        $region41: #{sr_model_forward.1} parent=39 // pred_check
          %p264 = pneg %p48
        $region42: #{sr_model_forward.1} parent=39 // pred_check_branch
          %266 = sbr.rel (%p264) target = $region44
        $region43: #{sr_model_forward.1} parent=39 // pred_region
          %p267 = scmp.lt.s32.totalorder %s28, 1
          %s268 = scalar_select %p267, %s28, 1
          %s269 = smul.addr %s268, 54
          %s270 = smul.addr %s269, 8
          %s271 = scalar_lea.vmem %s2, %s270
        $region44: #{sr_model_forward.1} parent=39 // pred_fallthru
          _
      $region40: #{sr_model_forward.1} parent=5 // pred_fallthru
        _
      %p272 = scmp.le.s32.totalorder 1, %s28
      %p273 = scmp.lt.s32.totalorder %s28, 3
      %p274 = pnand %p272, %p273
      %p275 = pneg %p274
      // Predicated region
      $region45: #{sr_model_forward.1} parent=5 // pred_check
        _
      $region46: #{sr_model_forward.1} parent=5 // pred_check_branch
        %277 = sbr.rel (%p274) target = $region48
      $region47: #{sr_model_forward.1} parent=5 // pred_region
        %s278 = ssub.s32 %s28, 1
        %p279 = scmp.lt.s32.totalorder %s33, 1
        %s280 = scalar_select %p279, %s33, 1
        %s281 = smul.addr %s280, 54
        %s282 = smul.addr %s281, 8
        %s283 = scalar_lea.vmem %s2, %s282
        %p284 = pneg %p54
        %p285 = pneg %p51
        %p286 = pneg %p75
        %p287 = pneg %p72
        %p288 = pneg %p96
        %p289 = pneg %p93
        %p290 = pneg %p117
        %p291 = pneg %p114
        %p292 = pneg %p138
        %p293 = pneg %p135
        %p294 = pneg %p159
        %p295 = pneg %p156
        %p296 = pneg %p180
        %p297 = pneg %p177
        %p298 = pneg %p206
        %p299 = pneg %p203
        %p300 = scmp.lt.s32.totalorder %s33, 1
        %s301 = scalar_select %p300, %s33, 1
        %s302 = smul.addr %s301, 2
        %s303 = smul.addr %s302, 8
        %s304 = scalar_lea.vmem %s9, %s303
        %p305 = pneg %p227
        %p306 = pneg %p224
        %p307 = scmp.lt.s32.totalorder %s33, 1
        %s308 = scalar_select %p307, %s33, 1
        %s309 = smul.addr %s308, 54
        %s310 = smul.addr %s309, 8
        %s311 = scalar_lea.vmem %s2, %s310
        %p312 = scmp.lt.s32.totalorder %s33, 1
        %s313 = scalar_select %p312, %s33, 1
        %s314 = smul.addr %s313, 2
        %s315 = smul.addr %s314, 8
        %s316 = scalar_lea.vmem %s9, %s315
        %v317 = vld [vmem:[%s311] sm:$0xff]
        %v318 = vld [vmem:[%s311 + $0x8] sm:$0xff]
        %v319 = vld [vmem:[%s311 + $0x18] sm:$0xff]
        %v320 = vld [vmem:[%s311 + $0x20] sm:$0xff]
        %v321 = vld [vmem:[%s311 + $0x30] sm:$0xff]
        %v322 = vld [vmem:[%s311 + $0x38] sm:$0xff]
        %v323 = vld [vmem:[%s311 + $0x48] sm:$0xff]
        %v324 = vld [vmem:[%s311 + $0x50] sm:$0xff]
        %v325 = vld [vmem:[%s311 + $0x60] sm:$0xff]
        %v326 = vld [vmem:[%s311 + $0x68] sm:$0xff]
        %v327 = vld [vmem:[%s311 + $0x78] sm:$0xff]
        %v328 = vld [vmem:[%s311 + $0x80] sm:$0xff]
        %v329 = vld [vmem:[%s311 + $0x90] sm:$0xff]
        %v330 = vld [vmem:[%s311 + $0x98] sm:$0xff]
        %v331 = vld [vmem:[%s311 + $0xa8] sm:$0xff]
        %v332 = vld [vmem:[%s311 + $0xb0] sm:$0xff]
        %v333 = vld [vmem:[%s311 + $0xc0] sm:$0xff]
        %v334 = vld [vmem:[%s311 + $0xc8] sm:$0xff]
        %v335 = vld [vmem:[%s311 + $0xd8] sm:$0xff]
        %v336 = vld [vmem:[%s311 + $0xe0] sm:$0xff]
        %v337 = vld [vmem:[%s311 + $0xf0] sm:$0xff]
        %v338 = vld [vmem:[%s311 + $0xf8] sm:$0xff]
        %v339 = vld [vmem:[%s311 + $0x108] sm:$0xff]
        %v340 = vld [vmem:[%s311 + $0x110] sm:$0xff]
        %v341 = vld [vmem:[%s311 + $0x120] sm:$0xff]
        %v342 = vld [vmem:[%s311 + $0x128] sm:$0xff]
        %v343 = vld [vmem:[%s311 + $0x138] sm:$0xff]
        %v344 = vld [vmem:[%s311 + $0x140] sm:$0xff]
        %v345 = vld [vmem:[%s311 + $0x150] sm:$0xff]
        %v346 = vld [vmem:[%s311 + $0x158] sm:$0xff]
        %v347 = vld [vmem:[%s311 + $0x168] sm:$0xff]
        %v348 = vld [vmem:[%s311 + $0x170] sm:$0xff]
        %v349 = vld [vmem:[%s3] sm:$0x1]
        %351 = vset.pattern.permute.xlu0 0
        %352 = vperm.xlu0 %351, %v317
        %v353 = vpop.permute.xlu0 %352
        %356 = vset.pattern.permute.xlu0 0
        %357 = vperm.xlu0 %356, %v318
        %v358 = vpop.permute.xlu0 %357
        %361 = vset.pattern.permute.xlu0 0
        %362 = vperm.xlu0 %361, %v319
        %v363 = vpop.permute.xlu0 %362
        %366 = vset.pattern.permute.xlu0 0
        %367 = vperm.xlu0 %366, %v320
        %v368 = vpop.permute.xlu0 %367
        %371 = vset.pattern.permute.xlu0 0
        %372 = vperm.xlu0 %371, %v321
        %v373 = vpop.permute.xlu0 %372
        %376 = vset.pattern.permute.xlu0 0
        %377 = vperm.xlu0 %376, %v322
        %v378 = vpop.permute.xlu0 %377
        %381 = vset.pattern.permute.xlu0 0
        %382 = vperm.xlu0 %381, %v323
        %v383 = vpop.permute.xlu0 %382
        %386 = vset.pattern.permute.xlu0 0
        %387 = vperm.xlu0 %386, %v324
        %v388 = vpop.permute.xlu0 %387
        %391 = vset.pattern.permute.xlu0 0
        %392 = vperm.xlu0 %391, %v325
        %v393 = vpop.permute.xlu0 %392
        %396 = vset.pattern.permute.xlu0 0
        %397 = vperm.xlu0 %396, %v326
        %v398 = vpop.permute.xlu0 %397
        %401 = vset.pattern.permute.xlu0 0
        %402 = vperm.xlu0 %401, %v327
        %v403 = vpop.permute.xlu0 %402
        %406 = vset.pattern.permute.xlu0 0
        %407 = vperm.xlu0 %406, %v328
        %v408 = vpop.permute.xlu0 %407
        %411 = vset.pattern.permute.xlu0 0
        %412 = vperm.xlu0 %411, %v329
        %v413 = vpop.permute.xlu0 %412
        %416 = vset.pattern.permute.xlu0 0
        %417 = vperm.xlu0 %416, %v330
        %v418 = vpop.permute.xlu0 %417
        %421 = vset.pattern.permute.xlu0 0
        %422 = vperm.xlu0 %421, %v331
        %v423 = vpop.permute.xlu0 %422
        %426 = vset.pattern.permute.xlu0 0
        %427 = vperm.xlu0 %426, %v332
        %v428 = vpop.permute.xlu0 %427
        %431 = vset.pattern.permute.xlu0 0
        %432 = vperm.xlu0 %431, %v333
        %v433 = vpop.permute.xlu0 %432
        %436 = vset.pattern.permute.xlu0 0
        %437 = vperm.xlu0 %436, %v334
        %v438 = vpop.permute.xlu0 %437
        %441 = vset.pattern.permute.xlu0 0
        %442 = vperm.xlu0 %441, %v335
        %v443 = vpop.permute.xlu0 %442
        %446 = vset.pattern.permute.xlu0 0
        %447 = vperm.xlu0 %446, %v336
        %v448 = vpop.permute.xlu0 %447
        %451 = vset.pattern.permute.xlu0 0
        %452 = vperm.xlu0 %451, %v337
        %v453 = vpop.permute.xlu0 %452
        %456 = vset.pattern.permute.xlu0 0
        %457 = vperm.xlu0 %456, %v338
        %v458 = vpop.permute.xlu0 %457
        %461 = vset.pattern.permute.xlu0 0
        %462 = vperm.xlu0 %461, %v339
        %v463 = vpop.permute.xlu0 %462
        %466 = vset.pattern.permute.xlu0 0
        %467 = vperm.xlu0 %466, %v340
        %v468 = vpop.permute.xlu0 %467
        %471 = vset.pattern.permute.xlu0 0
        %472 = vperm.xlu0 %471, %v341
        %v473 = vpop.permute.xlu0 %472
        %476 = vset.pattern.permute.xlu0 0
        %477 = vperm.xlu0 %476, %v342
        %v478 = vpop.permute.xlu0 %477
        %481 = vset.pattern.permute.xlu0 0
        %482 = vperm.xlu0 %481, %v343
        %v483 = vpop.permute.xlu0 %482
        %486 = vset.pattern.permute.xlu0 0
        %487 = vperm.xlu0 %486, %v344
        %v488 = vpop.permute.xlu0 %487
        %491 = vset.pattern.permute.xlu0 0
        %492 = vperm.xlu0 %491, %v345
        %v493 = vpop.permute.xlu0 %492
        %496 = vset.pattern.permute.xlu0 0
        %497 = vperm.xlu0 %496, %v346
        %v498 = vpop.permute.xlu0 %497
        %501 = vset.pattern.permute.xlu0 0
        %502 = vperm.xlu0 %501, %v347
        %v503 = vpop.permute.xlu0 %502
        %506 = vset.pattern.permute.xlu0 0
        %507 = vperm.xlu0 %506, %v348
        %v508 = vpop.permute.xlu0 %507
        %v510 = vlaneseq
        %v511 = vshrl.u32 %v510, 7
        %v512 = vsub.s32 0, %v511
        %v513 = vrot.slane %v349, %v512
        %v514 = vmul.f32 %v353, %v513
        %v515 = vmul.f32 %v358, %v513
        %v516 = vmul.f32 %v363, %v513
        %v517 = vmul.f32 %v368, %v513
        %v518 = vmul.f32 %v373, %v513
        %v519 = vmul.f32 %v378, %v513
        %v520 = vmul.f32 %v383, %v513
        %v521 = vmul.f32 %v388, %v513
        %v522 = vmul.f32 %v393, %v513
        %v523 = vmul.f32 %v398, %v513
        %v524 = vmul.f32 %v403, %v513
        %v525 = vmul.f32 %v408, %v513
        %v526 = vmul.f32 %v413, %v513
        %v527 = vmul.f32 %v418, %v513
        %v528 = vmul.f32 %v423, %v513
        %v529 = vmul.f32 %v428, %v513
        %v530 = vmul.f32 %v433, %v513
        %v531 = vmul.f32 %v438, %v513
        %v532 = vmul.f32 %v443, %v513
        %v533 = vmul.f32 %v448, %v513
        %v534 = vmul.f32 %v453, %v513
        %v535 = vmul.f32 %v458, %v513
        %v536 = vmul.f32 %v463, %v513
        %v537 = vmul.f32 %v468, %v513
        %v538 = vmul.f32 %v473, %v513
        %v539 = vmul.f32 %v478, %v513
        %v540 = vmul.f32 %v483, %v513
        %v541 = vmul.f32 %v488, %v513
        %v542 = vmul.f32 %v493, %v513
        %v543 = vmul.f32 %v498, %v513
        %v544 = vmul.f32 %v503, %v513
        %v545 = vmul.f32 %v508, %v513
        %v546 = vadd.f32 %v514, 0.0
        %v547 = vadd.f32 %v515, 0.0
        %v548 = vadd.f32 %v516, 0.0
        %v549 = vadd.f32 %v517, 0.0
        %v550 = vadd.f32 %v518, 0.0
        %v551 = vadd.f32 %v519, 0.0
        %v552 = vadd.f32 %v520, 0.0
        %v553 = vadd.f32 %v521, 0.0
        %v554 = vadd.f32 %v522, 0.0
        %v555 = vadd.f32 %v523, 0.0
        %v556 = vadd.f32 %v524, 0.0
        %v557 = vadd.f32 %v525, 0.0
        %v558 = vadd.f32 %v526, 0.0
        %v559 = vadd.f32 %v527, 0.0
        %v560 = vadd.f32 %v528, 0.0
        %v561 = vadd.f32 %v529, 0.0
        %v562 = vadd.f32 %v530, 0.0
        %v563 = vadd.f32 %v531, 0.0
        %v564 = vadd.f32 %v532, 0.0
        %v565 = vadd.f32 %v533, 0.0
        %v566 = vadd.f32 %v534, 0.0
        %v567 = vadd.f32 %v535, 0.0
        %v568 = vadd.f32 %v536, 0.0
        %v569 = vadd.f32 %v537, 0.0
        %v570 = vadd.f32 %v538, 0.0
        %v571 = vadd.f32 %v539, 0.0
        %v572 = vadd.f32 %v540, 0.0
        %v573 = vadd.f32 %v541, 0.0
        %v574 = vadd.f32 %v542, 0.0
        %v575 = vadd.f32 %v543, 0.0
        %v576 = vadd.f32 %v544, 0.0
        %v577 = vadd.f32 %v545, 0.0
        %v578 = vld [vmem:[%s3 + $0x1] sm:$0x1]
        %579 = vset.pattern.permute.xlu0 1
        %580 = vperm.xlu0 %579, %v317
        %v581 = vpop.permute.xlu0 %580
        %583 = vset.pattern.permute.xlu0 1
        %584 = vperm.xlu0 %583, %v318
        %v585 = vpop.permute.xlu0 %584
        %587 = vset.pattern.permute.xlu0 1
        %588 = vperm.xlu0 %587, %v319
        %v589 = vpop.permute.xlu0 %588
        %591 = vset.pattern.permute.xlu0 1
        %592 = vperm.xlu0 %591, %v320
        %v593 = vpop.permute.xlu0 %592
        %595 = vset.pattern.permute.xlu0 1
        %596 = vperm.xlu0 %595, %v321
        %v597 = vpop.permute.xlu0 %596
        %599 = vset.pattern.permute.xlu0 1
        %600 = vperm.xlu0 %599, %v322
        %v601 = vpop.permute.xlu0 %600
        %603 = vset.pattern.permute.xlu0 1
        %604 = vperm.xlu0 %603, %v323
        %v605 = vpop.permute.xlu0 %604
        %607 = vset.pattern.permute.xlu0 1
        %608 = vperm.xlu0 %607, %v324
        %v609 = vpop.permute.xlu0 %608
        %611 = vset.pattern.permute.xlu0 1
        %612 = vperm.xlu0 %611, %v325
        %v613 = vpop.permute.xlu0 %612
        %615 = vset.pattern.permute.xlu0 1
        %616 = vperm.xlu0 %615, %v326
        %v617 = vpop.permute.xlu0 %616
        %619 = vset.pattern.permute.xlu0 1
        %620 = vperm.xlu0 %619, %v327
        %v621 = vpop.permute.xlu0 %620
        %623 = vset.pattern.permute.xlu0 1
        %624 = vperm.xlu0 %623, %v328
        %v625 = vpop.permute.xlu0 %624
        %627 = vset.pattern.permute.xlu0 1
        %628 = vperm.xlu0 %627, %v329
        %v629 = vpop.permute.xlu0 %628
        %631 = vset.pattern.permute.xlu0 1
        %632 = vperm.xlu0 %631, %v330
        %v633 = vpop.permute.xlu0 %632
        %635 = vset.pattern.permute.xlu0 1
        %636 = vperm.xlu0 %635, %v331
        %v637 = vpop.permute.xlu0 %636
        %639 = vset.pattern.permute.xlu0 1
        %640 = vperm.xlu0 %639, %v332
        %v641 = vpop.permute.xlu0 %640
        %643 = vset.pattern.permute.xlu0 1
        %644 = vperm.xlu0 %643, %v333
        %v645 = vpop.permute.xlu0 %644
        %647 = vset.pattern.permute.xlu0 1
        %648 = vperm.xlu0 %647, %v334
        %v649 = vpop.permute.xlu0 %648
        %651 = vset.pattern.permute.xlu0 1
        %652 = vperm.xlu0 %651, %v335
        %v653 = vpop.permute.xlu0 %652
        %655 = vset.pattern.permute.xlu0 1
        %656 = vperm.xlu0 %655, %v336
        %v657 = vpop.permute.xlu0 %656
        %659 = vset.pattern.permute.xlu0 1
        %660 = vperm.xlu0 %659, %v337
        %v661 = vpop.permute.xlu0 %660
        %663 = vset.pattern.permute.xlu0 1
        %664 = vperm.xlu0 %663, %v338
        %v665 = vpop.permute.xlu0 %664
        %667 = vset.pattern.permute.xlu0 1
        %668 = vperm.xlu0 %667, %v339
        %v669 = vpop.permute.xlu0 %668
        %671 = vset.pattern.permute.xlu0 1
        %672 = vperm.xlu0 %671, %v340
        %v673 = vpop.permute.xlu0 %672
        %675 = vset.pattern.permute.xlu0 1
        %676 = vperm.xlu0 %675, %v341
        %v677 = vpop.permute.xlu0 %676
        %679 = vset.pattern.permute.xlu0 1
        %680 = vperm.xlu0 %679, %v342
        %v681 = vpop.permute.xlu0 %680
        %683 = vset.pattern.permute.xlu0 1
        %684 = vperm.xlu0 %683, %v343
        %v685 = vpop.permute.xlu0 %684
        %687 = vset.pattern.permute.xlu0 1
        %688 = vperm.xlu0 %687, %v344
        %v689 = vpop.permute.xlu0 %688
        %691 = vset.pattern.permute.xlu0 1
        %692 = vperm.xlu0 %691, %v345
        %v693 = vpop.permute.xlu0 %692
        %695 = vset.pattern.permute.xlu0 1
        %696 = vperm.xlu0 %695, %v346
        %v697 = vpop.permute.xlu0 %696
        %699 = vset.pattern.permute.xlu0 1
        %700 = vperm.xlu0 %699, %v347
        %v701 = vpop.permute.xlu0 %700
        %703 = vset.pattern.permute.xlu0 1
        %704 = vperm.xlu0 %703, %v348
        %v705 = vpop.permute.xlu0 %704
        %v707 = vlaneseq
        %v708 = vshrl.u32 %v707, 7
        %v709 = vsub.s32 0, %v708
        %v710 = vrot.slane %v578, %v709
        %v711 = vmul.f32 %v581, %v710
        %v712 = vmul.f32 %v585, %v710
        %v713 = vmul.f32 %v589, %v710
        %v714 = vmul.f32 %v593, %v710
        %v715 = vmul.f32 %v597, %v710
        %v716 = vmul.f32 %v601, %v710
        %v717 = vmul.f32 %v605, %v710
        %v718 = vmul.f32 %v609, %v710
        %v719 = vmul.f32 %v613, %v710
        %v720 = vmul.f32 %v617, %v710
        %v721 = vmul.f32 %v621, %v710
        %v722 = vmul.f32 %v625, %v710
        %v723 = vmul.f32 %v629, %v710
        %v724 = vmul.f32 %v633, %v710
        %v725 = vmul.f32 %v637, %v710
        %v726 = vmul.f32 %v641, %v710
        %v727 = vmul.f32 %v645, %v710
        %v728 = vmul.f32 %v649, %v710
        %v729 = vmul.f32 %v653, %v710
        %v730 = vmul.f32 %v657, %v710
        %v731 = vmul.f32 %v661, %v710
        %v732 = vmul.f32 %v665, %v710
        %v733 = vmul.f32 %v669, %v710
        %v734 = vmul.f32 %v673, %v710
        %v735 = vmul.f32 %v677, %v710
        %v736 = vmul.f32 %v681, %v710
        %v737 = vmul.f32 %v685, %v710
        %v738 = vmul.f32 %v689, %v710
        %v739 = vmul.f32 %v693, %v710
        %v740 = vmul.f32 %v697, %v710
        %v741 = vmul.f32 %v701, %v710
        %v742 = vmul.f32 %v705, %v710
        %v743 = vadd.f32 %v546, %v711
        %v744 = vadd.f32 %v547, %v712
        %v745 = vadd.f32 %v548, %v713
        %v746 = vadd.f32 %v549, %v714
        %v747 = vadd.f32 %v550, %v715
        %v748 = vadd.f32 %v551, %v716
        %v749 = vadd.f32 %v552, %v717
        %v750 = vadd.f32 %v553, %v718
        %v751 = vadd.f32 %v554, %v719
        %v752 = vadd.f32 %v555, %v720
        %v753 = vadd.f32 %v556, %v721
        %v754 = vadd.f32 %v557, %v722
        %v755 = vadd.f32 %v558, %v723
        %v756 = vadd.f32 %v559, %v724
        %v757 = vadd.f32 %v560, %v725
        %v758 = vadd.f32 %v561, %v726
        %v759 = vadd.f32 %v562, %v727
        %v760 = vadd.f32 %v563, %v728
        %v761 = vadd.f32 %v564, %v729
        %v762 = vadd.f32 %v565, %v730
        %v763 = vadd.f32 %v566, %v731
        %v764 = vadd.f32 %v567, %v732
        %v765 = vadd.f32 %v568, %v733
        %v766 = vadd.f32 %v569, %v734
        %v767 = vadd.f32 %v570, %v735
        %v768 = vadd.f32 %v571, %v736
        %v769 = vadd.f32 %v572, %v737
        %v770 = vadd.f32 %v573, %v738
        %v771 = vadd.f32 %v574, %v739
        %v772 = vadd.f32 %v575, %v740
        %v773 = vadd.f32 %v576, %v741
        %v774 = vadd.f32 %v577, %v742
        %v775 = vld [vmem:[%s3 + $0x2] sm:$0x1]
        %776 = vset.pattern.permute.xlu0 2
        %777 = vperm.xlu0 %776, %v317
        %v778 = vpop.permute.xlu0 %777
        %780 = vset.pattern.permute.xlu0 2
        %781 = vperm.xlu0 %780, %v318
        %v782 = vpop.permute.xlu0 %781
        %784 = vset.pattern.permute.xlu0 2
        %785 = vperm.xlu0 %784, %v319
        %v786 = vpop.permute.xlu0 %785
        %788 = vset.pattern.permute.xlu0 2
        %789 = vperm.xlu0 %788, %v320
        %v790 = vpop.permute.xlu0 %789
        %792 = vset.pattern.permute.xlu0 2
        %793 = vperm.xlu0 %792, %v321
        %v794 = vpop.permute.xlu0 %793
        %796 = vset.pattern.permute.xlu0 2
        %797 = vperm.xlu0 %796, %v322
        %v798 = vpop.permute.xlu0 %797
        %800 = vset.pattern.permute.xlu0 2
        %801 = vperm.xlu0 %800, %v323
        %v802 = vpop.permute.xlu0 %801
        %804 = vset.pattern.permute.xlu0 2
        %805 = vperm.xlu0 %804, %v324
        %v806 = vpop.permute.xlu0 %805
        %808 = vset.pattern.permute.xlu0 2
        %809 = vperm.xlu0 %808, %v325
        %v810 = vpop.permute.xlu0 %809
        %812 = vset.pattern.permute.xlu0 2
        %813 = vperm.xlu0 %812, %v326
        %v814 = vpop.permute.xlu0 %813
        %816 = vset.pattern.permute.xlu0 2
        %817 = vperm.xlu0 %816, %v327
        %v818 = vpop.permute.xlu0 %817
        %820 = vset.pattern.permute.xlu0 2
        %821 = vperm.xlu0 %820, %v328
        %v822 = vpop.permute.xlu0 %821
        %824 = vset.pattern.permute.xlu0 2
        %825 = vperm.xlu0 %824, %v329
        %v826 = vpop.permute.xlu0 %825
        %828 = vset.pattern.permute.xlu0 2
        %829 = vperm.xlu0 %828, %v330
        %v830 = vpop.permute.xlu0 %829
        %832 = vset.pattern.permute.xlu0 2
        %833 = vperm.xlu0 %832, %v331
        %v834 = vpop.permute.xlu0 %833
        %836 = vset.pattern.permute.xlu0 2
        %837 = vperm.xlu0 %836, %v332
        %v838 = vpop.permute.xlu0 %837
        %840 = vset.pattern.permute.xlu0 2
        %841 = vperm.xlu0 %840, %v333
        %v842 = vpop.permute.xlu0 %841
        %844 = vset.pattern.permute.xlu0 2
        %845 = vperm.xlu0 %844, %v334
        %v846 = vpop.permute.xlu0 %845
        %848 = vset.pattern.permute.xlu0 2
        %849 = vperm.xlu0 %848, %v335
        %v850 = vpop.permute.xlu0 %849
        %852 = vset.pattern.permute.xlu0 2
        %853 = vperm.xlu0 %852, %v336
        %v854 = vpop.permute.xlu0 %853
        %856 = vset.pattern.permute.xlu0 2
        %857 = vperm.xlu0 %856, %v337
        %v858 = vpop.permute.xlu0 %857
        %860 = vset.pattern.permute.xlu0 2
        %861 = vperm.xlu0 %860, %v338
        %v862 = vpop.permute.xlu0 %861
        %864 = vset.pattern.permute.xlu0 2
        %865 = vperm.xlu0 %864, %v339
        %v866 = vpop.permute.xlu0 %865
        %868 = vset.pattern.permute.xlu0 2
        %869 = vperm.xlu0 %868, %v340
        %v870 = vpop.permute.xlu0 %869
        %872 = vset.pattern.permute.xlu0 2
        %873 = vperm.xlu0 %872, %v341
        %v874 = vpop.permute.xlu0 %873
        %876 = vset.pattern.permute.xlu0 2
        %877 = vperm.xlu0 %876, %v342
        %v878 = vpop.permute.xlu0 %877
        %880 = vset.pattern.permute.xlu0 2
        %881 = vperm.xlu0 %880, %v343
        %v882 = vpop.permute.xlu0 %881
        %884 = vset.pattern.permute.xlu0 2
        %885 = vperm.xlu0 %884, %v344
        %v886 = vpop.permute.xlu0 %885
        %888 = vset.pattern.permute.xlu0 2
        %889 = vperm.xlu0 %888, %v345
        %v890 = vpop.permute.xlu0 %889
        %892 = vset.pattern.permute.xlu0 2
        %893 = vperm.xlu0 %892, %v346
        %v894 = vpop.permute.xlu0 %893
        %896 = vset.pattern.permute.xlu0 2
        %897 = vperm.xlu0 %896, %v347
        %v898 = vpop.permute.xlu0 %897
        %900 = vset.pattern.permute.xlu0 2
        %901 = vperm.xlu0 %900, %v348
        %v902 = vpop.permute.xlu0 %901
        %v904 = vlaneseq
        %v905 = vshrl.u32 %v904, 7
        %v906 = vsub.s32 0, %v905
        %v907 = vrot.slane %v775, %v906
        %v908 = vmul.f32 %v778, %v907
        %v909 = vmul.f32 %v782, %v907
        %v910 = vmul.f32 %v786, %v907
        %v911 = vmul.f32 %v790, %v907
        %v912 = vmul.f32 %v794, %v907
        %v913 = vmul.f32 %v798, %v907
        %v914 = vmul.f32 %v802, %v907
        %v915 = vmul.f32 %v806, %v907
        %v916 = vmul.f32 %v810, %v907
        %v917 = vmul.f32 %v814, %v907
        %v918 = vmul.f32 %v818, %v907
        %v919 = vmul.f32 %v822, %v907
        %v920 = vmul.f32 %v826, %v907
        %v921 = vmul.f32 %v830, %v907
        %v922 = vmul.f32 %v834, %v907
        %v923 = vmul.f32 %v838, %v907
        %v924 = vmul.f32 %v842, %v907
        %v925 = vmul.f32 %v846, %v907
        %v926 = vmul.f32 %v850, %v907
        %v927 = vmul.f32 %v854, %v907
        %v928 = vmul.f32 %v858, %v907
        %v929 = vmul.f32 %v862, %v907
        %v930 = vmul.f32 %v866, %v907
        %v931 = vmul.f32 %v870, %v907
        %v932 = vmul.f32 %v874, %v907
        %v933 = vmul.f32 %v878, %v907
        %v934 = vmul.f32 %v882, %v907
        %v935 = vmul.f32 %v886, %v907
        %v936 = vmul.f32 %v890, %v907
        %v937 = vmul.f32 %v894, %v907
        %v938 = vmul.f32 %v898, %v907
        %v939 = vmul.f32 %v902, %v907
        %v940 = vadd.f32 %v743, %v908
        %v941 = vadd.f32 %v744, %v909
        %v942 = vadd.f32 %v745, %v910
        %v943 = vadd.f32 %v746, %v911
        %v944 = vadd.f32 %v747, %v912
        %v945 = vadd.f32 %v748, %v913
        %v946 = vadd.f32 %v749, %v914
        %v947 = vadd.f32 %v750, %v915
        %v948 = vadd.f32 %v751, %v916
        %v949 = vadd.f32 %v752, %v917
        %v950 = vadd.f32 %v753, %v918
        %v951 = vadd.f32 %v754, %v919
        %v952 = vadd.f32 %v755, %v920
        %v953 = vadd.f32 %v756, %v921
        %v954 = vadd.f32 %v757, %v922
        %v955 = vadd.f32 %v758, %v923
        %v956 = vadd.f32 %v759, %v924
        %v957 = vadd.f32 %v760, %v925
        %v958 = vadd.f32 %v761, %v926
        %v959 = vadd.f32 %v762, %v927
        %v960 = vadd.f32 %v763, %v928
        %v961 = vadd.f32 %v764, %v929
        %v962 = vadd.f32 %v765, %v930
        %v963 = vadd.f32 %v766, %v931
        %v964 = vadd.f32 %v767, %v932
        %v965 = vadd.f32 %v768, %v933
        %v966 = vadd.f32 %v769, %v934
        %v967 = vadd.f32 %v770, %v935
        %v968 = vadd.f32 %v771, %v936
        %v969 = vadd.f32 %v772, %v937
        %v970 = vadd.f32 %v773, %v938
        %v971 = vadd.f32 %v774, %v939
        %v972 = vld [vmem:[%s311 + $0x1] sm:$0xff]
        %v973 = vld [vmem:[%s311 + $0x9] sm:$0xff]
        %v974 = vld [vmem:[%s311 + $0x19] sm:$0xff]
        %v975 = vld [vmem:[%s311 + $0x21] sm:$0xff]
        %v976 = vld [vmem:[%s311 + $0x31] sm:$0xff]
        %v977 = vld [vmem:[%s311 + $0x39] sm:$0xff]
        %v978 = vld [vmem:[%s311 + $0x49] sm:$0xff]
        %v979 = vld [vmem:[%s311 + $0x51] sm:$0xff]
        %v980 = vld [vmem:[%s311 + $0x61] sm:$0xff]
        %v981 = vld [vmem:[%s311 + $0x69] sm:$0xff]
        %v982 = vld [vmem:[%s311 + $0x79] sm:$0xff]
        %v983 = vld [vmem:[%s311 + $0x81] sm:$0xff]
        %v984 = vld [vmem:[%s311 + $0x91] sm:$0xff]
        %v985 = vld [vmem:[%s311 + $0x99] sm:$0xff]
        %v986 = vld [vmem:[%s311 + $0xa9] sm:$0xff]
        %v987 = vld [vmem:[%s311 + $0xb1] sm:$0xff]
        %v988 = vld [vmem:[%s311 + $0xc1] sm:$0xff]
        %v989 = vld [vmem:[%s311 + $0xc9] sm:$0xff]
        %v990 = vld [vmem:[%s311 + $0xd9] sm:$0xff]
        %v991 = vld [vmem:[%s311 + $0xe1] sm:$0xff]
        %v992 = vld [vmem:[%s311 + $0xf1] sm:$0xff]
        %v993 = vld [vmem:[%s311 + $0xf9] sm:$0xff]
        %v994 = vld [vmem:[%s311 + $0x109] sm:$0xff]
        %v995 = vld [vmem:[%s311 + $0x111] sm:$0xff]
        %v996 = vld [vmem:[%s311 + $0x121] sm:$0xff]
        %v997 = vld [vmem:[%s311 + $0x129] sm:$0xff]
        %v998 = vld [vmem:[%s311 + $0x139] sm:$0xff]
        %v999 = vld [vmem:[%s311 + $0x141] sm:$0xff]
        %v1000 = vld [vmem:[%s311 + $0x151] sm:$0xff]
        %v1001 = vld [vmem:[%s311 + $0x159] sm:$0xff]
        %v1002 = vld [vmem:[%s311 + $0x169] sm:$0xff]
        %v1003 = vld [vmem:[%s311 + $0x171] sm:$0xff]
        %v1004 = vld [vmem:[%s3 + $0x3] sm:$0x1]
        %1006 = vset.pattern.permute.xlu0 0
        %1007 = vperm.xlu0 %1006, %v972
        %v1008 = vpop.permute.xlu0 %1007
        %1011 = vset.pattern.permute.xlu0 0
        %1012 = vperm.xlu0 %1011, %v973
        %v1013 = vpop.permute.xlu0 %1012
        %1016 = vset.pattern.permute.xlu0 0
        %1017 = vperm.xlu0 %1016, %v974
        %v1018 = vpop.permute.xlu0 %1017
        %1021 = vset.pattern.permute.xlu0 0
        %1022 = vperm.xlu0 %1021, %v975
        %v1023 = vpop.permute.xlu0 %1022
        %1026 = vset.pattern.permute.xlu0 0
        %1027 = vperm.xlu0 %1026, %v976
        %v1028 = vpop.permute.xlu0 %1027
        %1031 = vset.pattern.permute.xlu0 0
        %1032 = vperm.xlu0 %1031, %v977
        %v1033 = vpop.permute.xlu0 %1032
        %1036 = vset.pattern.permute.xlu0 0
        %1037 = vperm.xlu0 %1036, %v978
        %v1038 = vpop.permute.xlu0 %1037
        %1041 = vset.pattern.permute.xlu0 0
        %1042 = vperm.xlu0 %1041, %v979
        %v1043 = vpop.permute.xlu0 %1042
        %1046 = vset.pattern.permute.xlu0 0
        %1047 = vperm.xlu0 %1046, %v980
        %v1048 = vpop.permute.xlu0 %1047
        %1051 = vset.pattern.permute.xlu0 0
        %1052 = vperm.xlu0 %1051, %v981
        %v1053 = vpop.permute.xlu0 %1052
        %1056 = vset.pattern.permute.xlu0 0
        %1057 = vperm.xlu0 %1056, %v982
        %v1058 = vpop.permute.xlu0 %1057
        %1061 = vset.pattern.permute.xlu0 0
        %1062 = vperm.xlu0 %1061, %v983
        %v1063 = vpop.permute.xlu0 %1062
        %1066 = vset.pattern.permute.xlu0 0
        %1067 = vperm.xlu0 %1066, %v984
        %v1068 = vpop.permute.xlu0 %1067
        %1071 = vset.pattern.permute.xlu0 0
        %1072 = vperm.xlu0 %1071, %v985
        %v1073 = vpop.permute.xlu0 %1072
        %1076 = vset.pattern.permute.xlu0 0
        %1077 = vperm.xlu0 %1076, %v986
        %v1078 = vpop.permute.xlu0 %1077
        %1081 = vset.pattern.permute.xlu0 0
        %1082 = vperm.xlu0 %1081, %v987
        %v1083 = vpop.permute.xlu0 %1082
        %1086 = vset.pattern.permute.xlu0 0
        %1087 = vperm.xlu0 %1086, %v988
        %v1088 = vpop.permute.xlu0 %1087
        %1091 = vset.pattern.permute.xlu0 0
        %1092 = vperm.xlu0 %1091, %v989
        %v1093 = vpop.permute.xlu0 %1092
        %1096 = vset.pattern.permute.xlu0 0
        %1097 = vperm.xlu0 %1096, %v990
        %v1098 = vpop.permute.xlu0 %1097
        %1101 = vset.pattern.permute.xlu0 0
        %1102 = vperm.xlu0 %1101, %v991
        %v1103 = vpop.permute.xlu0 %1102
        %1106 = vset.pattern.permute.xlu0 0
        %1107 = vperm.xlu0 %1106, %v992
        %v1108 = vpop.permute.xlu0 %1107
        %1111 = vset.pattern.permute.xlu0 0
        %1112 = vperm.xlu0 %1111, %v993
        %v1113 = vpop.permute.xlu0 %1112
        %1116 = vset.pattern.permute.xlu0 0
        %1117 = vperm.xlu0 %1116, %v994
        %v1118 = vpop.permute.xlu0 %1117
        %1121 = vset.pattern.permute.xlu0 0
        %1122 = vperm.xlu0 %1121, %v995
        %v1123 = vpop.permute.xlu0 %1122
        %1126 = vset.pattern.permute.xlu0 0
        %1127 = vperm.xlu0 %1126, %v996
        %v1128 = vpop.permute.xlu0 %1127
        %1131 = vset.pattern.permute.xlu0 0
        %1132 = vperm.xlu0 %1131, %v997
        %v1133 = vpop.permute.xlu0 %1132
        %1136 = vset.pattern.permute.xlu0 0
        %1137 = vperm.xlu0 %1136, %v998
        %v1138 = vpop.permute.xlu0 %1137
        %1141 = vset.pattern.permute.xlu0 0
        %1142 = vperm.xlu0 %1141, %v999
        %v1143 = vpop.permute.xlu0 %1142
        %1146 = vset.pattern.permute.xlu0 0
        %1147 = vperm.xlu0 %1146, %v1000
        %v1148 = vpop.permute.xlu0 %1147
        %1151 = vset.pattern.permute.xlu0 0
        %1152 = vperm.xlu0 %1151, %v1001
        %v1153 = vpop.permute.xlu0 %1152
        %1156 = vset.pattern.permute.xlu0 0
        %1157 = vperm.xlu0 %1156, %v1002
        %v1158 = vpop.permute.xlu0 %1157
        %1161 = vset.pattern.permute.xlu0 0
        %1162 = vperm.xlu0 %1161, %v1003
        %v1163 = vpop.permute.xlu0 %1162
        %v1165 = vlaneseq
        %v1166 = vshrl.u32 %v1165, 7
        %v1167 = vsub.s32 0, %v1166
        %v1168 = vrot.slane %v1004, %v1167
        %v1169 = vmul.f32 %v1008, %v1168
        %v1170 = vmul.f32 %v1013, %v1168
        %v1171 = vmul.f32 %v1018, %v1168
        %v1172 = vmul.f32 %v1023, %v1168
        %v1173 = vmul.f32 %v1028, %v1168
        %v1174 = vmul.f32 %v1033, %v1168
        %v1175 = vmul.f32 %v1038, %v1168
        %v1176 = vmul.f32 %v1043, %v1168
        %v1177 = vmul.f32 %v1048, %v1168
        %v1178 = vmul.f32 %v1053, %v1168
        %v1179 = vmul.f32 %v1058, %v1168
        %v1180 = vmul.f32 %v1063, %v1168
        %v1181 = vmul.f32 %v1068, %v1168
        %v1182 = vmul.f32 %v1073, %v1168
        %v1183 = vmul.f32 %v1078, %v1168
        %v1184 = vmul.f32 %v1083, %v1168
        %v1185 = vmul.f32 %v1088, %v1168
        %v1186 = vmul.f32 %v1093, %v1168
        %v1187 = vmul.f32 %v1098, %v1168
        %v1188 = vmul.f32 %v1103, %v1168
        %v1189 = vmul.f32 %v1108, %v1168
        %v1190 = vmul.f32 %v1113, %v1168
        %v1191 = vmul.f32 %v1118, %v1168
        %v1192 = vmul.f32 %v1123, %v1168
        %v1193 = vmul.f32 %v1128, %v1168
        %v1194 = vmul.f32 %v1133, %v1168
        %v1195 = vmul.f32 %v1138, %v1168
        %v1196 = vmul.f32 %v1143, %v1168
        %v1197 = vmul.f32 %v1148, %v1168
        %v1198 = vmul.f32 %v1153, %v1168
        %v1199 = vmul.f32 %v1158, %v1168
        %v1200 = vmul.f32 %v1163, %v1168
        %v1201 = vadd.f32 %v940, %v1169
        %v1202 = vadd.f32 %v941, %v1170
        %v1203 = vadd.f32 %v942, %v1171
        %v1204 = vadd.f32 %v943, %v1172
        %v1205 = vadd.f32 %v944, %v1173
        %v1206 = vadd.f32 %v945, %v1174
        %v1207 = vadd.f32 %v946, %v1175
        %v1208 = vadd.f32 %v947, %v1176
        %v1209 = vadd.f32 %v948, %v1177
        %v1210 = vadd.f32 %v949, %v1178
        %v1211 = vadd.f32 %v950, %v1179
        %v1212 = vadd.f32 %v951, %v1180
        %v1213 = vadd.f32 %v952, %v1181
        %v1214 = vadd.f32 %v953, %v1182
        %v1215 = vadd.f32 %v954, %v1183
        %v1216 = vadd.f32 %v955, %v1184
        %v1217 = vadd.f32 %v956, %v1185
        %v1218 = vadd.f32 %v957, %v1186
        %v1219 = vadd.f32 %v958, %v1187
        %v1220 = vadd.f32 %v959, %v1188
        %v1221 = vadd.f32 %v960, %v1189
        %v1222 = vadd.f32 %v961, %v1190
        %v1223 = vadd.f32 %v962, %v1191
        %v1224 = vadd.f32 %v963, %v1192
        %v1225 = vadd.f32 %v964, %v1193
        %v1226 = vadd.f32 %v965, %v1194
        %v1227 = vadd.f32 %v966, %v1195
        %v1228 = vadd.f32 %v967, %v1196
        %v1229 = vadd.f32 %v968, %v1197
        %v1230 = vadd.f32 %v969, %v1198
        %v1231 = vadd.f32 %v970, %v1199
        %v1232 = vadd.f32 %v971, %v1200
        %v1233 = vld [vmem:[%s3 + $0x4] sm:$0x1]
        %1234 = vset.pattern.permute.xlu0 1
        %1235 = vperm.xlu0 %1234, %v972
        %v1236 = vpop.permute.xlu0 %1235
        %1238 = vset.pattern.permute.xlu0 1
        %1239 = vperm.xlu0 %1238, %v973
        %v1240 = vpop.permute.xlu0 %1239
        %1242 = vset.pattern.permute.xlu0 1
        %1243 = vperm.xlu0 %1242, %v974
        %v1244 = vpop.permute.xlu0 %1243
        %1246 = vset.pattern.permute.xlu0 1
        %1247 = vperm.xlu0 %1246, %v975
        %v1248 = vpop.permute.xlu0 %1247
        %1250 = vset.pattern.permute.xlu0 1
        %1251 = vperm.xlu0 %1250, %v976
        %v1252 = vpop.permute.xlu0 %1251
        %1254 = vset.pattern.permute.xlu0 1
        %1255 = vperm.xlu0 %1254, %v977
        %v1256 = vpop.permute.xlu0 %1255
        %1258 = vset.pattern.permute.xlu0 1
        %1259 = vperm.xlu0 %1258, %v978
        %v1260 = vpop.permute.xlu0 %1259
        %1262 = vset.pattern.permute.xlu0 1
        %1263 = vperm.xlu0 %1262, %v979
        %v1264 = vpop.permute.xlu0 %1263
        %1266 = vset.pattern.permute.xlu0 1
        %1267 = vperm.xlu0 %1266, %v980
        %v1268 = vpop.permute.xlu0 %1267
        %1270 = vset.pattern.permute.xlu0 1
        %1271 = vperm.xlu0 %1270, %v981
        %v1272 = vpop.permute.xlu0 %1271
        %1274 = vset.pattern.permute.xlu0 1
        %1275 = vperm.xlu0 %1274, %v982
        %v1276 = vpop.permute.xlu0 %1275
        %1278 = vset.pattern.permute.xlu0 1
        %1279 = vperm.xlu0 %1278, %v983
        %v1280 = vpop.permute.xlu0 %1279
        %1282 = vset.pattern.permute.xlu0 1
        %1283 = vperm.xlu0 %1282, %v984
        %v1284 = vpop.permute.xlu0 %1283
        %1286 = vset.pattern.permute.xlu0 1
        %1287 = vperm.xlu0 %1286, %v985
        %v1288 = vpop.permute.xlu0 %1287
        %1290 = vset.pattern.permute.xlu0 1
        %1291 = vperm.xlu0 %1290, %v986
        %v1292 = vpop.permute.xlu0 %1291
        %1294 = vset.pattern.permute.xlu0 1
        %1295 = vperm.xlu0 %1294, %v987
        %v1296 = vpop.permute.xlu0 %1295
        %1298 = vset.pattern.permute.xlu0 1
        %1299 = vperm.xlu0 %1298, %v988
        %v1300 = vpop.permute.xlu0 %1299
        %1302 = vset.pattern.permute.xlu0 1
        %1303 = vperm.xlu0 %1302, %v989
        %v1304 = vpop.permute.xlu0 %1303
        %1306 = vset.pattern.permute.xlu0 1
        %1307 = vperm.xlu0 %1306, %v990
        %v1308 = vpop.permute.xlu0 %1307
        %1310 = vset.pattern.permute.xlu0 1
        %1311 = vperm.xlu0 %1310, %v991
        %v1312 = vpop.permute.xlu0 %1311
        %1314 = vset.pattern.permute.xlu0 1
        %1315 = vperm.xlu0 %1314, %v992
        %v1316 = vpop.permute.xlu0 %1315
        %1318 = vset.pattern.permute.xlu0 1
        %1319 = vperm.xlu0 %1318, %v993
        %v1320 = vpop.permute.xlu0 %1319
        %1322 = vset.pattern.permute.xlu0 1
        %1323 = vperm.xlu0 %1322, %v994
        %v1324 = vpop.permute.xlu0 %1323
        %1326 = vset.pattern.permute.xlu0 1
        %1327 = vperm.xlu0 %1326, %v995
        %v1328 = vpop.permute.xlu0 %1327
        %1330 = vset.pattern.permute.xlu0 1
        %1331 = vperm.xlu0 %1330, %v996
        %v1332 = vpop.permute.xlu0 %1331
        %1334 = vset.pattern.permute.xlu0 1
        %1335 = vperm.xlu0 %1334, %v997
        %v1336 = vpop.permute.xlu0 %1335
        %1338 = vset.pattern.permute.xlu0 1
        %1339 = vperm.xlu0 %1338, %v998
        %v1340 = vpop.permute.xlu0 %1339
        %1342 = vset.pattern.permute.xlu0 1
        %1343 = vperm.xlu0 %1342, %v999
        %v1344 = vpop.permute.xlu0 %1343
        %1346 = vset.pattern.permute.xlu0 1
        %1347 = vperm.xlu0 %1346, %v1000
        %v1348 = vpop.permute.xlu0 %1347
        %1350 = vset.pattern.permute.xlu0 1
        %1351 = vperm.xlu0 %1350, %v1001
        %v1352 = vpop.permute.xlu0 %1351
        %1354 = vset.pattern.permute.xlu0 1
        %1355 = vperm.xlu0 %1354, %v1002
        %v1356 = vpop.permute.xlu0 %1355
        %1358 = vset.pattern.permute.xlu0 1
        %1359 = vperm.xlu0 %1358, %v1003
        %v1360 = vpop.permute.xlu0 %1359
        %v1362 = vlaneseq
        %v1363 = vshrl.u32 %v1362, 7
        %v1364 = vsub.s32 0, %v1363
        %v1365 = vrot.slane %v1233, %v1364
        %v1366 = vmul.f32 %v1236, %v1365
        %v1367 = vmul.f32 %v1240, %v1365
        %v1368 = vmul.f32 %v1244, %v1365
        %v1369 = vmul.f32 %v1248, %v1365
        %v1370 = vmul.f32 %v1252, %v1365
        %v1371 = vmul.f32 %v1256, %v1365
        %v1372 = vmul.f32 %v1260, %v1365
        %v1373 = vmul.f32 %v1264, %v1365
        %v1374 = vmul.f32 %v1268, %v1365
        %v1375 = vmul.f32 %v1272, %v1365
        %v1376 = vmul.f32 %v1276, %v1365
        %v1377 = vmul.f32 %v1280, %v1365
        %v1378 = vmul.f32 %v1284, %v1365
        %v1379 = vmul.f32 %v1288, %v1365
        %v1380 = vmul.f32 %v1292, %v1365
        %v1381 = vmul.f32 %v1296, %v1365
        %v1382 = vmul.f32 %v1300, %v1365
        %v1383 = vmul.f32 %v1304, %v1365
        %v1384 = vmul.f32 %v1308, %v1365
        %v1385 = vmul.f32 %v1312, %v1365
        %v1386 = vmul.f32 %v1316, %v1365
        %v1387 = vmul.f32 %v1320, %v1365
        %v1388 = vmul.f32 %v1324, %v1365
        %v1389 = vmul.f32 %v1328, %v1365
        %v1390 = vmul.f32 %v1332, %v1365
        %v1391 = vmul.f32 %v1336, %v1365
        %v1392 = vmul.f32 %v1340, %v1365
        %v1393 = vmul.f32 %v1344, %v1365
        %v1394 = vmul.f32 %v1348, %v1365
        %v1395 = vmul.f32 %v1352, %v1365
        %v1396 = vmul.f32 %v1356, %v1365
        %v1397 = vmul.f32 %v1360, %v1365
        %v1398 = vadd.f32 %v1201, %v1366
        %v1399 = vadd.f32 %v1202, %v1367
        %v1400 = vadd.f32 %v1203, %v1368
        %v1401 = vadd.f32 %v1204, %v1369
        %v1402 = vadd.f32 %v1205, %v1370
        %v1403 = vadd.f32 %v1206, %v1371
        %v1404 = vadd.f32 %v1207, %v1372
        %v1405 = vadd.f32 %v1208, %v1373
        %v1406 = vadd.f32 %v1209, %v1374
        %v1407 = vadd.f32 %v1210, %v1375
        %v1408 = vadd.f32 %v1211, %v1376
        %v1409 = vadd.f32 %v1212, %v1377
        %v1410 = vadd.f32 %v1213, %v1378
        %v1411 = vadd.f32 %v1214, %v1379
        %v1412 = vadd.f32 %v1215, %v1380
        %v1413 = vadd.f32 %v1216, %v1381
        %v1414 = vadd.f32 %v1217, %v1382
        %v1415 = vadd.f32 %v1218, %v1383
        %v1416 = vadd.f32 %v1219, %v1384
        %v1417 = vadd.f32 %v1220, %v1385
        %v1418 = vadd.f32 %v1221, %v1386
        %v1419 = vadd.f32 %v1222, %v1387
        %v1420 = vadd.f32 %v1223, %v1388
        %v1421 = vadd.f32 %v1224, %v1389
        %v1422 = vadd.f32 %v1225, %v1390
        %v1423 = vadd.f32 %v1226, %v1391
        %v1424 = vadd.f32 %v1227, %v1392
        %v1425 = vadd.f32 %v1228, %v1393
        %v1426 = vadd.f32 %v1229, %v1394
        %v1427 = vadd.f32 %v1230, %v1395
        %v1428 = vadd.f32 %v1231, %v1396
        %v1429 = vadd.f32 %v1232, %v1397
        %v1430 = vld [vmem:[%s3 + $0x5] sm:$0x1]
        %1431 = vset.pattern.permute.xlu0 2
        %1432 = vperm.xlu0 %1431, %v972
        %v1433 = vpop.permute.xlu0 %1432
        %1435 = vset.pattern.permute.xlu0 2
        %1436 = vperm.xlu0 %1435, %v973
        %v1437 = vpop.permute.xlu0 %1436
        %1439 = vset.pattern.permute.xlu0 2
        %1440 = vperm.xlu0 %1439, %v974
        %v1441 = vpop.permute.xlu0 %1440
        %1443 = vset.pattern.permute.xlu0 2
        %1444 = vperm.xlu0 %1443, %v975
        %v1445 = vpop.permute.xlu0 %1444
        %1447 = vset.pattern.permute.xlu0 2
        %1448 = vperm.xlu0 %1447, %v976
        %v1449 = vpop.permute.xlu0 %1448
        %1451 = vset.pattern.permute.xlu0 2
        %1452 = vperm.xlu0 %1451, %v977
        %v1453 = vpop.permute.xlu0 %1452
        %1455 = vset.pattern.permute.xlu0 2
        %1456 = vperm.xlu0 %1455, %v978
        %v1457 = vpop.permute.xlu0 %1456
        %1459 = vset.pattern.permute.xlu0 2
        %1460 = vperm.xlu0 %1459, %v979
        %v1461 = vpop.permute.xlu0 %1460
        %1463 = vset.pattern.permute.xlu0 2
        %1464 = vperm.xlu0 %1463, %v980
        %v1465 = vpop.permute.xlu0 %1464
        %1467 = vset.pattern.permute.xlu0 2
        %1468 = vperm.xlu0 %1467, %v981
        %v1469 = vpop.permute.xlu0 %1468
        %1471 = vset.pattern.permute.xlu0 2
        %1472 = vperm.xlu0 %1471, %v982
        %v1473 = vpop.permute.xlu0 %1472
        %1475 = vset.pattern.permute.xlu0 2
        %1476 = vperm.xlu0 %1475, %v983
        %v1477 = vpop.permute.xlu0 %1476
        %1479 = vset.pattern.permute.xlu0 2
        %1480 = vperm.xlu0 %1479, %v984
        %v1481 = vpop.permute.xlu0 %1480
        %1483 = vset.pattern.permute.xlu0 2
        %1484 = vperm.xlu0 %1483, %v985
        %v1485 = vpop.permute.xlu0 %1484
        %1487 = vset.pattern.permute.xlu0 2
        %1488 = vperm.xlu0 %1487, %v986
        %v1489 = vpop.permute.xlu0 %1488
        %1491 = vset.pattern.permute.xlu0 2
        %1492 = vperm.xlu0 %1491, %v987
        %v1493 = vpop.permute.xlu0 %1492
        %1495 = vset.pattern.permute.xlu0 2
        %1496 = vperm.xlu0 %1495, %v988
        %v1497 = vpop.permute.xlu0 %1496
        %1499 = vset.pattern.permute.xlu0 2
        %1500 = vperm.xlu0 %1499, %v989
        %v1501 = vpop.permute.xlu0 %1500
        %1503 = vset.pattern.permute.xlu0 2
        %1504 = vperm.xlu0 %1503, %v990
        %v1505 = vpop.permute.xlu0 %1504
        %1507 = vset.pattern.permute.xlu0 2
        %1508 = vperm.xlu0 %1507, %v991
        %v1509 = vpop.permute.xlu0 %1508
        %1511 = vset.pattern.permute.xlu0 2
        %1512 = vperm.xlu0 %1511, %v992
        %v1513 = vpop.permute.xlu0 %1512
        %1515 = vset.pattern.permute.xlu0 2
        %1516 = vperm.xlu0 %1515, %v993
        %v1517 = vpop.permute.xlu0 %1516
        %1519 = vset.pattern.permute.xlu0 2
        %1520 = vperm.xlu0 %1519, %v994
        %v1521 = vpop.permute.xlu0 %1520
        %1523 = vset.pattern.permute.xlu0 2
        %1524 = vperm.xlu0 %1523, %v995
        %v1525 = vpop.permute.xlu0 %1524
        %1527 = vset.pattern.permute.xlu0 2
        %1528 = vperm.xlu0 %1527, %v996
        %v1529 = vpop.permute.xlu0 %1528
        %1531 = vset.pattern.permute.xlu0 2
        %1532 = vperm.xlu0 %1531, %v997
        %v1533 = vpop.permute.xlu0 %1532
        %1535 = vset.pattern.permute.xlu0 2
        %1536 = vperm.xlu0 %1535, %v998
        %v1537 = vpop.permute.xlu0 %1536
        %1539 = vset.pattern.permute.xlu0 2
        %1540 = vperm.xlu0 %1539, %v999
        %v1541 = vpop.permute.xlu0 %1540
        %1543 = vset.pattern.permute.xlu0 2
        %1544 = vperm.xlu0 %1543, %v1000
        %v1545 = vpop.permute.xlu0 %1544
        %1547 = vset.pattern.permute.xlu0 2
        %1548 = vperm.xlu0 %1547, %v1001
        %v1549 = vpop.permute.xlu0 %1548
        %1551 = vset.pattern.permute.xlu0 2
        %1552 = vperm.xlu0 %1551, %v1002
        %v1553 = vpop.permute.xlu0 %1552
        %1555 = vset.pattern.permute.xlu0 2
        %1556 = vperm.xlu0 %1555, %v1003
        %v1557 = vpop.permute.xlu0 %1556
        %v1559 = vlaneseq
        %v1560 = vshrl.u32 %v1559, 7
        %v1561 = vsub.s32 0, %v1560
        %v1562 = vrot.slane %v1430, %v1561
        %v1563 = vmul.f32 %v1433, %v1562
        %v1564 = vmul.f32 %v1437, %v1562
        %v1565 = vmul.f32 %v1441, %v1562
        %v1566 = vmul.f32 %v1445, %v1562
        %v1567 = vmul.f32 %v1449, %v1562
        %v1568 = vmul.f32 %v1453, %v1562
        %v1569 = vmul.f32 %v1457, %v1562
        %v1570 = vmul.f32 %v1461, %v1562
        %v1571 = vmul.f32 %v1465, %v1562
        %v1572 = vmul.f32 %v1469, %v1562
        %v1573 = vmul.f32 %v1473, %v1562
        %v1574 = vmul.f32 %v1477, %v1562
        %v1575 = vmul.f32 %v1481, %v1562
        %v1576 = vmul.f32 %v1485, %v1562
        %v1577 = vmul.f32 %v1489, %v1562
        %v1578 = vmul.f32 %v1493, %v1562
        %v1579 = vmul.f32 %v1497, %v1562
        %v1580 = vmul.f32 %v1501, %v1562
        %v1581 = vmul.f32 %v1505, %v1562
        %v1582 = vmul.f32 %v1509, %v1562
        %v1583 = vmul.f32 %v1513, %v1562
        %v1584 = vmul.f32 %v1517, %v1562
        %v1585 = vmul.f32 %v1521, %v1562
        %v1586 = vmul.f32 %v1525, %v1562
        %v1587 = vmul.f32 %v1529, %v1562
        %v1588 = vmul.f32 %v1533, %v1562
        %v1589 = vmul.f32 %v1537, %v1562
        %v1590 = vmul.f32 %v1541, %v1562
        %v1591 = vmul.f32 %v1545, %v1562
        %v1592 = vmul.f32 %v1549, %v1562
        %v1593 = vmul.f32 %v1553, %v1562
        %v1594 = vmul.f32 %v1557, %v1562
        %v1595 = vadd.f32 %v1398, %v1563
        %v1596 = vadd.f32 %v1399, %v1564
        %v1597 = vadd.f32 %v1400, %v1565
        %v1598 = vadd.f32 %v1401, %v1566
        %v1599 = vadd.f32 %v1402, %v1567
        %v1600 = vadd.f32 %v1403, %v1568
        %v1601 = vadd.f32 %v1404, %v1569
        %v1602 = vadd.f32 %v1405, %v1570
        %v1603 = vadd.f32 %v1406, %v1571
        %v1604 = vadd.f32 %v1407, %v1572
        %v1605 = vadd.f32 %v1408, %v1573
        %v1606 = vadd.f32 %v1409, %v1574
        %v1607 = vadd.f32 %v1410, %v1575
        %v1608 = vadd.f32 %v1411, %v1576
        %v1609 = vadd.f32 %v1412, %v1577
        %v1610 = vadd.f32 %v1413, %v1578
        %v1611 = vadd.f32 %v1414, %v1579
        %v1612 = vadd.f32 %v1415, %v1580
        %v1613 = vadd.f32 %v1416, %v1581
        %v1614 = vadd.f32 %v1417, %v1582
        %v1615 = vadd.f32 %v1418, %v1583
        %v1616 = vadd.f32 %v1419, %v1584
        %v1617 = vadd.f32 %v1420, %v1585
        %v1618 = vadd.f32 %v1421, %v1586
        %v1619 = vadd.f32 %v1422, %v1587
        %v1620 = vadd.f32 %v1423, %v1588
        %v1621 = vadd.f32 %v1424, %v1589
        %v1622 = vadd.f32 %v1425, %v1590
        %v1623 = vadd.f32 %v1426, %v1591
        %v1624 = vadd.f32 %v1427, %v1592
        %v1625 = vadd.f32 %v1428, %v1593
        %v1626 = vadd.f32 %v1429, %v1594
        %v1627 = vld [vmem:[%s311 + $0x2] sm:$0xff]
        %v1628 = vld [vmem:[%s311 + $0xa] sm:$0xff]
        %v1629 = vld [vmem:[%s311 + $0x1a] sm:$0xff]
        %v1630 = vld [vmem:[%s311 + $0x22] sm:$0xff]
        %v1631 = vld [vmem:[%s311 + $0x32] sm:$0xff]
        %v1632 = vld [vmem:[%s311 + $0x3a] sm:$0xff]
        %v1633 = vld [vmem:[%s311 + $0x4a] sm:$0xff]
        %v1634 = vld [vmem:[%s311 + $0x52] sm:$0xff]
        %v1635 = vld [vmem:[%s311 + $0x62] sm:$0xff]
        %v1636 = vld [vmem:[%s311 + $0x6a] sm:$0xff]
        %v1637 = vld [vmem:[%s311 + $0x7a] sm:$0xff]
        %v1638 = vld [vmem:[%s311 + $0x82] sm:$0xff]
        %v1639 = vld [vmem:[%s311 + $0x92] sm:$0xff]
        %v1640 = vld [vmem:[%s311 + $0x9a] sm:$0xff]
        %v1641 = vld [vmem:[%s311 + $0xaa] sm:$0xff]
        %v1642 = vld [vmem:[%s311 + $0xb2] sm:$0xff]
        %v1643 = vld [vmem:[%s311 + $0xc2] sm:$0xff]
        %v1644 = vld [vmem:[%s311 + $0xca] sm:$0xff]
        %v1645 = vld [vmem:[%s311 + $0xda] sm:$0xff]
        %v1646 = vld [vmem:[%s311 + $0xe2] sm:$0xff]
        %v1647 = vld [vmem:[%s311 + $0xf2] sm:$0xff]
        %v1648 = vld [vmem:[%s311 + $0xfa] sm:$0xff]
        %v1649 = vld [vmem:[%s311 + $0x10a] sm:$0xff]
        %v1650 = vld [vmem:[%s311 + $0x112] sm:$0xff]
        %v1651 = vld [vmem:[%s311 + $0x122] sm:$0xff]
        %v1652 = vld [vmem:[%s311 + $0x12a] sm:$0xff]
        %v1653 = vld [vmem:[%s311 + $0x13a] sm:$0xff]
        %v1654 = vld [vmem:[%s311 + $0x142] sm:$0xff]
        %v1655 = vld [vmem:[%s311 + $0x152] sm:$0xff]
        %v1656 = vld [vmem:[%s311 + $0x15a] sm:$0xff]
        %v1657 = vld [vmem:[%s311 + $0x16a] sm:$0xff]
        %v1658 = vld [vmem:[%s311 + $0x172] sm:$0xff]
        %v1659 = vld [vmem:[%s3 + $0x6] sm:$0x1]
        %1661 = vset.pattern.permute.xlu0 0
        %1662 = vperm.xlu0 %1661, %v1627
        %v1663 = vpop.permute.xlu0 %1662
        %1666 = vset.pattern.permute.xlu0 0
        %1667 = vperm.xlu0 %1666, %v1628
        %v1668 = vpop.permute.xlu0 %1667
        %1671 = vset.pattern.permute.xlu0 0
        %1672 = vperm.xlu0 %1671, %v1629
        %v1673 = vpop.permute.xlu0 %1672
        %1676 = vset.pattern.permute.xlu0 0
        %1677 = vperm.xlu0 %1676, %v1630
        %v1678 = vpop.permute.xlu0 %1677
        %1681 = vset.pattern.permute.xlu0 0
        %1682 = vperm.xlu0 %1681, %v1631
        %v1683 = vpop.permute.xlu0 %1682
        %1686 = vset.pattern.permute.xlu0 0
        %1687 = vperm.xlu0 %1686, %v1632
        %v1688 = vpop.permute.xlu0 %1687
        %1691 = vset.pattern.permute.xlu0 0
        %1692 = vperm.xlu0 %1691, %v1633
        %v1693 = vpop.permute.xlu0 %1692
        %1696 = vset.pattern.permute.xlu0 0
        %1697 = vperm.xlu0 %1696, %v1634
        %v1698 = vpop.permute.xlu0 %1697
        %1701 = vset.pattern.permute.xlu0 0
        %1702 = vperm.xlu0 %1701, %v1635
        %v1703 = vpop.permute.xlu0 %1702
        %1706 = vset.pattern.permute.xlu0 0
        %1707 = vperm.xlu0 %1706, %v1636
        %v1708 = vpop.permute.xlu0 %1707
        %1711 = vset.pattern.permute.xlu0 0
        %1712 = vperm.xlu0 %1711, %v1637
        %v1713 = vpop.permute.xlu0 %1712
        %1716 = vset.pattern.permute.xlu0 0
        %1717 = vperm.xlu0 %1716, %v1638
        %v1718 = vpop.permute.xlu0 %1717
        %1721 = vset.pattern.permute.xlu0 0
        %1722 = vperm.xlu0 %1721, %v1639
        %v1723 = vpop.permute.xlu0 %1722
        %1726 = vset.pattern.permute.xlu0 0
        %1727 = vperm.xlu0 %1726, %v1640
        %v1728 = vpop.permute.xlu0 %1727
        %1731 = vset.pattern.permute.xlu0 0
        %1732 = vperm.xlu0 %1731, %v1641
        %v1733 = vpop.permute.xlu0 %1732
        %1736 = vset.pattern.permute.xlu0 0
        %1737 = vperm.xlu0 %1736, %v1642
        %v1738 = vpop.permute.xlu0 %1737
        %1741 = vset.pattern.permute.xlu0 0
        %1742 = vperm.xlu0 %1741, %v1643
        %v1743 = vpop.permute.xlu0 %1742
        %1746 = vset.pattern.permute.xlu0 0
        %1747 = vperm.xlu0 %1746, %v1644
        %v1748 = vpop.permute.xlu0 %1747
        %1751 = vset.pattern.permute.xlu0 0
        %1752 = vperm.xlu0 %1751, %v1645
        %v1753 = vpop.permute.xlu0 %1752
        %1756 = vset.pattern.permute.xlu0 0
        %1757 = vperm.xlu0 %1756, %v1646
        %v1758 = vpop.permute.xlu0 %1757
        %1761 = vset.pattern.permute.xlu0 0
        %1762 = vperm.xlu0 %1761, %v1647
        %v1763 = vpop.permute.xlu0 %1762
        %1766 = vset.pattern.permute.xlu0 0
        %1767 = vperm.xlu0 %1766, %v1648
        %v1768 = vpop.permute.xlu0 %1767
        %1771 = vset.pattern.permute.xlu0 0
        %1772 = vperm.xlu0 %1771, %v1649
        %v1773 = vpop.permute.xlu0 %1772
        %1776 = vset.pattern.permute.xlu0 0
        %1777 = vperm.xlu0 %1776, %v1650
        %v1778 = vpop.permute.xlu0 %1777
        %1781 = vset.pattern.permute.xlu0 0
        %1782 = vperm.xlu0 %1781, %v1651
        %v1783 = vpop.permute.xlu0 %1782
        %1786 = vset.pattern.permute.xlu0 0
        %1787 = vperm.xlu0 %1786, %v1652
        %v1788 = vpop.permute.xlu0 %1787
        %1791 = vset.pattern.permute.xlu0 0
        %1792 = vperm.xlu0 %1791, %v1653
        %v1793 = vpop.permute.xlu0 %1792
        %1796 = vset.pattern.permute.xlu0 0
        %1797 = vperm.xlu0 %1796, %v1654
        %v1798 = vpop.permute.xlu0 %1797
        %1801 = vset.pattern.permute.xlu0 0
        %1802 = vperm.xlu0 %1801, %v1655
        %v1803 = vpop.permute.xlu0 %1802
        %1806 = vset.pattern.permute.xlu0 0
        %1807 = vperm.xlu0 %1806, %v1656
        %v1808 = vpop.permute.xlu0 %1807
        %1811 = vset.pattern.permute.xlu0 0
        %1812 = vperm.xlu0 %1811, %v1657
        %v1813 = vpop.permute.xlu0 %1812
        %1816 = vset.pattern.permute.xlu0 0
        %1817 = vperm.xlu0 %1816, %v1658
        %v1818 = vpop.permute.xlu0 %1817
        %v1820 = vlaneseq
        %v1821 = vshrl.u32 %v1820, 7
        %v1822 = vsub.s32 0, %v1821
        %v1823 = vrot.slane %v1659, %v1822
        %v1824 = vmul.f32 %v1663, %v1823
        %v1825 = vmul.f32 %v1668, %v1823
        %v1826 = vmul.f32 %v1673, %v1823
        %v1827 = vmul.f32 %v1678, %v1823
        %v1828 = vmul.f32 %v1683, %v1823
        %v1829 = vmul.f32 %v1688, %v1823
        %v1830 = vmul.f32 %v1693, %v1823
        %v1831 = vmul.f32 %v1698, %v1823
        %v1832 = vmul.f32 %v1703, %v1823
        %v1833 = vmul.f32 %v1708, %v1823
        %v1834 = vmul.f32 %v1713, %v1823
        %v1835 = vmul.f32 %v1718, %v1823
        %v1836 = vmul.f32 %v1723, %v1823
        %v1837 = vmul.f32 %v1728, %v1823
        %v1838 = vmul.f32 %v1733, %v1823
        %v1839 = vmul.f32 %v1738, %v1823
        %v1840 = vmul.f32 %v1743, %v1823
        %v1841 = vmul.f32 %v1748, %v1823
        %v1842 = vmul.f32 %v1753, %v1823
        %v1843 = vmul.f32 %v1758, %v1823
        %v1844 = vmul.f32 %v1763, %v1823
        %v1845 = vmul.f32 %v1768, %v1823
        %v1846 = vmul.f32 %v1773, %v1823
        %v1847 = vmul.f32 %v1778, %v1823
        %v1848 = vmul.f32 %v1783, %v1823
        %v1849 = vmul.f32 %v1788, %v1823
        %v1850 = vmul.f32 %v1793, %v1823
        %v1851 = vmul.f32 %v1798, %v1823
        %v1852 = vmul.f32 %v1803, %v1823
        %v1853 = vmul.f32 %v1808, %v1823
        %v1854 = vmul.f32 %v1813, %v1823
        %v1855 = vmul.f32 %v1818, %v1823
        %v1856 = vadd.f32 %v1595, %v1824
        %v1857 = vadd.f32 %v1596, %v1825
        %v1858 = vadd.f32 %v1597, %v1826
        %v1859 = vadd.f32 %v1598, %v1827
        %v1860 = vadd.f32 %v1599, %v1828
        %v1861 = vadd.f32 %v1600, %v1829
        %v1862 = vadd.f32 %v1601, %v1830
        %v1863 = vadd.f32 %v1602, %v1831
        %v1864 = vadd.f32 %v1603, %v1832
        %v1865 = vadd.f32 %v1604, %v1833
        %v1866 = vadd.f32 %v1605, %v1834
        %v1867 = vadd.f32 %v1606, %v1835
        %v1868 = vadd.f32 %v1607, %v1836
        %v1869 = vadd.f32 %v1608, %v1837
        %v1870 = vadd.f32 %v1609, %v1838
        %v1871 = vadd.f32 %v1610, %v1839
        %v1872 = vadd.f32 %v1611, %v1840
        %v1873 = vadd.f32 %v1612, %v1841
        %v1874 = vadd.f32 %v1613, %v1842
        %v1875 = vadd.f32 %v1614, %v1843
        %v1876 = vadd.f32 %v1615, %v1844
        %v1877 = vadd.f32 %v1616, %v1845
        %v1878 = vadd.f32 %v1617, %v1846
        %v1879 = vadd.f32 %v1618, %v1847
        %v1880 = vadd.f32 %v1619, %v1848
        %v1881 = vadd.f32 %v1620, %v1849
        %v1882 = vadd.f32 %v1621, %v1850
        %v1883 = vadd.f32 %v1622, %v1851
        %v1884 = vadd.f32 %v1623, %v1852
        %v1885 = vadd.f32 %v1624, %v1853
        %v1886 = vadd.f32 %v1625, %v1854
        %v1887 = vadd.f32 %v1626, %v1855
        %v1888 = vld [vmem:[%s3 + $0x7] sm:$0x1]
        %1889 = vset.pattern.permute.xlu0 1
        %1890 = vperm.xlu0 %1889, %v1627
        %v1891 = vpop.permute.xlu0 %1890
        %1893 = vset.pattern.permute.xlu0 1
        %1894 = vperm.xlu0 %1893, %v1628
        %v1895 = vpop.permute.xlu0 %1894
        %1897 = vset.pattern.permute.xlu0 1
        %1898 = vperm.xlu0 %1897, %v1629
        %v1899 = vpop.permute.xlu0 %1898
        %1901 = vset.pattern.permute.xlu0 1
        %1902 = vperm.xlu0 %1901, %v1630
        %v1903 = vpop.permute.xlu0 %1902
        %1905 = vset.pattern.permute.xlu0 1
        %1906 = vperm.xlu0 %1905, %v1631
        %v1907 = vpop.permute.xlu0 %1906
        %1909 = vset.pattern.permute.xlu0 1
        %1910 = vperm.xlu0 %1909, %v1632
        %v1911 = vpop.permute.xlu0 %1910
        %1913 = vset.pattern.permute.xlu0 1
        %1914 = vperm.xlu0 %1913, %v1633
        %v1915 = vpop.permute.xlu0 %1914
        %1917 = vset.pattern.permute.xlu0 1
        %1918 = vperm.xlu0 %1917, %v1634
        %v1919 = vpop.permute.xlu0 %1918
        %1921 = vset.pattern.permute.xlu0 1
        %1922 = vperm.xlu0 %1921, %v1635
        %v1923 = vpop.permute.xlu0 %1922
        %1925 = vset.pattern.permute.xlu0 1
        %1926 = vperm.xlu0 %1925, %v1636
        %v1927 = vpop.permute.xlu0 %1926
        %1929 = vset.pattern.permute.xlu0 1
        %1930 = vperm.xlu0 %1929, %v1637
        %v1931 = vpop.permute.xlu0 %1930
        %1933 = vset.pattern.permute.xlu0 1
        %1934 = vperm.xlu0 %1933, %v1638
        %v1935 = vpop.permute.xlu0 %1934
        %1937 = vset.pattern.permute.xlu0 1
        %1938 = vperm.xlu0 %1937, %v1639
        %v1939 = vpop.permute.xlu0 %1938
        %1941 = vset.pattern.permute.xlu0 1
        %1942 = vperm.xlu0 %1941, %v1640
        %v1943 = vpop.permute.xlu0 %1942
        %1945 = vset.pattern.permute.xlu0 1
        %1946 = vperm.xlu0 %1945, %v1641
        %v1947 = vpop.permute.xlu0 %1946
        %1949 = vset.pattern.permute.xlu0 1
        %1950 = vperm.xlu0 %1949, %v1642
        %v1951 = vpop.permute.xlu0 %1950
        %1953 = vset.pattern.permute.xlu0 1
        %1954 = vperm.xlu0 %1953, %v1643
        %v1955 = vpop.permute.xlu0 %1954
        %1957 = vset.pattern.permute.xlu0 1
        %1958 = vperm.xlu0 %1957, %v1644
        %v1959 = vpop.permute.xlu0 %1958
        %1961 = vset.pattern.permute.xlu0 1
        %1962 = vperm.xlu0 %1961, %v1645
        %v1963 = vpop.permute.xlu0 %1962
        %1965 = vset.pattern.permute.xlu0 1
        %1966 = vperm.xlu0 %1965, %v1646
        %v1967 = vpop.permute.xlu0 %1966
        %1969 = vset.pattern.permute.xlu0 1
        %1970 = vperm.xlu0 %1969, %v1647
        %v1971 = vpop.permute.xlu0 %1970
        %1973 = vset.pattern.permute.xlu0 1
        %1974 = vperm.xlu0 %1973, %v1648
        %v1975 = vpop.permute.xlu0 %1974
        %1977 = vset.pattern.permute.xlu0 1
        %1978 = vperm.xlu0 %1977, %v1649
        %v1979 = vpop.permute.xlu0 %1978
        %1981 = vset.pattern.permute.xlu0 1
        %1982 = vperm.xlu0 %1981, %v1650
        %v1983 = vpop.permute.xlu0 %1982
        %1985 = vset.pattern.permute.xlu0 1
        %1986 = vperm.xlu0 %1985, %v1651
        %v1987 = vpop.permute.xlu0 %1986
        %1989 = vset.pattern.permute.xlu0 1
        %1990 = vperm.xlu0 %1989, %v1652
        %v1991 = vpop.permute.xlu0 %1990
        %1993 = vset.pattern.permute.xlu0 1
        %1994 = vperm.xlu0 %1993, %v1653
        %v1995 = vpop.permute.xlu0 %1994
        %1997 = vset.pattern.permute.xlu0 1
        %1998 = vperm.xlu0 %1997, %v1654
        %v1999 = vpop.permute.xlu0 %1998
        %2001 = vset.pattern.permute.xlu0 1
        %2002 = vperm.xlu0 %2001, %v1655
        %v2003 = vpop.permute.xlu0 %2002
        %2005 = vset.pattern.permute.xlu0 1
        %2006 = vperm.xlu0 %2005, %v1656
        %v2007 = vpop.permute.xlu0 %2006
        %2009 = vset.pattern.permute.xlu0 1
        %2010 = vperm.xlu0 %2009, %v1657
        %v2011 = vpop.permute.xlu0 %2010
        %2013 = vset.pattern.permute.xlu0 1
        %2014 = vperm.xlu0 %2013, %v1658
        %v2015 = vpop.permute.xlu0 %2014
        %v2017 = vlaneseq
        %v2018 = vshrl.u32 %v2017, 7
        %v2019 = vsub.s32 0, %v2018
        %v2020 = vrot.slane %v1888, %v2019
        %v2021 = vmul.f32 %v1891, %v2020
        %v2022 = vmul.f32 %v1895, %v2020
        %v2023 = vmul.f32 %v1899, %v2020
        %v2024 = vmul.f32 %v1903, %v2020
        %v2025 = vmul.f32 %v1907, %v2020
        %v2026 = vmul.f32 %v1911, %v2020
        %v2027 = vmul.f32 %v1915, %v2020
        %v2028 = vmul.f32 %v1919, %v2020
        %v2029 = vmul.f32 %v1923, %v2020
        %v2030 = vmul.f32 %v1927, %v2020
        %v2031 = vmul.f32 %v1931, %v2020
        %v2032 = vmul.f32 %v1935, %v2020
        %v2033 = vmul.f32 %v1939, %v2020
        %v2034 = vmul.f32 %v1943, %v2020
        %v2035 = vmul.f32 %v1947, %v2020
        %v2036 = vmul.f32 %v1951, %v2020
        %v2037 = vmul.f32 %v1955, %v2020
        %v2038 = vmul.f32 %v1959, %v2020
        %v2039 = vmul.f32 %v1963, %v2020
        %v2040 = vmul.f32 %v1967, %v2020
        %v2041 = vmul.f32 %v1971, %v2020
        %v2042 = vmul.f32 %v1975, %v2020
        %v2043 = vmul.f32 %v1979, %v2020
        %v2044 = vmul.f32 %v1983, %v2020
        %v2045 = vmul.f32 %v1987, %v2020
        %v2046 = vmul.f32 %v1991, %v2020
        %v2047 = vmul.f32 %v1995, %v2020
        %v2048 = vmul.f32 %v1999, %v2020
        %v2049 = vmul.f32 %v2003, %v2020
        %v2050 = vmul.f32 %v2007, %v2020
        %v2051 = vmul.f32 %v2011, %v2020
        %v2052 = vmul.f32 %v2015, %v2020
        %v2053 = vadd.f32 %v1856, %v2021
        %v2054 = vadd.f32 %v1857, %v2022
        %v2055 = vadd.f32 %v1858, %v2023
        %v2056 = vadd.f32 %v1859, %v2024
        %v2057 = vadd.f32 %v1860, %v2025
        %v2058 = vadd.f32 %v1861, %v2026
        %v2059 = vadd.f32 %v1862, %v2027
        %v2060 = vadd.f32 %v1863, %v2028
        %v2061 = vadd.f32 %v1864, %v2029
        %v2062 = vadd.f32 %v1865, %v2030
        %v2063 = vadd.f32 %v1866, %v2031
        %v2064 = vadd.f32 %v1867, %v2032
        %v2065 = vadd.f32 %v1868, %v2033
        %v2066 = vadd.f32 %v1869, %v2034
        %v2067 = vadd.f32 %v1870, %v2035
        %v2068 = vadd.f32 %v1871, %v2036
        %v2069 = vadd.f32 %v1872, %v2037
        %v2070 = vadd.f32 %v1873, %v2038
        %v2071 = vadd.f32 %v1874, %v2039
        %v2072 = vadd.f32 %v1875, %v2040
        %v2073 = vadd.f32 %v1876, %v2041
        %v2074 = vadd.f32 %v1877, %v2042
        %v2075 = vadd.f32 %v1878, %v2043
        %v2076 = vadd.f32 %v1879, %v2044
        %v2077 = vadd.f32 %v1880, %v2045
        %v2078 = vadd.f32 %v1881, %v2046
        %v2079 = vadd.f32 %v1882, %v2047
        %v2080 = vadd.f32 %v1883, %v2048
        %v2081 = vadd.f32 %v1884, %v2049
        %v2082 = vadd.f32 %v1885, %v2050
        %v2083 = vadd.f32 %v1886, %v2051
        %v2084 = vadd.f32 %v1887, %v2052
        %v2085 = vld [vmem:[%s3 + $0x8] sm:$0x1]
        %2086 = vset.pattern.permute.xlu0 2
        %2087 = vperm.xlu0 %2086, %v1627
        %v2088 = vpop.permute.xlu0 %2087
        %2090 = vset.pattern.permute.xlu0 2
        %2091 = vperm.xlu0 %2090, %v1628
        %v2092 = vpop.permute.xlu0 %2091
        %2094 = vset.pattern.permute.xlu0 2
        %2095 = vperm.xlu0 %2094, %v1629
        %v2096 = vpop.permute.xlu0 %2095
        %2098 = vset.pattern.permute.xlu0 2
        %2099 = vperm.xlu0 %2098, %v1630
        %v2100 = vpop.permute.xlu0 %2099
        %2102 = vset.pattern.permute.xlu0 2
        %2103 = vperm.xlu0 %2102, %v1631
        %v2104 = vpop.permute.xlu0 %2103
        %2106 = vset.pattern.permute.xlu0 2
        %2107 = vperm.xlu0 %2106, %v1632
        %v2108 = vpop.permute.xlu0 %2107
        %2110 = vset.pattern.permute.xlu0 2
        %2111 = vperm.xlu0 %2110, %v1633
        %v2112 = vpop.permute.xlu0 %2111
        %2114 = vset.pattern.permute.xlu0 2
        %2115 = vperm.xlu0 %2114, %v1634
        %v2116 = vpop.permute.xlu0 %2115
        %2118 = vset.pattern.permute.xlu0 2
        %2119 = vperm.xlu0 %2118, %v1635
        %v2120 = vpop.permute.xlu0 %2119
        %2122 = vset.pattern.permute.xlu0 2
        %2123 = vperm.xlu0 %2122, %v1636
        %v2124 = vpop.permute.xlu0 %2123
        %2126 = vset.pattern.permute.xlu0 2
        %2127 = vperm.xlu0 %2126, %v1637
        %v2128 = vpop.permute.xlu0 %2127
        %2130 = vset.pattern.permute.xlu0 2
        %2131 = vperm.xlu0 %2130, %v1638
        %v2132 = vpop.permute.xlu0 %2131
        %2134 = vset.pattern.permute.xlu0 2
        %2135 = vperm.xlu0 %2134, %v1639
        %v2136 = vpop.permute.xlu0 %2135
        %2138 = vset.pattern.permute.xlu0 2
        %2139 = vperm.xlu0 %2138, %v1640
        %v2140 = vpop.permute.xlu0 %2139
        %2142 = vset.pattern.permute.xlu0 2
        %2143 = vperm.xlu0 %2142, %v1641
        %v2144 = vpop.permute.xlu0 %2143
        %2146 = vset.pattern.permute.xlu0 2
        %2147 = vperm.xlu0 %2146, %v1642
        %v2148 = vpop.permute.xlu0 %2147
        %2150 = vset.pattern.permute.xlu0 2
        %2151 = vperm.xlu0 %2150, %v1643
        %v2152 = vpop.permute.xlu0 %2151
        %2154 = vset.pattern.permute.xlu0 2
        %2155 = vperm.xlu0 %2154, %v1644
        %v2156 = vpop.permute.xlu0 %2155
        %2158 = vset.pattern.permute.xlu0 2
        %2159 = vperm.xlu0 %2158, %v1645
        %v2160 = vpop.permute.xlu0 %2159
        %2162 = vset.pattern.permute.xlu0 2
        %2163 = vperm.xlu0 %2162, %v1646
        %v2164 = vpop.permute.xlu0 %2163
        %2166 = vset.pattern.permute.xlu0 2
        %2167 = vperm.xlu0 %2166, %v1647
        %v2168 = vpop.permute.xlu0 %2167
        %2170 = vset.pattern.permute.xlu0 2
        %2171 = vperm.xlu0 %2170, %v1648
        %v2172 = vpop.permute.xlu0 %2171
        %2174 = vset.pattern.permute.xlu0 2
        %2175 = vperm.xlu0 %2174, %v1649
        %v2176 = vpop.permute.xlu0 %2175
        %2178 = vset.pattern.permute.xlu0 2
        %2179 = vperm.xlu0 %2178, %v1650
        %v2180 = vpop.permute.xlu0 %2179
        %2182 = vset.pattern.permute.xlu0 2
        %2183 = vperm.xlu0 %2182, %v1651
        %v2184 = vpop.permute.xlu0 %2183
        %2186 = vset.pattern.permute.xlu0 2
        %2187 = vperm.xlu0 %2186, %v1652
        %v2188 = vpop.permute.xlu0 %2187
        %2190 = vset.pattern.permute.xlu0 2
        %2191 = vperm.xlu0 %2190, %v1653
        %v2192 = vpop.permute.xlu0 %2191
        %2194 = vset.pattern.permute.xlu0 2
        %2195 = vperm.xlu0 %2194, %v1654
        %v2196 = vpop.permute.xlu0 %2195
        %2198 = vset.pattern.permute.xlu0 2
        %2199 = vperm.xlu0 %2198, %v1655
        %v2200 = vpop.permute.xlu0 %2199
        %2202 = vset.pattern.permute.xlu0 2
        %2203 = vperm.xlu0 %2202, %v1656
        %v2204 = vpop.permute.xlu0 %2203
        %2206 = vset.pattern.permute.xlu0 2
        %2207 = vperm.xlu0 %2206, %v1657
        %v2208 = vpop.permute.xlu0 %2207
        %2210 = vset.pattern.permute.xlu0 2
        %2211 = vperm.xlu0 %2210, %v1658
        %v2212 = vpop.permute.xlu0 %2211
        %v2214 = vlaneseq
        %v2215 = vshrl.u32 %v2214, 7
        %v2216 = vsub.s32 0, %v2215
        %v2217 = vrot.slane %v2085, %v2216
        %v2218 = vmul.f32 %v2088, %v2217
        %v2219 = vmul.f32 %v2092, %v2217
        %v2220 = vmul.f32 %v2096, %v2217
        %v2221 = vmul.f32 %v2100, %v2217
        %v2222 = vmul.f32 %v2104, %v2217
        %v2223 = vmul.f32 %v2108, %v2217
        %v2224 = vmul.f32 %v2112, %v2217
        %v2225 = vmul.f32 %v2116, %v2217
        %v2226 = vmul.f32 %v2120, %v2217
        %v2227 = vmul.f32 %v2124, %v2217
        %v2228 = vmul.f32 %v2128, %v2217
        %v2229 = vmul.f32 %v2132, %v2217
        %v2230 = vmul.f32 %v2136, %v2217
        %v2231 = vmul.f32 %v2140, %v2217
        %v2232 = vmul.f32 %v2144, %v2217
        %v2233 = vmul.f32 %v2148, %v2217
        %v2234 = vmul.f32 %v2152, %v2217
        %v2235 = vmul.f32 %v2156, %v2217
        %v2236 = vmul.f32 %v2160, %v2217
        %v2237 = vmul.f32 %v2164, %v2217
        %v2238 = vmul.f32 %v2168, %v2217
        %v2239 = vmul.f32 %v2172, %v2217
        %v2240 = vmul.f32 %v2176, %v2217
        %v2241 = vmul.f32 %v2180, %v2217
        %v2242 = vmul.f32 %v2184, %v2217
        %v2243 = vmul.f32 %v2188, %v2217
        %v2244 = vmul.f32 %v2192, %v2217
        %v2245 = vmul.f32 %v2196, %v2217
        %v2246 = vmul.f32 %v2200, %v2217
        %v2247 = vmul.f32 %v2204, %v2217
        %v2248 = vmul.f32 %v2208, %v2217
        %v2249 = vmul.f32 %v2212, %v2217
        %v2250 = vadd.f32 %v2053, %v2218
        %v2251 = vadd.f32 %v2054, %v2219
        %v2252 = vadd.f32 %v2055, %v2220
        %v2253 = vadd.f32 %v2056, %v2221
        %v2254 = vadd.f32 %v2057, %v2222
        %v2255 = vadd.f32 %v2058, %v2223
        %v2256 = vadd.f32 %v2059, %v2224
        %v2257 = vadd.f32 %v2060, %v2225
        %v2258 = vadd.f32 %v2061, %v2226
        %v2259 = vadd.f32 %v2062, %v2227
        %v2260 = vadd.f32 %v2063, %v2228
        %v2261 = vadd.f32 %v2064, %v2229
        %v2262 = vadd.f32 %v2065, %v2230
        %v2263 = vadd.f32 %v2066, %v2231
        %v2264 = vadd.f32 %v2067, %v2232
        %v2265 = vadd.f32 %v2068, %v2233
        %v2266 = vadd.f32 %v2069, %v2234
        %v2267 = vadd.f32 %v2070, %v2235
        %v2268 = vadd.f32 %v2071, %v2236
        %v2269 = vadd.f32 %v2072, %v2237
        %v2270 = vadd.f32 %v2073, %v2238
        %v2271 = vadd.f32 %v2074, %v2239
        %v2272 = vadd.f32 %v2075, %v2240
        %v2273 = vadd.f32 %v2076, %v2241
        %v2274 = vadd.f32 %v2077, %v2242
        %v2275 = vadd.f32 %v2078, %v2243
        %v2276 = vadd.f32 %v2079, %v2244
        %v2277 = vadd.f32 %v2080, %v2245
        %v2278 = vadd.f32 %v2081, %v2246
        %v2279 = vadd.f32 %v2082, %v2247
        %v2280 = vadd.f32 %v2083, %v2248
        %v2281 = vadd.f32 %v2084, %v2249
        %s2282 = scalar_lea.vmem %s311, 24
        %v2283 = vld [vmem:[%s2282] sm:$0xff]
        %v2284 = vld [vmem:[%s2282 + $0x8] sm:$0xff]
        %v2285 = vld [vmem:[%s2282 + $0x18] sm:$0xff]
        %v2286 = vld [vmem:[%s2282 + $0x20] sm:$0xff]
        %v2287 = vld [vmem:[%s2282 + $0x30] sm:$0xff]
        %v2288 = vld [vmem:[%s2282 + $0x38] sm:$0xff]
        %v2289 = vld [vmem:[%s2282 + $0x48] sm:$0xff]
        %v2290 = vld [vmem:[%s2282 + $0x50] sm:$0xff]
        %v2291 = vld [vmem:[%s2282 + $0x60] sm:$0xff]
        %v2292 = vld [vmem:[%s2282 + $0x68] sm:$0xff]
        %v2293 = vld [vmem:[%s2282 + $0x78] sm:$0xff]
        %v2294 = vld [vmem:[%s2282 + $0x80] sm:$0xff]
        %v2295 = vld [vmem:[%s2282 + $0x90] sm:$0xff]
        %v2296 = vld [vmem:[%s2282 + $0x98] sm:$0xff]
        %v2297 = vld [vmem:[%s2282 + $0xa8] sm:$0xff]
        %v2298 = vld [vmem:[%s2282 + $0xb0] sm:$0xff]
        %v2299 = vld [vmem:[%s2282 + $0xc0] sm:$0xff]
        %v2300 = vld [vmem:[%s2282 + $0xc8] sm:$0xff]
        %v2301 = vld [vmem:[%s2282 + $0xd8] sm:$0xff]
        %v2302 = vld [vmem:[%s2282 + $0xe0] sm:$0xff]
        %v2303 = vld [vmem:[%s2282 + $0xf0] sm:$0xff]
        %v2304 = vld [vmem:[%s2282 + $0xf8] sm:$0xff]
        %v2305 = vld [vmem:[%s2282 + $0x108] sm:$0xff]
        %v2306 = vld [vmem:[%s2282 + $0x110] sm:$0xff]
        %v2307 = vld [vmem:[%s2282 + $0x120] sm:$0xff]
        %v2308 = vld [vmem:[%s2282 + $0x128] sm:$0xff]
        %v2309 = vld [vmem:[%s2282 + $0x138] sm:$0xff]
        %v2310 = vld [vmem:[%s2282 + $0x140] sm:$0xff]
        %v2311 = vld [vmem:[%s2282 + $0x150] sm:$0xff]
        %v2312 = vld [vmem:[%s2282 + $0x158] sm:$0xff]
        %v2313 = vld [vmem:[%s2282 + $0x168] sm:$0xff]
        %v2314 = vld [vmem:[%s2282 + $0x170] sm:$0xff]
        %v2315 = vld [vmem:[%s3 + $0x9] sm:$0x1]
        %2317 = vset.pattern.permute.xlu0 0
        %2318 = vperm.xlu0 %2317, %v2283
        %v2319 = vpop.permute.xlu0 %2318
        %2322 = vset.pattern.permute.xlu0 0
        %2323 = vperm.xlu0 %2322, %v2284
        %v2324 = vpop.permute.xlu0 %2323
        %2327 = vset.pattern.permute.xlu0 0
        %2328 = vperm.xlu0 %2327, %v2285
        %v2329 = vpop.permute.xlu0 %2328
        %2332 = vset.pattern.permute.xlu0 0
        %2333 = vperm.xlu0 %2332, %v2286
        %v2334 = vpop.permute.xlu0 %2333
        %2337 = vset.pattern.permute.xlu0 0
        %2338 = vperm.xlu0 %2337, %v2287
        %v2339 = vpop.permute.xlu0 %2338
        %2342 = vset.pattern.permute.xlu0 0
        %2343 = vperm.xlu0 %2342, %v2288
        %v2344 = vpop.permute.xlu0 %2343
        %2347 = vset.pattern.permute.xlu0 0
        %2348 = vperm.xlu0 %2347, %v2289
        %v2349 = vpop.permute.xlu0 %2348
        %2352 = vset.pattern.permute.xlu0 0
        %2353 = vperm.xlu0 %2352, %v2290
        %v2354 = vpop.permute.xlu0 %2353
        %2357 = vset.pattern.permute.xlu0 0
        %2358 = vperm.xlu0 %2357, %v2291
        %v2359 = vpop.permute.xlu0 %2358
        %2362 = vset.pattern.permute.xlu0 0
        %2363 = vperm.xlu0 %2362, %v2292
        %v2364 = vpop.permute.xlu0 %2363
        %2367 = vset.pattern.permute.xlu0 0
        %2368 = vperm.xlu0 %2367, %v2293
        %v2369 = vpop.permute.xlu0 %2368
        %2372 = vset.pattern.permute.xlu0 0
        %2373 = vperm.xlu0 %2372, %v2294
        %v2374 = vpop.permute.xlu0 %2373
        %2377 = vset.pattern.permute.xlu0 0
        %2378 = vperm.xlu0 %2377, %v2295
        %v2379 = vpop.permute.xlu0 %2378
        %2382 = vset.pattern.permute.xlu0 0
        %2383 = vperm.xlu0 %2382, %v2296
        %v2384 = vpop.permute.xlu0 %2383
        %2387 = vset.pattern.permute.xlu0 0
        %2388 = vperm.xlu0 %2387, %v2297
        %v2389 = vpop.permute.xlu0 %2388
        %2392 = vset.pattern.permute.xlu0 0
        %2393 = vperm.xlu0 %2392, %v2298
        %v2394 = vpop.permute.xlu0 %2393
        %2397 = vset.pattern.permute.xlu0 0
        %2398 = vperm.xlu0 %2397, %v2299
        %v2399 = vpop.permute.xlu0 %2398
        %2402 = vset.pattern.permute.xlu0 0
        %2403 = vperm.xlu0 %2402, %v2300
        %v2404 = vpop.permute.xlu0 %2403
        %2407 = vset.pattern.permute.xlu0 0
        %2408 = vperm.xlu0 %2407, %v2301
        %v2409 = vpop.permute.xlu0 %2408
        %2412 = vset.pattern.permute.xlu0 0
        %2413 = vperm.xlu0 %2412, %v2302
        %v2414 = vpop.permute.xlu0 %2413
        %2417 = vset.pattern.permute.xlu0 0
        %2418 = vperm.xlu0 %2417, %v2303
        %v2419 = vpop.permute.xlu0 %2418
        %2422 = vset.pattern.permute.xlu0 0
        %2423 = vperm.xlu0 %2422, %v2304
        %v2424 = vpop.permute.xlu0 %2423
        %2427 = vset.pattern.permute.xlu0 0
        %2428 = vperm.xlu0 %2427, %v2305
        %v2429 = vpop.permute.xlu0 %2428
        %2432 = vset.pattern.permute.xlu0 0
        %2433 = vperm.xlu0 %2432, %v2306
        %v2434 = vpop.permute.xlu0 %2433
        %2437 = vset.pattern.permute.xlu0 0
        %2438 = vperm.xlu0 %2437, %v2307
        %v2439 = vpop.permute.xlu0 %2438
        %2442 = vset.pattern.permute.xlu0 0
        %2443 = vperm.xlu0 %2442, %v2308
        %v2444 = vpop.permute.xlu0 %2443
        %2447 = vset.pattern.permute.xlu0 0
        %2448 = vperm.xlu0 %2447, %v2309
        %v2449 = vpop.permute.xlu0 %2448
        %2452 = vset.pattern.permute.xlu0 0
        %2453 = vperm.xlu0 %2452, %v2310
        %v2454 = vpop.permute.xlu0 %2453
        %2457 = vset.pattern.permute.xlu0 0
        %2458 = vperm.xlu0 %2457, %v2311
        %v2459 = vpop.permute.xlu0 %2458
        %2462 = vset.pattern.permute.xlu0 0
        %2463 = vperm.xlu0 %2462, %v2312
        %v2464 = vpop.permute.xlu0 %2463
        %2467 = vset.pattern.permute.xlu0 0
        %2468 = vperm.xlu0 %2467, %v2313
        %v2469 = vpop.permute.xlu0 %2468
        %2472 = vset.pattern.permute.xlu0 0
        %2473 = vperm.xlu0 %2472, %v2314
        %v2474 = vpop.permute.xlu0 %2473
        %v2476 = vlaneseq
        %v2477 = vshrl.u32 %v2476, 7
        %v2478 = vsub.s32 0, %v2477
        %v2479 = vrot.slane %v2315, %v2478
        %v2480 = vmul.f32 %v2319, %v2479
        %v2481 = vmul.f32 %v2324, %v2479
        %v2482 = vmul.f32 %v2329, %v2479
        %v2483 = vmul.f32 %v2334, %v2479
        %v2484 = vmul.f32 %v2339, %v2479
        %v2485 = vmul.f32 %v2344, %v2479
        %v2486 = vmul.f32 %v2349, %v2479
        %v2487 = vmul.f32 %v2354, %v2479
        %v2488 = vmul.f32 %v2359, %v2479
        %v2489 = vmul.f32 %v2364, %v2479
        %v2490 = vmul.f32 %v2369, %v2479
        %v2491 = vmul.f32 %v2374, %v2479
        %v2492 = vmul.f32 %v2379, %v2479
        %v2493 = vmul.f32 %v2384, %v2479
        %v2494 = vmul.f32 %v2389, %v2479
        %v2495 = vmul.f32 %v2394, %v2479
        %v2496 = vmul.f32 %v2399, %v2479
        %v2497 = vmul.f32 %v2404, %v2479
        %v2498 = vmul.f32 %v2409, %v2479
        %v2499 = vmul.f32 %v2414, %v2479
        %v2500 = vmul.f32 %v2419, %v2479
        %v2501 = vmul.f32 %v2424, %v2479
        %v2502 = vmul.f32 %v2429, %v2479
        %v2503 = vmul.f32 %v2434, %v2479
        %v2504 = vmul.f32 %v2439, %v2479
        %v2505 = vmul.f32 %v2444, %v2479
        %v2506 = vmul.f32 %v2449, %v2479
        %v2507 = vmul.f32 %v2454, %v2479
        %v2508 = vmul.f32 %v2459, %v2479
        %v2509 = vmul.f32 %v2464, %v2479
        %v2510 = vmul.f32 %v2469, %v2479
        %v2511 = vmul.f32 %v2474, %v2479
        %v2512 = vadd.f32 %v2250, %v2480
        %v2513 = vadd.f32 %v2251, %v2481
        %v2514 = vadd.f32 %v2252, %v2482
        %v2515 = vadd.f32 %v2253, %v2483
        %v2516 = vadd.f32 %v2254, %v2484
        %v2517 = vadd.f32 %v2255, %v2485
        %v2518 = vadd.f32 %v2256, %v2486
        %v2519 = vadd.f32 %v2257, %v2487
        %v2520 = vadd.f32 %v2258, %v2488
        %v2521 = vadd.f32 %v2259, %v2489
        %v2522 = vadd.f32 %v2260, %v2490
        %v2523 = vadd.f32 %v2261, %v2491
        %v2524 = vadd.f32 %v2262, %v2492
        %v2525 = vadd.f32 %v2263, %v2493
        %v2526 = vadd.f32 %v2264, %v2494
        %v2527 = vadd.f32 %v2265, %v2495
        %v2528 = vadd.f32 %v2266, %v2496
        %v2529 = vadd.f32 %v2267, %v2497
        %v2530 = vadd.f32 %v2268, %v2498
        %v2531 = vadd.f32 %v2269, %v2499
        %v2532 = vadd.f32 %v2270, %v2500
        %v2533 = vadd.f32 %v2271, %v2501
        %v2534 = vadd.f32 %v2272, %v2502
        %v2535 = vadd.f32 %v2273, %v2503
        %v2536 = vadd.f32 %v2274, %v2504
        %v2537 = vadd.f32 %v2275, %v2505
        %v2538 = vadd.f32 %v2276, %v2506
        %v2539 = vadd.f32 %v2277, %v2507
        %v2540 = vadd.f32 %v2278, %v2508
        %v2541 = vadd.f32 %v2279, %v2509
        %v2542 = vadd.f32 %v2280, %v2510
        %v2543 = vadd.f32 %v2281, %v2511
        %v2544 = vld [vmem:[%s3 + $0xa] sm:$0x1]
        %2545 = vset.pattern.permute.xlu0 1
        %2546 = vperm.xlu0 %2545, %v2283
        %v2547 = vpop.permute.xlu0 %2546
        %2549 = vset.pattern.permute.xlu0 1
        %2550 = vperm.xlu0 %2549, %v2284
        %v2551 = vpop.permute.xlu0 %2550
        %2553 = vset.pattern.permute.xlu0 1
        %2554 = vperm.xlu0 %2553, %v2285
        %v2555 = vpop.permute.xlu0 %2554
        %2557 = vset.pattern.permute.xlu0 1
        %2558 = vperm.xlu0 %2557, %v2286
        %v2559 = vpop.permute.xlu0 %2558
        %2561 = vset.pattern.permute.xlu0 1
        %2562 = vperm.xlu0 %2561, %v2287
        %v2563 = vpop.permute.xlu0 %2562
        %2565 = vset.pattern.permute.xlu0 1
        %2566 = vperm.xlu0 %2565, %v2288
        %v2567 = vpop.permute.xlu0 %2566
        %2569 = vset.pattern.permute.xlu0 1
        %2570 = vperm.xlu0 %2569, %v2289
        %v2571 = vpop.permute.xlu0 %2570
        %2573 = vset.pattern.permute.xlu0 1
        %2574 = vperm.xlu0 %2573, %v2290
        %v2575 = vpop.permute.xlu0 %2574
        %2577 = vset.pattern.permute.xlu0 1
        %2578 = vperm.xlu0 %2577, %v2291
        %v2579 = vpop.permute.xlu0 %2578
        %2581 = vset.pattern.permute.xlu0 1
        %2582 = vperm.xlu0 %2581, %v2292
        %v2583 = vpop.permute.xlu0 %2582
        %2585 = vset.pattern.permute.xlu0 1
        %2586 = vperm.xlu0 %2585, %v2293
        %v2587 = vpop.permute.xlu0 %2586
        %2589 = vset.pattern.permute.xlu0 1
        %2590 = vperm.xlu0 %2589, %v2294
        %v2591 = vpop.permute.xlu0 %2590
        %2593 = vset.pattern.permute.xlu0 1
        %2594 = vperm.xlu0 %2593, %v2295
        %v2595 = vpop.permute.xlu0 %2594
        %2597 = vset.pattern.permute.xlu0 1
        %2598 = vperm.xlu0 %2597, %v2296
        %v2599 = vpop.permute.xlu0 %2598
        %2601 = vset.pattern.permute.xlu0 1
        %2602 = vperm.xlu0 %2601, %v2297
        %v2603 = vpop.permute.xlu0 %2602
        %2605 = vset.pattern.permute.xlu0 1
        %2606 = vperm.xlu0 %2605, %v2298
        %v2607 = vpop.permute.xlu0 %2606
        %2609 = vset.pattern.permute.xlu0 1
        %2610 = vperm.xlu0 %2609, %v2299
        %v2611 = vpop.permute.xlu0 %2610
        %2613 = vset.pattern.permute.xlu0 1
        %2614 = vperm.xlu0 %2613, %v2300
        %v2615 = vpop.permute.xlu0 %2614
        %2617 = vset.pattern.permute.xlu0 1
        %2618 = vperm.xlu0 %2617, %v2301
        %v2619 = vpop.permute.xlu0 %2618
        %2621 = vset.pattern.permute.xlu0 1
        %2622 = vperm.xlu0 %2621, %v2302
        %v2623 = vpop.permute.xlu0 %2622
        %2625 = vset.pattern.permute.xlu0 1
        %2626 = vperm.xlu0 %2625, %v2303
        %v2627 = vpop.permute.xlu0 %2626
        %2629 = vset.pattern.permute.xlu0 1
        %2630 = vperm.xlu0 %2629, %v2304
        %v2631 = vpop.permute.xlu0 %2630
        %2633 = vset.pattern.permute.xlu0 1
        %2634 = vperm.xlu0 %2633, %v2305
        %v2635 = vpop.permute.xlu0 %2634
        %2637 = vset.pattern.permute.xlu0 1
        %2638 = vperm.xlu0 %2637, %v2306
        %v2639 = vpop.permute.xlu0 %2638
        %2641 = vset.pattern.permute.xlu0 1
        %2642 = vperm.xlu0 %2641, %v2307
        %v2643 = vpop.permute.xlu0 %2642
        %2645 = vset.pattern.permute.xlu0 1
        %2646 = vperm.xlu0 %2645, %v2308
        %v2647 = vpop.permute.xlu0 %2646
        %2649 = vset.pattern.permute.xlu0 1
        %2650 = vperm.xlu0 %2649, %v2309
        %v2651 = vpop.permute.xlu0 %2650
        %2653 = vset.pattern.permute.xlu0 1
        %2654 = vperm.xlu0 %2653, %v2310
        %v2655 = vpop.permute.xlu0 %2654
        %2657 = vset.pattern.permute.xlu0 1
        %2658 = vperm.xlu0 %2657, %v2311
        %v2659 = vpop.permute.xlu0 %2658
        %2661 = vset.pattern.permute.xlu0 1
        %2662 = vperm.xlu0 %2661, %v2312
        %v2663 = vpop.permute.xlu0 %2662
        %2665 = vset.pattern.permute.xlu0 1
        %2666 = vperm.xlu0 %2665, %v2313
        %v2667 = vpop.permute.xlu0 %2666
        %2669 = vset.pattern.permute.xlu0 1
        %2670 = vperm.xlu0 %2669, %v2314
        %v2671 = vpop.permute.xlu0 %2670
        %v2673 = vlaneseq
        %v2674 = vshrl.u32 %v2673, 7
        %v2675 = vsub.s32 0, %v2674
        %v2676 = vrot.slane %v2544, %v2675
        %v2677 = vmul.f32 %v2547, %v2676
        %v2678 = vmul.f32 %v2551, %v2676
        %v2679 = vmul.f32 %v2555, %v2676
        %v2680 = vmul.f32 %v2559, %v2676
        %v2681 = vmul.f32 %v2563, %v2676
        %v2682 = vmul.f32 %v2567, %v2676
        %v2683 = vmul.f32 %v2571, %v2676
        %v2684 = vmul.f32 %v2575, %v2676
        %v2685 = vmul.f32 %v2579, %v2676
        %v2686 = vmul.f32 %v2583, %v2676
        %v2687 = vmul.f32 %v2587, %v2676
        %v2688 = vmul.f32 %v2591, %v2676
        %v2689 = vmul.f32 %v2595, %v2676
        %v2690 = vmul.f32 %v2599, %v2676
        %v2691 = vmul.f32 %v2603, %v2676
        %v2692 = vmul.f32 %v2607, %v2676
        %v2693 = vmul.f32 %v2611, %v2676
        %v2694 = vmul.f32 %v2615, %v2676
        %v2695 = vmul.f32 %v2619, %v2676
        %v2696 = vmul.f32 %v2623, %v2676
        %v2697 = vmul.f32 %v2627, %v2676
        %v2698 = vmul.f32 %v2631, %v2676
        %v2699 = vmul.f32 %v2635, %v2676
        %v2700 = vmul.f32 %v2639, %v2676
        %v2701 = vmul.f32 %v2643, %v2676
        %v2702 = vmul.f32 %v2647, %v2676
        %v2703 = vmul.f32 %v2651, %v2676
        %v2704 = vmul.f32 %v2655, %v2676
        %v2705 = vmul.f32 %v2659, %v2676
        %v2706 = vmul.f32 %v2663, %v2676
        %v2707 = vmul.f32 %v2667, %v2676
        %v2708 = vmul.f32 %v2671, %v2676
        %v2709 = vadd.f32 %v2512, %v2677
        %v2710 = vadd.f32 %v2513, %v2678
        %v2711 = vadd.f32 %v2514, %v2679
        %v2712 = vadd.f32 %v2515, %v2680
        %v2713 = vadd.f32 %v2516, %v2681
        %v2714 = vadd.f32 %v2517, %v2682
        %v2715 = vadd.f32 %v2518, %v2683
        %v2716 = vadd.f32 %v2519, %v2684
        %v2717 = vadd.f32 %v2520, %v2685
        %v2718 = vadd.f32 %v2521, %v2686
        %v2719 = vadd.f32 %v2522, %v2687
        %v2720 = vadd.f32 %v2523, %v2688
        %v2721 = vadd.f32 %v2524, %v2689
        %v2722 = vadd.f32 %v2525, %v2690
        %v2723 = vadd.f32 %v2526, %v2691
        %v2724 = vadd.f32 %v2527, %v2692
        %v2725 = vadd.f32 %v2528, %v2693
        %v2726 = vadd.f32 %v2529, %v2694
        %v2727 = vadd.f32 %v2530, %v2695
        %v2728 = vadd.f32 %v2531, %v2696
        %v2729 = vadd.f32 %v2532, %v2697
        %v2730 = vadd.f32 %v2533, %v2698
        %v2731 = vadd.f32 %v2534, %v2699
        %v2732 = vadd.f32 %v2535, %v2700
        %v2733 = vadd.f32 %v2536, %v2701
        %v2734 = vadd.f32 %v2537, %v2702
        %v2735 = vadd.f32 %v2538, %v2703
        %v2736 = vadd.f32 %v2539, %v2704
        %v2737 = vadd.f32 %v2540, %v2705
        %v2738 = vadd.f32 %v2541, %v2706
        %v2739 = vadd.f32 %v2542, %v2707
        %v2740 = vadd.f32 %v2543, %v2708
        %v2741 = vld [vmem:[%s3 + $0xb] sm:$0x1]
        %2742 = vset.pattern.permute.xlu0 2
        %2743 = vperm.xlu0 %2742, %v2283
        %v2744 = vpop.permute.xlu0 %2743
        %2746 = vset.pattern.permute.xlu0 2
        %2747 = vperm.xlu0 %2746, %v2284
        %v2748 = vpop.permute.xlu0 %2747
        %2750 = vset.pattern.permute.xlu0 2
        %2751 = vperm.xlu0 %2750, %v2285
        %v2752 = vpop.permute.xlu0 %2751
        %2754 = vset.pattern.permute.xlu0 2
        %2755 = vperm.xlu0 %2754, %v2286
        %v2756 = vpop.permute.xlu0 %2755
        %2758 = vset.pattern.permute.xlu0 2
        %2759 = vperm.xlu0 %2758, %v2287
        %v2760 = vpop.permute.xlu0 %2759
        %2762 = vset.pattern.permute.xlu0 2
        %2763 = vperm.xlu0 %2762, %v2288
        %v2764 = vpop.permute.xlu0 %2763
        %2766 = vset.pattern.permute.xlu0 2
        %2767 = vperm.xlu0 %2766, %v2289
        %v2768 = vpop.permute.xlu0 %2767
        %2770 = vset.pattern.permute.xlu0 2
        %2771 = vperm.xlu0 %2770, %v2290
        %v2772 = vpop.permute.xlu0 %2771
        %2774 = vset.pattern.permute.xlu0 2
        %2775 = vperm.xlu0 %2774, %v2291
        %v2776 = vpop.permute.xlu0 %2775
        %2778 = vset.pattern.permute.xlu0 2
        %2779 = vperm.xlu0 %2778, %v2292
        %v2780 = vpop.permute.xlu0 %2779
        %2782 = vset.pattern.permute.xlu0 2
        %2783 = vperm.xlu0 %2782, %v2293
        %v2784 = vpop.permute.xlu0 %2783
        %2786 = vset.pattern.permute.xlu0 2
        %2787 = vperm.xlu0 %2786, %v2294
        %v2788 = vpop.permute.xlu0 %2787
        %2790 = vset.pattern.permute.xlu0 2
        %2791 = vperm.xlu0 %2790, %v2295
        %v2792 = vpop.permute.xlu0 %2791
        %2794 = vset.pattern.permute.xlu0 2
        %2795 = vperm.xlu0 %2794, %v2296
        %v2796 = vpop.permute.xlu0 %2795
        %2798 = vset.pattern.permute.xlu0 2
        %2799 = vperm.xlu0 %2798, %v2297
        %v2800 = vpop.permute.xlu0 %2799
        %2802 = vset.pattern.permute.xlu0 2
        %2803 = vperm.xlu0 %2802, %v2298
        %v2804 = vpop.permute.xlu0 %2803
        %2806 = vset.pattern.permute.xlu0 2
        %2807 = vperm.xlu0 %2806, %v2299
        %v2808 = vpop.permute.xlu0 %2807
        %2810 = vset.pattern.permute.xlu0 2
        %2811 = vperm.xlu0 %2810, %v2300
        %v2812 = vpop.permute.xlu0 %2811
        %2814 = vset.pattern.permute.xlu0 2
        %2815 = vperm.xlu0 %2814, %v2301
        %v2816 = vpop.permute.xlu0 %2815
        %2818 = vset.pattern.permute.xlu0 2
        %2819 = vperm.xlu0 %2818, %v2302
        %v2820 = vpop.permute.xlu0 %2819
        %2822 = vset.pattern.permute.xlu0 2
        %2823 = vperm.xlu0 %2822, %v2303
        %v2824 = vpop.permute.xlu0 %2823
        %2826 = vset.pattern.permute.xlu0 2
        %2827 = vperm.xlu0 %2826, %v2304
        %v2828 = vpop.permute.xlu0 %2827
        %2830 = vset.pattern.permute.xlu0 2
        %2831 = vperm.xlu0 %2830, %v2305
        %v2832 = vpop.permute.xlu0 %2831
        %2834 = vset.pattern.permute.xlu0 2
        %2835 = vperm.xlu0 %2834, %v2306
        %v2836 = vpop.permute.xlu0 %2835
        %2838 = vset.pattern.permute.xlu0 2
        %2839 = vperm.xlu0 %2838, %v2307
        %v2840 = vpop.permute.xlu0 %2839
        %2842 = vset.pattern.permute.xlu0 2
        %2843 = vperm.xlu0 %2842, %v2308
        %v2844 = vpop.permute.xlu0 %2843
        %2846 = vset.pattern.permute.xlu0 2
        %2847 = vperm.xlu0 %2846, %v2309
        %v2848 = vpop.permute.xlu0 %2847
        %2850 = vset.pattern.permute.xlu0 2
        %2851 = vperm.xlu0 %2850, %v2310
        %v2852 = vpop.permute.xlu0 %2851
        %2854 = vset.pattern.permute.xlu0 2
        %2855 = vperm.xlu0 %2854, %v2311
        %v2856 = vpop.permute.xlu0 %2855
        %2858 = vset.pattern.permute.xlu0 2
        %2859 = vperm.xlu0 %2858, %v2312
        %v2860 = vpop.permute.xlu0 %2859
        %2862 = vset.pattern.permute.xlu0 2
        %2863 = vperm.xlu0 %2862, %v2313
        %v2864 = vpop.permute.xlu0 %2863
        %2866 = vset.pattern.permute.xlu0 2
        %2867 = vperm.xlu0 %2866, %v2314
        %v2868 = vpop.permute.xlu0 %2867
        %v2870 = vlaneseq
        %v2871 = vshrl.u32 %v2870, 7
        %v2872 = vsub.s32 0, %v2871
        %v2873 = vrot.slane %v2741, %v2872
        %v2874 = vmul.f32 %v2744, %v2873
        %v2875 = vmul.f32 %v2748, %v2873
        %v2876 = vmul.f32 %v2752, %v2873
        %v2877 = vmul.f32 %v2756, %v2873
        %v2878 = vmul.f32 %v2760, %v2873
        %v2879 = vmul.f32 %v2764, %v2873
        %v2880 = vmul.f32 %v2768, %v2873
        %v2881 = vmul.f32 %v2772, %v2873
        %v2882 = vmul.f32 %v2776, %v2873
        %v2883 = vmul.f32 %v2780, %v2873
        %v2884 = vmul.f32 %v2784, %v2873
        %v2885 = vmul.f32 %v2788, %v2873
        %v2886 = vmul.f32 %v2792, %v2873
        %v2887 = vmul.f32 %v2796, %v2873
        %v2888 = vmul.f32 %v2800, %v2873
        %v2889 = vmul.f32 %v2804, %v2873
        %v2890 = vmul.f32 %v2808, %v2873
        %v2891 = vmul.f32 %v2812, %v2873
        %v2892 = vmul.f32 %v2816, %v2873
        %v2893 = vmul.f32 %v2820, %v2873
        %v2894 = vmul.f32 %v2824, %v2873
        %v2895 = vmul.f32 %v2828, %v2873
        %v2896 = vmul.f32 %v2832, %v2873
        %v2897 = vmul.f32 %v2836, %v2873
        %v2898 = vmul.f32 %v2840, %v2873
        %v2899 = vmul.f32 %v2844, %v2873
        %v2900 = vmul.f32 %v2848, %v2873
        %v2901 = vmul.f32 %v2852, %v2873
        %v2902 = vmul.f32 %v2856, %v2873
        %v2903 = vmul.f32 %v2860, %v2873
        %v2904 = vmul.f32 %v2864, %v2873
        %v2905 = vmul.f32 %v2868, %v2873
        %v2906 = vadd.f32 %v2709, %v2874
        %v2907 = vadd.f32 %v2710, %v2875
        %v2908 = vadd.f32 %v2711, %v2876
        %v2909 = vadd.f32 %v2712, %v2877
        %v2910 = vadd.f32 %v2713, %v2878
        %v2911 = vadd.f32 %v2714, %v2879
        %v2912 = vadd.f32 %v2715, %v2880
        %v2913 = vadd.f32 %v2716, %v2881
        %v2914 = vadd.f32 %v2717, %v2882
        %v2915 = vadd.f32 %v2718, %v2883
        %v2916 = vadd.f32 %v2719, %v2884
        %v2917 = vadd.f32 %v2720, %v2885
        %v2918 = vadd.f32 %v2721, %v2886
        %v2919 = vadd.f32 %v2722, %v2887
        %v2920 = vadd.f32 %v2723, %v2888
        %v2921 = vadd.f32 %v2724, %v2889
        %v2922 = vadd.f32 %v2725, %v2890
        %v2923 = vadd.f32 %v2726, %v2891
        %v2924 = vadd.f32 %v2727, %v2892
        %v2925 = vadd.f32 %v2728, %v2893
        %v2926 = vadd.f32 %v2729, %v2894
        %v2927 = vadd.f32 %v2730, %v2895
        %v2928 = vadd.f32 %v2731, %v2896
        %v2929 = vadd.f32 %v2732, %v2897
        %v2930 = vadd.f32 %v2733, %v2898
        %v2931 = vadd.f32 %v2734, %v2899
        %v2932 = vadd.f32 %v2735, %v2900
        %v2933 = vadd.f32 %v2736, %v2901
        %v2934 = vadd.f32 %v2737, %v2902
        %v2935 = vadd.f32 %v2738, %v2903
        %v2936 = vadd.f32 %v2739, %v2904
        %v2937 = vadd.f32 %v2740, %v2905
        %v2938 = vld [vmem:[%s2282 + $0x1] sm:$0xff]
        %v2939 = vld [vmem:[%s2282 + $0x9] sm:$0xff]
        %v2940 = vld [vmem:[%s2282 + $0x19] sm:$0xff]
        %v2941 = vld [vmem:[%s2282 + $0x21] sm:$0xff]
        %v2942 = vld [vmem:[%s2282 + $0x31] sm:$0xff]
        %v2943 = vld [vmem:[%s2282 + $0x39] sm:$0xff]
        %v2944 = vld [vmem:[%s2282 + $0x49] sm:$0xff]
        %v2945 = vld [vmem:[%s2282 + $0x51] sm:$0xff]
        %v2946 = vld [vmem:[%s2282 + $0x61] sm:$0xff]
        %v2947 = vld [vmem:[%s2282 + $0x69] sm:$0xff]
        %v2948 = vld [vmem:[%s2282 + $0x79] sm:$0xff]
        %v2949 = vld [vmem:[%s2282 + $0x81] sm:$0xff]
        %v2950 = vld [vmem:[%s2282 + $0x91] sm:$0xff]
        %v2951 = vld [vmem:[%s2282 + $0x99] sm:$0xff]
        %v2952 = vld [vmem:[%s2282 + $0xa9] sm:$0xff]
        %v2953 = vld [vmem:[%s2282 + $0xb1] sm:$0xff]
        %v2954 = vld [vmem:[%s2282 + $0xc1] sm:$0xff]
        %v2955 = vld [vmem:[%s2282 + $0xc9] sm:$0xff]
        %v2956 = vld [vmem:[%s2282 + $0xd9] sm:$0xff]
        %v2957 = vld [vmem:[%s2282 + $0xe1] sm:$0xff]
        %v2958 = vld [vmem:[%s2282 + $0xf1] sm:$0xff]
        %v2959 = vld [vmem:[%s2282 + $0xf9] sm:$0xff]
        %v2960 = vld [vmem:[%s2282 + $0x109] sm:$0xff]
        %v2961 = vld [vmem:[%s2282 + $0x111] sm:$0xff]
        %v2962 = vld [vmem:[%s2282 + $0x121] sm:$0xff]
        %v2963 = vld [vmem:[%s2282 + $0x129] sm:$0xff]
        %v2964 = vld [vmem:[%s2282 + $0x139] sm:$0xff]
        %v2965 = vld [vmem:[%s2282 + $0x141] sm:$0xff]
        %v2966 = vld [vmem:[%s2282 + $0x151] sm:$0xff]
        %v2967 = vld [vmem:[%s2282 + $0x159] sm:$0xff]
        %v2968 = vld [vmem:[%s2282 + $0x169] sm:$0xff]
        %v2969 = vld [vmem:[%s2282 + $0x171] sm:$0xff]
        %v2970 = vld [vmem:[%s3 + $0xc] sm:$0x1]
        %2972 = vset.pattern.permute.xlu0 0
        %2973 = vperm.xlu0 %2972, %v2938
        %v2974 = vpop.permute.xlu0 %2973
        %2977 = vset.pattern.permute.xlu0 0
        %2978 = vperm.xlu0 %2977, %v2939
        %v2979 = vpop.permute.xlu0 %2978
        %2982 = vset.pattern.permute.xlu0 0
        %2983 = vperm.xlu0 %2982, %v2940
        %v2984 = vpop.permute.xlu0 %2983
        %2987 = vset.pattern.permute.xlu0 0
        %2988 = vperm.xlu0 %2987, %v2941
        %v2989 = vpop.permute.xlu0 %2988
        %2992 = vset.pattern.permute.xlu0 0
        %2993 = vperm.xlu0 %2992, %v2942
        %v2994 = vpop.permute.xlu0 %2993
        %2997 = vset.pattern.permute.xlu0 0
        %2998 = vperm.xlu0 %2997, %v2943
        %v2999 = vpop.permute.xlu0 %2998
        %3002 = vset.pattern.permute.xlu0 0
        %3003 = vperm.xlu0 %3002, %v2944
        %v3004 = vpop.permute.xlu0 %3003
        %3007 = vset.pattern.permute.xlu0 0
        %3008 = vperm.xlu0 %3007, %v2945
        %v3009 = vpop.permute.xlu0 %3008
        %3012 = vset.pattern.permute.xlu0 0
        %3013 = vperm.xlu0 %3012, %v2946
        %v3014 = vpop.permute.xlu0 %3013
        %3017 = vset.pattern.permute.xlu0 0
        %3018 = vperm.xlu0 %3017, %v2947
        %v3019 = vpop.permute.xlu0 %3018
        %3022 = vset.pattern.permute.xlu0 0
        %3023 = vperm.xlu0 %3022, %v2948
        %v3024 = vpop.permute.xlu0 %3023
        %3027 = vset.pattern.permute.xlu0 0
        %3028 = vperm.xlu0 %3027, %v2949
        %v3029 = vpop.permute.xlu0 %3028
        %3032 = vset.pattern.permute.xlu0 0
        %3033 = vperm.xlu0 %3032, %v2950
        %v3034 = vpop.permute.xlu0 %3033
        %3037 = vset.pattern.permute.xlu0 0
        %3038 = vperm.xlu0 %3037, %v2951
        %v3039 = vpop.permute.xlu0 %3038
        %3042 = vset.pattern.permute.xlu0 0
        %3043 = vperm.xlu0 %3042, %v2952
        %v3044 = vpop.permute.xlu0 %3043
        %3047 = vset.pattern.permute.xlu0 0
        %3048 = vperm.xlu0 %3047, %v2953
        %v3049 = vpop.permute.xlu0 %3048
        %3052 = vset.pattern.permute.xlu0 0
        %3053 = vperm.xlu0 %3052, %v2954
        %v3054 = vpop.permute.xlu0 %3053
        %3057 = vset.pattern.permute.xlu0 0
        %3058 = vperm.xlu0 %3057, %v2955
        %v3059 = vpop.permute.xlu0 %3058
        %3062 = vset.pattern.permute.xlu0 0
        %3063 = vperm.xlu0 %3062, %v2956
        %v3064 = vpop.permute.xlu0 %3063
        %3067 = vset.pattern.permute.xlu0 0
        %3068 = vperm.xlu0 %3067, %v2957
        %v3069 = vpop.permute.xlu0 %3068
        %3072 = vset.pattern.permute.xlu0 0
        %3073 = vperm.xlu0 %3072, %v2958
        %v3074 = vpop.permute.xlu0 %3073
        %3077 = vset.pattern.permute.xlu0 0
        %3078 = vperm.xlu0 %3077, %v2959
        %v3079 = vpop.permute.xlu0 %3078
        %3082 = vset.pattern.permute.xlu0 0
        %3083 = vperm.xlu0 %3082, %v2960
        %v3084 = vpop.permute.xlu0 %3083
        %3087 = vset.pattern.permute.xlu0 0
        %3088 = vperm.xlu0 %3087, %v2961
        %v3089 = vpop.permute.xlu0 %3088
        %3092 = vset.pattern.permute.xlu0 0
        %3093 = vperm.xlu0 %3092, %v2962
        %v3094 = vpop.permute.xlu0 %3093
        %3097 = vset.pattern.permute.xlu0 0
        %3098 = vperm.xlu0 %3097, %v2963
        %v3099 = vpop.permute.xlu0 %3098
        %3102 = vset.pattern.permute.xlu0 0
        %3103 = vperm.xlu0 %3102, %v2964
        %v3104 = vpop.permute.xlu0 %3103
        %3107 = vset.pattern.permute.xlu0 0
        %3108 = vperm.xlu0 %3107, %v2965
        %v3109 = vpop.permute.xlu0 %3108
        %3112 = vset.pattern.permute.xlu0 0
        %3113 = vperm.xlu0 %3112, %v2966
        %v3114 = vpop.permute.xlu0 %3113
        %3117 = vset.pattern.permute.xlu0 0
        %3118 = vperm.xlu0 %3117, %v2967
        %v3119 = vpop.permute.xlu0 %3118
        %3122 = vset.pattern.permute.xlu0 0
        %3123 = vperm.xlu0 %3122, %v2968
        %v3124 = vpop.permute.xlu0 %3123
        %3127 = vset.pattern.permute.xlu0 0
        %3128 = vperm.xlu0 %3127, %v2969
        %v3129 = vpop.permute.xlu0 %3128
        %v3131 = vlaneseq
        %v3132 = vshrl.u32 %v3131, 7
        %v3133 = vsub.s32 0, %v3132
        %v3134 = vrot.slane %v2970, %v3133
        %v3135 = vmul.f32 %v2974, %v3134
        %v3136 = vmul.f32 %v2979, %v3134
        %v3137 = vmul.f32 %v2984, %v3134
        %v3138 = vmul.f32 %v2989, %v3134
        %v3139 = vmul.f32 %v2994, %v3134
        %v3140 = vmul.f32 %v2999, %v3134
        %v3141 = vmul.f32 %v3004, %v3134
        %v3142 = vmul.f32 %v3009, %v3134
        %v3143 = vmul.f32 %v3014, %v3134
        %v3144 = vmul.f32 %v3019, %v3134
        %v3145 = vmul.f32 %v3024, %v3134
        %v3146 = vmul.f32 %v3029, %v3134
        %v3147 = vmul.f32 %v3034, %v3134
        %v3148 = vmul.f32 %v3039, %v3134
        %v3149 = vmul.f32 %v3044, %v3134
        %v3150 = vmul.f32 %v3049, %v3134
        %v3151 = vmul.f32 %v3054, %v3134
        %v3152 = vmul.f32 %v3059, %v3134
        %v3153 = vmul.f32 %v3064, %v3134
        %v3154 = vmul.f32 %v3069, %v3134
        %v3155 = vmul.f32 %v3074, %v3134
        %v3156 = vmul.f32 %v3079, %v3134
        %v3157 = vmul.f32 %v3084, %v3134
        %v3158 = vmul.f32 %v3089, %v3134
        %v3159 = vmul.f32 %v3094, %v3134
        %v3160 = vmul.f32 %v3099, %v3134
        %v3161 = vmul.f32 %v3104, %v3134
        %v3162 = vmul.f32 %v3109, %v3134
        %v3163 = vmul.f32 %v3114, %v3134
        %v3164 = vmul.f32 %v3119, %v3134
        %v3165 = vmul.f32 %v3124, %v3134
        %v3166 = vmul.f32 %v3129, %v3134
        %v3167 = vadd.f32 %v2906, %v3135
        %v3168 = vadd.f32 %v2907, %v3136
        %v3169 = vadd.f32 %v2908, %v3137
        %v3170 = vadd.f32 %v2909, %v3138
        %v3171 = vadd.f32 %v2910, %v3139
        %v3172 = vadd.f32 %v2911, %v3140
        %v3173 = vadd.f32 %v2912, %v3141
        %v3174 = vadd.f32 %v2913, %v3142
        %v3175 = vadd.f32 %v2914, %v3143
        %v3176 = vadd.f32 %v2915, %v3144
        %v3177 = vadd.f32 %v2916, %v3145
        %v3178 = vadd.f32 %v2917, %v3146
        %v3179 = vadd.f32 %v2918, %v3147
        %v3180 = vadd.f32 %v2919, %v3148
        %v3181 = vadd.f32 %v2920, %v3149
        %v3182 = vadd.f32 %v2921, %v3150
        %v3183 = vadd.f32 %v2922, %v3151
        %v3184 = vadd.f32 %v2923, %v3152
        %v3185 = vadd.f32 %v2924, %v3153
        %v3186 = vadd.f32 %v2925, %v3154
        %v3187 = vadd.f32 %v2926, %v3155
        %v3188 = vadd.f32 %v2927, %v3156
        %v3189 = vadd.f32 %v2928, %v3157
        %v3190 = vadd.f32 %v2929, %v3158
        %v3191 = vadd.f32 %v2930, %v3159
        %v3192 = vadd.f32 %v2931, %v3160
        %v3193 = vadd.f32 %v2932, %v3161
        %v3194 = vadd.f32 %v2933, %v3162
        %v3195 = vadd.f32 %v2934, %v3163
        %v3196 = vadd.f32 %v2935, %v3164
        %v3197 = vadd.f32 %v2936, %v3165
        %v3198 = vadd.f32 %v2937, %v3166
        %v3199 = vld [vmem:[%s3 + $0xd] sm:$0x1]
        %3200 = vset.pattern.permute.xlu0 1
        %3201 = vperm.xlu0 %3200, %v2938
        %v3202 = vpop.permute.xlu0 %3201
        %3204 = vset.pattern.permute.xlu0 1
        %3205 = vperm.xlu0 %3204, %v2939
        %v3206 = vpop.permute.xlu0 %3205
        %3208 = vset.pattern.permute.xlu0 1
        %3209 = vperm.xlu0 %3208, %v2940
        %v3210 = vpop.permute.xlu0 %3209
        %3212 = vset.pattern.permute.xlu0 1
        %3213 = vperm.xlu0 %3212, %v2941
        %v3214 = vpop.permute.xlu0 %3213
        %3216 = vset.pattern.permute.xlu0 1
        %3217 = vperm.xlu0 %3216, %v2942
        %v3218 = vpop.permute.xlu0 %3217
        %3220 = vset.pattern.permute.xlu0 1
        %3221 = vperm.xlu0 %3220, %v2943
        %v3222 = vpop.permute.xlu0 %3221
        %3224 = vset.pattern.permute.xlu0 1
        %3225 = vperm.xlu0 %3224, %v2944
        %v3226 = vpop.permute.xlu0 %3225
        %3228 = vset.pattern.permute.xlu0 1
        %3229 = vperm.xlu0 %3228, %v2945
        %v3230 = vpop.permute.xlu0 %3229
        %3232 = vset.pattern.permute.xlu0 1
        %3233 = vperm.xlu0 %3232, %v2946
        %v3234 = vpop.permute.xlu0 %3233
        %3236 = vset.pattern.permute.xlu0 1
        %3237 = vperm.xlu0 %3236, %v2947
        %v3238 = vpop.permute.xlu0 %3237
        %3240 = vset.pattern.permute.xlu0 1
        %3241 = vperm.xlu0 %3240, %v2948
        %v3242 = vpop.permute.xlu0 %3241
        %3244 = vset.pattern.permute.xlu0 1
        %3245 = vperm.xlu0 %3244, %v2949
        %v3246 = vpop.permute.xlu0 %3245
        %3248 = vset.pattern.permute.xlu0 1
        %3249 = vperm.xlu0 %3248, %v2950
        %v3250 = vpop.permute.xlu0 %3249
        %3252 = vset.pattern.permute.xlu0 1
        %3253 = vperm.xlu0 %3252, %v2951
        %v3254 = vpop.permute.xlu0 %3253
        %3256 = vset.pattern.permute.xlu0 1
        %3257 = vperm.xlu0 %3256, %v2952
        %v3258 = vpop.permute.xlu0 %3257
        %3260 = vset.pattern.permute.xlu0 1
        %3261 = vperm.xlu0 %3260, %v2953
        %v3262 = vpop.permute.xlu0 %3261
        %3264 = vset.pattern.permute.xlu0 1
        %3265 = vperm.xlu0 %3264, %v2954
        %v3266 = vpop.permute.xlu0 %3265
        %3268 = vset.pattern.permute.xlu0 1
        %3269 = vperm.xlu0 %3268, %v2955
        %v3270 = vpop.permute.xlu0 %3269
        %3272 = vset.pattern.permute.xlu0 1
        %3273 = vperm.xlu0 %3272, %v2956
        %v3274 = vpop.permute.xlu0 %3273
        %3276 = vset.pattern.permute.xlu0 1
        %3277 = vperm.xlu0 %3276, %v2957
        %v3278 = vpop.permute.xlu0 %3277
        %3280 = vset.pattern.permute.xlu0 1
        %3281 = vperm.xlu0 %3280, %v2958
        %v3282 = vpop.permute.xlu0 %3281
        %3284 = vset.pattern.permute.xlu0 1
        %3285 = vperm.xlu0 %3284, %v2959
        %v3286 = vpop.permute.xlu0 %3285
        %3288 = vset.pattern.permute.xlu0 1
        %3289 = vperm.xlu0 %3288, %v2960
        %v3290 = vpop.permute.xlu0 %3289
        %3292 = vset.pattern.permute.xlu0 1
        %3293 = vperm.xlu0 %3292, %v2961
        %v3294 = vpop.permute.xlu0 %3293
        %3296 = vset.pattern.permute.xlu0 1
        %3297 = vperm.xlu0 %3296, %v2962
        %v3298 = vpop.permute.xlu0 %3297
        %3300 = vset.pattern.permute.xlu0 1
        %3301 = vperm.xlu0 %3300, %v2963
        %v3302 = vpop.permute.xlu0 %3301
        %3304 = vset.pattern.permute.xlu0 1
        %3305 = vperm.xlu0 %3304, %v2964
        %v3306 = vpop.permute.xlu0 %3305
        %3308 = vset.pattern.permute.xlu0 1
        %3309 = vperm.xlu0 %3308, %v2965
        %v3310 = vpop.permute.xlu0 %3309
        %3312 = vset.pattern.permute.xlu0 1
        %3313 = vperm.xlu0 %3312, %v2966
        %v3314 = vpop.permute.xlu0 %3313
        %3316 = vset.pattern.permute.xlu0 1
        %3317 = vperm.xlu0 %3316, %v2967
        %v3318 = vpop.permute.xlu0 %3317
        %3320 = vset.pattern.permute.xlu0 1
        %3321 = vperm.xlu0 %3320, %v2968
        %v3322 = vpop.permute.xlu0 %3321
        %3324 = vset.pattern.permute.xlu0 1
        %3325 = vperm.xlu0 %3324, %v2969
        %v3326 = vpop.permute.xlu0 %3325
        %v3328 = vlaneseq
        %v3329 = vshrl.u32 %v3328, 7
        %v3330 = vsub.s32 0, %v3329
        %v3331 = vrot.slane %v3199, %v3330
        %v3332 = vmul.f32 %v3202, %v3331
        %v3333 = vmul.f32 %v3206, %v3331
        %v3334 = vmul.f32 %v3210, %v3331
        %v3335 = vmul.f32 %v3214, %v3331
        %v3336 = vmul.f32 %v3218, %v3331
        %v3337 = vmul.f32 %v3222, %v3331
        %v3338 = vmul.f32 %v3226, %v3331
        %v3339 = vmul.f32 %v3230, %v3331
        %v3340 = vmul.f32 %v3234, %v3331
        %v3341 = vmul.f32 %v3238, %v3331
        %v3342 = vmul.f32 %v3242, %v3331
        %v3343 = vmul.f32 %v3246, %v3331
        %v3344 = vmul.f32 %v3250, %v3331
        %v3345 = vmul.f32 %v3254, %v3331
        %v3346 = vmul.f32 %v3258, %v3331
        %v3347 = vmul.f32 %v3262, %v3331
        %v3348 = vmul.f32 %v3266, %v3331
        %v3349 = vmul.f32 %v3270, %v3331
        %v3350 = vmul.f32 %v3274, %v3331
        %v3351 = vmul.f32 %v3278, %v3331
        %v3352 = vmul.f32 %v3282, %v3331
        %v3353 = vmul.f32 %v3286, %v3331
        %v3354 = vmul.f32 %v3290, %v3331
        %v3355 = vmul.f32 %v3294, %v3331
        %v3356 = vmul.f32 %v3298, %v3331
        %v3357 = vmul.f32 %v3302, %v3331
        %v3358 = vmul.f32 %v3306, %v3331
        %v3359 = vmul.f32 %v3310, %v3331
        %v3360 = vmul.f32 %v3314, %v3331
        %v3361 = vmul.f32 %v3318, %v3331
        %v3362 = vmul.f32 %v3322, %v3331
        %v3363 = vmul.f32 %v3326, %v3331
        %v3364 = vadd.f32 %v3167, %v3332
        %v3365 = vadd.f32 %v3168, %v3333
        %v3366 = vadd.f32 %v3169, %v3334
        %v3367 = vadd.f32 %v3170, %v3335
        %v3368 = vadd.f32 %v3171, %v3336
        %v3369 = vadd.f32 %v3172, %v3337
        %v3370 = vadd.f32 %v3173, %v3338
        %v3371 = vadd.f32 %v3174, %v3339
        %v3372 = vadd.f32 %v3175, %v3340
        %v3373 = vadd.f32 %v3176, %v3341
        %v3374 = vadd.f32 %v3177, %v3342
        %v3375 = vadd.f32 %v3178, %v3343
        %v3376 = vadd.f32 %v3179, %v3344
        %v3377 = vadd.f32 %v3180, %v3345
        %v3378 = vadd.f32 %v3181, %v3346
        %v3379 = vadd.f32 %v3182, %v3347
        %v3380 = vadd.f32 %v3183, %v3348
        %v3381 = vadd.f32 %v3184, %v3349
        %v3382 = vadd.f32 %v3185, %v3350
        %v3383 = vadd.f32 %v3186, %v3351
        %v3384 = vadd.f32 %v3187, %v3352
        %v3385 = vadd.f32 %v3188, %v3353
        %v3386 = vadd.f32 %v3189, %v3354
        %v3387 = vadd.f32 %v3190, %v3355
        %v3388 = vadd.f32 %v3191, %v3356
        %v3389 = vadd.f32 %v3192, %v3357
        %v3390 = vadd.f32 %v3193, %v3358
        %v3391 = vadd.f32 %v3194, %v3359
        %v3392 = vadd.f32 %v3195, %v3360
        %v3393 = vadd.f32 %v3196, %v3361
        %v3394 = vadd.f32 %v3197, %v3362
        %v3395 = vadd.f32 %v3198, %v3363
        %v3396 = vld [vmem:[%s3 + $0xe] sm:$0x1]
        %3397 = vset.pattern.permute.xlu0 2
        %3398 = vperm.xlu0 %3397, %v2938
        %v3399 = vpop.permute.xlu0 %3398
        %3401 = vset.pattern.permute.xlu0 2
        %3402 = vperm.xlu0 %3401, %v2939
        %v3403 = vpop.permute.xlu0 %3402
        %3405 = vset.pattern.permute.xlu0 2
        %3406 = vperm.xlu0 %3405, %v2940
        %v3407 = vpop.permute.xlu0 %3406
        %3409 = vset.pattern.permute.xlu0 2
        %3410 = vperm.xlu0 %3409, %v2941
        %v3411 = vpop.permute.xlu0 %3410
        %3413 = vset.pattern.permute.xlu0 2
        %3414 = vperm.xlu0 %3413, %v2942
        %v3415 = vpop.permute.xlu0 %3414
        %3417 = vset.pattern.permute.xlu0 2
        %3418 = vperm.xlu0 %3417, %v2943
        %v3419 = vpop.permute.xlu0 %3418
        %3421 = vset.pattern.permute.xlu0 2
        %3422 = vperm.xlu0 %3421, %v2944
        %v3423 = vpop.permute.xlu0 %3422
        %3425 = vset.pattern.permute.xlu0 2
        %3426 = vperm.xlu0 %3425, %v2945
        %v3427 = vpop.permute.xlu0 %3426
        %3429 = vset.pattern.permute.xlu0 2
        %3430 = vperm.xlu0 %3429, %v2946
        %v3431 = vpop.permute.xlu0 %3430
        %3433 = vset.pattern.permute.xlu0 2
        %3434 = vperm.xlu0 %3433, %v2947
        %v3435 = vpop.permute.xlu0 %3434
        %3437 = vset.pattern.permute.xlu0 2
        %3438 = vperm.xlu0 %3437, %v2948
        %v3439 = vpop.permute.xlu0 %3438
        %3441 = vset.pattern.permute.xlu0 2
        %3442 = vperm.xlu0 %3441, %v2949
        %v3443 = vpop.permute.xlu0 %3442
        %3445 = vset.pattern.permute.xlu0 2
        %3446 = vperm.xlu0 %3445, %v2950
        %v3447 = vpop.permute.xlu0 %3446
        %3449 = vset.pattern.permute.xlu0 2
        %3450 = vperm.xlu0 %3449, %v2951
        %v3451 = vpop.permute.xlu0 %3450
        %3453 = vset.pattern.permute.xlu0 2
        %3454 = vperm.xlu0 %3453, %v2952
        %v3455 = vpop.permute.xlu0 %3454
        %3457 = vset.pattern.permute.xlu0 2
        %3458 = vperm.xlu0 %3457, %v2953
        %v3459 = vpop.permute.xlu0 %3458
        %3461 = vset.pattern.permute.xlu0 2
        %3462 = vperm.xlu0 %3461, %v2954
        %v3463 = vpop.permute.xlu0 %3462
        %3465 = vset.pattern.permute.xlu0 2
        %3466 = vperm.xlu0 %3465, %v2955
        %v3467 = vpop.permute.xlu0 %3466
        %3469 = vset.pattern.permute.xlu0 2
        %3470 = vperm.xlu0 %3469, %v2956
        %v3471 = vpop.permute.xlu0 %3470
        %3473 = vset.pattern.permute.xlu0 2
        %3474 = vperm.xlu0 %3473, %v2957
        %v3475 = vpop.permute.xlu0 %3474
        %3477 = vset.pattern.permute.xlu0 2
        %3478 = vperm.xlu0 %3477, %v2958
        %v3479 = vpop.permute.xlu0 %3478
        %3481 = vset.pattern.permute.xlu0 2
        %3482 = vperm.xlu0 %3481, %v2959
        %v3483 = vpop.permute.xlu0 %3482
        %3485 = vset.pattern.permute.xlu0 2
        %3486 = vperm.xlu0 %3485, %v2960
        %v3487 = vpop.permute.xlu0 %3486
        %3489 = vset.pattern.permute.xlu0 2
        %3490 = vperm.xlu0 %3489, %v2961
        %v3491 = vpop.permute.xlu0 %3490
        %3493 = vset.pattern.permute.xlu0 2
        %3494 = vperm.xlu0 %3493, %v2962
        %v3495 = vpop.permute.xlu0 %3494
        %3497 = vset.pattern.permute.xlu0 2
        %3498 = vperm.xlu0 %3497, %v2963
        %v3499 = vpop.permute.xlu0 %3498
        %3501 = vset.pattern.permute.xlu0 2
        %3502 = vperm.xlu0 %3501, %v2964
        %v3503 = vpop.permute.xlu0 %3502
        %3505 = vset.pattern.permute.xlu0 2
        %3506 = vperm.xlu0 %3505, %v2965
        %v3507 = vpop.permute.xlu0 %3506
        %3509 = vset.pattern.permute.xlu0 2
        %3510 = vperm.xlu0 %3509, %v2966
        %v3511 = vpop.permute.xlu0 %3510
        %3513 = vset.pattern.permute.xlu0 2
        %3514 = vperm.xlu0 %3513, %v2967
        %v3515 = vpop.permute.xlu0 %3514
        %3517 = vset.pattern.permute.xlu0 2
        %3518 = vperm.xlu0 %3517, %v2968
        %v3519 = vpop.permute.xlu0 %3518
        %3521 = vset.pattern.permute.xlu0 2
        %3522 = vperm.xlu0 %3521, %v2969
        %v3523 = vpop.permute.xlu0 %3522
        %v3525 = vlaneseq
        %v3526 = vshrl.u32 %v3525, 7
        %v3527 = vsub.s32 0, %v3526
        %v3528 = vrot.slane %v3396, %v3527
        %v3529 = vmul.f32 %v3399, %v3528
        %v3530 = vmul.f32 %v3403, %v3528
        %v3531 = vmul.f32 %v3407, %v3528
        %v3532 = vmul.f32 %v3411, %v3528
        %v3533 = vmul.f32 %v3415, %v3528
        %v3534 = vmul.f32 %v3419, %v3528
        %v3535 = vmul.f32 %v3423, %v3528
        %v3536 = vmul.f32 %v3427, %v3528
        %v3537 = vmul.f32 %v3431, %v3528
        %v3538 = vmul.f32 %v3435, %v3528
        %v3539 = vmul.f32 %v3439, %v3528
        %v3540 = vmul.f32 %v3443, %v3528
        %v3541 = vmul.f32 %v3447, %v3528
        %v3542 = vmul.f32 %v3451, %v3528
        %v3543 = vmul.f32 %v3455, %v3528
        %v3544 = vmul.f32 %v3459, %v3528
        %v3545 = vmul.f32 %v3463, %v3528
        %v3546 = vmul.f32 %v3467, %v3528
        %v3547 = vmul.f32 %v3471, %v3528
        %v3548 = vmul.f32 %v3475, %v3528
        %v3549 = vmul.f32 %v3479, %v3528
        %v3550 = vmul.f32 %v3483, %v3528
        %v3551 = vmul.f32 %v3487, %v3528
        %v3552 = vmul.f32 %v3491, %v3528
        %v3553 = vmul.f32 %v3495, %v3528
        %v3554 = vmul.f32 %v3499, %v3528
        %v3555 = vmul.f32 %v3503, %v3528
        %v3556 = vmul.f32 %v3507, %v3528
        %v3557 = vmul.f32 %v3511, %v3528
        %v3558 = vmul.f32 %v3515, %v3528
        %v3559 = vmul.f32 %v3519, %v3528
        %v3560 = vmul.f32 %v3523, %v3528
        %v3561 = vadd.f32 %v3364, %v3529
        %v3562 = vadd.f32 %v3365, %v3530
        %v3563 = vadd.f32 %v3366, %v3531
        %v3564 = vadd.f32 %v3367, %v3532
        %v3565 = vadd.f32 %v3368, %v3533
        %v3566 = vadd.f32 %v3369, %v3534
        %v3567 = vadd.f32 %v3370, %v3535
        %v3568 = vadd.f32 %v3371, %v3536
        %v3569 = vadd.f32 %v3372, %v3537
        %v3570 = vadd.f32 %v3373, %v3538
        %v3571 = vadd.f32 %v3374, %v3539
        %v3572 = vadd.f32 %v3375, %v3540
        %v3573 = vadd.f32 %v3376, %v3541
        %v3574 = vadd.f32 %v3377, %v3542
        %v3575 = vadd.f32 %v3378, %v3543
        %v3576 = vadd.f32 %v3379, %v3544
        %v3577 = vadd.f32 %v3380, %v3545
        %v3578 = vadd.f32 %v3381, %v3546
        %v3579 = vadd.f32 %v3382, %v3547
        %v3580 = vadd.f32 %v3383, %v3548
        %v3581 = vadd.f32 %v3384, %v3549
        %v3582 = vadd.f32 %v3385, %v3550
        %v3583 = vadd.f32 %v3386, %v3551
        %v3584 = vadd.f32 %v3387, %v3552
        %v3585 = vadd.f32 %v3388, %v3553
        %v3586 = vadd.f32 %v3389, %v3554
        %v3587 = vadd.f32 %v3390, %v3555
        %v3588 = vadd.f32 %v3391, %v3556
        %v3589 = vadd.f32 %v3392, %v3557
        %v3590 = vadd.f32 %v3393, %v3558
        %v3591 = vadd.f32 %v3394, %v3559
        %v3592 = vadd.f32 %v3395, %v3560
        %v3593 = vld [vmem:[%s2282 + $0x2] sm:$0xff]
        %v3594 = vld [vmem:[%s2282 + $0xa] sm:$0xff]
        %v3595 = vld [vmem:[%s2282 + $0x1a] sm:$0xff]
        %v3596 = vld [vmem:[%s2282 + $0x22] sm:$0xff]
        %v3597 = vld [vmem:[%s2282 + $0x32] sm:$0xff]
        %v3598 = vld [vmem:[%s2282 + $0x3a] sm:$0xff]
        %v3599 = vld [vmem:[%s2282 + $0x4a] sm:$0xff]
        %v3600 = vld [vmem:[%s2282 + $0x52] sm:$0xff]
        %v3601 = vld [vmem:[%s2282 + $0x62] sm:$0xff]
        %v3602 = vld [vmem:[%s2282 + $0x6a] sm:$0xff]
        %v3603 = vld [vmem:[%s2282 + $0x7a] sm:$0xff]
        %v3604 = vld [vmem:[%s2282 + $0x82] sm:$0xff]
        %v3605 = vld [vmem:[%s2282 + $0x92] sm:$0xff]
        %v3606 = vld [vmem:[%s2282 + $0x9a] sm:$0xff]
        %v3607 = vld [vmem:[%s2282 + $0xaa] sm:$0xff]
        %v3608 = vld [vmem:[%s2282 + $0xb2] sm:$0xff]
        %v3609 = vld [vmem:[%s2282 + $0xc2] sm:$0xff]
        %v3610 = vld [vmem:[%s2282 + $0xca] sm:$0xff]
        %v3611 = vld [vmem:[%s2282 + $0xda] sm:$0xff]
        %v3612 = vld [vmem:[%s2282 + $0xe2] sm:$0xff]
        %v3613 = vld [vmem:[%s2282 + $0xf2] sm:$0xff]
        %v3614 = vld [vmem:[%s2282 + $0xfa] sm:$0xff]
        %v3615 = vld [vmem:[%s2282 + $0x10a] sm:$0xff]
        %v3616 = vld [vmem:[%s2282 + $0x112] sm:$0xff]
        %v3617 = vld [vmem:[%s2282 + $0x122] sm:$0xff]
        %v3618 = vld [vmem:[%s2282 + $0x12a] sm:$0xff]
        %v3619 = vld [vmem:[%s2282 + $0x13a] sm:$0xff]
        %v3620 = vld [vmem:[%s2282 + $0x142] sm:$0xff]
        %v3621 = vld [vmem:[%s2282 + $0x152] sm:$0xff]
        %v3622 = vld [vmem:[%s2282 + $0x15a] sm:$0xff]
        %v3623 = vld [vmem:[%s2282 + $0x16a] sm:$0xff]
        %v3624 = vld [vmem:[%s2282 + $0x172] sm:$0xff]
        %v3625 = vld [vmem:[%s3 + $0xf] sm:$0x1]
        %3627 = vset.pattern.permute.xlu0 0
        %3628 = vperm.xlu0 %3627, %v3593
        %v3629 = vpop.permute.xlu0 %3628
        %3632 = vset.pattern.permute.xlu0 0
        %3633 = vperm.xlu0 %3632, %v3594
        %v3634 = vpop.permute.xlu0 %3633
        %3637 = vset.pattern.permute.xlu0 0
        %3638 = vperm.xlu0 %3637, %v3595
        %v3639 = vpop.permute.xlu0 %3638
        %3642 = vset.pattern.permute.xlu0 0
        %3643 = vperm.xlu0 %3642, %v3596
        %v3644 = vpop.permute.xlu0 %3643
        %3647 = vset.pattern.permute.xlu0 0
        %3648 = vperm.xlu0 %3647, %v3597
        %v3649 = vpop.permute.xlu0 %3648
        %3652 = vset.pattern.permute.xlu0 0
        %3653 = vperm.xlu0 %3652, %v3598
        %v3654 = vpop.permute.xlu0 %3653
        %3657 = vset.pattern.permute.xlu0 0
        %3658 = vperm.xlu0 %3657, %v3599
        %v3659 = vpop.permute.xlu0 %3658
        %3662 = vset.pattern.permute.xlu0 0
        %3663 = vperm.xlu0 %3662, %v3600
        %v3664 = vpop.permute.xlu0 %3663
        %3667 = vset.pattern.permute.xlu0 0
        %3668 = vperm.xlu0 %3667, %v3601
        %v3669 = vpop.permute.xlu0 %3668
        %3672 = vset.pattern.permute.xlu0 0
        %3673 = vperm.xlu0 %3672, %v3602
        %v3674 = vpop.permute.xlu0 %3673
        %3677 = vset.pattern.permute.xlu0 0
        %3678 = vperm.xlu0 %3677, %v3603
        %v3679 = vpop.permute.xlu0 %3678
        %3682 = vset.pattern.permute.xlu0 0
        %3683 = vperm.xlu0 %3682, %v3604
        %v3684 = vpop.permute.xlu0 %3683
        %3687 = vset.pattern.permute.xlu0 0
        %3688 = vperm.xlu0 %3687, %v3605
        %v3689 = vpop.permute.xlu0 %3688
        %3692 = vset.pattern.permute.xlu0 0
        %3693 = vperm.xlu0 %3692, %v3606
        %v3694 = vpop.permute.xlu0 %3693
        %3697 = vset.pattern.permute.xlu0 0
        %3698 = vperm.xlu0 %3697, %v3607
        %v3699 = vpop.permute.xlu0 %3698
        %3702 = vset.pattern.permute.xlu0 0
        %3703 = vperm.xlu0 %3702, %v3608
        %v3704 = vpop.permute.xlu0 %3703
        %3707 = vset.pattern.permute.xlu0 0
        %3708 = vperm.xlu0 %3707, %v3609
        %v3709 = vpop.permute.xlu0 %3708
        %3712 = vset.pattern.permute.xlu0 0
        %3713 = vperm.xlu0 %3712, %v3610
        %v3714 = vpop.permute.xlu0 %3713
        %3717 = vset.pattern.permute.xlu0 0
        %3718 = vperm.xlu0 %3717, %v3611
        %v3719 = vpop.permute.xlu0 %3718
        %3722 = vset.pattern.permute.xlu0 0
        %3723 = vperm.xlu0 %3722, %v3612
        %v3724 = vpop.permute.xlu0 %3723
        %3727 = vset.pattern.permute.xlu0 0
        %3728 = vperm.xlu0 %3727, %v3613
        %v3729 = vpop.permute.xlu0 %3728
        %3732 = vset.pattern.permute.xlu0 0
        %3733 = vperm.xlu0 %3732, %v3614
        %v3734 = vpop.permute.xlu0 %3733
        %3737 = vset.pattern.permute.xlu0 0
        %3738 = vperm.xlu0 %3737, %v3615
        %v3739 = vpop.permute.xlu0 %3738
        %3742 = vset.pattern.permute.xlu0 0
        %3743 = vperm.xlu0 %3742, %v3616
        %v3744 = vpop.permute.xlu0 %3743
        %3747 = vset.pattern.permute.xlu0 0
        %3748 = vperm.xlu0 %3747, %v3617
        %v3749 = vpop.permute.xlu0 %3748
        %3752 = vset.pattern.permute.xlu0 0
        %3753 = vperm.xlu0 %3752, %v3618
        %v3754 = vpop.permute.xlu0 %3753
        %3757 = vset.pattern.permute.xlu0 0
        %3758 = vperm.xlu0 %3757, %v3619
        %v3759 = vpop.permute.xlu0 %3758
        %3762 = vset.pattern.permute.xlu0 0
        %3763 = vperm.xlu0 %3762, %v3620
        %v3764 = vpop.permute.xlu0 %3763
        %3767 = vset.pattern.permute.xlu0 0
        %3768 = vperm.xlu0 %3767, %v3621
        %v3769 = vpop.permute.xlu0 %3768
        %3772 = vset.pattern.permute.xlu0 0
        %3773 = vperm.xlu0 %3772, %v3622
        %v3774 = vpop.permute.xlu0 %3773
        %3777 = vset.pattern.permute.xlu0 0
        %3778 = vperm.xlu0 %3777, %v3623
        %v3779 = vpop.permute.xlu0 %3778
        %3782 = vset.pattern.permute.xlu0 0
        %3783 = vperm.xlu0 %3782, %v3624
        %v3784 = vpop.permute.xlu0 %3783
        %v3786 = vlaneseq
        %v3787 = vshrl.u32 %v3786, 7
        %v3788 = vsub.s32 0, %v3787
        %v3789 = vrot.slane %v3625, %v3788
        %v3790 = vmul.f32 %v3629, %v3789
        %v3791 = vmul.f32 %v3634, %v3789
        %v3792 = vmul.f32 %v3639, %v3789
        %v3793 = vmul.f32 %v3644, %v3789
        %v3794 = vmul.f32 %v3649, %v3789
        %v3795 = vmul.f32 %v3654, %v3789
        %v3796 = vmul.f32 %v3659, %v3789
        %v3797 = vmul.f32 %v3664, %v3789
        %v3798 = vmul.f32 %v3669, %v3789
        %v3799 = vmul.f32 %v3674, %v3789
        %v3800 = vmul.f32 %v3679, %v3789
        %v3801 = vmul.f32 %v3684, %v3789
        %v3802 = vmul.f32 %v3689, %v3789
        %v3803 = vmul.f32 %v3694, %v3789
        %v3804 = vmul.f32 %v3699, %v3789
        %v3805 = vmul.f32 %v3704, %v3789
        %v3806 = vmul.f32 %v3709, %v3789
        %v3807 = vmul.f32 %v3714, %v3789
        %v3808 = vmul.f32 %v3719, %v3789
        %v3809 = vmul.f32 %v3724, %v3789
        %v3810 = vmul.f32 %v3729, %v3789
        %v3811 = vmul.f32 %v3734, %v3789
        %v3812 = vmul.f32 %v3739, %v3789
        %v3813 = vmul.f32 %v3744, %v3789
        %v3814 = vmul.f32 %v3749, %v3789
        %v3815 = vmul.f32 %v3754, %v3789
        %v3816 = vmul.f32 %v3759, %v3789
        %v3817 = vmul.f32 %v3764, %v3789
        %v3818 = vmul.f32 %v3769, %v3789
        %v3819 = vmul.f32 %v3774, %v3789
        %v3820 = vmul.f32 %v3779, %v3789
        %v3821 = vmul.f32 %v3784, %v3789
        %v3822 = vadd.f32 %v3561, %v3790
        %v3823 = vadd.f32 %v3562, %v3791
        %v3824 = vadd.f32 %v3563, %v3792
        %v3825 = vadd.f32 %v3564, %v3793
        %v3826 = vadd.f32 %v3565, %v3794
        %v3827 = vadd.f32 %v3566, %v3795
        %v3828 = vadd.f32 %v3567, %v3796
        %v3829 = vadd.f32 %v3568, %v3797
        %v3830 = vadd.f32 %v3569, %v3798
        %v3831 = vadd.f32 %v3570, %v3799
        %v3832 = vadd.f32 %v3571, %v3800
        %v3833 = vadd.f32 %v3572, %v3801
        %v3834 = vadd.f32 %v3573, %v3802
        %v3835 = vadd.f32 %v3574, %v3803
        %v3836 = vadd.f32 %v3575, %v3804
        %v3837 = vadd.f32 %v3576, %v3805
        %v3838 = vadd.f32 %v3577, %v3806
        %v3839 = vadd.f32 %v3578, %v3807
        %v3840 = vadd.f32 %v3579, %v3808
        %v3841 = vadd.f32 %v3580, %v3809
        %v3842 = vadd.f32 %v3581, %v3810
        %v3843 = vadd.f32 %v3582, %v3811
        %v3844 = vadd.f32 %v3583, %v3812
        %v3845 = vadd.f32 %v3584, %v3813
        %v3846 = vadd.f32 %v3585, %v3814
        %v3847 = vadd.f32 %v3586, %v3815
        %v3848 = vadd.f32 %v3587, %v3816
        %v3849 = vadd.f32 %v3588, %v3817
        %v3850 = vadd.f32 %v3589, %v3818
        %v3851 = vadd.f32 %v3590, %v3819
        %v3852 = vadd.f32 %v3591, %v3820
        %v3853 = vadd.f32 %v3592, %v3821
        %v3854 = vld [vmem:[%s3 + $0x10] sm:$0x1]
        %3855 = vset.pattern.permute.xlu0 1
        %3856 = vperm.xlu0 %3855, %v3593
        %v3857 = vpop.permute.xlu0 %3856
        %3859 = vset.pattern.permute.xlu0 1
        %3860 = vperm.xlu0 %3859, %v3594
        %v3861 = vpop.permute.xlu0 %3860
        %3863 = vset.pattern.permute.xlu0 1
        %3864 = vperm.xlu0 %3863, %v3595
        %v3865 = vpop.permute.xlu0 %3864
        %3867 = vset.pattern.permute.xlu0 1
        %3868 = vperm.xlu0 %3867, %v3596
        %v3869 = vpop.permute.xlu0 %3868
        %3871 = vset.pattern.permute.xlu0 1
        %3872 = vperm.xlu0 %3871, %v3597
        %v3873 = vpop.permute.xlu0 %3872
        %3875 = vset.pattern.permute.xlu0 1
        %3876 = vperm.xlu0 %3875, %v3598
        %v3877 = vpop.permute.xlu0 %3876
        %3879 = vset.pattern.permute.xlu0 1
        %3880 = vperm.xlu0 %3879, %v3599
        %v3881 = vpop.permute.xlu0 %3880
        %3883 = vset.pattern.permute.xlu0 1
        %3884 = vperm.xlu0 %3883, %v3600
        %v3885 = vpop.permute.xlu0 %3884
        %3887 = vset.pattern.permute.xlu0 1
        %3888 = vperm.xlu0 %3887, %v3601
        %v3889 = vpop.permute.xlu0 %3888
        %3891 = vset.pattern.permute.xlu0 1
        %3892 = vperm.xlu0 %3891, %v3602
        %v3893 = vpop.permute.xlu0 %3892
        %3895 = vset.pattern.permute.xlu0 1
        %3896 = vperm.xlu0 %3895, %v3603
        %v3897 = vpop.permute.xlu0 %3896
        %3899 = vset.pattern.permute.xlu0 1
        %3900 = vperm.xlu0 %3899, %v3604
        %v3901 = vpop.permute.xlu0 %3900
        %3903 = vset.pattern.permute.xlu0 1
        %3904 = vperm.xlu0 %3903, %v3605
        %v3905 = vpop.permute.xlu0 %3904
        %3907 = vset.pattern.permute.xlu0 1
        %3908 = vperm.xlu0 %3907, %v3606
        %v3909 = vpop.permute.xlu0 %3908
        %3911 = vset.pattern.permute.xlu0 1
        %3912 = vperm.xlu0 %3911, %v3607
        %v3913 = vpop.permute.xlu0 %3912
        %3915 = vset.pattern.permute.xlu0 1
        %3916 = vperm.xlu0 %3915, %v3608
        %v3917 = vpop.permute.xlu0 %3916
        %3919 = vset.pattern.permute.xlu0 1
        %3920 = vperm.xlu0 %3919, %v3609
        %v3921 = vpop.permute.xlu0 %3920
        %3923 = vset.pattern.permute.xlu0 1
        %3924 = vperm.xlu0 %3923, %v3610
        %v3925 = vpop.permute.xlu0 %3924
        %3927 = vset.pattern.permute.xlu0 1
        %3928 = vperm.xlu0 %3927, %v3611
        %v3929 = vpop.permute.xlu0 %3928
        %3931 = vset.pattern.permute.xlu0 1
        %3932 = vperm.xlu0 %3931, %v3612
        %v3933 = vpop.permute.xlu0 %3932
        %3935 = vset.pattern.permute.xlu0 1
        %3936 = vperm.xlu0 %3935, %v3613
        %v3937 = vpop.permute.xlu0 %3936
        %3939 = vset.pattern.permute.xlu0 1
        %3940 = vperm.xlu0 %3939, %v3614
        %v3941 = vpop.permute.xlu0 %3940
        %3943 = vset.pattern.permute.xlu0 1
        %3944 = vperm.xlu0 %3943, %v3615
        %v3945 = vpop.permute.xlu0 %3944
        %3947 = vset.pattern.permute.xlu0 1
        %3948 = vperm.xlu0 %3947, %v3616
        %v3949 = vpop.permute.xlu0 %3948
        %3951 = vset.pattern.permute.xlu0 1
        %3952 = vperm.xlu0 %3951, %v3617
        %v3953 = vpop.permute.xlu0 %3952
        %3955 = vset.pattern.permute.xlu0 1
        %3956 = vperm.xlu0 %3955, %v3618
        %v3957 = vpop.permute.xlu0 %3956
        %3959 = vset.pattern.permute.xlu0 1
        %3960 = vperm.xlu0 %3959, %v3619
        %v3961 = vpop.permute.xlu0 %3960
        %3963 = vset.pattern.permute.xlu0 1
        %3964 = vperm.xlu0 %3963, %v3620
        %v3965 = vpop.permute.xlu0 %3964
        %3967 = vset.pattern.permute.xlu0 1
        %3968 = vperm.xlu0 %3967, %v3621
        %v3969 = vpop.permute.xlu0 %3968
        %3971 = vset.pattern.permute.xlu0 1
        %3972 = vperm.xlu0 %3971, %v3622
        %v3973 = vpop.permute.xlu0 %3972
        %3975 = vset.pattern.permute.xlu0 1
        %3976 = vperm.xlu0 %3975, %v3623
        %v3977 = vpop.permute.xlu0 %3976
        %3979 = vset.pattern.permute.xlu0 1
        %3980 = vperm.xlu0 %3979, %v3624
        %v3981 = vpop.permute.xlu0 %3980
        %v3983 = vlaneseq
        %v3984 = vshrl.u32 %v3983, 7
        %v3985 = vsub.s32 0, %v3984
        %v3986 = vrot.slane %v3854, %v3985
        %v3987 = vmul.f32 %v3857, %v3986
        %v3988 = vmul.f32 %v3861, %v3986
        %v3989 = vmul.f32 %v3865, %v3986
        %v3990 = vmul.f32 %v3869, %v3986
        %v3991 = vmul.f32 %v3873, %v3986
        %v3992 = vmul.f32 %v3877, %v3986
        %v3993 = vmul.f32 %v3881, %v3986
        %v3994 = vmul.f32 %v3885, %v3986
        %v3995 = vmul.f32 %v3889, %v3986
        %v3996 = vmul.f32 %v3893, %v3986
        %v3997 = vmul.f32 %v3897, %v3986
        %v3998 = vmul.f32 %v3901, %v3986
        %v3999 = vmul.f32 %v3905, %v3986
        %v4000 = vmul.f32 %v3909, %v3986
        %v4001 = vmul.f32 %v3913, %v3986
        %v4002 = vmul.f32 %v3917, %v3986
        %v4003 = vmul.f32 %v3921, %v3986
        %v4004 = vmul.f32 %v3925, %v3986
        %v4005 = vmul.f32 %v3929, %v3986
        %v4006 = vmul.f32 %v3933, %v3986
        %v4007 = vmul.f32 %v3937, %v3986
        %v4008 = vmul.f32 %v3941, %v3986
        %v4009 = vmul.f32 %v3945, %v3986
        %v4010 = vmul.f32 %v3949, %v3986
        %v4011 = vmul.f32 %v3953, %v3986
        %v4012 = vmul.f32 %v3957, %v3986
        %v4013 = vmul.f32 %v3961, %v3986
        %v4014 = vmul.f32 %v3965, %v3986
        %v4015 = vmul.f32 %v3969, %v3986
        %v4016 = vmul.f32 %v3973, %v3986
        %v4017 = vmul.f32 %v3977, %v3986
        %v4018 = vmul.f32 %v3981, %v3986
        %v4019 = vadd.f32 %v3822, %v3987
        %v4020 = vadd.f32 %v3823, %v3988
        %v4021 = vadd.f32 %v3824, %v3989
        %v4022 = vadd.f32 %v3825, %v3990
        %v4023 = vadd.f32 %v3826, %v3991
        %v4024 = vadd.f32 %v3827, %v3992
        %v4025 = vadd.f32 %v3828, %v3993
        %v4026 = vadd.f32 %v3829, %v3994
        %v4027 = vadd.f32 %v3830, %v3995
        %v4028 = vadd.f32 %v3831, %v3996
        %v4029 = vadd.f32 %v3832, %v3997
        %v4030 = vadd.f32 %v3833, %v3998
        %v4031 = vadd.f32 %v3834, %v3999
        %v4032 = vadd.f32 %v3835, %v4000
        %v4033 = vadd.f32 %v3836, %v4001
        %v4034 = vadd.f32 %v3837, %v4002
        %v4035 = vadd.f32 %v3838, %v4003
        %v4036 = vadd.f32 %v3839, %v4004
        %v4037 = vadd.f32 %v3840, %v4005
        %v4038 = vadd.f32 %v3841, %v4006
        %v4039 = vadd.f32 %v3842, %v4007
        %v4040 = vadd.f32 %v3843, %v4008
        %v4041 = vadd.f32 %v3844, %v4009
        %v4042 = vadd.f32 %v3845, %v4010
        %v4043 = vadd.f32 %v3846, %v4011
        %v4044 = vadd.f32 %v3847, %v4012
        %v4045 = vadd.f32 %v3848, %v4013
        %v4046 = vadd.f32 %v3849, %v4014
        %v4047 = vadd.f32 %v3850, %v4015
        %v4048 = vadd.f32 %v3851, %v4016
        %v4049 = vadd.f32 %v3852, %v4017
        %v4050 = vadd.f32 %v3853, %v4018
        %v4051 = vld [vmem:[%s3 + $0x11] sm:$0x1]
        %4052 = vset.pattern.permute.xlu0 2
        %4053 = vperm.xlu0 %4052, %v3593
        %v4054 = vpop.permute.xlu0 %4053
        %4056 = vset.pattern.permute.xlu0 2
        %4057 = vperm.xlu0 %4056, %v3594
        %v4058 = vpop.permute.xlu0 %4057
        %4060 = vset.pattern.permute.xlu0 2
        %4061 = vperm.xlu0 %4060, %v3595
        %v4062 = vpop.permute.xlu0 %4061
        %4064 = vset.pattern.permute.xlu0 2
        %4065 = vperm.xlu0 %4064, %v3596
        %v4066 = vpop.permute.xlu0 %4065
        %4068 = vset.pattern.permute.xlu0 2
        %4069 = vperm.xlu0 %4068, %v3597
        %v4070 = vpop.permute.xlu0 %4069
        %4072 = vset.pattern.permute.xlu0 2
        %4073 = vperm.xlu0 %4072, %v3598
        %v4074 = vpop.permute.xlu0 %4073
        %4076 = vset.pattern.permute.xlu0 2
        %4077 = vperm.xlu0 %4076, %v3599
        %v4078 = vpop.permute.xlu0 %4077
        %4080 = vset.pattern.permute.xlu0 2
        %4081 = vperm.xlu0 %4080, %v3600
        %v4082 = vpop.permute.xlu0 %4081
        %4084 = vset.pattern.permute.xlu0 2
        %4085 = vperm.xlu0 %4084, %v3601
        %v4086 = vpop.permute.xlu0 %4085
        %4088 = vset.pattern.permute.xlu0 2
        %4089 = vperm.xlu0 %4088, %v3602
        %v4090 = vpop.permute.xlu0 %4089
        %4092 = vset.pattern.permute.xlu0 2
        %4093 = vperm.xlu0 %4092, %v3603
        %v4094 = vpop.permute.xlu0 %4093
        %4096 = vset.pattern.permute.xlu0 2
        %4097 = vperm.xlu0 %4096, %v3604
        %v4098 = vpop.permute.xlu0 %4097
        %4100 = vset.pattern.permute.xlu0 2
        %4101 = vperm.xlu0 %4100, %v3605
        %v4102 = vpop.permute.xlu0 %4101
        %4104 = vset.pattern.permute.xlu0 2
        %4105 = vperm.xlu0 %4104, %v3606
        %v4106 = vpop.permute.xlu0 %4105
        %4108 = vset.pattern.permute.xlu0 2
        %4109 = vperm.xlu0 %4108, %v3607
        %v4110 = vpop.permute.xlu0 %4109
        %4112 = vset.pattern.permute.xlu0 2
        %4113 = vperm.xlu0 %4112, %v3608
        %v4114 = vpop.permute.xlu0 %4113
        %4116 = vset.pattern.permute.xlu0 2
        %4117 = vperm.xlu0 %4116, %v3609
        %v4118 = vpop.permute.xlu0 %4117
        %4120 = vset.pattern.permute.xlu0 2
        %4121 = vperm.xlu0 %4120, %v3610
        %v4122 = vpop.permute.xlu0 %4121
        %4124 = vset.pattern.permute.xlu0 2
        %4125 = vperm.xlu0 %4124, %v3611
        %v4126 = vpop.permute.xlu0 %4125
        %4128 = vset.pattern.permute.xlu0 2
        %4129 = vperm.xlu0 %4128, %v3612
        %v4130 = vpop.permute.xlu0 %4129
        %4132 = vset.pattern.permute.xlu0 2
        %4133 = vperm.xlu0 %4132, %v3613
        %v4134 = vpop.permute.xlu0 %4133
        %4136 = vset.pattern.permute.xlu0 2
        %4137 = vperm.xlu0 %4136, %v3614
        %v4138 = vpop.permute.xlu0 %4137
        %4140 = vset.pattern.permute.xlu0 2
        %4141 = vperm.xlu0 %4140, %v3615
        %v4142 = vpop.permute.xlu0 %4141
        %4144 = vset.pattern.permute.xlu0 2
        %4145 = vperm.xlu0 %4144, %v3616
        %v4146 = vpop.permute.xlu0 %4145
        %4148 = vset.pattern.permute.xlu0 2
        %4149 = vperm.xlu0 %4148, %v3617
        %v4150 = vpop.permute.xlu0 %4149
        %4152 = vset.pattern.permute.xlu0 2
        %4153 = vperm.xlu0 %4152, %v3618
        %v4154 = vpop.permute.xlu0 %4153
        %4156 = vset.pattern.permute.xlu0 2
        %4157 = vperm.xlu0 %4156, %v3619
        %v4158 = vpop.permute.xlu0 %4157
        %4160 = vset.pattern.permute.xlu0 2
        %4161 = vperm.xlu0 %4160, %v3620
        %v4162 = vpop.permute.xlu0 %4161
        %4164 = vset.pattern.permute.xlu0 2
        %4165 = vperm.xlu0 %4164, %v3621
        %v4166 = vpop.permute.xlu0 %4165
        %4168 = vset.pattern.permute.xlu0 2
        %4169 = vperm.xlu0 %4168, %v3622
        %v4170 = vpop.permute.xlu0 %4169
        %4172 = vset.pattern.permute.xlu0 2
        %4173 = vperm.xlu0 %4172, %v3623
        %v4174 = vpop.permute.xlu0 %4173
        %4176 = vset.pattern.permute.xlu0 2
        %4177 = vperm.xlu0 %4176, %v3624
        %v4178 = vpop.permute.xlu0 %4177
        %v4180 = vlaneseq
        %v4181 = vshrl.u32 %v4180, 7
        %v4182 = vsub.s32 0, %v4181
        %v4183 = vrot.slane %v4051, %v4182
        %v4184 = vmul.f32 %v4054, %v4183
        %v4185 = vmul.f32 %v4058, %v4183
        %v4186 = vmul.f32 %v4062, %v4183
        %v4187 = vmul.f32 %v4066, %v4183
        %v4188 = vmul.f32 %v4070, %v4183
        %v4189 = vmul.f32 %v4074, %v4183
        %v4190 = vmul.f32 %v4078, %v4183
        %v4191 = vmul.f32 %v4082, %v4183
        %v4192 = vmul.f32 %v4086, %v4183
        %v4193 = vmul.f32 %v4090, %v4183
        %v4194 = vmul.f32 %v4094, %v4183
        %v4195 = vmul.f32 %v4098, %v4183
        %v4196 = vmul.f32 %v4102, %v4183
        %v4197 = vmul.f32 %v4106, %v4183
        %v4198 = vmul.f32 %v4110, %v4183
        %v4199 = vmul.f32 %v4114, %v4183
        %v4200 = vmul.f32 %v4118, %v4183
        %v4201 = vmul.f32 %v4122, %v4183
        %v4202 = vmul.f32 %v4126, %v4183
        %v4203 = vmul.f32 %v4130, %v4183
        %v4204 = vmul.f32 %v4134, %v4183
        %v4205 = vmul.f32 %v4138, %v4183
        %v4206 = vmul.f32 %v4142, %v4183
        %v4207 = vmul.f32 %v4146, %v4183
        %v4208 = vmul.f32 %v4150, %v4183
        %v4209 = vmul.f32 %v4154, %v4183
        %v4210 = vmul.f32 %v4158, %v4183
        %v4211 = vmul.f32 %v4162, %v4183
        %v4212 = vmul.f32 %v4166, %v4183
        %v4213 = vmul.f32 %v4170, %v4183
        %v4214 = vmul.f32 %v4174, %v4183
        %v4215 = vmul.f32 %v4178, %v4183
        %v4216 = vadd.f32 %v4019, %v4184
        %v4217 = vadd.f32 %v4020, %v4185
        %v4218 = vadd.f32 %v4021, %v4186
        %v4219 = vadd.f32 %v4022, %v4187
        %v4220 = vadd.f32 %v4023, %v4188
        %v4221 = vadd.f32 %v4024, %v4189
        %v4222 = vadd.f32 %v4025, %v4190
        %v4223 = vadd.f32 %v4026, %v4191
        %v4224 = vadd.f32 %v4027, %v4192
        %v4225 = vadd.f32 %v4028, %v4193
        %v4226 = vadd.f32 %v4029, %v4194
        %v4227 = vadd.f32 %v4030, %v4195
        %v4228 = vadd.f32 %v4031, %v4196
        %v4229 = vadd.f32 %v4032, %v4197
        %v4230 = vadd.f32 %v4033, %v4198
        %v4231 = vadd.f32 %v4034, %v4199
        %v4232 = vadd.f32 %v4035, %v4200
        %v4233 = vadd.f32 %v4036, %v4201
        %v4234 = vadd.f32 %v4037, %v4202
        %v4235 = vadd.f32 %v4038, %v4203
        %v4236 = vadd.f32 %v4039, %v4204
        %v4237 = vadd.f32 %v4040, %v4205
        %v4238 = vadd.f32 %v4041, %v4206
        %v4239 = vadd.f32 %v4042, %v4207
        %v4240 = vadd.f32 %v4043, %v4208
        %v4241 = vadd.f32 %v4044, %v4209
        %v4242 = vadd.f32 %v4045, %v4210
        %v4243 = vadd.f32 %v4046, %v4211
        %v4244 = vadd.f32 %v4047, %v4212
        %v4245 = vadd.f32 %v4048, %v4213
        %v4246 = vadd.f32 %v4049, %v4214
        %v4247 = vadd.f32 %v4050, %v4215
        %s4248 = scalar_lea.vmem %s311, 48
        %v4249 = vld [vmem:[%s4248] sm:$0xff]
        %v4250 = vld [vmem:[%s4248 + $0x8] sm:$0xff]
        %v4251 = vld [vmem:[%s4248 + $0x18] sm:$0xff]
        %v4252 = vld [vmem:[%s4248 + $0x20] sm:$0xff]
        %v4253 = vld [vmem:[%s4248 + $0x30] sm:$0xff]
        %v4254 = vld [vmem:[%s4248 + $0x38] sm:$0xff]
        %v4255 = vld [vmem:[%s4248 + $0x48] sm:$0xff]
        %v4256 = vld [vmem:[%s4248 + $0x50] sm:$0xff]
        %v4257 = vld [vmem:[%s4248 + $0x60] sm:$0xff]
        %v4258 = vld [vmem:[%s4248 + $0x68] sm:$0xff]
        %v4259 = vld [vmem:[%s4248 + $0x78] sm:$0xff]
        %v4260 = vld [vmem:[%s4248 + $0x80] sm:$0xff]
        %v4261 = vld [vmem:[%s4248 + $0x90] sm:$0xff]
        %v4262 = vld [vmem:[%s4248 + $0x98] sm:$0xff]
        %v4263 = vld [vmem:[%s4248 + $0xa8] sm:$0xff]
        %v4264 = vld [vmem:[%s4248 + $0xb0] sm:$0xff]
        %v4265 = vld [vmem:[%s4248 + $0xc0] sm:$0xff]
        %v4266 = vld [vmem:[%s4248 + $0xc8] sm:$0xff]
        %v4267 = vld [vmem:[%s4248 + $0xd8] sm:$0xff]
        %v4268 = vld [vmem:[%s4248 + $0xe0] sm:$0xff]
        %v4269 = vld [vmem:[%s4248 + $0xf0] sm:$0xff]
        %v4270 = vld [vmem:[%s4248 + $0xf8] sm:$0xff]
        %v4271 = vld [vmem:[%s4248 + $0x108] sm:$0xff]
        %v4272 = vld [vmem:[%s4248 + $0x110] sm:$0xff]
        %v4273 = vld [vmem:[%s4248 + $0x120] sm:$0xff]
        %v4274 = vld [vmem:[%s4248 + $0x128] sm:$0xff]
        %v4275 = vld [vmem:[%s4248 + $0x138] sm:$0xff]
        %v4276 = vld [vmem:[%s4248 + $0x140] sm:$0xff]
        %v4277 = vld [vmem:[%s4248 + $0x150] sm:$0xff]
        %v4278 = vld [vmem:[%s4248 + $0x158] sm:$0xff]
        %v4279 = vld [vmem:[%s4248 + $0x168] sm:$0xff]
        %v4280 = vld [vmem:[%s4248 + $0x170] sm:$0xff]
        %v4281 = vld [vmem:[%s3 + $0x12] sm:$0x1]
        %4283 = vset.pattern.permute.xlu0 0
        %4284 = vperm.xlu0 %4283, %v4249
        %v4285 = vpop.permute.xlu0 %4284
        %4288 = vset.pattern.permute.xlu0 0
        %4289 = vperm.xlu0 %4288, %v4250
        %v4290 = vpop.permute.xlu0 %4289
        %4293 = vset.pattern.permute.xlu0 0
        %4294 = vperm.xlu0 %4293, %v4251
        %v4295 = vpop.permute.xlu0 %4294
        %4298 = vset.pattern.permute.xlu0 0
        %4299 = vperm.xlu0 %4298, %v4252
        %v4300 = vpop.permute.xlu0 %4299
        %4303 = vset.pattern.permute.xlu0 0
        %4304 = vperm.xlu0 %4303, %v4253
        %v4305 = vpop.permute.xlu0 %4304
        %4308 = vset.pattern.permute.xlu0 0
        %4309 = vperm.xlu0 %4308, %v4254
        %v4310 = vpop.permute.xlu0 %4309
        %4313 = vset.pattern.permute.xlu0 0
        %4314 = vperm.xlu0 %4313, %v4255
        %v4315 = vpop.permute.xlu0 %4314
        %4318 = vset.pattern.permute.xlu0 0
        %4319 = vperm.xlu0 %4318, %v4256
        %v4320 = vpop.permute.xlu0 %4319
        %4323 = vset.pattern.permute.xlu0 0
        %4324 = vperm.xlu0 %4323, %v4257
        %v4325 = vpop.permute.xlu0 %4324
        %4328 = vset.pattern.permute.xlu0 0
        %4329 = vperm.xlu0 %4328, %v4258
        %v4330 = vpop.permute.xlu0 %4329
        %4333 = vset.pattern.permute.xlu0 0
        %4334 = vperm.xlu0 %4333, %v4259
        %v4335 = vpop.permute.xlu0 %4334
        %4338 = vset.pattern.permute.xlu0 0
        %4339 = vperm.xlu0 %4338, %v4260
        %v4340 = vpop.permute.xlu0 %4339
        %4343 = vset.pattern.permute.xlu0 0
        %4344 = vperm.xlu0 %4343, %v4261
        %v4345 = vpop.permute.xlu0 %4344
        %4348 = vset.pattern.permute.xlu0 0
        %4349 = vperm.xlu0 %4348, %v4262
        %v4350 = vpop.permute.xlu0 %4349
        %4353 = vset.pattern.permute.xlu0 0
        %4354 = vperm.xlu0 %4353, %v4263
        %v4355 = vpop.permute.xlu0 %4354
        %4358 = vset.pattern.permute.xlu0 0
        %4359 = vperm.xlu0 %4358, %v4264
        %v4360 = vpop.permute.xlu0 %4359
        %4363 = vset.pattern.permute.xlu0 0
        %4364 = vperm.xlu0 %4363, %v4265
        %v4365 = vpop.permute.xlu0 %4364
        %4368 = vset.pattern.permute.xlu0 0
        %4369 = vperm.xlu0 %4368, %v4266
        %v4370 = vpop.permute.xlu0 %4369
        %4373 = vset.pattern.permute.xlu0 0
        %4374 = vperm.xlu0 %4373, %v4267
        %v4375 = vpop.permute.xlu0 %4374
        %4378 = vset.pattern.permute.xlu0 0
        %4379 = vperm.xlu0 %4378, %v4268
        %v4380 = vpop.permute.xlu0 %4379
        %4383 = vset.pattern.permute.xlu0 0
        %4384 = vperm.xlu0 %4383, %v4269
        %v4385 = vpop.permute.xlu0 %4384
        %4388 = vset.pattern.permute.xlu0 0
        %4389 = vperm.xlu0 %4388, %v4270
        %v4390 = vpop.permute.xlu0 %4389
        %4393 = vset.pattern.permute.xlu0 0
        %4394 = vperm.xlu0 %4393, %v4271
        %v4395 = vpop.permute.xlu0 %4394
        %4398 = vset.pattern.permute.xlu0 0
        %4399 = vperm.xlu0 %4398, %v4272
        %v4400 = vpop.permute.xlu0 %4399
        %4403 = vset.pattern.permute.xlu0 0
        %4404 = vperm.xlu0 %4403, %v4273
        %v4405 = vpop.permute.xlu0 %4404
        %4408 = vset.pattern.permute.xlu0 0
        %4409 = vperm.xlu0 %4408, %v4274
        %v4410 = vpop.permute.xlu0 %4409
        %4413 = vset.pattern.permute.xlu0 0
        %4414 = vperm.xlu0 %4413, %v4275
        %v4415 = vpop.permute.xlu0 %4414
        %4418 = vset.pattern.permute.xlu0 0
        %4419 = vperm.xlu0 %4418, %v4276
        %v4420 = vpop.permute.xlu0 %4419
        %4423 = vset.pattern.permute.xlu0 0
        %4424 = vperm.xlu0 %4423, %v4277
        %v4425 = vpop.permute.xlu0 %4424
        %4428 = vset.pattern.permute.xlu0 0
        %4429 = vperm.xlu0 %4428, %v4278
        %v4430 = vpop.permute.xlu0 %4429
        %4433 = vset.pattern.permute.xlu0 0
        %4434 = vperm.xlu0 %4433, %v4279
        %v4435 = vpop.permute.xlu0 %4434
        %4438 = vset.pattern.permute.xlu0 0
        %4439 = vperm.xlu0 %4438, %v4280
        %v4440 = vpop.permute.xlu0 %4439
        %v4442 = vlaneseq
        %v4443 = vshrl.u32 %v4442, 7
        %v4444 = vsub.s32 0, %v4443
        %v4445 = vrot.slane %v4281, %v4444
        %v4446 = vmul.f32 %v4285, %v4445
        %v4447 = vmul.f32 %v4290, %v4445
        %v4448 = vmul.f32 %v4295, %v4445
        %v4449 = vmul.f32 %v4300, %v4445
        %v4450 = vmul.f32 %v4305, %v4445
        %v4451 = vmul.f32 %v4310, %v4445
        %v4452 = vmul.f32 %v4315, %v4445
        %v4453 = vmul.f32 %v4320, %v4445
        %v4454 = vmul.f32 %v4325, %v4445
        %v4455 = vmul.f32 %v4330, %v4445
        %v4456 = vmul.f32 %v4335, %v4445
        %v4457 = vmul.f32 %v4340, %v4445
        %v4458 = vmul.f32 %v4345, %v4445
        %v4459 = vmul.f32 %v4350, %v4445
        %v4460 = vmul.f32 %v4355, %v4445
        %v4461 = vmul.f32 %v4360, %v4445
        %v4462 = vmul.f32 %v4365, %v4445
        %v4463 = vmul.f32 %v4370, %v4445
        %v4464 = vmul.f32 %v4375, %v4445
        %v4465 = vmul.f32 %v4380, %v4445
        %v4466 = vmul.f32 %v4385, %v4445
        %v4467 = vmul.f32 %v4390, %v4445
        %v4468 = vmul.f32 %v4395, %v4445
        %v4469 = vmul.f32 %v4400, %v4445
        %v4470 = vmul.f32 %v4405, %v4445
        %v4471 = vmul.f32 %v4410, %v4445
        %v4472 = vmul.f32 %v4415, %v4445
        %v4473 = vmul.f32 %v4420, %v4445
        %v4474 = vmul.f32 %v4425, %v4445
        %v4475 = vmul.f32 %v4430, %v4445
        %v4476 = vmul.f32 %v4435, %v4445
        %v4477 = vmul.f32 %v4440, %v4445
        %v4478 = vadd.f32 %v4216, %v4446
        %v4479 = vadd.f32 %v4217, %v4447
        %v4480 = vadd.f32 %v4218, %v4448
        %v4481 = vadd.f32 %v4219, %v4449
        %v4482 = vadd.f32 %v4220, %v4450
        %v4483 = vadd.f32 %v4221, %v4451
        %v4484 = vadd.f32 %v4222, %v4452
        %v4485 = vadd.f32 %v4223, %v4453
        %v4486 = vadd.f32 %v4224, %v4454
        %v4487 = vadd.f32 %v4225, %v4455
        %v4488 = vadd.f32 %v4226, %v4456
        %v4489 = vadd.f32 %v4227, %v4457
        %v4490 = vadd.f32 %v4228, %v4458
        %v4491 = vadd.f32 %v4229, %v4459
        %v4492 = vadd.f32 %v4230, %v4460
        %v4493 = vadd.f32 %v4231, %v4461
        %v4494 = vadd.f32 %v4232, %v4462
        %v4495 = vadd.f32 %v4233, %v4463
        %v4496 = vadd.f32 %v4234, %v4464
        %v4497 = vadd.f32 %v4235, %v4465
        %v4498 = vadd.f32 %v4236, %v4466
        %v4499 = vadd.f32 %v4237, %v4467
        %v4500 = vadd.f32 %v4238, %v4468
        %v4501 = vadd.f32 %v4239, %v4469
        %v4502 = vadd.f32 %v4240, %v4470
        %v4503 = vadd.f32 %v4241, %v4471
        %v4504 = vadd.f32 %v4242, %v4472
        %v4505 = vadd.f32 %v4243, %v4473
        %v4506 = vadd.f32 %v4244, %v4474
        %v4507 = vadd.f32 %v4245, %v4475
        %v4508 = vadd.f32 %v4246, %v4476
        %v4509 = vadd.f32 %v4247, %v4477
        %v4510 = vld [vmem:[%s3 + $0x13] sm:$0x1]
        %4511 = vset.pattern.permute.xlu0 1
        %4512 = vperm.xlu0 %4511, %v4249
        %v4513 = vpop.permute.xlu0 %4512
        %4515 = vset.pattern.permute.xlu0 1
        %4516 = vperm.xlu0 %4515, %v4250
        %v4517 = vpop.permute.xlu0 %4516
        %4519 = vset.pattern.permute.xlu0 1
        %4520 = vperm.xlu0 %4519, %v4251
        %v4521 = vpop.permute.xlu0 %4520
        %4523 = vset.pattern.permute.xlu0 1
        %4524 = vperm.xlu0 %4523, %v4252
        %v4525 = vpop.permute.xlu0 %4524
        %4527 = vset.pattern.permute.xlu0 1
        %4528 = vperm.xlu0 %4527, %v4253
        %v4529 = vpop.permute.xlu0 %4528
        %4531 = vset.pattern.permute.xlu0 1
        %4532 = vperm.xlu0 %4531, %v4254
        %v4533 = vpop.permute.xlu0 %4532
        %4535 = vset.pattern.permute.xlu0 1
        %4536 = vperm.xlu0 %4535, %v4255
        %v4537 = vpop.permute.xlu0 %4536
        %4539 = vset.pattern.permute.xlu0 1
        %4540 = vperm.xlu0 %4539, %v4256
        %v4541 = vpop.permute.xlu0 %4540
        %4543 = vset.pattern.permute.xlu0 1
        %4544 = vperm.xlu0 %4543, %v4257
        %v4545 = vpop.permute.xlu0 %4544
        %4547 = vset.pattern.permute.xlu0 1
        %4548 = vperm.xlu0 %4547, %v4258
        %v4549 = vpop.permute.xlu0 %4548
        %4551 = vset.pattern.permute.xlu0 1
        %4552 = vperm.xlu0 %4551, %v4259
        %v4553 = vpop.permute.xlu0 %4552
        %4555 = vset.pattern.permute.xlu0 1
        %4556 = vperm.xlu0 %4555, %v4260
        %v4557 = vpop.permute.xlu0 %4556
        %4559 = vset.pattern.permute.xlu0 1
        %4560 = vperm.xlu0 %4559, %v4261
        %v4561 = vpop.permute.xlu0 %4560
        %4563 = vset.pattern.permute.xlu0 1
        %4564 = vperm.xlu0 %4563, %v4262
        %v4565 = vpop.permute.xlu0 %4564
        %4567 = vset.pattern.permute.xlu0 1
        %4568 = vperm.xlu0 %4567, %v4263
        %v4569 = vpop.permute.xlu0 %4568
        %4571 = vset.pattern.permute.xlu0 1
        %4572 = vperm.xlu0 %4571, %v4264
        %v4573 = vpop.permute.xlu0 %4572
        %4575 = vset.pattern.permute.xlu0 1
        %4576 = vperm.xlu0 %4575, %v4265
        %v4577 = vpop.permute.xlu0 %4576
        %4579 = vset.pattern.permute.xlu0 1
        %4580 = vperm.xlu0 %4579, %v4266
        %v4581 = vpop.permute.xlu0 %4580
        %4583 = vset.pattern.permute.xlu0 1
        %4584 = vperm.xlu0 %4583, %v4267
        %v4585 = vpop.permute.xlu0 %4584
        %4587 = vset.pattern.permute.xlu0 1
        %4588 = vperm.xlu0 %4587, %v4268
        %v4589 = vpop.permute.xlu0 %4588
        %4591 = vset.pattern.permute.xlu0 1
        %4592 = vperm.xlu0 %4591, %v4269
        %v4593 = vpop.permute.xlu0 %4592
        %4595 = vset.pattern.permute.xlu0 1
        %4596 = vperm.xlu0 %4595, %v4270
        %v4597 = vpop.permute.xlu0 %4596
        %4599 = vset.pattern.permute.xlu0 1
        %4600 = vperm.xlu0 %4599, %v4271
        %v4601 = vpop.permute.xlu0 %4600
        %4603 = vset.pattern.permute.xlu0 1
        %4604 = vperm.xlu0 %4603, %v4272
        %v4605 = vpop.permute.xlu0 %4604
        %4607 = vset.pattern.permute.xlu0 1
        %4608 = vperm.xlu0 %4607, %v4273
        %v4609 = vpop.permute.xlu0 %4608
        %4611 = vset.pattern.permute.xlu0 1
        %4612 = vperm.xlu0 %4611, %v4274
        %v4613 = vpop.permute.xlu0 %4612
        %4615 = vset.pattern.permute.xlu0 1
        %4616 = vperm.xlu0 %4615, %v4275
        %v4617 = vpop.permute.xlu0 %4616
        %4619 = vset.pattern.permute.xlu0 1
        %4620 = vperm.xlu0 %4619, %v4276
        %v4621 = vpop.permute.xlu0 %4620
        %4623 = vset.pattern.permute.xlu0 1
        %4624 = vperm.xlu0 %4623, %v4277
        %v4625 = vpop.permute.xlu0 %4624
        %4627 = vset.pattern.permute.xlu0 1
        %4628 = vperm.xlu0 %4627, %v4278
        %v4629 = vpop.permute.xlu0 %4628
        %4631 = vset.pattern.permute.xlu0 1
        %4632 = vperm.xlu0 %4631, %v4279
        %v4633 = vpop.permute.xlu0 %4632
        %4635 = vset.pattern.permute.xlu0 1
        %4636 = vperm.xlu0 %4635, %v4280
        %v4637 = vpop.permute.xlu0 %4636
        %v4639 = vlaneseq
        %v4640 = vshrl.u32 %v4639, 7
        %v4641 = vsub.s32 0, %v4640
        %v4642 = vrot.slane %v4510, %v4641
        %v4643 = vmul.f32 %v4513, %v4642
        %v4644 = vmul.f32 %v4517, %v4642
        %v4645 = vmul.f32 %v4521, %v4642
        %v4646 = vmul.f32 %v4525, %v4642
        %v4647 = vmul.f32 %v4529, %v4642
        %v4648 = vmul.f32 %v4533, %v4642
        %v4649 = vmul.f32 %v4537, %v4642
        %v4650 = vmul.f32 %v4541, %v4642
        %v4651 = vmul.f32 %v4545, %v4642
        %v4652 = vmul.f32 %v4549, %v4642
        %v4653 = vmul.f32 %v4553, %v4642
        %v4654 = vmul.f32 %v4557, %v4642
        %v4655 = vmul.f32 %v4561, %v4642
        %v4656 = vmul.f32 %v4565, %v4642
        %v4657 = vmul.f32 %v4569, %v4642
        %v4658 = vmul.f32 %v4573, %v4642
        %v4659 = vmul.f32 %v4577, %v4642
        %v4660 = vmul.f32 %v4581, %v4642
        %v4661 = vmul.f32 %v4585, %v4642
        %v4662 = vmul.f32 %v4589, %v4642
        %v4663 = vmul.f32 %v4593, %v4642
        %v4664 = vmul.f32 %v4597, %v4642
        %v4665 = vmul.f32 %v4601, %v4642
        %v4666 = vmul.f32 %v4605, %v4642
        %v4667 = vmul.f32 %v4609, %v4642
        %v4668 = vmul.f32 %v4613, %v4642
        %v4669 = vmul.f32 %v4617, %v4642
        %v4670 = vmul.f32 %v4621, %v4642
        %v4671 = vmul.f32 %v4625, %v4642
        %v4672 = vmul.f32 %v4629, %v4642
        %v4673 = vmul.f32 %v4633, %v4642
        %v4674 = vmul.f32 %v4637, %v4642
        %v4675 = vadd.f32 %v4478, %v4643
        %v4676 = vadd.f32 %v4479, %v4644
        %v4677 = vadd.f32 %v4480, %v4645
        %v4678 = vadd.f32 %v4481, %v4646
        %v4679 = vadd.f32 %v4482, %v4647
        %v4680 = vadd.f32 %v4483, %v4648
        %v4681 = vadd.f32 %v4484, %v4649
        %v4682 = vadd.f32 %v4485, %v4650
        %v4683 = vadd.f32 %v4486, %v4651
        %v4684 = vadd.f32 %v4487, %v4652
        %v4685 = vadd.f32 %v4488, %v4653
        %v4686 = vadd.f32 %v4489, %v4654
        %v4687 = vadd.f32 %v4490, %v4655
        %v4688 = vadd.f32 %v4491, %v4656
        %v4689 = vadd.f32 %v4492, %v4657
        %v4690 = vadd.f32 %v4493, %v4658
        %v4691 = vadd.f32 %v4494, %v4659
        %v4692 = vadd.f32 %v4495, %v4660
        %v4693 = vadd.f32 %v4496, %v4661
        %v4694 = vadd.f32 %v4497, %v4662
        %v4695 = vadd.f32 %v4498, %v4663
        %v4696 = vadd.f32 %v4499, %v4664
        %v4697 = vadd.f32 %v4500, %v4665
        %v4698 = vadd.f32 %v4501, %v4666
        %v4699 = vadd.f32 %v4502, %v4667
        %v4700 = vadd.f32 %v4503, %v4668
        %v4701 = vadd.f32 %v4504, %v4669
        %v4702 = vadd.f32 %v4505, %v4670
        %v4703 = vadd.f32 %v4506, %v4671
        %v4704 = vadd.f32 %v4507, %v4672
        %v4705 = vadd.f32 %v4508, %v4673
        %v4706 = vadd.f32 %v4509, %v4674
        %v4707 = vld [vmem:[%s3 + $0x14] sm:$0x1]
        %4708 = vset.pattern.permute.xlu0 2
        %4709 = vperm.xlu0 %4708, %v4249
        %v4710 = vpop.permute.xlu0 %4709
        %4712 = vset.pattern.permute.xlu0 2
        %4713 = vperm.xlu0 %4712, %v4250
        %v4714 = vpop.permute.xlu0 %4713
        %4716 = vset.pattern.permute.xlu0 2
        %4717 = vperm.xlu0 %4716, %v4251
        %v4718 = vpop.permute.xlu0 %4717
        %4720 = vset.pattern.permute.xlu0 2
        %4721 = vperm.xlu0 %4720, %v4252
        %v4722 = vpop.permute.xlu0 %4721
        %4724 = vset.pattern.permute.xlu0 2
        %4725 = vperm.xlu0 %4724, %v4253
        %v4726 = vpop.permute.xlu0 %4725
        %4728 = vset.pattern.permute.xlu0 2
        %4729 = vperm.xlu0 %4728, %v4254
        %v4730 = vpop.permute.xlu0 %4729
        %4732 = vset.pattern.permute.xlu0 2
        %4733 = vperm.xlu0 %4732, %v4255
        %v4734 = vpop.permute.xlu0 %4733
        %4736 = vset.pattern.permute.xlu0 2
        %4737 = vperm.xlu0 %4736, %v4256
        %v4738 = vpop.permute.xlu0 %4737
        %4740 = vset.pattern.permute.xlu0 2
        %4741 = vperm.xlu0 %4740, %v4257
        %v4742 = vpop.permute.xlu0 %4741
        %4744 = vset.pattern.permute.xlu0 2
        %4745 = vperm.xlu0 %4744, %v4258
        %v4746 = vpop.permute.xlu0 %4745
        %4748 = vset.pattern.permute.xlu0 2
        %4749 = vperm.xlu0 %4748, %v4259
        %v4750 = vpop.permute.xlu0 %4749
        %4752 = vset.pattern.permute.xlu0 2
        %4753 = vperm.xlu0 %4752, %v4260
        %v4754 = vpop.permute.xlu0 %4753
        %4756 = vset.pattern.permute.xlu0 2
        %4757 = vperm.xlu0 %4756, %v4261
        %v4758 = vpop.permute.xlu0 %4757
        %4760 = vset.pattern.permute.xlu0 2
        %4761 = vperm.xlu0 %4760, %v4262
        %v4762 = vpop.permute.xlu0 %4761
        %4764 = vset.pattern.permute.xlu0 2
        %4765 = vperm.xlu0 %4764, %v4263
        %v4766 = vpop.permute.xlu0 %4765
        %4768 = vset.pattern.permute.xlu0 2
        %4769 = vperm.xlu0 %4768, %v4264
        %v4770 = vpop.permute.xlu0 %4769
        %4772 = vset.pattern.permute.xlu0 2
        %4773 = vperm.xlu0 %4772, %v4265
        %v4774 = vpop.permute.xlu0 %4773
        %4776 = vset.pattern.permute.xlu0 2
        %4777 = vperm.xlu0 %4776, %v4266
        %v4778 = vpop.permute.xlu0 %4777
        %4780 = vset.pattern.permute.xlu0 2
        %4781 = vperm.xlu0 %4780, %v4267
        %v4782 = vpop.permute.xlu0 %4781
        %4784 = vset.pattern.permute.xlu0 2
        %4785 = vperm.xlu0 %4784, %v4268
        %v4786 = vpop.permute.xlu0 %4785
        %4788 = vset.pattern.permute.xlu0 2
        %4789 = vperm.xlu0 %4788, %v4269
        %v4790 = vpop.permute.xlu0 %4789
        %4792 = vset.pattern.permute.xlu0 2
        %4793 = vperm.xlu0 %4792, %v4270
        %v4794 = vpop.permute.xlu0 %4793
        %4796 = vset.pattern.permute.xlu0 2
        %4797 = vperm.xlu0 %4796, %v4271
        %v4798 = vpop.permute.xlu0 %4797
        %4800 = vset.pattern.permute.xlu0 2
        %4801 = vperm.xlu0 %4800, %v4272
        %v4802 = vpop.permute.xlu0 %4801
        %4804 = vset.pattern.permute.xlu0 2
        %4805 = vperm.xlu0 %4804, %v4273
        %v4806 = vpop.permute.xlu0 %4805
        %4808 = vset.pattern.permute.xlu0 2
        %4809 = vperm.xlu0 %4808, %v4274
        %v4810 = vpop.permute.xlu0 %4809
        %4812 = vset.pattern.permute.xlu0 2
        %4813 = vperm.xlu0 %4812, %v4275
        %v4814 = vpop.permute.xlu0 %4813
        %4816 = vset.pattern.permute.xlu0 2
        %4817 = vperm.xlu0 %4816, %v4276
        %v4818 = vpop.permute.xlu0 %4817
        %4820 = vset.pattern.permute.xlu0 2
        %4821 = vperm.xlu0 %4820, %v4277
        %v4822 = vpop.permute.xlu0 %4821
        %4824 = vset.pattern.permute.xlu0 2
        %4825 = vperm.xlu0 %4824, %v4278
        %v4826 = vpop.permute.xlu0 %4825
        %4828 = vset.pattern.permute.xlu0 2
        %4829 = vperm.xlu0 %4828, %v4279
        %v4830 = vpop.permute.xlu0 %4829
        %4832 = vset.pattern.permute.xlu0 2
        %4833 = vperm.xlu0 %4832, %v4280
        %v4834 = vpop.permute.xlu0 %4833
        %v4836 = vlaneseq
        %v4837 = vshrl.u32 %v4836, 7
        %v4838 = vsub.s32 0, %v4837
        %v4839 = vrot.slane %v4707, %v4838
        %v4840 = vmul.f32 %v4710, %v4839
        %v4841 = vmul.f32 %v4714, %v4839
        %v4842 = vmul.f32 %v4718, %v4839
        %v4843 = vmul.f32 %v4722, %v4839
        %v4844 = vmul.f32 %v4726, %v4839
        %v4845 = vmul.f32 %v4730, %v4839
        %v4846 = vmul.f32 %v4734, %v4839
        %v4847 = vmul.f32 %v4738, %v4839
        %v4848 = vmul.f32 %v4742, %v4839
        %v4849 = vmul.f32 %v4746, %v4839
        %v4850 = vmul.f32 %v4750, %v4839
        %v4851 = vmul.f32 %v4754, %v4839
        %v4852 = vmul.f32 %v4758, %v4839
        %v4853 = vmul.f32 %v4762, %v4839
        %v4854 = vmul.f32 %v4766, %v4839
        %v4855 = vmul.f32 %v4770, %v4839
        %v4856 = vmul.f32 %v4774, %v4839
        %v4857 = vmul.f32 %v4778, %v4839
        %v4858 = vmul.f32 %v4782, %v4839
        %v4859 = vmul.f32 %v4786, %v4839
        %v4860 = vmul.f32 %v4790, %v4839
        %v4861 = vmul.f32 %v4794, %v4839
        %v4862 = vmul.f32 %v4798, %v4839
        %v4863 = vmul.f32 %v4802, %v4839
        %v4864 = vmul.f32 %v4806, %v4839
        %v4865 = vmul.f32 %v4810, %v4839
        %v4866 = vmul.f32 %v4814, %v4839
        %v4867 = vmul.f32 %v4818, %v4839
        %v4868 = vmul.f32 %v4822, %v4839
        %v4869 = vmul.f32 %v4826, %v4839
        %v4870 = vmul.f32 %v4830, %v4839
        %v4871 = vmul.f32 %v4834, %v4839
        %v4872 = vadd.f32 %v4675, %v4840
        %v4873 = vadd.f32 %v4676, %v4841
        %v4874 = vadd.f32 %v4677, %v4842
        %v4875 = vadd.f32 %v4678, %v4843
        %v4876 = vadd.f32 %v4679, %v4844
        %v4877 = vadd.f32 %v4680, %v4845
        %v4878 = vadd.f32 %v4681, %v4846
        %v4879 = vadd.f32 %v4682, %v4847
        %v4880 = vadd.f32 %v4683, %v4848
        %v4881 = vadd.f32 %v4684, %v4849
        %v4882 = vadd.f32 %v4685, %v4850
        %v4883 = vadd.f32 %v4686, %v4851
        %v4884 = vadd.f32 %v4687, %v4852
        %v4885 = vadd.f32 %v4688, %v4853
        %v4886 = vadd.f32 %v4689, %v4854
        %v4887 = vadd.f32 %v4690, %v4855
        %v4888 = vadd.f32 %v4691, %v4856
        %v4889 = vadd.f32 %v4692, %v4857
        %v4890 = vadd.f32 %v4693, %v4858
        %v4891 = vadd.f32 %v4694, %v4859
        %v4892 = vadd.f32 %v4695, %v4860
        %v4893 = vadd.f32 %v4696, %v4861
        %v4894 = vadd.f32 %v4697, %v4862
        %v4895 = vadd.f32 %v4698, %v4863
        %v4896 = vadd.f32 %v4699, %v4864
        %v4897 = vadd.f32 %v4700, %v4865
        %v4898 = vadd.f32 %v4701, %v4866
        %v4899 = vadd.f32 %v4702, %v4867
        %v4900 = vadd.f32 %v4703, %v4868
        %v4901 = vadd.f32 %v4704, %v4869
        %v4902 = vadd.f32 %v4705, %v4870
        %v4903 = vadd.f32 %v4706, %v4871
        %v4904 = vld [vmem:[%s4248 + $0x1] sm:$0xff]
        %v4905 = vld [vmem:[%s4248 + $0x9] sm:$0xff]
        %v4906 = vld [vmem:[%s4248 + $0x19] sm:$0xff]
        %v4907 = vld [vmem:[%s4248 + $0x21] sm:$0xff]
        %v4908 = vld [vmem:[%s4248 + $0x31] sm:$0xff]
        %v4909 = vld [vmem:[%s4248 + $0x39] sm:$0xff]
        %v4910 = vld [vmem:[%s4248 + $0x49] sm:$0xff]
        %v4911 = vld [vmem:[%s4248 + $0x51] sm:$0xff]
        %v4912 = vld [vmem:[%s4248 + $0x61] sm:$0xff]
        %v4913 = vld [vmem:[%s4248 + $0x69] sm:$0xff]
        %v4914 = vld [vmem:[%s4248 + $0x79] sm:$0xff]
        %v4915 = vld [vmem:[%s4248 + $0x81] sm:$0xff]
        %v4916 = vld [vmem:[%s4248 + $0x91] sm:$0xff]
        %v4917 = vld [vmem:[%s4248 + $0x99] sm:$0xff]
        %v4918 = vld [vmem:[%s4248 + $0xa9] sm:$0xff]
        %v4919 = vld [vmem:[%s4248 + $0xb1] sm:$0xff]
        %v4920 = vld [vmem:[%s4248 + $0xc1] sm:$0xff]
        %v4921 = vld [vmem:[%s4248 + $0xc9] sm:$0xff]
        %v4922 = vld [vmem:[%s4248 + $0xd9] sm:$0xff]
        %v4923 = vld [vmem:[%s4248 + $0xe1] sm:$0xff]
        %v4924 = vld [vmem:[%s4248 + $0xf1] sm:$0xff]
        %v4925 = vld [vmem:[%s4248 + $0xf9] sm:$0xff]
        %v4926 = vld [vmem:[%s4248 + $0x109] sm:$0xff]
        %v4927 = vld [vmem:[%s4248 + $0x111] sm:$0xff]
        %v4928 = vld [vmem:[%s4248 + $0x121] sm:$0xff]
        %v4929 = vld [vmem:[%s4248 + $0x129] sm:$0xff]
        %v4930 = vld [vmem:[%s4248 + $0x139] sm:$0xff]
        %v4931 = vld [vmem:[%s4248 + $0x141] sm:$0xff]
        %v4932 = vld [vmem:[%s4248 + $0x151] sm:$0xff]
        %v4933 = vld [vmem:[%s4248 + $0x159] sm:$0xff]
        %v4934 = vld [vmem:[%s4248 + $0x169] sm:$0xff]
        %v4935 = vld [vmem:[%s4248 + $0x171] sm:$0xff]
        %v4936 = vld [vmem:[%s3 + $0x15] sm:$0x1]
        %4938 = vset.pattern.permute.xlu0 0
        %4939 = vperm.xlu0 %4938, %v4904
        %v4940 = vpop.permute.xlu0 %4939
        %4943 = vset.pattern.permute.xlu0 0
        %4944 = vperm.xlu0 %4943, %v4905
        %v4945 = vpop.permute.xlu0 %4944
        %4948 = vset.pattern.permute.xlu0 0
        %4949 = vperm.xlu0 %4948, %v4906
        %v4950 = vpop.permute.xlu0 %4949
        %4953 = vset.pattern.permute.xlu0 0
        %4954 = vperm.xlu0 %4953, %v4907
        %v4955 = vpop.permute.xlu0 %4954
        %4958 = vset.pattern.permute.xlu0 0
        %4959 = vperm.xlu0 %4958, %v4908
        %v4960 = vpop.permute.xlu0 %4959
        %4963 = vset.pattern.permute.xlu0 0
        %4964 = vperm.xlu0 %4963, %v4909
        %v4965 = vpop.permute.xlu0 %4964
        %4968 = vset.pattern.permute.xlu0 0
        %4969 = vperm.xlu0 %4968, %v4910
        %v4970 = vpop.permute.xlu0 %4969
        %4973 = vset.pattern.permute.xlu0 0
        %4974 = vperm.xlu0 %4973, %v4911
        %v4975 = vpop.permute.xlu0 %4974
        %4978 = vset.pattern.permute.xlu0 0
        %4979 = vperm.xlu0 %4978, %v4912
        %v4980 = vpop.permute.xlu0 %4979
        %4983 = vset.pattern.permute.xlu0 0
        %4984 = vperm.xlu0 %4983, %v4913
        %v4985 = vpop.permute.xlu0 %4984
        %4988 = vset.pattern.permute.xlu0 0
        %4989 = vperm.xlu0 %4988, %v4914
        %v4990 = vpop.permute.xlu0 %4989
        %4993 = vset.pattern.permute.xlu0 0
        %4994 = vperm.xlu0 %4993, %v4915
        %v4995 = vpop.permute.xlu0 %4994
        %4998 = vset.pattern.permute.xlu0 0
        %4999 = vperm.xlu0 %4998, %v4916
        %v5000 = vpop.permute.xlu0 %4999
        %5003 = vset.pattern.permute.xlu0 0
        %5004 = vperm.xlu0 %5003, %v4917
        %v5005 = vpop.permute.xlu0 %5004
        %5008 = vset.pattern.permute.xlu0 0
        %5009 = vperm.xlu0 %5008, %v4918
        %v5010 = vpop.permute.xlu0 %5009
        %5013 = vset.pattern.permute.xlu0 0
        %5014 = vperm.xlu0 %5013, %v4919
        %v5015 = vpop.permute.xlu0 %5014
        %5018 = vset.pattern.permute.xlu0 0
        %5019 = vperm.xlu0 %5018, %v4920
        %v5020 = vpop.permute.xlu0 %5019
        %5023 = vset.pattern.permute.xlu0 0
        %5024 = vperm.xlu0 %5023, %v4921
        %v5025 = vpop.permute.xlu0 %5024
        %5028 = vset.pattern.permute.xlu0 0
        %5029 = vperm.xlu0 %5028, %v4922
        %v5030 = vpop.permute.xlu0 %5029
        %5033 = vset.pattern.permute.xlu0 0
        %5034 = vperm.xlu0 %5033, %v4923
        %v5035 = vpop.permute.xlu0 %5034
        %5038 = vset.pattern.permute.xlu0 0
        %5039 = vperm.xlu0 %5038, %v4924
        %v5040 = vpop.permute.xlu0 %5039
        %5043 = vset.pattern.permute.xlu0 0
        %5044 = vperm.xlu0 %5043, %v4925
        %v5045 = vpop.permute.xlu0 %5044
        %5048 = vset.pattern.permute.xlu0 0
        %5049 = vperm.xlu0 %5048, %v4926
        %v5050 = vpop.permute.xlu0 %5049
        %5053 = vset.pattern.permute.xlu0 0
        %5054 = vperm.xlu0 %5053, %v4927
        %v5055 = vpop.permute.xlu0 %5054
        %5058 = vset.pattern.permute.xlu0 0
        %5059 = vperm.xlu0 %5058, %v4928
        %v5060 = vpop.permute.xlu0 %5059
        %5063 = vset.pattern.permute.xlu0 0
        %5064 = vperm.xlu0 %5063, %v4929
        %v5065 = vpop.permute.xlu0 %5064
        %5068 = vset.pattern.permute.xlu0 0
        %5069 = vperm.xlu0 %5068, %v4930
        %v5070 = vpop.permute.xlu0 %5069
        %5073 = vset.pattern.permute.xlu0 0
        %5074 = vperm.xlu0 %5073, %v4931
        %v5075 = vpop.permute.xlu0 %5074
        %5078 = vset.pattern.permute.xlu0 0
        %5079 = vperm.xlu0 %5078, %v4932
        %v5080 = vpop.permute.xlu0 %5079
        %5083 = vset.pattern.permute.xlu0 0
        %5084 = vperm.xlu0 %5083, %v4933
        %v5085 = vpop.permute.xlu0 %5084
        %5088 = vset.pattern.permute.xlu0 0
        %5089 = vperm.xlu0 %5088, %v4934
        %v5090 = vpop.permute.xlu0 %5089
        %5093 = vset.pattern.permute.xlu0 0
        %5094 = vperm.xlu0 %5093, %v4935
        %v5095 = vpop.permute.xlu0 %5094
        %v5097 = vlaneseq
        %v5098 = vshrl.u32 %v5097, 7
        %v5099 = vsub.s32 0, %v5098
        %v5100 = vrot.slane %v4936, %v5099
        %v5101 = vmul.f32 %v4940, %v5100
        %v5102 = vmul.f32 %v4945, %v5100
        %v5103 = vmul.f32 %v4950, %v5100
        %v5104 = vmul.f32 %v4955, %v5100
        %v5105 = vmul.f32 %v4960, %v5100
        %v5106 = vmul.f32 %v4965, %v5100
        %v5107 = vmul.f32 %v4970, %v5100
        %v5108 = vmul.f32 %v4975, %v5100
        %v5109 = vmul.f32 %v4980, %v5100
        %v5110 = vmul.f32 %v4985, %v5100
        %v5111 = vmul.f32 %v4990, %v5100
        %v5112 = vmul.f32 %v4995, %v5100
        %v5113 = vmul.f32 %v5000, %v5100
        %v5114 = vmul.f32 %v5005, %v5100
        %v5115 = vmul.f32 %v5010, %v5100
        %v5116 = vmul.f32 %v5015, %v5100
        %v5117 = vmul.f32 %v5020, %v5100
        %v5118 = vmul.f32 %v5025, %v5100
        %v5119 = vmul.f32 %v5030, %v5100
        %v5120 = vmul.f32 %v5035, %v5100
        %v5121 = vmul.f32 %v5040, %v5100
        %v5122 = vmul.f32 %v5045, %v5100
        %v5123 = vmul.f32 %v5050, %v5100
        %v5124 = vmul.f32 %v5055, %v5100
        %v5125 = vmul.f32 %v5060, %v5100
        %v5126 = vmul.f32 %v5065, %v5100
        %v5127 = vmul.f32 %v5070, %v5100
        %v5128 = vmul.f32 %v5075, %v5100
        %v5129 = vmul.f32 %v5080, %v5100
        %v5130 = vmul.f32 %v5085, %v5100
        %v5131 = vmul.f32 %v5090, %v5100
        %v5132 = vmul.f32 %v5095, %v5100
        %v5133 = vadd.f32 %v4872, %v5101
        %v5134 = vadd.f32 %v4873, %v5102
        %v5135 = vadd.f32 %v4874, %v5103
        %v5136 = vadd.f32 %v4875, %v5104
        %v5137 = vadd.f32 %v4876, %v5105
        %v5138 = vadd.f32 %v4877, %v5106
        %v5139 = vadd.f32 %v4878, %v5107
        %v5140 = vadd.f32 %v4879, %v5108
        %v5141 = vadd.f32 %v4880, %v5109
        %v5142 = vadd.f32 %v4881, %v5110
        %v5143 = vadd.f32 %v4882, %v5111
        %v5144 = vadd.f32 %v4883, %v5112
        %v5145 = vadd.f32 %v4884, %v5113
        %v5146 = vadd.f32 %v4885, %v5114
        %v5147 = vadd.f32 %v4886, %v5115
        %v5148 = vadd.f32 %v4887, %v5116
        %v5149 = vadd.f32 %v4888, %v5117
        %v5150 = vadd.f32 %v4889, %v5118
        %v5151 = vadd.f32 %v4890, %v5119
        %v5152 = vadd.f32 %v4891, %v5120
        %v5153 = vadd.f32 %v4892, %v5121
        %v5154 = vadd.f32 %v4893, %v5122
        %v5155 = vadd.f32 %v4894, %v5123
        %v5156 = vadd.f32 %v4895, %v5124
        %v5157 = vadd.f32 %v4896, %v5125
        %v5158 = vadd.f32 %v4897, %v5126
        %v5159 = vadd.f32 %v4898, %v5127
        %v5160 = vadd.f32 %v4899, %v5128
        %v5161 = vadd.f32 %v4900, %v5129
        %v5162 = vadd.f32 %v4901, %v5130
        %v5163 = vadd.f32 %v4902, %v5131
        %v5164 = vadd.f32 %v4903, %v5132
        %v5165 = vld [vmem:[%s3 + $0x16] sm:$0x1]
        %5166 = vset.pattern.permute.xlu0 1
        %5167 = vperm.xlu0 %5166, %v4904
        %v5168 = vpop.permute.xlu0 %5167
        %5170 = vset.pattern.permute.xlu0 1
        %5171 = vperm.xlu0 %5170, %v4905
        %v5172 = vpop.permute.xlu0 %5171
        %5174 = vset.pattern.permute.xlu0 1
        %5175 = vperm.xlu0 %5174, %v4906
        %v5176 = vpop.permute.xlu0 %5175
        %5178 = vset.pattern.permute.xlu0 1
        %5179 = vperm.xlu0 %5178, %v4907
        %v5180 = vpop.permute.xlu0 %5179
        %5182 = vset.pattern.permute.xlu0 1
        %5183 = vperm.xlu0 %5182, %v4908
        %v5184 = vpop.permute.xlu0 %5183
        %5186 = vset.pattern.permute.xlu0 1
        %5187 = vperm.xlu0 %5186, %v4909
        %v5188 = vpop.permute.xlu0 %5187
        %5190 = vset.pattern.permute.xlu0 1
        %5191 = vperm.xlu0 %5190, %v4910
        %v5192 = vpop.permute.xlu0 %5191
        %5194 = vset.pattern.permute.xlu0 1
        %5195 = vperm.xlu0 %5194, %v4911
        %v5196 = vpop.permute.xlu0 %5195
        %5198 = vset.pattern.permute.xlu0 1
        %5199 = vperm.xlu0 %5198, %v4912
        %v5200 = vpop.permute.xlu0 %5199
        %5202 = vset.pattern.permute.xlu0 1
        %5203 = vperm.xlu0 %5202, %v4913
        %v5204 = vpop.permute.xlu0 %5203
        %5206 = vset.pattern.permute.xlu0 1
        %5207 = vperm.xlu0 %5206, %v4914
        %v5208 = vpop.permute.xlu0 %5207
        %5210 = vset.pattern.permute.xlu0 1
        %5211 = vperm.xlu0 %5210, %v4915
        %v5212 = vpop.permute.xlu0 %5211
        %5214 = vset.pattern.permute.xlu0 1
        %5215 = vperm.xlu0 %5214, %v4916
        %v5216 = vpop.permute.xlu0 %5215
        %5218 = vset.pattern.permute.xlu0 1
        %5219 = vperm.xlu0 %5218, %v4917
        %v5220 = vpop.permute.xlu0 %5219
        %5222 = vset.pattern.permute.xlu0 1
        %5223 = vperm.xlu0 %5222, %v4918
        %v5224 = vpop.permute.xlu0 %5223
        %5226 = vset.pattern.permute.xlu0 1
        %5227 = vperm.xlu0 %5226, %v4919
        %v5228 = vpop.permute.xlu0 %5227
        %5230 = vset.pattern.permute.xlu0 1
        %5231 = vperm.xlu0 %5230, %v4920
        %v5232 = vpop.permute.xlu0 %5231
        %5234 = vset.pattern.permute.xlu0 1
        %5235 = vperm.xlu0 %5234, %v4921
        %v5236 = vpop.permute.xlu0 %5235
        %5238 = vset.pattern.permute.xlu0 1
        %5239 = vperm.xlu0 %5238, %v4922
        %v5240 = vpop.permute.xlu0 %5239
        %5242 = vset.pattern.permute.xlu0 1
        %5243 = vperm.xlu0 %5242, %v4923
        %v5244 = vpop.permute.xlu0 %5243
        %5246 = vset.pattern.permute.xlu0 1
        %5247 = vperm.xlu0 %5246, %v4924
        %v5248 = vpop.permute.xlu0 %5247
        %5250 = vset.pattern.permute.xlu0 1
        %5251 = vperm.xlu0 %5250, %v4925
        %v5252 = vpop.permute.xlu0 %5251
        %5254 = vset.pattern.permute.xlu0 1
        %5255 = vperm.xlu0 %5254, %v4926
        %v5256 = vpop.permute.xlu0 %5255
        %5258 = vset.pattern.permute.xlu0 1
        %5259 = vperm.xlu0 %5258, %v4927
        %v5260 = vpop.permute.xlu0 %5259
        %5262 = vset.pattern.permute.xlu0 1
        %5263 = vperm.xlu0 %5262, %v4928
        %v5264 = vpop.permute.xlu0 %5263
        %5266 = vset.pattern.permute.xlu0 1
        %5267 = vperm.xlu0 %5266, %v4929
        %v5268 = vpop.permute.xlu0 %5267
        %5270 = vset.pattern.permute.xlu0 1
        %5271 = vperm.xlu0 %5270, %v4930
        %v5272 = vpop.permute.xlu0 %5271
        %5274 = vset.pattern.permute.xlu0 1
        %5275 = vperm.xlu0 %5274, %v4931
        %v5276 = vpop.permute.xlu0 %5275
        %5278 = vset.pattern.permute.xlu0 1
        %5279 = vperm.xlu0 %5278, %v4932
        %v5280 = vpop.permute.xlu0 %5279
        %5282 = vset.pattern.permute.xlu0 1
        %5283 = vperm.xlu0 %5282, %v4933
        %v5284 = vpop.permute.xlu0 %5283
        %5286 = vset.pattern.permute.xlu0 1
        %5287 = vperm.xlu0 %5286, %v4934
        %v5288 = vpop.permute.xlu0 %5287
        %5290 = vset.pattern.permute.xlu0 1
        %5291 = vperm.xlu0 %5290, %v4935
        %v5292 = vpop.permute.xlu0 %5291
        %v5294 = vlaneseq
        %v5295 = vshrl.u32 %v5294, 7
        %v5296 = vsub.s32 0, %v5295
        %v5297 = vrot.slane %v5165, %v5296
        %v5298 = vmul.f32 %v5168, %v5297
        %v5299 = vmul.f32 %v5172, %v5297
        %v5300 = vmul.f32 %v5176, %v5297
        %v5301 = vmul.f32 %v5180, %v5297
        %v5302 = vmul.f32 %v5184, %v5297
        %v5303 = vmul.f32 %v5188, %v5297
        %v5304 = vmul.f32 %v5192, %v5297
        %v5305 = vmul.f32 %v5196, %v5297
        %v5306 = vmul.f32 %v5200, %v5297
        %v5307 = vmul.f32 %v5204, %v5297
        %v5308 = vmul.f32 %v5208, %v5297
        %v5309 = vmul.f32 %v5212, %v5297
        %v5310 = vmul.f32 %v5216, %v5297
        %v5311 = vmul.f32 %v5220, %v5297
        %v5312 = vmul.f32 %v5224, %v5297
        %v5313 = vmul.f32 %v5228, %v5297
        %v5314 = vmul.f32 %v5232, %v5297
        %v5315 = vmul.f32 %v5236, %v5297
        %v5316 = vmul.f32 %v5240, %v5297
        %v5317 = vmul.f32 %v5244, %v5297
        %v5318 = vmul.f32 %v5248, %v5297
        %v5319 = vmul.f32 %v5252, %v5297
        %v5320 = vmul.f32 %v5256, %v5297
        %v5321 = vmul.f32 %v5260, %v5297
        %v5322 = vmul.f32 %v5264, %v5297
        %v5323 = vmul.f32 %v5268, %v5297
        %v5324 = vmul.f32 %v5272, %v5297
        %v5325 = vmul.f32 %v5276, %v5297
        %v5326 = vmul.f32 %v5280, %v5297
        %v5327 = vmul.f32 %v5284, %v5297
        %v5328 = vmul.f32 %v5288, %v5297
        %v5329 = vmul.f32 %v5292, %v5297
        %v5330 = vadd.f32 %v5133, %v5298
        %v5331 = vadd.f32 %v5134, %v5299
        %v5332 = vadd.f32 %v5135, %v5300
        %v5333 = vadd.f32 %v5136, %v5301
        %v5334 = vadd.f32 %v5137, %v5302
        %v5335 = vadd.f32 %v5138, %v5303
        %v5336 = vadd.f32 %v5139, %v5304
        %v5337 = vadd.f32 %v5140, %v5305
        %v5338 = vadd.f32 %v5141, %v5306
        %v5339 = vadd.f32 %v5142, %v5307
        %v5340 = vadd.f32 %v5143, %v5308
        %v5341 = vadd.f32 %v5144, %v5309
        %v5342 = vadd.f32 %v5145, %v5310
        %v5343 = vadd.f32 %v5146, %v5311
        %v5344 = vadd.f32 %v5147, %v5312
        %v5345 = vadd.f32 %v5148, %v5313
        %v5346 = vadd.f32 %v5149, %v5314
        %v5347 = vadd.f32 %v5150, %v5315
        %v5348 = vadd.f32 %v5151, %v5316
        %v5349 = vadd.f32 %v5152, %v5317
        %v5350 = vadd.f32 %v5153, %v5318
        %v5351 = vadd.f32 %v5154, %v5319
        %v5352 = vadd.f32 %v5155, %v5320
        %v5353 = vadd.f32 %v5156, %v5321
        %v5354 = vadd.f32 %v5157, %v5322
        %v5355 = vadd.f32 %v5158, %v5323
        %v5356 = vadd.f32 %v5159, %v5324
        %v5357 = vadd.f32 %v5160, %v5325
        %v5358 = vadd.f32 %v5161, %v5326
        %v5359 = vadd.f32 %v5162, %v5327
        %v5360 = vadd.f32 %v5163, %v5328
        %v5361 = vadd.f32 %v5164, %v5329
        %v5362 = vld [vmem:[%s3 + $0x17] sm:$0x1]
        %5363 = vset.pattern.permute.xlu0 2
        %5364 = vperm.xlu0 %5363, %v4904
        %v5365 = vpop.permute.xlu0 %5364
        %5367 = vset.pattern.permute.xlu0 2
        %5368 = vperm.xlu0 %5367, %v4905
        %v5369 = vpop.permute.xlu0 %5368
        %5371 = vset.pattern.permute.xlu0 2
        %5372 = vperm.xlu0 %5371, %v4906
        %v5373 = vpop.permute.xlu0 %5372
        %5375 = vset.pattern.permute.xlu0 2
        %5376 = vperm.xlu0 %5375, %v4907
        %v5377 = vpop.permute.xlu0 %5376
        %5379 = vset.pattern.permute.xlu0 2
        %5380 = vperm.xlu0 %5379, %v4908
        %v5381 = vpop.permute.xlu0 %5380
        %5383 = vset.pattern.permute.xlu0 2
        %5384 = vperm.xlu0 %5383, %v4909
        %v5385 = vpop.permute.xlu0 %5384
        %5387 = vset.pattern.permute.xlu0 2
        %5388 = vperm.xlu0 %5387, %v4910
        %v5389 = vpop.permute.xlu0 %5388
        %5391 = vset.pattern.permute.xlu0 2
        %5392 = vperm.xlu0 %5391, %v4911
        %v5393 = vpop.permute.xlu0 %5392
        %5395 = vset.pattern.permute.xlu0 2
        %5396 = vperm.xlu0 %5395, %v4912
        %v5397 = vpop.permute.xlu0 %5396
        %5399 = vset.pattern.permute.xlu0 2
        %5400 = vperm.xlu0 %5399, %v4913
        %v5401 = vpop.permute.xlu0 %5400
        %5403 = vset.pattern.permute.xlu0 2
        %5404 = vperm.xlu0 %5403, %v4914
        %v5405 = vpop.permute.xlu0 %5404
        %5407 = vset.pattern.permute.xlu0 2
        %5408 = vperm.xlu0 %5407, %v4915
        %v5409 = vpop.permute.xlu0 %5408
        %5411 = vset.pattern.permute.xlu0 2
        %5412 = vperm.xlu0 %5411, %v4916
        %v5413 = vpop.permute.xlu0 %5412
        %5415 = vset.pattern.permute.xlu0 2
        %5416 = vperm.xlu0 %5415, %v4917
        %v5417 = vpop.permute.xlu0 %5416
        %5419 = vset.pattern.permute.xlu0 2
        %5420 = vperm.xlu0 %5419, %v4918
        %v5421 = vpop.permute.xlu0 %5420
        %5423 = vset.pattern.permute.xlu0 2
        %5424 = vperm.xlu0 %5423, %v4919
        %v5425 = vpop.permute.xlu0 %5424
        %5427 = vset.pattern.permute.xlu0 2
        %5428 = vperm.xlu0 %5427, %v4920
        %v5429 = vpop.permute.xlu0 %5428
        %5431 = vset.pattern.permute.xlu0 2
        %5432 = vperm.xlu0 %5431, %v4921
        %v5433 = vpop.permute.xlu0 %5432
        %5435 = vset.pattern.permute.xlu0 2
        %5436 = vperm.xlu0 %5435, %v4922
        %v5437 = vpop.permute.xlu0 %5436
        %5439 = vset.pattern.permute.xlu0 2
        %5440 = vperm.xlu0 %5439, %v4923
        %v5441 = vpop.permute.xlu0 %5440
        %5443 = vset.pattern.permute.xlu0 2
        %5444 = vperm.xlu0 %5443, %v4924
        %v5445 = vpop.permute.xlu0 %5444
        %5447 = vset.pattern.permute.xlu0 2
        %5448 = vperm.xlu0 %5447, %v4925
        %v5449 = vpop.permute.xlu0 %5448
        %5451 = vset.pattern.permute.xlu0 2
        %5452 = vperm.xlu0 %5451, %v4926
        %v5453 = vpop.permute.xlu0 %5452
        %5455 = vset.pattern.permute.xlu0 2
        %5456 = vperm.xlu0 %5455, %v4927
        %v5457 = vpop.permute.xlu0 %5456
        %5459 = vset.pattern.permute.xlu0 2
        %5460 = vperm.xlu0 %5459, %v4928
        %v5461 = vpop.permute.xlu0 %5460
        %5463 = vset.pattern.permute.xlu0 2
        %5464 = vperm.xlu0 %5463, %v4929
        %v5465 = vpop.permute.xlu0 %5464
        %5467 = vset.pattern.permute.xlu0 2
        %5468 = vperm.xlu0 %5467, %v4930
        %v5469 = vpop.permute.xlu0 %5468
        %5471 = vset.pattern.permute.xlu0 2
        %5472 = vperm.xlu0 %5471, %v4931
        %v5473 = vpop.permute.xlu0 %5472
        %5475 = vset.pattern.permute.xlu0 2
        %5476 = vperm.xlu0 %5475, %v4932
        %v5477 = vpop.permute.xlu0 %5476
        %5479 = vset.pattern.permute.xlu0 2
        %5480 = vperm.xlu0 %5479, %v4933
        %v5481 = vpop.permute.xlu0 %5480
        %5483 = vset.pattern.permute.xlu0 2
        %5484 = vperm.xlu0 %5483, %v4934
        %v5485 = vpop.permute.xlu0 %5484
        %5487 = vset.pattern.permute.xlu0 2
        %5488 = vperm.xlu0 %5487, %v4935
        %v5489 = vpop.permute.xlu0 %5488
        %v5491 = vlaneseq
        %v5492 = vshrl.u32 %v5491, 7
        %v5493 = vsub.s32 0, %v5492
        %v5494 = vrot.slane %v5362, %v5493
        %v5495 = vmul.f32 %v5365, %v5494
        %v5496 = vmul.f32 %v5369, %v5494
        %v5497 = vmul.f32 %v5373, %v5494
        %v5498 = vmul.f32 %v5377, %v5494
        %v5499 = vmul.f32 %v5381, %v5494
        %v5500 = vmul.f32 %v5385, %v5494
        %v5501 = vmul.f32 %v5389, %v5494
        %v5502 = vmul.f32 %v5393, %v5494
        %v5503 = vmul.f32 %v5397, %v5494
        %v5504 = vmul.f32 %v5401, %v5494
        %v5505 = vmul.f32 %v5405, %v5494
        %v5506 = vmul.f32 %v5409, %v5494
        %v5507 = vmul.f32 %v5413, %v5494
        %v5508 = vmul.f32 %v5417, %v5494
        %v5509 = vmul.f32 %v5421, %v5494
        %v5510 = vmul.f32 %v5425, %v5494
        %v5511 = vmul.f32 %v5429, %v5494
        %v5512 = vmul.f32 %v5433, %v5494
        %v5513 = vmul.f32 %v5437, %v5494
        %v5514 = vmul.f32 %v5441, %v5494
        %v5515 = vmul.f32 %v5445, %v5494
        %v5516 = vmul.f32 %v5449, %v5494
        %v5517 = vmul.f32 %v5453, %v5494
        %v5518 = vmul.f32 %v5457, %v5494
        %v5519 = vmul.f32 %v5461, %v5494
        %v5520 = vmul.f32 %v5465, %v5494
        %v5521 = vmul.f32 %v5469, %v5494
        %v5522 = vmul.f32 %v5473, %v5494
        %v5523 = vmul.f32 %v5477, %v5494
        %v5524 = vmul.f32 %v5481, %v5494
        %v5525 = vmul.f32 %v5485, %v5494
        %v5526 = vmul.f32 %v5489, %v5494
        %v5527 = vadd.f32 %v5330, %v5495
        %v5528 = vadd.f32 %v5331, %v5496
        %v5529 = vadd.f32 %v5332, %v5497
        %v5530 = vadd.f32 %v5333, %v5498
        %v5531 = vadd.f32 %v5334, %v5499
        %v5532 = vadd.f32 %v5335, %v5500
        %v5533 = vadd.f32 %v5336, %v5501
        %v5534 = vadd.f32 %v5337, %v5502
        %v5535 = vadd.f32 %v5338, %v5503
        %v5536 = vadd.f32 %v5339, %v5504
        %v5537 = vadd.f32 %v5340, %v5505
        %v5538 = vadd.f32 %v5341, %v5506
        %v5539 = vadd.f32 %v5342, %v5507
        %v5540 = vadd.f32 %v5343, %v5508
        %v5541 = vadd.f32 %v5344, %v5509
        %v5542 = vadd.f32 %v5345, %v5510
        %v5543 = vadd.f32 %v5346, %v5511
        %v5544 = vadd.f32 %v5347, %v5512
        %v5545 = vadd.f32 %v5348, %v5513
        %v5546 = vadd.f32 %v5349, %v5514
        %v5547 = vadd.f32 %v5350, %v5515
        %v5548 = vadd.f32 %v5351, %v5516
        %v5549 = vadd.f32 %v5352, %v5517
        %v5550 = vadd.f32 %v5353, %v5518
        %v5551 = vadd.f32 %v5354, %v5519
        %v5552 = vadd.f32 %v5355, %v5520
        %v5553 = vadd.f32 %v5356, %v5521
        %v5554 = vadd.f32 %v5357, %v5522
        %v5555 = vadd.f32 %v5358, %v5523
        %v5556 = vadd.f32 %v5359, %v5524
        %v5557 = vadd.f32 %v5360, %v5525
        %v5558 = vadd.f32 %v5361, %v5526
        %v5559 = vld [vmem:[%s4248 + $0x2] sm:$0xff]
        %v5560 = vld [vmem:[%s4248 + $0xa] sm:$0xff]
        %v5561 = vld [vmem:[%s4248 + $0x1a] sm:$0xff]
        %v5562 = vld [vmem:[%s4248 + $0x22] sm:$0xff]
        %v5563 = vld [vmem:[%s4248 + $0x32] sm:$0xff]
        %v5564 = vld [vmem:[%s4248 + $0x3a] sm:$0xff]
        %v5565 = vld [vmem:[%s4248 + $0x4a] sm:$0xff]
        %v5566 = vld [vmem:[%s4248 + $0x52] sm:$0xff]
        %v5567 = vld [vmem:[%s4248 + $0x62] sm:$0xff]
        %v5568 = vld [vmem:[%s4248 + $0x6a] sm:$0xff]
        %v5569 = vld [vmem:[%s4248 + $0x7a] sm:$0xff]
        %v5570 = vld [vmem:[%s4248 + $0x82] sm:$0xff]
        %v5571 = vld [vmem:[%s4248 + $0x92] sm:$0xff]
        %v5572 = vld [vmem:[%s4248 + $0x9a] sm:$0xff]
        %v5573 = vld [vmem:[%s4248 + $0xaa] sm:$0xff]
        %v5574 = vld [vmem:[%s4248 + $0xb2] sm:$0xff]
        %v5575 = vld [vmem:[%s4248 + $0xc2] sm:$0xff]
        %v5576 = vld [vmem:[%s4248 + $0xca] sm:$0xff]
        %v5577 = vld [vmem:[%s4248 + $0xda] sm:$0xff]
        %v5578 = vld [vmem:[%s4248 + $0xe2] sm:$0xff]
        %v5579 = vld [vmem:[%s4248 + $0xf2] sm:$0xff]
        %v5580 = vld [vmem:[%s4248 + $0xfa] sm:$0xff]
        %v5581 = vld [vmem:[%s4248 + $0x10a] sm:$0xff]
        %v5582 = vld [vmem:[%s4248 + $0x112] sm:$0xff]
        %v5583 = vld [vmem:[%s4248 + $0x122] sm:$0xff]
        %v5584 = vld [vmem:[%s4248 + $0x12a] sm:$0xff]
        %v5585 = vld [vmem:[%s4248 + $0x13a] sm:$0xff]
        %v5586 = vld [vmem:[%s4248 + $0x142] sm:$0xff]
        %v5587 = vld [vmem:[%s4248 + $0x152] sm:$0xff]
        %v5588 = vld [vmem:[%s4248 + $0x15a] sm:$0xff]
        %v5589 = vld [vmem:[%s4248 + $0x16a] sm:$0xff]
        %v5590 = vld [vmem:[%s4248 + $0x172] sm:$0xff]
        %v5591 = vld [vmem:[%s3 + $0x18] sm:$0x1]
        %5593 = vset.pattern.permute.xlu0 0
        %5594 = vperm.xlu0 %5593, %v5559
        %v5595 = vpop.permute.xlu0 %5594
        %5598 = vset.pattern.permute.xlu0 0
        %5599 = vperm.xlu0 %5598, %v5560
        %v5600 = vpop.permute.xlu0 %5599
        %5603 = vset.pattern.permute.xlu0 0
        %5604 = vperm.xlu0 %5603, %v5561
        %v5605 = vpop.permute.xlu0 %5604
        %5608 = vset.pattern.permute.xlu0 0
        %5609 = vperm.xlu0 %5608, %v5562
        %v5610 = vpop.permute.xlu0 %5609
        %5613 = vset.pattern.permute.xlu0 0
        %5614 = vperm.xlu0 %5613, %v5563
        %v5615 = vpop.permute.xlu0 %5614
        %5618 = vset.pattern.permute.xlu0 0
        %5619 = vperm.xlu0 %5618, %v5564
        %v5620 = vpop.permute.xlu0 %5619
        %5623 = vset.pattern.permute.xlu0 0
        %5624 = vperm.xlu0 %5623, %v5565
        %v5625 = vpop.permute.xlu0 %5624
        %5628 = vset.pattern.permute.xlu0 0
        %5629 = vperm.xlu0 %5628, %v5566
        %v5630 = vpop.permute.xlu0 %5629
        %5633 = vset.pattern.permute.xlu0 0
        %5634 = vperm.xlu0 %5633, %v5567
        %v5635 = vpop.permute.xlu0 %5634
        %5638 = vset.pattern.permute.xlu0 0
        %5639 = vperm.xlu0 %5638, %v5568
        %v5640 = vpop.permute.xlu0 %5639
        %5643 = vset.pattern.permute.xlu0 0
        %5644 = vperm.xlu0 %5643, %v5569
        %v5645 = vpop.permute.xlu0 %5644
        %5648 = vset.pattern.permute.xlu0 0
        %5649 = vperm.xlu0 %5648, %v5570
        %v5650 = vpop.permute.xlu0 %5649
        %5653 = vset.pattern.permute.xlu0 0
        %5654 = vperm.xlu0 %5653, %v5571
        %v5655 = vpop.permute.xlu0 %5654
        %5658 = vset.pattern.permute.xlu0 0
        %5659 = vperm.xlu0 %5658, %v5572
        %v5660 = vpop.permute.xlu0 %5659
        %5663 = vset.pattern.permute.xlu0 0
        %5664 = vperm.xlu0 %5663, %v5573
        %v5665 = vpop.permute.xlu0 %5664
        %5668 = vset.pattern.permute.xlu0 0
        %5669 = vperm.xlu0 %5668, %v5574
        %v5670 = vpop.permute.xlu0 %5669
        %5673 = vset.pattern.permute.xlu0 0
        %5674 = vperm.xlu0 %5673, %v5575
        %v5675 = vpop.permute.xlu0 %5674
        %5678 = vset.pattern.permute.xlu0 0
        %5679 = vperm.xlu0 %5678, %v5576
        %v5680 = vpop.permute.xlu0 %5679
        %5683 = vset.pattern.permute.xlu0 0
        %5684 = vperm.xlu0 %5683, %v5577
        %v5685 = vpop.permute.xlu0 %5684
        %5688 = vset.pattern.permute.xlu0 0
        %5689 = vperm.xlu0 %5688, %v5578
        %v5690 = vpop.permute.xlu0 %5689
        %5693 = vset.pattern.permute.xlu0 0
        %5694 = vperm.xlu0 %5693, %v5579
        %v5695 = vpop.permute.xlu0 %5694
        %5698 = vset.pattern.permute.xlu0 0
        %5699 = vperm.xlu0 %5698, %v5580
        %v5700 = vpop.permute.xlu0 %5699
        %5703 = vset.pattern.permute.xlu0 0
        %5704 = vperm.xlu0 %5703, %v5581
        %v5705 = vpop.permute.xlu0 %5704
        %5708 = vset.pattern.permute.xlu0 0
        %5709 = vperm.xlu0 %5708, %v5582
        %v5710 = vpop.permute.xlu0 %5709
        %5713 = vset.pattern.permute.xlu0 0
        %5714 = vperm.xlu0 %5713, %v5583
        %v5715 = vpop.permute.xlu0 %5714
        %5718 = vset.pattern.permute.xlu0 0
        %5719 = vperm.xlu0 %5718, %v5584
        %v5720 = vpop.permute.xlu0 %5719
        %5723 = vset.pattern.permute.xlu0 0
        %5724 = vperm.xlu0 %5723, %v5585
        %v5725 = vpop.permute.xlu0 %5724
        %5728 = vset.pattern.permute.xlu0 0
        %5729 = vperm.xlu0 %5728, %v5586
        %v5730 = vpop.permute.xlu0 %5729
        %5733 = vset.pattern.permute.xlu0 0
        %5734 = vperm.xlu0 %5733, %v5587
        %v5735 = vpop.permute.xlu0 %5734
        %5738 = vset.pattern.permute.xlu0 0
        %5739 = vperm.xlu0 %5738, %v5588
        %v5740 = vpop.permute.xlu0 %5739
        %5743 = vset.pattern.permute.xlu0 0
        %5744 = vperm.xlu0 %5743, %v5589
        %v5745 = vpop.permute.xlu0 %5744
        %5748 = vset.pattern.permute.xlu0 0
        %5749 = vperm.xlu0 %5748, %v5590
        %v5750 = vpop.permute.xlu0 %5749
        %v5752 = vlaneseq
        %v5753 = vshrl.u32 %v5752, 7
        %v5754 = vsub.s32 0, %v5753
        %v5755 = vrot.slane %v5591, %v5754
        %v5756 = vmul.f32 %v5595, %v5755
        %v5757 = vmul.f32 %v5600, %v5755
        %v5758 = vmul.f32 %v5605, %v5755
        %v5759 = vmul.f32 %v5610, %v5755
        %v5760 = vmul.f32 %v5615, %v5755
        %v5761 = vmul.f32 %v5620, %v5755
        %v5762 = vmul.f32 %v5625, %v5755
        %v5763 = vmul.f32 %v5630, %v5755
        %v5764 = vmul.f32 %v5635, %v5755
        %v5765 = vmul.f32 %v5640, %v5755
        %v5766 = vmul.f32 %v5645, %v5755
        %v5767 = vmul.f32 %v5650, %v5755
        %v5768 = vmul.f32 %v5655, %v5755
        %v5769 = vmul.f32 %v5660, %v5755
        %v5770 = vmul.f32 %v5665, %v5755
        %v5771 = vmul.f32 %v5670, %v5755
        %v5772 = vmul.f32 %v5675, %v5755
        %v5773 = vmul.f32 %v5680, %v5755
        %v5774 = vmul.f32 %v5685, %v5755
        %v5775 = vmul.f32 %v5690, %v5755
        %v5776 = vmul.f32 %v5695, %v5755
        %v5777 = vmul.f32 %v5700, %v5755
        %v5778 = vmul.f32 %v5705, %v5755
        %v5779 = vmul.f32 %v5710, %v5755
        %v5780 = vmul.f32 %v5715, %v5755
        %v5781 = vmul.f32 %v5720, %v5755
        %v5782 = vmul.f32 %v5725, %v5755
        %v5783 = vmul.f32 %v5730, %v5755
        %v5784 = vmul.f32 %v5735, %v5755
        %v5785 = vmul.f32 %v5740, %v5755
        %v5786 = vmul.f32 %v5745, %v5755
        %v5787 = vmul.f32 %v5750, %v5755
        %v5788 = vadd.f32 %v5527, %v5756
        %v5789 = vadd.f32 %v5528, %v5757
        %v5790 = vadd.f32 %v5529, %v5758
        %v5791 = vadd.f32 %v5530, %v5759
        %v5792 = vadd.f32 %v5531, %v5760
        %v5793 = vadd.f32 %v5532, %v5761
        %v5794 = vadd.f32 %v5533, %v5762
        %v5795 = vadd.f32 %v5534, %v5763
        %v5796 = vadd.f32 %v5535, %v5764
        %v5797 = vadd.f32 %v5536, %v5765
        %v5798 = vadd.f32 %v5537, %v5766
        %v5799 = vadd.f32 %v5538, %v5767
        %v5800 = vadd.f32 %v5539, %v5768
        %v5801 = vadd.f32 %v5540, %v5769
        %v5802 = vadd.f32 %v5541, %v5770
        %v5803 = vadd.f32 %v5542, %v5771
        %v5804 = vadd.f32 %v5543, %v5772
        %v5805 = vadd.f32 %v5544, %v5773
        %v5806 = vadd.f32 %v5545, %v5774
        %v5807 = vadd.f32 %v5546, %v5775
        %v5808 = vadd.f32 %v5547, %v5776
        %v5809 = vadd.f32 %v5548, %v5777
        %v5810 = vadd.f32 %v5549, %v5778
        %v5811 = vadd.f32 %v5550, %v5779
        %v5812 = vadd.f32 %v5551, %v5780
        %v5813 = vadd.f32 %v5552, %v5781
        %v5814 = vadd.f32 %v5553, %v5782
        %v5815 = vadd.f32 %v5554, %v5783
        %v5816 = vadd.f32 %v5555, %v5784
        %v5817 = vadd.f32 %v5556, %v5785
        %v5818 = vadd.f32 %v5557, %v5786
        %v5819 = vadd.f32 %v5558, %v5787
        %v5820 = vld [vmem:[%s3 + $0x19] sm:$0x1]
        %5821 = vset.pattern.permute.xlu0 1
        %5822 = vperm.xlu0 %5821, %v5559
        %v5823 = vpop.permute.xlu0 %5822
        %5825 = vset.pattern.permute.xlu0 1
        %5826 = vperm.xlu0 %5825, %v5560
        %v5827 = vpop.permute.xlu0 %5826
        %5829 = vset.pattern.permute.xlu0 1
        %5830 = vperm.xlu0 %5829, %v5561
        %v5831 = vpop.permute.xlu0 %5830
        %5833 = vset.pattern.permute.xlu0 1
        %5834 = vperm.xlu0 %5833, %v5562
        %v5835 = vpop.permute.xlu0 %5834
        %5837 = vset.pattern.permute.xlu0 1
        %5838 = vperm.xlu0 %5837, %v5563
        %v5839 = vpop.permute.xlu0 %5838
        %5841 = vset.pattern.permute.xlu0 1
        %5842 = vperm.xlu0 %5841, %v5564
        %v5843 = vpop.permute.xlu0 %5842
        %5845 = vset.pattern.permute.xlu0 1
        %5846 = vperm.xlu0 %5845, %v5565
        %v5847 = vpop.permute.xlu0 %5846
        %5849 = vset.pattern.permute.xlu0 1
        %5850 = vperm.xlu0 %5849, %v5566
        %v5851 = vpop.permute.xlu0 %5850
        %5853 = vset.pattern.permute.xlu0 1
        %5854 = vperm.xlu0 %5853, %v5567
        %v5855 = vpop.permute.xlu0 %5854
        %5857 = vset.pattern.permute.xlu0 1
        %5858 = vperm.xlu0 %5857, %v5568
        %v5859 = vpop.permute.xlu0 %5858
        %5861 = vset.pattern.permute.xlu0 1
        %5862 = vperm.xlu0 %5861, %v5569
        %v5863 = vpop.permute.xlu0 %5862
        %5865 = vset.pattern.permute.xlu0 1
        %5866 = vperm.xlu0 %5865, %v5570
        %v5867 = vpop.permute.xlu0 %5866
        %5869 = vset.pattern.permute.xlu0 1
        %5870 = vperm.xlu0 %5869, %v5571
        %v5871 = vpop.permute.xlu0 %5870
        %5873 = vset.pattern.permute.xlu0 1
        %5874 = vperm.xlu0 %5873, %v5572
        %v5875 = vpop.permute.xlu0 %5874
        %5877 = vset.pattern.permute.xlu0 1
        %5878 = vperm.xlu0 %5877, %v5573
        %v5879 = vpop.permute.xlu0 %5878
        %5881 = vset.pattern.permute.xlu0 1
        %5882 = vperm.xlu0 %5881, %v5574
        %v5883 = vpop.permute.xlu0 %5882
        %5885 = vset.pattern.permute.xlu0 1
        %5886 = vperm.xlu0 %5885, %v5575
        %v5887 = vpop.permute.xlu0 %5886
        %5889 = vset.pattern.permute.xlu0 1
        %5890 = vperm.xlu0 %5889, %v5576
        %v5891 = vpop.permute.xlu0 %5890
        %5893 = vset.pattern.permute.xlu0 1
        %5894 = vperm.xlu0 %5893, %v5577
        %v5895 = vpop.permute.xlu0 %5894
        %5897 = vset.pattern.permute.xlu0 1
        %5898 = vperm.xlu0 %5897, %v5578
        %v5899 = vpop.permute.xlu0 %5898
        %5901 = vset.pattern.permute.xlu0 1
        %5902 = vperm.xlu0 %5901, %v5579
        %v5903 = vpop.permute.xlu0 %5902
        %5905 = vset.pattern.permute.xlu0 1
        %5906 = vperm.xlu0 %5905, %v5580
        %v5907 = vpop.permute.xlu0 %5906
        %5909 = vset.pattern.permute.xlu0 1
        %5910 = vperm.xlu0 %5909, %v5581
        %v5911 = vpop.permute.xlu0 %5910
        %5913 = vset.pattern.permute.xlu0 1
        %5914 = vperm.xlu0 %5913, %v5582
        %v5915 = vpop.permute.xlu0 %5914
        %5917 = vset.pattern.permute.xlu0 1
        %5918 = vperm.xlu0 %5917, %v5583
        %v5919 = vpop.permute.xlu0 %5918
        %5921 = vset.pattern.permute.xlu0 1
        %5922 = vperm.xlu0 %5921, %v5584
        %v5923 = vpop.permute.xlu0 %5922
        %5925 = vset.pattern.permute.xlu0 1
        %5926 = vperm.xlu0 %5925, %v5585
        %v5927 = vpop.permute.xlu0 %5926
        %5929 = vset.pattern.permute.xlu0 1
        %5930 = vperm.xlu0 %5929, %v5586
        %v5931 = vpop.permute.xlu0 %5930
        %5933 = vset.pattern.permute.xlu0 1
        %5934 = vperm.xlu0 %5933, %v5587
        %v5935 = vpop.permute.xlu0 %5934
        %5937 = vset.pattern.permute.xlu0 1
        %5938 = vperm.xlu0 %5937, %v5588
        %v5939 = vpop.permute.xlu0 %5938
        %5941 = vset.pattern.permute.xlu0 1
        %5942 = vperm.xlu0 %5941, %v5589
        %v5943 = vpop.permute.xlu0 %5942
        %5945 = vset.pattern.permute.xlu0 1
        %5946 = vperm.xlu0 %5945, %v5590
        %v5947 = vpop.permute.xlu0 %5946
        %v5949 = vlaneseq
        %v5950 = vshrl.u32 %v5949, 7
        %v5951 = vsub.s32 0, %v5950
        %v5952 = vrot.slane %v5820, %v5951
        %v5953 = vmul.f32 %v5823, %v5952
        %v5954 = vmul.f32 %v5827, %v5952
        %v5955 = vmul.f32 %v5831, %v5952
        %v5956 = vmul.f32 %v5835, %v5952
        %v5957 = vmul.f32 %v5839, %v5952
        %v5958 = vmul.f32 %v5843, %v5952
        %v5959 = vmul.f32 %v5847, %v5952
        %v5960 = vmul.f32 %v5851, %v5952
        %v5961 = vmul.f32 %v5855, %v5952
        %v5962 = vmul.f32 %v5859, %v5952
        %v5963 = vmul.f32 %v5863, %v5952
        %v5964 = vmul.f32 %v5867, %v5952
        %v5965 = vmul.f32 %v5871, %v5952
        %v5966 = vmul.f32 %v5875, %v5952
        %v5967 = vmul.f32 %v5879, %v5952
        %v5968 = vmul.f32 %v5883, %v5952
        %v5969 = vmul.f32 %v5887, %v5952
        %v5970 = vmul.f32 %v5891, %v5952
        %v5971 = vmul.f32 %v5895, %v5952
        %v5972 = vmul.f32 %v5899, %v5952
        %v5973 = vmul.f32 %v5903, %v5952
        %v5974 = vmul.f32 %v5907, %v5952
        %v5975 = vmul.f32 %v5911, %v5952
        %v5976 = vmul.f32 %v5915, %v5952
        %v5977 = vmul.f32 %v5919, %v5952
        %v5978 = vmul.f32 %v5923, %v5952
        %v5979 = vmul.f32 %v5927, %v5952
        %v5980 = vmul.f32 %v5931, %v5952
        %v5981 = vmul.f32 %v5935, %v5952
        %v5982 = vmul.f32 %v5939, %v5952
        %v5983 = vmul.f32 %v5943, %v5952
        %v5984 = vmul.f32 %v5947, %v5952
        %v5985 = vadd.f32 %v5788, %v5953
        %v5986 = vadd.f32 %v5789, %v5954
        %v5987 = vadd.f32 %v5790, %v5955
        %v5988 = vadd.f32 %v5791, %v5956
        %v5989 = vadd.f32 %v5792, %v5957
        %v5990 = vadd.f32 %v5793, %v5958
        %v5991 = vadd.f32 %v5794, %v5959
        %v5992 = vadd.f32 %v5795, %v5960
        %v5993 = vadd.f32 %v5796, %v5961
        %v5994 = vadd.f32 %v5797, %v5962
        %v5995 = vadd.f32 %v5798, %v5963
        %v5996 = vadd.f32 %v5799, %v5964
        %v5997 = vadd.f32 %v5800, %v5965
        %v5998 = vadd.f32 %v5801, %v5966
        %v5999 = vadd.f32 %v5802, %v5967
        %v6000 = vadd.f32 %v5803, %v5968
        %v6001 = vadd.f32 %v5804, %v5969
        %v6002 = vadd.f32 %v5805, %v5970
        %v6003 = vadd.f32 %v5806, %v5971
        %v6004 = vadd.f32 %v5807, %v5972
        %v6005 = vadd.f32 %v5808, %v5973
        %v6006 = vadd.f32 %v5809, %v5974
        %v6007 = vadd.f32 %v5810, %v5975
        %v6008 = vadd.f32 %v5811, %v5976
        %v6009 = vadd.f32 %v5812, %v5977
        %v6010 = vadd.f32 %v5813, %v5978
        %v6011 = vadd.f32 %v5814, %v5979
        %v6012 = vadd.f32 %v5815, %v5980
        %v6013 = vadd.f32 %v5816, %v5981
        %v6014 = vadd.f32 %v5817, %v5982
        %v6015 = vadd.f32 %v5818, %v5983
        %v6016 = vadd.f32 %v5819, %v5984
        %v6017 = vld [vmem:[%s3 + $0x1a] sm:$0x1]
        %6018 = vset.pattern.permute.xlu0 2
        %6019 = vperm.xlu0 %6018, %v5559
        %v6020 = vpop.permute.xlu0 %6019
        %6022 = vset.pattern.permute.xlu0 2
        %6023 = vperm.xlu0 %6022, %v5560
        %v6024 = vpop.permute.xlu0 %6023
        %6026 = vset.pattern.permute.xlu0 2
        %6027 = vperm.xlu0 %6026, %v5561
        %v6028 = vpop.permute.xlu0 %6027
        %6030 = vset.pattern.permute.xlu0 2
        %6031 = vperm.xlu0 %6030, %v5562
        %v6032 = vpop.permute.xlu0 %6031
        %6034 = vset.pattern.permute.xlu0 2
        %6035 = vperm.xlu0 %6034, %v5563
        %v6036 = vpop.permute.xlu0 %6035
        %6038 = vset.pattern.permute.xlu0 2
        %6039 = vperm.xlu0 %6038, %v5564
        %v6040 = vpop.permute.xlu0 %6039
        %6042 = vset.pattern.permute.xlu0 2
        %6043 = vperm.xlu0 %6042, %v5565
        %v6044 = vpop.permute.xlu0 %6043
        %6046 = vset.pattern.permute.xlu0 2
        %6047 = vperm.xlu0 %6046, %v5566
        %v6048 = vpop.permute.xlu0 %6047
        %6050 = vset.pattern.permute.xlu0 2
        %6051 = vperm.xlu0 %6050, %v5567
        %v6052 = vpop.permute.xlu0 %6051
        %6054 = vset.pattern.permute.xlu0 2
        %6055 = vperm.xlu0 %6054, %v5568
        %v6056 = vpop.permute.xlu0 %6055
        %6058 = vset.pattern.permute.xlu0 2
        %6059 = vperm.xlu0 %6058, %v5569
        %v6060 = vpop.permute.xlu0 %6059
        %6062 = vset.pattern.permute.xlu0 2
        %6063 = vperm.xlu0 %6062, %v5570
        %v6064 = vpop.permute.xlu0 %6063
        %6066 = vset.pattern.permute.xlu0 2
        %6067 = vperm.xlu0 %6066, %v5571
        %v6068 = vpop.permute.xlu0 %6067
        %6070 = vset.pattern.permute.xlu0 2
        %6071 = vperm.xlu0 %6070, %v5572
        %v6072 = vpop.permute.xlu0 %6071
        %6074 = vset.pattern.permute.xlu0 2
        %6075 = vperm.xlu0 %6074, %v5573
        %v6076 = vpop.permute.xlu0 %6075
        %6078 = vset.pattern.permute.xlu0 2
        %6079 = vperm.xlu0 %6078, %v5574
        %v6080 = vpop.permute.xlu0 %6079
        %6082 = vset.pattern.permute.xlu0 2
        %6083 = vperm.xlu0 %6082, %v5575
        %v6084 = vpop.permute.xlu0 %6083
        %6086 = vset.pattern.permute.xlu0 2
        %6087 = vperm.xlu0 %6086, %v5576
        %v6088 = vpop.permute.xlu0 %6087
        %6090 = vset.pattern.permute.xlu0 2
        %6091 = vperm.xlu0 %6090, %v5577
        %v6092 = vpop.permute.xlu0 %6091
        %6094 = vset.pattern.permute.xlu0 2
        %6095 = vperm.xlu0 %6094, %v5578
        %v6096 = vpop.permute.xlu0 %6095
        %6098 = vset.pattern.permute.xlu0 2
        %6099 = vperm.xlu0 %6098, %v5579
        %v6100 = vpop.permute.xlu0 %6099
        %6102 = vset.pattern.permute.xlu0 2
        %6103 = vperm.xlu0 %6102, %v5580
        %v6104 = vpop.permute.xlu0 %6103
        %6106 = vset.pattern.permute.xlu0 2
        %6107 = vperm.xlu0 %6106, %v5581
        %v6108 = vpop.permute.xlu0 %6107
        %6110 = vset.pattern.permute.xlu0 2
        %6111 = vperm.xlu0 %6110, %v5582
        %v6112 = vpop.permute.xlu0 %6111
        %6114 = vset.pattern.permute.xlu0 2
        %6115 = vperm.xlu0 %6114, %v5583
        %v6116 = vpop.permute.xlu0 %6115
        %6118 = vset.pattern.permute.xlu0 2
        %6119 = vperm.xlu0 %6118, %v5584
        %v6120 = vpop.permute.xlu0 %6119
        %6122 = vset.pattern.permute.xlu0 2
        %6123 = vperm.xlu0 %6122, %v5585
        %v6124 = vpop.permute.xlu0 %6123
        %6126 = vset.pattern.permute.xlu0 2
        %6127 = vperm.xlu0 %6126, %v5586
        %v6128 = vpop.permute.xlu0 %6127
        %6130 = vset.pattern.permute.xlu0 2
        %6131 = vperm.xlu0 %6130, %v5587
        %v6132 = vpop.permute.xlu0 %6131
        %6134 = vset.pattern.permute.xlu0 2
        %6135 = vperm.xlu0 %6134, %v5588
        %v6136 = vpop.permute.xlu0 %6135
        %6138 = vset.pattern.permute.xlu0 2
        %6139 = vperm.xlu0 %6138, %v5589
        %v6140 = vpop.permute.xlu0 %6139
        %6142 = vset.pattern.permute.xlu0 2
        %6143 = vperm.xlu0 %6142, %v5590
        %v6144 = vpop.permute.xlu0 %6143
        %v6146 = vlaneseq
        %v6147 = vshrl.u32 %v6146, 7
        %v6148 = vsub.s32 0, %v6147
        %v6149 = vrot.slane %v6017, %v6148
        %v6150 = vmul.f32 %v6020, %v6149
        %v6151 = vmul.f32 %v6024, %v6149
        %v6152 = vmul.f32 %v6028, %v6149
        %v6153 = vmul.f32 %v6032, %v6149
        %v6154 = vmul.f32 %v6036, %v6149
        %v6155 = vmul.f32 %v6040, %v6149
        %v6156 = vmul.f32 %v6044, %v6149
        %v6157 = vmul.f32 %v6048, %v6149
        %v6158 = vmul.f32 %v6052, %v6149
        %v6159 = vmul.f32 %v6056, %v6149
        %v6160 = vmul.f32 %v6060, %v6149
        %v6161 = vmul.f32 %v6064, %v6149
        %v6162 = vmul.f32 %v6068, %v6149
        %v6163 = vmul.f32 %v6072, %v6149
        %v6164 = vmul.f32 %v6076, %v6149
        %v6165 = vmul.f32 %v6080, %v6149
        %v6166 = vmul.f32 %v6084, %v6149
        %v6167 = vmul.f32 %v6088, %v6149
        %v6168 = vmul.f32 %v6092, %v6149
        %v6169 = vmul.f32 %v6096, %v6149
        %v6170 = vmul.f32 %v6100, %v6149
        %v6171 = vmul.f32 %v6104, %v6149
        %v6172 = vmul.f32 %v6108, %v6149
        %v6173 = vmul.f32 %v6112, %v6149
        %v6174 = vmul.f32 %v6116, %v6149
        %v6175 = vmul.f32 %v6120, %v6149
        %v6176 = vmul.f32 %v6124, %v6149
        %v6177 = vmul.f32 %v6128, %v6149
        %v6178 = vmul.f32 %v6132, %v6149
        %v6179 = vmul.f32 %v6136, %v6149
        %v6180 = vmul.f32 %v6140, %v6149
        %v6181 = vmul.f32 %v6144, %v6149
        %v6182 = vadd.f32 %v5985, %v6150
        %v6183 = vadd.f32 %v5986, %v6151
        %v6184 = vadd.f32 %v5987, %v6152
        %v6185 = vadd.f32 %v5988, %v6153
        %v6186 = vadd.f32 %v5989, %v6154
        %v6187 = vadd.f32 %v5990, %v6155
        %v6188 = vadd.f32 %v5991, %v6156
        %v6189 = vadd.f32 %v5992, %v6157
        %v6190 = vadd.f32 %v5993, %v6158
        %v6191 = vadd.f32 %v5994, %v6159
        %v6192 = vadd.f32 %v5995, %v6160
        %v6193 = vadd.f32 %v5996, %v6161
        %v6194 = vadd.f32 %v5997, %v6162
        %v6195 = vadd.f32 %v5998, %v6163
        %v6196 = vadd.f32 %v5999, %v6164
        %v6197 = vadd.f32 %v6000, %v6165
        %v6198 = vadd.f32 %v6001, %v6166
        %v6199 = vadd.f32 %v6002, %v6167
        %v6200 = vadd.f32 %v6003, %v6168
        %v6201 = vadd.f32 %v6004, %v6169
        %v6202 = vadd.f32 %v6005, %v6170
        %v6203 = vadd.f32 %v6006, %v6171
        %v6204 = vadd.f32 %v6007, %v6172
        %v6205 = vadd.f32 %v6008, %v6173
        %v6206 = vadd.f32 %v6009, %v6174
        %v6207 = vadd.f32 %v6010, %v6175
        %v6208 = vadd.f32 %v6011, %v6176
        %v6209 = vadd.f32 %v6012, %v6177
        %v6210 = vadd.f32 %v6013, %v6178
        %v6211 = vadd.f32 %v6014, %v6179
        %v6212 = vadd.f32 %v6015, %v6180
        %v6213 = vadd.f32 %v6016, %v6181
        %v6214 = vld [vmem:[%s4] sm:$0x1]
        %v6216 = vlaneseq
        %v6217 = vshrl.u32 %v6216, 7
        %v6218 = vsub.s32 0, %v6217
        %v6219 = vrot.slane %v6214, %v6218
        %v6221 = vadd.f32 %v6182, %v6219
        %v6222 = vadd.f32 %v6183, %v6219
        %v6223 = vadd.f32 %v6184, %v6219
        %v6224 = vadd.f32 %v6185, %v6219
        %v6225 = vadd.f32 %v6186, %v6219
        %v6226 = vadd.f32 %v6187, %v6219
        %v6227 = vadd.f32 %v6188, %v6219
        %v6228 = vadd.f32 %v6189, %v6219
        %v6229 = vadd.f32 %v6190, %v6219
        %v6230 = vadd.f32 %v6191, %v6219
        %v6231 = vadd.f32 %v6192, %v6219
        %v6232 = vadd.f32 %v6193, %v6219
        %v6233 = vadd.f32 %v6194, %v6219
        %v6234 = vadd.f32 %v6195, %v6219
        %v6235 = vadd.f32 %v6196, %v6219
        %v6236 = vadd.f32 %v6197, %v6219
        %v6237 = vadd.f32 %v6198, %v6219
        %v6238 = vadd.f32 %v6199, %v6219
        %v6239 = vadd.f32 %v6200, %v6219
        %v6240 = vadd.f32 %v6201, %v6219
        %v6241 = vadd.f32 %v6202, %v6219
        %v6242 = vadd.f32 %v6203, %v6219
        %v6243 = vadd.f32 %v6204, %v6219
        %v6244 = vadd.f32 %v6205, %v6219
        %v6245 = vadd.f32 %v6206, %v6219
        %v6246 = vadd.f32 %v6207, %v6219
        %v6247 = vadd.f32 %v6208, %v6219
        %v6248 = vadd.f32 %v6209, %v6219
        %v6249 = vadd.f32 %v6210, %v6219
        %v6250 = vadd.f32 %v6211, %v6219
        %v6251 = vadd.f32 %v6212, %v6219
        %v6252 = vadd.f32 %v6213, %v6219
        %v6253 = vmax.f32 %v6221, 0.0
        %v6254 = vmax.f32 %v6222, 0.0
        %v6255 = vmax.f32 %v6223, 0.0
        %v6256 = vmax.f32 %v6224, 0.0
        %v6257 = vmax.f32 %v6225, 0.0
        %v6258 = vmax.f32 %v6226, 0.0
        %v6259 = vmax.f32 %v6227, 0.0
        %v6260 = vmax.f32 %v6228, 0.0
        %v6261 = vmax.f32 %v6229, 0.0
        %v6262 = vmax.f32 %v6230, 0.0
        %v6263 = vmax.f32 %v6231, 0.0
        %v6264 = vmax.f32 %v6232, 0.0
        %v6265 = vmax.f32 %v6233, 0.0
        %v6266 = vmax.f32 %v6234, 0.0
        %v6267 = vmax.f32 %v6235, 0.0
        %v6268 = vmax.f32 %v6236, 0.0
        %v6269 = vmax.f32 %v6237, 0.0
        %v6270 = vmax.f32 %v6238, 0.0
        %v6271 = vmax.f32 %v6239, 0.0
        %v6272 = vmax.f32 %v6240, 0.0
        %v6273 = vmax.f32 %v6241, 0.0
        %v6274 = vmax.f32 %v6242, 0.0
        %v6275 = vmax.f32 %v6243, 0.0
        %v6276 = vmax.f32 %v6244, 0.0
        %v6277 = vmax.f32 %v6245, 0.0
        %v6278 = vmax.f32 %v6246, 0.0
        %v6279 = vmax.f32 %v6247, 0.0
        %v6280 = vmax.f32 %v6248, 0.0
        %v6281 = vmax.f32 %v6249, 0.0
        %v6282 = vmax.f32 %v6250, 0.0
        %v6283 = vmax.f32 %v6251, 0.0
        %v6284 = vmax.f32 %v6252, 0.0
        %s6285 = smul.u32 %s33, 256
        %s6286 = scalar_lea.vmem [#allocation2], %s6285
        %vm6287 = vcmask 261120
        %6288 = vst.msk [vmem:[%s6286] sm:$0xff] %vm6287, %v6253
        %6289 = vst.msk [vmem:[%s6286 + $0x8] sm:$0xff] %vm6287, %v6254
        %6290 = vst.msk [vmem:[%s6286 + $0x10] sm:$0xff] %vm6287, %v6255
        %6291 = vst.msk [vmem:[%s6286 + $0x18] sm:$0xff] %vm6287, %v6256
        %6292 = vst.msk [vmem:[%s6286 + $0x20] sm:$0xff] %vm6287, %v6257
        %6293 = vst.msk [vmem:[%s6286 + $0x28] sm:$0xff] %vm6287, %v6258
        %6294 = vst.msk [vmem:[%s6286 + $0x30] sm:$0xff] %vm6287, %v6259
        %6295 = vst.msk [vmem:[%s6286 + $0x38] sm:$0xff] %vm6287, %v6260
        %6296 = vst.msk [vmem:[%s6286 + $0x40] sm:$0xff] %vm6287, %v6261
        %6297 = vst.msk [vmem:[%s6286 + $0x48] sm:$0xff] %vm6287, %v6262
        %6298 = vst.msk [vmem:[%s6286 + $0x50] sm:$0xff] %vm6287, %v6263
        %6299 = vst.msk [vmem:[%s6286 + $0x58] sm:$0xff] %vm6287, %v6264
        %6300 = vst.msk [vmem:[%s6286 + $0x60] sm:$0xff] %vm6287, %v6265
        %6301 = vst.msk [vmem:[%s6286 + $0x68] sm:$0xff] %vm6287, %v6266
        %6302 = vst.msk [vmem:[%s6286 + $0x70] sm:$0xff] %vm6287, %v6267
        %6303 = vst.msk [vmem:[%s6286 + $0x78] sm:$0xff] %vm6287, %v6268
        %6304 = vst.msk [vmem:[%s6286 + $0x80] sm:$0xff] %vm6287, %v6269
        %6305 = vst.msk [vmem:[%s6286 + $0x88] sm:$0xff] %vm6287, %v6270
        %6306 = vst.msk [vmem:[%s6286 + $0x90] sm:$0xff] %vm6287, %v6271
        %6307 = vst.msk [vmem:[%s6286 + $0x98] sm:$0xff] %vm6287, %v6272
        %6308 = vst.msk [vmem:[%s6286 + $0xa0] sm:$0xff] %vm6287, %v6273
        %6309 = vst.msk [vmem:[%s6286 + $0xa8] sm:$0xff] %vm6287, %v6274
        %6310 = vst.msk [vmem:[%s6286 + $0xb0] sm:$0xff] %vm6287, %v6275
        %6311 = vst.msk [vmem:[%s6286 + $0xb8] sm:$0xff] %vm6287, %v6276
        %6312 = vst.msk [vmem:[%s6286 + $0xc0] sm:$0xff] %vm6287, %v6277
        %6313 = vst.msk [vmem:[%s6286 + $0xc8] sm:$0xff] %vm6287, %v6278
        %6314 = vst.msk [vmem:[%s6286 + $0xd0] sm:$0xff] %vm6287, %v6279
        %6315 = vst.msk [vmem:[%s6286 + $0xd8] sm:$0xff] %vm6287, %v6280
        %6316 = vst.msk [vmem:[%s6286 + $0xe0] sm:$0xff] %vm6287, %v6281
        %6317 = vst.msk [vmem:[%s6286 + $0xe8] sm:$0xff] %vm6287, %v6282
        %6318 = vst.msk [vmem:[%s6286 + $0xf0] sm:$0xff] %vm6287, %v6283
        %6319 = vst.msk [vmem:[%s6286 + $0xf8] sm:$0xff] %vm6287, %v6284
        %v6320 = vld [vmem:[%s5] sm:$0xff]
        %v6321 = vld [vmem:[%s5 + $0x8] sm:$0xff]
        %v6322 = vld [vmem:[%s5 + $0x10] sm:$0xff]
        %v6323 = vld [vmem:[%s5 + $0x18] sm:$0xff]
        %v6324 = vld [vmem:[%s6] sm:$0x1]
        %v6326 = vlaneseq
        %v6327 = vshrl.u32 %v6326, 7
        %v6328 = vsub.s32 0, %v6327
        %v6329 = vrot.slane %v6324, %v6328
        %v6332 = vsel %vm6287, %v6253, 0
        %v6335 = vsel %vm6287, %v6254, 0
        %v6338 = vsel %vm6287, %v6255, 0
        %v6341 = vsel %vm6287, %v6256, 0
        %v6344 = vsel %vm6287, %v6257, 0
        %v6347 = vsel %vm6287, %v6258, 0
        %v6350 = vsel %vm6287, %v6259, 0
        %v6353 = vsel %vm6287, %v6260, 0
        %v6356 = vsel %vm6287, %v6261, 0
        %v6359 = vsel %vm6287, %v6262, 0
        %v6362 = vsel %vm6287, %v6263, 0
        %v6365 = vsel %vm6287, %v6264, 0
        %v6368 = vsel %vm6287, %v6265, 0
        %v6371 = vsel %vm6287, %v6266, 0
        %v6374 = vsel %vm6287, %v6267, 0
        %v6377 = vsel %vm6287, %v6268, 0
        %v6380 = vsel %vm6287, %v6269, 0
        %v6383 = vsel %vm6287, %v6270, 0
        %v6386 = vsel %vm6287, %v6271, 0
        %v6389 = vsel %vm6287, %v6272, 0
        %v6392 = vsel %vm6287, %v6273, 0
        %v6395 = vsel %vm6287, %v6274, 0
        %v6398 = vsel %vm6287, %v6275, 0
        %v6401 = vsel %vm6287, %v6276, 0
        %v6404 = vsel %vm6287, %v6277, 0
        %v6407 = vsel %vm6287, %v6278, 0
        %v6410 = vsel %vm6287, %v6279, 0
        %v6413 = vsel %vm6287, %v6280, 0
        %v6416 = vsel %vm6287, %v6281, 0
        %v6419 = vsel %vm6287, %v6282, 0
        %v6422 = vsel %vm6287, %v6283, 0
        %v6425 = vsel %vm6287, %v6284, 0
        %6427 = vmatprep.subr.mxu0 0.0
        %6428 = vmatpush1.msra.mxu0 0.0
        %6429 = vmatprep.subr.mxu0 0.0
        %6430 = vmatpush1.msra.mxu0 0.0
        %6431 = vmatprep.subr.mxu0 0.0
        %6432 = vmatpush1.msra.mxu0 0.0
        %6433 = vmatprep.subr.mxu0 0.0
        %6434 = vmatpush1.msra.mxu0 0.0
        %6435 = vmatprep.subr.mxu0 0.0
        %6436 = vmatpush1.msra.mxu0 0.0
        %6437 = vmatprep.subr.mxu0 0.0
        %6438 = vmatpush1.msra.mxu0 0.0
        %6439 = vmatprep.subr.mxu0 0.0
        %6440 = vmatpush1.msra.mxu0 0.0
        %6441 = vmatprep.subr.mxu0 0.0
        %6442 = vmatpush1.msra.mxu0 0.0
        %6443 = vmatprep.subr.mxu0 0.0
        %6444 = vmatpush1.msra.mxu0 0.0
        %6445 = vmatprep.subr.mxu0 0.0
        %6446 = vmatpush1.msra.mxu0 0.0
        %6447 = vmatprep.subr.mxu0 0.0
        %6448 = vmatpush1.msra.mxu0 0.0
        %6449 = vmatprep.subr.mxu0 0.0
        %6450 = vmatpush1.msra.mxu0 0.0
        %6451 = vmatprep.subr.mxu0 0.0
        %6452 = vmatpush1.msra.mxu0 %v6323
        %6453 = vmatprep.subr.mxu0 0.0
        %6454 = vmatpush1.msra.mxu0 %v6322
        %6455 = vmatprep.subr.mxu0 0.0
        %6456 = vmatpush1.msra.mxu0 %v6321
        %6457 = vmatprep.subr.mxu0 0.0
        %6458 = vmatpush1.msra.mxu0 %v6320
        %6459 = vmatprep.subr.mxu0 0.0
        %6460 = vmatpush2.msra.mxu0 0.0
        %6461 = vmatprep.subr.mxu0 0.0
        %6462 = vmatpush2.msra.mxu0 0.0
        %6463 = vmatprep.subr.mxu0 0.0
        %6464 = vmatpush2.msra.mxu0 0.0
        %6465 = vmatprep.subr.mxu0 0.0
        %6466 = vmatpush2.msra.mxu0 0.0
        %6467 = vmatprep.subr.mxu0 0.0
        %6468 = vmatpush2.msra.mxu0 0.0
        %6469 = vmatprep.subr.mxu0 0.0
        %6470 = vmatpush2.msra.mxu0 0.0
        %6471 = vmatprep.subr.mxu0 0.0
        %6472 = vmatpush2.msra.mxu0 0.0
        %6473 = vmatprep.subr.mxu0 0.0
        %6474 = vmatpush2.msra.mxu0 0.0
        %6475 = vmatprep.subr.mxu0 0.0
        %6476 = vmatpush2.msra.mxu0 0.0
        %6477 = vmatprep.subr.mxu0 0.0
        %6478 = vmatpush2.msra.mxu0 0.0
        %6479 = vmatprep.subr.mxu0 0.0
        %6480 = vmatpush2.msra.mxu0 0.0
        %6481 = vmatprep.subr.mxu0 0.0
        %6482 = vmatpush2.msra.mxu0 0.0
        %6483 = vmatprep.subr.mxu0 0.0
        %6484 = vmatpush2.msra.mxu0 0.0
        %6485 = vmatprep.subr.mxu0 0.0
        %6486 = vmatpush2.msra.mxu0 0.0
        %6487 = vmatprep.subr.mxu0 0.0
        %6488 = vmatpush2.msra.mxu0 0.0
        %6489 = vmatprep.subr.mxu0 0.0
        %6490 = vmatpush2.msra.mxu0 0.0
        %6491 = vmatprep.mubr.f32.mxu0 0.0
        %6492 = vmatmul.mubr.f32.gmra.mxu0 %v6332
        %v6493 = vpop.f32.mrf.mxu0
        %v6494 = vadd.f32 %v6329, %v6493
        %v6495 = vpop.f32.mrf.mxu0
        %6496 = vmatprep.mubr.f32.mxu0 0.0
        %6497 = vmatmul.mubr.f32.gmra.mxu0 %v6335
        %v6498 = vpop.f32.mrf.mxu0
        %v6499 = vadd.f32 %v6329, %v6498
        %v6500 = vpop.f32.mrf.mxu0
        %6501 = vmatprep.mubr.f32.mxu0 0.0
        %6502 = vmatmul.mubr.f32.gmra.mxu0 %v6338
        %v6503 = vpop.f32.mrf.mxu0
        %v6504 = vadd.f32 %v6329, %v6503
        %v6505 = vpop.f32.mrf.mxu0
        %6506 = vmatprep.mubr.f32.mxu0 0.0
        %6507 = vmatmul.mubr.f32.gmra.mxu0 %v6341
        %v6508 = vpop.f32.mrf.mxu0
        %v6509 = vadd.f32 %v6329, %v6508
        %v6510 = vpop.f32.mrf.mxu0
        %6511 = vmatprep.mubr.f32.mxu0 0.0
        %6512 = vmatmul.mubr.f32.gmra.mxu0 %v6344
        %v6513 = vpop.f32.mrf.mxu0
        %v6514 = vadd.f32 %v6329, %v6513
        %v6515 = vpop.f32.mrf.mxu0
        %6516 = vmatprep.mubr.f32.mxu0 0.0
        %6517 = vmatmul.mubr.f32.gmra.mxu0 %v6347
        %v6518 = vpop.f32.mrf.mxu0
        %v6519 = vadd.f32 %v6329, %v6518
        %v6520 = vpop.f32.mrf.mxu0
        %6521 = vmatprep.mubr.f32.mxu0 0.0
        %6522 = vmatmul.mubr.f32.gmra.mxu0 %v6350
        %v6523 = vpop.f32.mrf.mxu0
        %v6524 = vadd.f32 %v6329, %v6523
        %v6525 = vpop.f32.mrf.mxu0
        %6526 = vmatprep.mubr.f32.mxu0 0.0
        %6527 = vmatmul.mubr.f32.gmra.mxu0 %v6353
        %v6528 = vpop.f32.mrf.mxu0
        %v6529 = vadd.f32 %v6329, %v6528
        %v6530 = vpop.f32.mrf.mxu0
        %6531 = vmatprep.mubr.f32.mxu0 0.0
        %6532 = vmatmul.mubr.f32.gmra.mxu0 %v6356
        %v6533 = vpop.f32.mrf.mxu0
        %v6534 = vadd.f32 %v6329, %v6533
        %v6535 = vpop.f32.mrf.mxu0
        %6536 = vmatprep.mubr.f32.mxu0 0.0
        %6537 = vmatmul.mubr.f32.gmra.mxu0 %v6359
        %v6538 = vpop.f32.mrf.mxu0
        %v6539 = vadd.f32 %v6329, %v6538
        %v6540 = vpop.f32.mrf.mxu0
        %6541 = vmatprep.mubr.f32.mxu0 0.0
        %6542 = vmatmul.mubr.f32.gmra.mxu0 %v6362
        %v6543 = vpop.f32.mrf.mxu0
        %v6544 = vadd.f32 %v6329, %v6543
        %v6545 = vpop.f32.mrf.mxu0
        %6546 = vmatprep.mubr.f32.mxu0 0.0
        %6547 = vmatmul.mubr.f32.gmra.mxu0 %v6365
        %v6548 = vpop.f32.mrf.mxu0
        %v6549 = vadd.f32 %v6329, %v6548
        %v6550 = vpop.f32.mrf.mxu0
        %6551 = vmatprep.mubr.f32.mxu0 0.0
        %6552 = vmatmul.mubr.f32.gmra.mxu0 %v6368
        %v6553 = vpop.f32.mrf.mxu0
        %v6554 = vadd.f32 %v6329, %v6553
        %v6555 = vpop.f32.mrf.mxu0
        %6556 = vmatprep.mubr.f32.mxu0 0.0
        %6557 = vmatmul.mubr.f32.gmra.mxu0 %v6371
        %v6558 = vpop.f32.mrf.mxu0
        %v6559 = vadd.f32 %v6329, %v6558
        %v6560 = vpop.f32.mrf.mxu0
        %6561 = vmatprep.mubr.f32.mxu0 0.0
        %6562 = vmatmul.mubr.f32.gmra.mxu0 %v6374
        %v6563 = vpop.f32.mrf.mxu0
        %v6564 = vadd.f32 %v6329, %v6563
        %v6565 = vpop.f32.mrf.mxu0
        %6566 = vmatprep.mubr.f32.mxu0 0.0
        %6567 = vmatmul.mubr.f32.gmra.mxu0 %v6377
        %v6568 = vpop.f32.mrf.mxu0
        %v6569 = vadd.f32 %v6329, %v6568
        %v6570 = vpop.f32.mrf.mxu0
        %6571 = vmatprep.mubr.f32.mxu0 0.0
        %6572 = vmatmul.mubr.f32.gmra.mxu0 %v6380
        %v6573 = vpop.f32.mrf.mxu0
        %v6574 = vadd.f32 %v6329, %v6573
        %v6575 = vpop.f32.mrf.mxu0
        %6576 = vmatprep.mubr.f32.mxu0 0.0
        %6577 = vmatmul.mubr.f32.gmra.mxu0 %v6383
        %v6578 = vpop.f32.mrf.mxu0
        %v6579 = vadd.f32 %v6329, %v6578
        %v6580 = vpop.f32.mrf.mxu0
        %6581 = vmatprep.mubr.f32.mxu0 0.0
        %6582 = vmatmul.mubr.f32.gmra.mxu0 %v6386
        %v6583 = vpop.f32.mrf.mxu0
        %v6584 = vadd.f32 %v6329, %v6583
        %v6585 = vpop.f32.mrf.mxu0
        %6586 = vmatprep.mubr.f32.mxu0 0.0
        %6587 = vmatmul.mubr.f32.gmra.mxu0 %v6389
        %v6588 = vpop.f32.mrf.mxu0
        %v6589 = vadd.f32 %v6329, %v6588
        %v6590 = vpop.f32.mrf.mxu0
        %6591 = vmatprep.mubr.f32.mxu0 0.0
        %6592 = vmatmul.mubr.f32.gmra.mxu0 %v6392
        %v6593 = vpop.f32.mrf.mxu0
        %v6594 = vadd.f32 %v6329, %v6593
        %v6595 = vpop.f32.mrf.mxu0
        %6596 = vmatprep.mubr.f32.mxu0 0.0
        %6597 = vmatmul.mubr.f32.gmra.mxu0 %v6395
        %v6598 = vpop.f32.mrf.mxu0
        %v6599 = vadd.f32 %v6329, %v6598
        %v6600 = vpop.f32.mrf.mxu0
        %6601 = vmatprep.mubr.f32.mxu0 0.0
        %6602 = vmatmul.mubr.f32.gmra.mxu0 %v6398
        %v6603 = vpop.f32.mrf.mxu0
        %v6604 = vadd.f32 %v6329, %v6603
        %v6605 = vpop.f32.mrf.mxu0
        %6606 = vmatprep.mubr.f32.mxu0 0.0
        %6607 = vmatmul.mubr.f32.gmra.mxu0 %v6401
        %v6608 = vpop.f32.mrf.mxu0
        %v6609 = vadd.f32 %v6329, %v6608
        %v6610 = vpop.f32.mrf.mxu0
        %6611 = vmatprep.mubr.f32.mxu0 0.0
        %6612 = vmatmul.mubr.f32.gmra.mxu0 %v6404
        %v6613 = vpop.f32.mrf.mxu0
        %v6614 = vadd.f32 %v6329, %v6613
        %v6615 = vpop.f32.mrf.mxu0
        %6616 = vmatprep.mubr.f32.mxu0 0.0
        %6617 = vmatmul.mubr.f32.gmra.mxu0 %v6407
        %v6618 = vpop.f32.mrf.mxu0
        %v6619 = vadd.f32 %v6329, %v6618
        %v6620 = vpop.f32.mrf.mxu0
        %6621 = vmatprep.mubr.f32.mxu0 0.0
        %6622 = vmatmul.mubr.f32.gmra.mxu0 %v6410
        %v6623 = vpop.f32.mrf.mxu0
        %v6624 = vadd.f32 %v6329, %v6623
        %v6625 = vpop.f32.mrf.mxu0
        %6626 = vmatprep.mubr.f32.mxu0 0.0
        %6627 = vmatmul.mubr.f32.gmra.mxu0 %v6413
        %v6628 = vpop.f32.mrf.mxu0
        %v6629 = vadd.f32 %v6329, %v6628
        %v6630 = vpop.f32.mrf.mxu0
        %6631 = vmatprep.mubr.f32.mxu0 0.0
        %6632 = vmatmul.mubr.f32.gmra.mxu0 %v6416
        %v6633 = vpop.f32.mrf.mxu0
        %v6634 = vadd.f32 %v6329, %v6633
        %v6635 = vpop.f32.mrf.mxu0
        %6636 = vmatprep.mubr.f32.mxu0 0.0
        %6637 = vmatmul.mubr.f32.gmra.mxu0 %v6419
        %v6638 = vpop.f32.mrf.mxu0
        %v6639 = vadd.f32 %v6329, %v6638
        %v6640 = vpop.f32.mrf.mxu0
        %6641 = vmatprep.mubr.f32.mxu0 0.0
        %6642 = vmatmul.mubr.f32.gmra.mxu0 %v6422
        %v6643 = vpop.f32.mrf.mxu0
        %v6644 = vadd.f32 %v6329, %v6643
        %v6645 = vpop.f32.mrf.mxu0
        %6646 = vmatprep.mubr.f32.mxu0 0.0
        %6647 = vmatmul.mubr.f32.gmra.mxu0 %v6425
        %v6648 = vpop.f32.mrf.mxu0
        %v6649 = vadd.f32 %v6329, %v6648
        %v6650 = vpop.f32.mrf.mxu0
        %6651 = vdwg.mxu0
        %v6652 = vxor.u32 %v6494, 2147483648
        %v6653 = vxor.u32 %v6499, 2147483648
        %v6654 = vxor.u32 %v6504, 2147483648
        %v6655 = vxor.u32 %v6509, 2147483648
        %v6656 = vxor.u32 %v6514, 2147483648
        %v6657 = vxor.u32 %v6519, 2147483648
        %v6658 = vxor.u32 %v6524, 2147483648
        %v6659 = vxor.u32 %v6529, 2147483648
        %v6660 = vxor.u32 %v6534, 2147483648
        %v6661 = vxor.u32 %v6539, 2147483648
        %v6662 = vxor.u32 %v6544, 2147483648
        %v6663 = vxor.u32 %v6549, 2147483648
        %v6664 = vxor.u32 %v6554, 2147483648
        %v6665 = vxor.u32 %v6559, 2147483648
        %v6666 = vxor.u32 %v6564, 2147483648
        %v6667 = vxor.u32 %v6569, 2147483648
        %v6668 = vxor.u32 %v6574, 2147483648
        %v6669 = vxor.u32 %v6579, 2147483648
        %v6670 = vxor.u32 %v6584, 2147483648
        %v6671 = vxor.u32 %v6589, 2147483648
        %v6672 = vxor.u32 %v6594, 2147483648
        %v6673 = vxor.u32 %v6599, 2147483648
        %v6674 = vxor.u32 %v6604, 2147483648
        %v6675 = vxor.u32 %v6609, 2147483648
        %v6676 = vxor.u32 %v6614, 2147483648
        %v6677 = vxor.u32 %v6619, 2147483648
        %v6678 = vxor.u32 %v6624, 2147483648
        %v6679 = vxor.u32 %v6629, 2147483648
        %v6680 = vxor.u32 %v6634, 2147483648
        %v6681 = vxor.u32 %v6639, 2147483648
        %v6682 = vxor.u32 %v6644, 2147483648
        %v6683 = vxor.u32 %v6649, 2147483648
        %v6684 = vmul.f32 %v6652, 1.442695
        %v6685 = vpow.pop %v6684
        %v6686 = vmul.f32 %v6653, 1.442695
        %v6687 = vpow.pop %v6686
        %v6688 = vmul.f32 %v6654, 1.442695
        %v6689 = vpow.pop %v6688
        %v6690 = vmul.f32 %v6655, 1.442695
        %v6691 = vpow.pop %v6690
        %v6692 = vmul.f32 %v6656, 1.442695
        %v6693 = vpow.pop %v6692
        %v6694 = vmul.f32 %v6657, 1.442695
        %v6695 = vpow.pop %v6694
        %v6696 = vmul.f32 %v6658, 1.442695
        %v6697 = vpow.pop %v6696
        %v6698 = vmul.f32 %v6659, 1.442695
        %v6699 = vpow.pop %v6698
        %v6700 = vmul.f32 %v6660, 1.442695
        %v6701 = vpow.pop %v6700
        %v6702 = vmul.f32 %v6661, 1.442695
        %v6703 = vpow.pop %v6702
        %v6704 = vmul.f32 %v6662, 1.442695
        %v6705 = vpow.pop %v6704
        %v6706 = vmul.f32 %v6663, 1.442695
        %v6707 = vpow.pop %v6706
        %v6708 = vmul.f32 %v6664, 1.442695
        %v6709 = vpow.pop %v6708
        %v6710 = vmul.f32 %v6665, 1.442695
        %v6711 = vpow.pop %v6710
        %v6712 = vmul.f32 %v6666, 1.442695
        %v6713 = vpow.pop %v6712
        %v6714 = vmul.f32 %v6667, 1.442695
        %v6715 = vpow.pop %v6714
        %v6716 = vmul.f32 %v6668, 1.442695
        %v6717 = vpow.pop %v6716
        %v6718 = vmul.f32 %v6669, 1.442695
        %v6719 = vpow.pop %v6718
        %v6720 = vmul.f32 %v6670, 1.442695
        %v6721 = vpow.pop %v6720
        %v6722 = vmul.f32 %v6671, 1.442695
        %v6723 = vpow.pop %v6722
        %v6724 = vmul.f32 %v6672, 1.442695
        %v6725 = vpow.pop %v6724
        %v6726 = vmul.f32 %v6673, 1.442695
        %v6727 = vpow.pop %v6726
        %v6728 = vmul.f32 %v6674, 1.442695
        %v6729 = vpow.pop %v6728
        %v6730 = vmul.f32 %v6675, 1.442695
        %v6731 = vpow.pop %v6730
        %v6732 = vmul.f32 %v6676, 1.442695
        %v6733 = vpow.pop %v6732
        %v6734 = vmul.f32 %v6677, 1.442695
        %v6735 = vpow.pop %v6734
        %v6736 = vmul.f32 %v6678, 1.442695
        %v6737 = vpow.pop %v6736
        %v6738 = vmul.f32 %v6679, 1.442695
        %v6739 = vpow.pop %v6738
        %v6740 = vmul.f32 %v6680, 1.442695
        %v6741 = vpow.pop %v6740
        %v6742 = vmul.f32 %v6681, 1.442695
        %v6743 = vpow.pop %v6742
        %v6744 = vmul.f32 %v6682, 1.442695
        %v6745 = vpow.pop %v6744
        %v6746 = vmul.f32 %v6683, 1.442695
        %v6747 = vpow.pop %v6746
        %v6748 = vadd.f32 %v6685, 1.0
        %v6749 = vadd.f32 %v6687, 1.0
        %v6750 = vadd.f32 %v6689, 1.0
        %v6751 = vadd.f32 %v6691, 1.0
        %v6752 = vadd.f32 %v6693, 1.0
        %v6753 = vadd.f32 %v6695, 1.0
        %v6754 = vadd.f32 %v6697, 1.0
        %v6755 = vadd.f32 %v6699, 1.0
        %v6756 = vadd.f32 %v6701, 1.0
        %v6757 = vadd.f32 %v6703, 1.0
        %v6758 = vadd.f32 %v6705, 1.0
        %v6759 = vadd.f32 %v6707, 1.0
        %v6760 = vadd.f32 %v6709, 1.0
        %v6761 = vadd.f32 %v6711, 1.0
        %v6762 = vadd.f32 %v6713, 1.0
        %v6763 = vadd.f32 %v6715, 1.0
        %v6764 = vadd.f32 %v6717, 1.0
        %v6765 = vadd.f32 %v6719, 1.0
        %v6766 = vadd.f32 %v6721, 1.0
        %v6767 = vadd.f32 %v6723, 1.0
        %v6768 = vadd.f32 %v6725, 1.0
        %v6769 = vadd.f32 %v6727, 1.0
        %v6770 = vadd.f32 %v6729, 1.0
        %v6771 = vadd.f32 %v6731, 1.0
        %v6772 = vadd.f32 %v6733, 1.0
        %v6773 = vadd.f32 %v6735, 1.0
        %v6774 = vadd.f32 %v6737, 1.0
        %v6775 = vadd.f32 %v6739, 1.0
        %v6776 = vadd.f32 %v6741, 1.0
        %v6777 = vadd.f32 %v6743, 1.0
        %v6778 = vadd.f32 %v6745, 1.0
        %v6779 = vadd.f32 %v6747, 1.0
        %v6780 = vrcp.pop %v6748
        %v6781 = vmul.f32 1.0, %v6780
        %v6782 = vrcp.pop %v6749
        %v6783 = vmul.f32 1.0, %v6782
        %v6784 = vrcp.pop %v6750
        %v6785 = vmul.f32 1.0, %v6784
        %v6786 = vrcp.pop %v6751
        %v6787 = vmul.f32 1.0, %v6786
        %v6788 = vrcp.pop %v6752
        %v6789 = vmul.f32 1.0, %v6788
        %v6790 = vrcp.pop %v6753
        %v6791 = vmul.f32 1.0, %v6790
        %v6792 = vrcp.pop %v6754
        %v6793 = vmul.f32 1.0, %v6792
        %v6794 = vrcp.pop %v6755
        %v6795 = vmul.f32 1.0, %v6794
        %v6796 = vrcp.pop %v6756
        %v6797 = vmul.f32 1.0, %v6796
        %v6798 = vrcp.pop %v6757
        %v6799 = vmul.f32 1.0, %v6798
        %v6800 = vrcp.pop %v6758
        %v6801 = vmul.f32 1.0, %v6800
        %v6802 = vrcp.pop %v6759
        %v6803 = vmul.f32 1.0, %v6802
        %v6804 = vrcp.pop %v6760
        %v6805 = vmul.f32 1.0, %v6804
        %v6806 = vrcp.pop %v6761
        %v6807 = vmul.f32 1.0, %v6806
        %v6808 = vrcp.pop %v6762
        %v6809 = vmul.f32 1.0, %v6808
        %v6810 = vrcp.pop %v6763
        %v6811 = vmul.f32 1.0, %v6810
        %v6812 = vrcp.pop %v6764
        %v6813 = vmul.f32 1.0, %v6812
        %v6814 = vrcp.pop %v6765
        %v6815 = vmul.f32 1.0, %v6814
        %v6816 = vrcp.pop %v6766
        %v6817 = vmul.f32 1.0, %v6816
        %v6818 = vrcp.pop %v6767
        %v6819 = vmul.f32 1.0, %v6818
        %v6820 = vrcp.pop %v6768
        %v6821 = vmul.f32 1.0, %v6820
        %v6822 = vrcp.pop %v6769
        %v6823 = vmul.f32 1.0, %v6822
        %v6824 = vrcp.pop %v6770
        %v6825 = vmul.f32 1.0, %v6824
        %v6826 = vrcp.pop %v6771
        %v6827 = vmul.f32 1.0, %v6826
        %v6828 = vrcp.pop %v6772
        %v6829 = vmul.f32 1.0, %v6828
        %v6830 = vrcp.pop %v6773
        %v6831 = vmul.f32 1.0, %v6830
        %v6832 = vrcp.pop %v6774
        %v6833 = vmul.f32 1.0, %v6832
        %v6834 = vrcp.pop %v6775
        %v6835 = vmul.f32 1.0, %v6834
        %v6836 = vrcp.pop %v6776
        %v6837 = vmul.f32 1.0, %v6836
        %v6838 = vrcp.pop %v6777
        %v6839 = vmul.f32 1.0, %v6838
        %v6840 = vrcp.pop %v6778
        %v6841 = vmul.f32 1.0, %v6840
        %v6842 = vrcp.pop %v6779
        %v6843 = vmul.f32 1.0, %v6842
        %v6844 = vlaneseq
        %v6845 = vand.u32 %v6844, 127
        %vm6846 = vcmp.eq.s32.totalorder %v6845, 0
        %vm6847 = vcmp.le.s32.totalorder %v6845, 4
        %vm6848 = vcmp.eq.s32.totalorder %v6845, 5
        %v6849 = vsel %vm6848, 1.5707964, 0.0
        %v6850 = vsel %vm6847, 512.0, %v6849
        %v6851 = vsel %vm6846, 1.0, %v6850
        %v6852 = vsel %vm6848, -0.7853982, 0.0
        %v6853 = vmul.f32 %v6781, %v6851
        %v6854 = vmul.f32 %v6783, %v6851
        %v6855 = vmul.f32 %v6785, %v6851
        %v6856 = vmul.f32 %v6787, %v6851
        %v6857 = vmul.f32 %v6789, %v6851
        %v6858 = vmul.f32 %v6791, %v6851
        %v6859 = vmul.f32 %v6793, %v6851
        %v6860 = vmul.f32 %v6795, %v6851
        %v6861 = vmul.f32 %v6797, %v6851
        %v6862 = vmul.f32 %v6799, %v6851
        %v6863 = vmul.f32 %v6801, %v6851
        %v6864 = vmul.f32 %v6803, %v6851
        %v6865 = vmul.f32 %v6805, %v6851
        %v6866 = vmul.f32 %v6807, %v6851
        %v6867 = vmul.f32 %v6809, %v6851
        %v6868 = vmul.f32 %v6811, %v6851
        %v6869 = vmul.f32 %v6813, %v6851
        %v6870 = vmul.f32 %v6815, %v6851
        %v6871 = vmul.f32 %v6817, %v6851
        %v6872 = vmul.f32 %v6819, %v6851
        %v6873 = vmul.f32 %v6821, %v6851
        %v6874 = vmul.f32 %v6823, %v6851
        %v6875 = vmul.f32 %v6825, %v6851
        %v6876 = vmul.f32 %v6827, %v6851
        %v6877 = vmul.f32 %v6829, %v6851
        %v6878 = vmul.f32 %v6831, %v6851
        %v6879 = vmul.f32 %v6833, %v6851
        %v6880 = vmul.f32 %v6835, %v6851
        %v6881 = vmul.f32 %v6837, %v6851
        %v6882 = vmul.f32 %v6839, %v6851
        %v6883 = vmul.f32 %v6841, %v6851
        %v6884 = vmul.f32 %v6843, %v6851
        %v6885 = vadd.f32 %v6853, %v6852
        %v6886 = vadd.f32 %v6854, %v6852
        %v6887 = vadd.f32 %v6855, %v6852
        %v6888 = vadd.f32 %v6856, %v6852
        %v6889 = vadd.f32 %v6857, %v6852
        %v6890 = vadd.f32 %v6858, %v6852
        %v6891 = vadd.f32 %v6859, %v6852
        %v6892 = vadd.f32 %v6860, %v6852
        %v6893 = vadd.f32 %v6861, %v6852
        %v6894 = vadd.f32 %v6862, %v6852
        %v6895 = vadd.f32 %v6863, %v6852
        %v6896 = vadd.f32 %v6864, %v6852
        %v6897 = vadd.f32 %v6865, %v6852
        %v6898 = vadd.f32 %v6866, %v6852
        %v6899 = vadd.f32 %v6867, %v6852
        %v6900 = vadd.f32 %v6868, %v6852
        %v6901 = vadd.f32 %v6869, %v6852
        %v6902 = vadd.f32 %v6870, %v6852
        %v6903 = vadd.f32 %v6871, %v6852
        %v6904 = vadd.f32 %v6872, %v6852
        %v6905 = vadd.f32 %v6873, %v6852
        %v6906 = vadd.f32 %v6874, %v6852
        %v6907 = vadd.f32 %v6875, %v6852
        %v6908 = vadd.f32 %v6876, %v6852
        %v6909 = vadd.f32 %v6877, %v6852
        %v6910 = vadd.f32 %v6878, %v6852
        %v6911 = vadd.f32 %v6879, %v6852
        %v6912 = vadd.f32 %v6880, %v6852
        %v6913 = vadd.f32 %v6881, %v6852
        %v6914 = vadd.f32 %v6882, %v6852
        %v6915 = vadd.f32 %v6883, %v6852
        %v6916 = vadd.f32 %v6884, %v6852
        %6917 = vxpose.xlu0.b32.start [1/16] %v6885, 128
        %6918 = vxpose.xlu0.b32.cont [2/16] %v6886, 128
        %6919 = vxpose.xlu0.b32.cont [3/16] %v6887, 128
        %6920 = vxpose.xlu0.b32.cont [4/16] %v6888, 128
        %6921 = vxpose.xlu0.b32.cont [5/16] %v6889, 128
        %6922 = vxpose.xlu0.b32.cont [6/16] %v6890, 128
        %6923 = vxpose.xlu0.b32.cont [7/16] %v6891, 128
        %6924 = vxpose.xlu0.b32.cont [8/16] %v6892, 128
        %6925 = vxpose.xlu0.b32.cont [9/16] %v6893, 128
        %6926 = vxpose.xlu0.b32.cont [10/16] %v6894, 128
        %6927 = vxpose.xlu0.b32.cont [11/16] %v6895, 128
        %6928 = vxpose.xlu0.b32.cont [12/16] %v6896, 128
        %6929 = vxpose.xlu0.b32.cont [13/16] %v6897, 128
        %6930 = vxpose.xlu0.b32.cont [14/16] %v6898, 128
        %6931 = vxpose.xlu0.b32.cont [15/16] %v6899, 128
        %6932 = vxpose.xlu0.b32.end [16/16] %v6900, 128
        %v6933 = vpop.trf.xlu0
        %v6934 = vpop.trf.xlu0
        %v6935 = vpop.trf.xlu0
        %v6936 = vpop.trf.xlu0
        %v6937 = vpop.trf.xlu0
        %v6938 = vpop.trf.xlu0
        %v6939 = vpop.trf.xlu0
        %v6940 = vpop.trf.xlu0
        %v6941 = vpop.trf.xlu0
        %v6942 = vpop.trf.xlu0
        %v6943 = vpop.trf.xlu0
        %v6944 = vpop.trf.xlu0
        %v6945 = vpop.trf.xlu0
        %v6946 = vpop.trf.xlu0
        %v6947 = vpop.trf.xlu0
        %v6948 = vpop.trf.xlu0
        %6949 = vxpose.xlu0.b32.start [1/16] %v6901, 128
        %6950 = vxpose.xlu0.b32.cont [2/16] %v6902, 128
        %6951 = vxpose.xlu0.b32.cont [3/16] %v6903, 128
        %6952 = vxpose.xlu0.b32.cont [4/16] %v6904, 128
        %6953 = vxpose.xlu0.b32.cont [5/16] %v6905, 128
        %6954 = vxpose.xlu0.b32.cont [6/16] %v6906, 128
        %6955 = vxpose.xlu0.b32.cont [7/16] %v6907, 128
        %6956 = vxpose.xlu0.b32.cont [8/16] %v6908, 128
        %6957 = vxpose.xlu0.b32.cont [9/16] %v6909, 128
        %6958 = vxpose.xlu0.b32.cont [10/16] %v6910, 128
        %6959 = vxpose.xlu0.b32.cont [11/16] %v6911, 128
        %6960 = vxpose.xlu0.b32.cont [12/16] %v6912, 128
        %6961 = vxpose.xlu0.b32.cont [13/16] %v6913, 128
        %6962 = vxpose.xlu0.b32.cont [14/16] %v6914, 128
        %6963 = vxpose.xlu0.b32.cont [15/16] %v6915, 128
        %6964 = vxpose.xlu0.b32.end [16/16] %v6916, 128
        %v6965 = vpop.trf.xlu0
        %v6966 = vpop.trf.xlu0
        %v6967 = vpop.trf.xlu0
        %v6968 = vpop.trf.xlu0
        %v6969 = vpop.trf.xlu0
        %v6970 = vpop.trf.xlu0
        %v6971 = vpop.trf.xlu0
        %v6972 = vpop.trf.xlu0
        %v6973 = vpop.trf.xlu0
        %v6974 = vpop.trf.xlu0
        %v6975 = vpop.trf.xlu0
        %v6976 = vpop.trf.xlu0
        %v6977 = vpop.trf.xlu0
        %v6978 = vpop.trf.xlu0
        %v6979 = vpop.trf.xlu0
        %v6980 = vpop.trf.xlu0
        %6981 = vst [vmem:[%s316] sm:$0xff] %v6933
        %6982 = vst [vmem:[%s316 + $0x8] sm:$0xff] %v6965
        %p6983 = scmp.eq.s32.totalorder %s33, 1
        // Predicated region
        $region49: #{sr_model_forward.1} parent=47 // pred_check
          %p6984 = pneg %p6983
        $region50: #{sr_model_forward.1} parent=47 // pred_check_branch
          %6986 = sbr.rel (%p6984) target = $region52
        $region51: #{sr_model_forward.1} parent=47 // pred_region
          %s6987 = sld [smem:[#allocation4]]
          %p6988 = scmp.gt.s32.totalorder %s6987, 0
          %s6989 = scalar_select %p6988, %s6987, 0
          %p6990 = scmp.lt.s32.totalorder %s6989, 1
          %s6991 = scalar_select %p6990, %s6989, 1
          %s6992 = sld [smem:[#allocation5 + $0x1]]
          %p6993 = scmp.gt.s32.totalorder %s6992, 0
          %s6994 = scalar_select %p6993, %s6992, 0
          %p6995 = scmp.lt.s32.totalorder %s6994, 8
          %s6996 = scalar_select %p6995, %s6994, 8
          %s6997 = smul.u32 %s6996, 16
          %s6998 = smul.u32 %s6991, 256
          %s6999 = sadd.s32 %s6997, %s6998
          %s7000 = scalar_lea.vmem [#allocation2], %s6999
          %v7001 = vld [vmem:[%s7000] sm:$0xff]
          %v7002 = vld [vmem:[%s7000 + $0x8] sm:$0xff]
          %v7003 = vld [vmem:[%s7000 + $0x10] sm:$0xff]
          %v7004 = vld [vmem:[%s7000 + $0x18] sm:$0xff]
          %v7005 = vld [vmem:[%s7000 + $0x20] sm:$0xff]
          %v7006 = vld [vmem:[%s7000 + $0x28] sm:$0xff]
          %v7007 = vld [vmem:[%s7000 + $0x30] sm:$0xff]
          %v7008 = vld [vmem:[%s7000 + $0x38] sm:$0xff]
          %v7009 = vld [vmem:[%s7000 + $0x40] sm:$0xff]
          %v7010 = vld [vmem:[%s7000 + $0x48] sm:$0xff]
          %v7011 = vld [vmem:[%s7000 + $0x50] sm:$0xff]
          %v7012 = vld [vmem:[%s7000 + $0x58] sm:$0xff]
          %v7013 = vld [vmem:[%s7000 + $0x60] sm:$0xff]
          %v7014 = vld [vmem:[%s7000 + $0x68] sm:$0xff]
          %v7015 = vld [vmem:[%s7000 + $0x70] sm:$0xff]
          %v7016 = vld [vmem:[%s7000 + $0x78] sm:$0xff]
          %v7017 = vsel %vm6287, %v7001, 0.0
          %v7018 = vsel %vm6287, %v7003, 0.0
          %v7019 = vadd.f32 %v7017, %v7018
          %v7020 = vsel %vm6287, %v7005, 0.0
          %v7021 = vadd.f32 %v7019, %v7020
          %v7022 = vsel %vm6287, %v7007, 0.0
          %v7023 = vadd.f32 %v7021, %v7022
          %v7024 = vsel %vm6287, %v7009, 0.0
          %v7025 = vadd.f32 %v7023, %v7024
          %v7026 = vsel %vm6287, %v7011, 0.0
          %v7027 = vadd.f32 %v7025, %v7026
          %v7028 = vsel %vm6287, %v7013, 0.0
          %v7029 = vadd.f32 %v7027, %v7028
          %v7030 = vsel %vm6287, %v7015, 0.0
          %v7031 = vadd.f32 %v7029, %v7030
          %v7032 = vsel %vm6287, %v7002, 0.0
          %v7033 = vsel %vm6287, %v7004, 0.0
          %v7034 = vadd.f32 %v7032, %v7033
          %v7035 = vsel %vm6287, %v7006, 0.0
          %v7036 = vadd.f32 %v7034, %v7035
          %v7037 = vsel %vm6287, %v7008, 0.0
          %v7038 = vadd.f32 %v7036, %v7037
          %v7039 = vsel %vm6287, %v7010, 0.0
          %v7040 = vadd.f32 %v7038, %v7039
          %v7041 = vsel %vm6287, %v7012, 0.0
          %v7042 = vadd.f32 %v7040, %v7041
          %v7043 = vsel %vm6287, %v7014, 0.0
          %v7044 = vadd.f32 %v7042, %v7043
          %v7045 = vsel %vm6287, %v7016, 0.0
          %v7046 = vadd.f32 %v7044, %v7045
          %v7047 = vrcp.pop 8.0
          %v7048 = vmul.f32 %v7031, %v7047
          %v7049 = vmul.f32 %v7046, %v7047
          %s7050 = sld [smem:[#allocation4 + $0x1]]
          %p7051 = scmp.gt.s32.totalorder %s7050, 0
          %s7052 = scalar_select %p7051, %s7050, 0
          %p7053 = scmp.lt.s32.totalorder %s7052, 1
          %s7054 = scalar_select %p7053, %s7052, 1
          %s7055 = sld [smem:[#allocation5 + $0x81]]
          %p7056 = scmp.gt.s32.totalorder %s7055, 0
          %s7057 = scalar_select %p7056, %s7055, 0
          %p7058 = scmp.lt.s32.totalorder %s7057, 8
          %s7059 = scalar_select %p7058, %s7057, 8
          %s7060 = smul.u32 %s7059, 16
          %s7061 = smul.u32 %s7054, 256
          %s7062 = sadd.s32 %s7060, %s7061
          %s7063 = scalar_lea.vmem [#allocation2], %s7062
          %v7064 = vld [vmem:[%s7063] sm:$0xff]
          %v7065 = vld [vmem:[%s7063 + $0x8] sm:$0xff]
          %v7066 = vld [vmem:[%s7063 + $0x10] sm:$0xff]
          %v7067 = vld [vmem:[%s7063 + $0x18] sm:$0xff]
          %v7068 = vld [vmem:[%s7063 + $0x20] sm:$0xff]
          %v7069 = vld [vmem:[%s7063 + $0x28] sm:$0xff]
          %v7070 = vld [vmem:[%s7063 + $0x30] sm:$0xff]
          %v7071 = vld [vmem:[%s7063 + $0x38] sm:$0xff]
          %v7072 = vld [vmem:[%s7063 + $0x40] sm:$0xff]
          %v7073 = vld [vmem:[%s7063 + $0x48] sm:$0xff]
          %v7074 = vld [vmem:[%s7063 + $0x50] sm:$0xff]
          %v7075 = vld [vmem:[%s7063 + $0x58] sm:$0xff]
          %v7076 = vld [vmem:[%s7063 + $0x60] sm:$0xff]
          %v7077 = vld [vmem:[%s7063 + $0x68] sm:$0xff]
          %v7078 = vld [vmem:[%s7063 + $0x70] sm:$0xff]
          %v7079 = vld [vmem:[%s7063 + $0x78] sm:$0xff]
          %v7080 = vsel %vm6287, %v7064, 0.0
          %v7081 = vsel %vm6287, %v7066, 0.0
          %v7082 = vadd.f32 %v7080, %v7081
          %v7083 = vsel %vm6287, %v7068, 0.0
          %v7084 = vadd.f32 %v7082, %v7083
          %v7085 = vsel %vm6287, %v7070, 0.0
          %v7086 = vadd.f32 %v7084, %v7085
          %v7087 = vsel %vm6287, %v7072, 0.0
          %v7088 = vadd.f32 %v7086, %v7087
          %v7089 = vsel %vm6287, %v7074, 0.0
          %v7090 = vadd.f32 %v7088, %v7089
          %v7091 = vsel %vm6287, %v7076, 0.0
          %v7092 = vadd.f32 %v7090, %v7091
          %v7093 = vsel %vm6287, %v7078, 0.0
          %v7094 = vadd.f32 %v7092, %v7093
          %v7095 = vsel %vm6287, %v7065, 0.0
          %v7096 = vsel %vm6287, %v7067, 0.0
          %v7097 = vadd.f32 %v7095, %v7096
          %v7098 = vsel %vm6287, %v7069, 0.0
          %v7099 = vadd.f32 %v7097, %v7098
          %v7100 = vsel %vm6287, %v7071, 0.0
          %v7101 = vadd.f32 %v7099, %v7100
          %v7102 = vsel %vm6287, %v7073, 0.0
          %v7103 = vadd.f32 %v7101, %v7102
          %v7104 = vsel %vm6287, %v7075, 0.0
          %v7105 = vadd.f32 %v7103, %v7104
          %v7106 = vsel %vm6287, %v7077, 0.0
          %v7107 = vadd.f32 %v7105, %v7106
          %v7108 = vsel %vm6287, %v7079, 0.0
          %v7109 = vadd.f32 %v7107, %v7108
          %v7110 = vmul.f32 %v7094, %v7047
          %v7111 = vmul.f32 %v7109, %v7047
          %s7112 = sld [smem:[#allocation4 + $0x2]]
          %p7113 = scmp.gt.s32.totalorder %s7112, 0
          %s7114 = scalar_select %p7113, %s7112, 0
          %p7115 = scmp.lt.s32.totalorder %s7114, 1
          %s7116 = scalar_select %p7115, %s7114, 1
          %s7117 = sld [smem:[#allocation5 + $0x101]]
          %p7118 = scmp.gt.s32.totalorder %s7117, 0
          %s7119 = scalar_select %p7118, %s7117, 0
          %p7120 = scmp.lt.s32.totalorder %s7119, 8
          %s7121 = scalar_select %p7120, %s7119, 8
          %s7122 = smul.u32 %s7121, 16
          %s7123 = smul.u32 %s7116, 256
          %s7124 = sadd.s32 %s7122, %s7123
          %s7125 = scalar_lea.vmem [#allocation2], %s7124
          %v7126 = vld [vmem:[%s7125] sm:$0xff]
          %v7127 = vld [vmem:[%s7125 + $0x8] sm:$0xff]
          %v7128 = vld [vmem:[%s7125 + $0x10] sm:$0xff]
          %v7129 = vld [vmem:[%s7125 + $0x18] sm:$0xff]
          %v7130 = vld [vmem:[%s7125 + $0x20] sm:$0xff]
          %v7131 = vld [vmem:[%s7125 + $0x28] sm:$0xff]
          %v7132 = vld [vmem:[%s7125 + $0x30] sm:$0xff]
          %v7133 = vld [vmem:[%s7125 + $0x38] sm:$0xff]
          %v7134 = vld [vmem:[%s7125 + $0x40] sm:$0xff]
          %v7135 = vld [vmem:[%s7125 + $0x48] sm:$0xff]
          %v7136 = vld [vmem:[%s7125 + $0x50] sm:$0xff]
          %v7137 = vld [vmem:[%s7125 + $0x58] sm:$0xff]
          %v7138 = vld [vmem:[%s7125 + $0x60] sm:$0xff]
          %v7139 = vld [vmem:[%s7125 + $0x68] sm:$0xff]
          %v7140 = vld [vmem:[%s7125 + $0x70] sm:$0xff]
          %v7141 = vld [vmem:[%s7125 + $0x78] sm:$0xff]
          %v7142 = vsel %vm6287, %v7126, 0.0
          %v7143 = vsel %vm6287, %v7128, 0.0
          %v7144 = vadd.f32 %v7142, %v7143
          %v7145 = vsel %vm6287, %v7130, 0.0
          %v7146 = vadd.f32 %v7144, %v7145
          %v7147 = vsel %vm6287, %v7132, 0.0
          %v7148 = vadd.f32 %v7146, %v7147
          %v7149 = vsel %vm6287, %v7134, 0.0
          %v7150 = vadd.f32 %v7148, %v7149
          %v7151 = vsel %vm6287, %v7136, 0.0
          %v7152 = vadd.f32 %v7150, %v7151
          %v7153 = vsel %vm6287, %v7138, 0.0
          %v7154 = vadd.f32 %v7152, %v7153
          %v7155 = vsel %vm6287, %v7140, 0.0
          %v7156 = vadd.f32 %v7154, %v7155
          %v7157 = vsel %vm6287, %v7127, 0.0
          %v7158 = vsel %vm6287, %v7129, 0.0
          %v7159 = vadd.f32 %v7157, %v7158
          %v7160 = vsel %vm6287, %v7131, 0.0
          %v7161 = vadd.f32 %v7159, %v7160
          %v7162 = vsel %vm6287, %v7133, 0.0
          %v7163 = vadd.f32 %v7161, %v7162
          %v7164 = vsel %vm6287, %v7135, 0.0
          %v7165 = vadd.f32 %v7163, %v7164
          %v7166 = vsel %vm6287, %v7137, 0.0
          %v7167 = vadd.f32 %v7165, %v7166
          %v7168 = vsel %vm6287, %v7139, 0.0
          %v7169 = vadd.f32 %v7167, %v7168
          %v7170 = vsel %vm6287, %v7141, 0.0
          %v7171 = vadd.f32 %v7169, %v7170
          %v7172 = vmul.f32 %v7156, %v7047
          %v7173 = vmul.f32 %v7171, %v7047
          %s7174 = sld [smem:[#allocation4 + $0x3]]
          %p7175 = scmp.gt.s32.totalorder %s7174, 0
          %s7176 = scalar_select %p7175, %s7174, 0
          %p7177 = scmp.lt.s32.totalorder %s7176, 1
          %s7178 = scalar_select %p7177, %s7176, 1
          %s7179 = sld [smem:[#allocation5 + $0x181]]
          %p7180 = scmp.gt.s32.totalorder %s7179, 0
          %s7181 = scalar_select %p7180, %s7179, 0
          %p7182 = scmp.lt.s32.totalorder %s7181, 8
          %s7183 = scalar_select %p7182, %s7181, 8
          %s7184 = smul.u32 %s7183, 16
          %s7185 = smul.u32 %s7178, 256
          %s7186 = sadd.s32 %s7184, %s7185
          %s7187 = scalar_lea.vmem [#allocation2], %s7186
          %v7188 = vld [vmem:[%s7187] sm:$0xff]
          %v7189 = vld [vmem:[%s7187 + $0x8] sm:$0xff]
          %v7190 = vld [vmem:[%s7187 + $0x10] sm:$0xff]
          %v7191 = vld [vmem:[%s7187 + $0x18] sm:$0xff]
          %v7192 = vld [vmem:[%s7187 + $0x20] sm:$0xff]
          %v7193 = vld [vmem:[%s7187 + $0x28] sm:$0xff]
          %v7194 = vld [vmem:[%s7187 + $0x30] sm:$0xff]
          %v7195 = vld [vmem:[%s7187 + $0x38] sm:$0xff]
          %v7196 = vld [vmem:[%s7187 + $0x40] sm:$0xff]
          %v7197 = vld [vmem:[%s7187 + $0x48] sm:$0xff]
          %v7198 = vld [vmem:[%s7187 + $0x50] sm:$0xff]
          %v7199 = vld [vmem:[%s7187 + $0x58] sm:$0xff]
          %v7200 = vld [vmem:[%s7187 + $0x60] sm:$0xff]
          %v7201 = vld [vmem:[%s7187 + $0x68] sm:$0xff]
          %v7202 = vld [vmem:[%s7187 + $0x70] sm:$0xff]
          %v7203 = vld [vmem:[%s7187 + $0x78] sm:$0xff]
          %v7204 = vsel %vm6287, %v7188, 0.0
          %v7205 = vsel %vm6287, %v7190, 0.0
          %v7206 = vadd.f32 %v7204, %v7205
          %v7207 = vsel %vm6287, %v7192, 0.0
          %v7208 = vadd.f32 %v7206, %v7207
          %v7209 = vsel %vm6287, %v7194, 0.0
          %v7210 = vadd.f32 %v7208, %v7209
          %v7211 = vsel %vm6287, %v7196, 0.0
          %v7212 = vadd.f32 %v7210, %v7211
          %v7213 = vsel %vm6287, %v7198, 0.0
          %v7214 = vadd.f32 %v7212, %v7213
          %v7215 = vsel %vm6287, %v7200, 0.0
          %v7216 = vadd.f32 %v7214, %v7215
          %v7217 = vsel %vm6287, %v7202, 0.0
          %v7218 = vadd.f32 %v7216, %v7217
          %v7219 = vsel %vm6287, %v7189, 0.0
          %v7220 = vsel %vm6287, %v7191, 0.0
          %v7221 = vadd.f32 %v7219, %v7220
          %v7222 = vsel %vm6287, %v7193, 0.0
          %v7223 = vadd.f32 %v7221, %v7222
          %v7224 = vsel %vm6287, %v7195, 0.0
          %v7225 = vadd.f32 %v7223, %v7224
          %v7226 = vsel %vm6287, %v7197, 0.0
          %v7227 = vadd.f32 %v7225, %v7226
          %v7228 = vsel %vm6287, %v7199, 0.0
          %v7229 = vadd.f32 %v7227, %v7228
          %v7230 = vsel %vm6287, %v7201, 0.0
          %v7231 = vadd.f32 %v7229, %v7230
          %v7232 = vsel %vm6287, %v7203, 0.0
          %v7233 = vadd.f32 %v7231, %v7232
          %v7234 = vmul.f32 %v7218, %v7047
          %v7235 = vmul.f32 %v7233, %v7047
          %v7236 = vld [vmem:[%s7] sm:$0xff]
          %v7237 = vld [vmem:[%s7 + $0x8] sm:$0xff]
          %v7238 = vld [vmem:[%s7 + $0x10] sm:$0xff]
          %v7239 = vld [vmem:[%s7 + $0x18] sm:$0xff]
          %v7240 = vld [vmem:[%s8] sm:$0x1]
          %v7242 = vlaneseq
          %v7243 = vshrl.u32 %v7242, 7
          %v7244 = vsub.s32 0, %v7243
          %v7245 = vrot.slane %v7240, %v7244
          %v7248 = vsel %vm6287, %v7048, 0
          %v7251 = vsel %vm6287, %v7049, 0
          %v7254 = vsel %vm6287, %v7110, 0
          %v7257 = vsel %vm6287, %v7111, 0
          %v7260 = vsel %vm6287, %v7172, 0
          %v7263 = vsel %vm6287, %v7173, 0
          %v7266 = vsel %vm6287, %v7234, 0
          %v7269 = vsel %vm6287, %v7235, 0
          %7271 = vmatprep.subr.mxu0 0.0
          %7272 = vmatpush1.msra.mxu0 0.0
          %7273 = vmatprep.subr.mxu0 0.0
          %7274 = vmatpush1.msra.mxu0 0.0
          %7275 = vmatprep.subr.mxu0 0.0
          %7276 = vmatpush1.msra.mxu0 0.0
          %7277 = vmatprep.subr.mxu0 0.0
          %7278 = vmatpush1.msra.mxu0 0.0
          %7279 = vmatprep.subr.mxu0 0.0
          %7280 = vmatpush1.msra.mxu0 0.0
          %7281 = vmatprep.subr.mxu0 0.0
          %7282 = vmatpush1.msra.mxu0 0.0
          %7283 = vmatprep.subr.mxu0 0.0
          %7284 = vmatpush1.msra.mxu0 0.0
          %7285 = vmatprep.subr.mxu0 0.0
          %7286 = vmatpush1.msra.mxu0 0.0
          %7287 = vmatprep.subr.mxu0 0.0
          %7288 = vmatpush1.msra.mxu0 0.0
          %7289 = vmatprep.subr.mxu0 0.0
          %7290 = vmatpush1.msra.mxu0 0.0
          %7291 = vmatprep.subr.mxu0 0.0
          %7292 = vmatpush1.msra.mxu0 0.0
          %7293 = vmatprep.subr.mxu0 0.0
          %7294 = vmatpush1.msra.mxu0 0.0
          %7295 = vmatprep.subr.mxu0 0.0
          %7296 = vmatpush1.msra.mxu0 %v7239
          %7297 = vmatprep.subr.mxu0 0.0
          %7298 = vmatpush1.msra.mxu0 %v7238
          %7299 = vmatprep.subr.mxu0 0.0
          %7300 = vmatpush1.msra.mxu0 %v7237
          %7301 = vmatprep.subr.mxu0 0.0
          %7302 = vmatpush1.msra.mxu0 %v7236
          %7303 = vmatprep.subr.mxu0 0.0
          %7304 = vmatpush2.msra.mxu0 0.0
          %7305 = vmatprep.subr.mxu0 0.0
          %7306 = vmatpush2.msra.mxu0 0.0
          %7307 = vmatprep.subr.mxu0 0.0
          %7308 = vmatpush2.msra.mxu0 0.0
          %7309 = vmatprep.subr.mxu0 0.0
          %7310 = vmatpush2.msra.mxu0 0.0
          %7311 = vmatprep.subr.mxu0 0.0
          %7312 = vmatpush2.msra.mxu0 0.0
          %7313 = vmatprep.subr.mxu0 0.0
          %7314 = vmatpush2.msra.mxu0 0.0
          %7315 = vmatprep.subr.mxu0 0.0
          %7316 = vmatpush2.msra.mxu0 0.0
          %7317 = vmatprep.subr.mxu0 0.0
          %7318 = vmatpush2.msra.mxu0 0.0
          %7319 = vmatprep.subr.mxu0 0.0
          %7320 = vmatpush2.msra.mxu0 0.0
          %7321 = vmatprep.subr.mxu0 0.0
          %7322 = vmatpush2.msra.mxu0 0.0
          %7323 = vmatprep.subr.mxu0 0.0
          %7324 = vmatpush2.msra.mxu0 0.0
          %7325 = vmatprep.subr.mxu0 0.0
          %7326 = vmatpush2.msra.mxu0 0.0
          %7327 = vmatprep.subr.mxu0 0.0
          %7328 = vmatpush2.msra.mxu0 0.0
          %7329 = vmatprep.subr.mxu0 0.0
          %7330 = vmatpush2.msra.mxu0 0.0
          %7331 = vmatprep.subr.mxu0 0.0
          %7332 = vmatpush2.msra.mxu0 0.0
          %7333 = vmatprep.subr.mxu0 0.0
          %7334 = vmatpush2.msra.mxu0 0.0
          %7335 = vmatprep.mubr.f32.mxu0 0.0
          %7336 = vmatmul.mubr.f32.gmra.mxu0 %v7248
          %v7337 = vpop.f32.mrf.mxu0
          %v7338 = vadd.f32 %v7245, %v7337
          %v7339 = vpop.f32.mrf.mxu0
          %7340 = vmatprep.mubr.f32.mxu0 0.0
          %7341 = vmatmul.mubr.f32.gmra.mxu0 %v7251
          %v7342 = vpop.f32.mrf.mxu0
          %v7343 = vadd.f32 %v7245, %v7342
          %v7344 = vpop.f32.mrf.mxu0
          %7345 = vmatprep.mubr.f32.mxu0 0.0
          %7346 = vmatmul.mubr.f32.gmra.mxu0 %v7254
          %v7347 = vpop.f32.mrf.mxu0
          %v7348 = vadd.f32 %v7245, %v7347
          %v7349 = vpop.f32.mrf.mxu0
          %7350 = vmatprep.mubr.f32.mxu0 0.0
          %7351 = vmatmul.mubr.f32.gmra.mxu0 %v7257
          %v7352 = vpop.f32.mrf.mxu0
          %v7353 = vadd.f32 %v7245, %v7352
          %v7354 = vpop.f32.mrf.mxu0
          %7355 = vmatprep.mubr.f32.mxu0 0.0
          %7356 = vmatmul.mubr.f32.gmra.mxu0 %v7260
          %v7357 = vpop.f32.mrf.mxu0
          %v7358 = vadd.f32 %v7245, %v7357
          %v7359 = vpop.f32.mrf.mxu0
          %7360 = vmatprep.mubr.f32.mxu0 0.0
          %7361 = vmatmul.mubr.f32.gmra.mxu0 %v7263
          %v7362 = vpop.f32.mrf.mxu0
          %v7363 = vadd.f32 %v7245, %v7362
          %v7364 = vpop.f32.mrf.mxu0
          %7365 = vmatprep.mubr.f32.mxu0 0.0
          %7366 = vmatmul.mubr.f32.gmra.mxu0 %v7266
          %v7367 = vpop.f32.mrf.mxu0
          %v7368 = vadd.f32 %v7245, %v7367
          %v7369 = vpop.f32.mrf.mxu0
          %7370 = vmatprep.mubr.f32.mxu0 0.0
          %7371 = vmatmul.mubr.f32.gmra.mxu0 %v7269
          %v7372 = vpop.f32.mrf.mxu0
          %v7373 = vadd.f32 %v7245, %v7372
          %v7374 = vpop.f32.mrf.mxu0
          %7375 = vdwg.mxu0
          %7376 = vmax.xlane.f32.xlu0 %v7338
          %v7377 = vpop.xlane.xlu0 %7376
          %7378 = vmax.xlane.f32.xlu0 %v7343
          %v7379 = vpop.xlane.xlu0 %7378
          %7380 = vmax.xlane.f32.xlu0 %v7348
          %v7381 = vpop.xlane.xlu0 %7380
          %7382 = vmax.xlane.f32.xlu0 %v7353
          %v7383 = vpop.xlane.xlu0 %7382
          %7384 = vmax.xlane.f32.xlu0 %v7358
          %v7385 = vpop.xlane.xlu0 %7384
          %7386 = vmax.xlane.f32.xlu0 %v7363
          %v7387 = vpop.xlane.xlu0 %7386
          %7388 = vmax.xlane.f32.xlu0 %v7368
          %v7389 = vpop.xlane.xlu0 %7388
          %7390 = vmax.xlane.f32.xlu0 %v7373
          %v7391 = vpop.xlane.xlu0 %7390
          %v7392 = vsub.f32 %v7338, %v7377
          %v7393 = vsub.f32 %v7343, %v7379
          %v7394 = vsub.f32 %v7348, %v7381
          %v7395 = vsub.f32 %v7353, %v7383
          %v7396 = vsub.f32 %v7358, %v7385
          %v7397 = vsub.f32 %v7363, %v7387
          %v7398 = vsub.f32 %v7368, %v7389
          %v7399 = vsub.f32 %v7373, %v7391
          %v7400 = vmul.f32 %v7392, 1.442695
          %v7401 = vpow.pop %v7400
          %v7402 = vmul.f32 %v7393, 1.442695
          %v7403 = vpow.pop %v7402
          %v7404 = vmul.f32 %v7394, 1.442695
          %v7405 = vpow.pop %v7404
          %v7406 = vmul.f32 %v7395, 1.442695
          %v7407 = vpow.pop %v7406
          %v7408 = vmul.f32 %v7396, 1.442695
          %v7409 = vpow.pop %v7408
          %v7410 = vmul.f32 %v7397, 1.442695
          %v7411 = vpow.pop %v7410
          %v7412 = vmul.f32 %v7398, 1.442695
          %v7413 = vpow.pop %v7412
          %v7414 = vmul.f32 %v7399, 1.442695
          %v7415 = vpow.pop %v7414
          %7416 = vadd.xlane.f32.xlu0 %v7401
          %v7417 = vpop.xlane.xlu0 %7416
          %7418 = vadd.xlane.f32.xlu0 %v7403
          %v7419 = vpop.xlane.xlu0 %7418
          %7420 = vadd.xlane.f32.xlu0 %v7405
          %v7421 = vpop.xlane.xlu0 %7420
          %7422 = vadd.xlane.f32.xlu0 %v7407
          %v7423 = vpop.xlane.xlu0 %7422
          %7424 = vadd.xlane.f32.xlu0 %v7409
          %v7425 = vpop.xlane.xlu0 %7424
          %7426 = vadd.xlane.f32.xlu0 %v7411
          %v7427 = vpop.xlane.xlu0 %7426
          %7428 = vadd.xlane.f32.xlu0 %v7413
          %v7429 = vpop.xlane.xlu0 %7428
          %7430 = vadd.xlane.f32.xlu0 %v7415
          %v7431 = vpop.xlane.xlu0 %7430
          %v7432 = vlog2.pop %v7417
          %v7433 = vmul.f32 %v7432, 0.6931472
          %v7434 = vlog2.pop %v7419
          %v7435 = vmul.f32 %v7434, 0.6931472
          %v7436 = vlog2.pop %v7421
          %v7437 = vmul.f32 %v7436, 0.6931472
          %v7438 = vlog2.pop %v7423
          %v7439 = vmul.f32 %v7438, 0.6931472
          %v7440 = vlog2.pop %v7425
          %v7441 = vmul.f32 %v7440, 0.6931472
          %v7442 = vlog2.pop %v7427
          %v7443 = vmul.f32 %v7442, 0.6931472
          %v7444 = vlog2.pop %v7429
          %v7445 = vmul.f32 %v7444, 0.6931472
          %v7446 = vlog2.pop %v7431
          %v7447 = vmul.f32 %v7446, 0.6931472
          %v7448 = vadd.f32 %v7433, %v7377
          %v7449 = vadd.f32 %v7435, %v7379
          %v7450 = vadd.f32 %v7437, %v7381
          %v7451 = vadd.f32 %v7439, %v7383
          %v7452 = vadd.f32 %v7441, %v7385
          %v7453 = vadd.f32 %v7443, %v7387
          %v7454 = vadd.f32 %v7445, %v7389
          %v7455 = vadd.f32 %v7447, %v7391
          %v7456 = vsub.f32 %v7338, %v7448
          %v7457 = vsub.f32 %v7343, %v7449
          %v7458 = vsub.f32 %v7348, %v7450
          %v7459 = vsub.f32 %v7353, %v7451
          %v7460 = vsub.f32 %v7358, %v7452
          %v7461 = vsub.f32 %v7363, %v7453
          %v7462 = vsub.f32 %v7368, %v7454
          %v7463 = vsub.f32 %v7373, %v7455
          %v7466 = vcombine.high %v7456, %v7456
          %v7468 = vunpack.c.l.s4 1966171168
          %v7469 = vunpack.c.0.s8 %v7468
          %v7470 = vlaneseq
          %v7471 = vshrl.u32 %v7470, 7
          %v7472 = vsub.s32 %v7469, %v7471
          %v7473 = vrot.slane %v7456, %v7472
          %v7475 = vunpack.c.l.s4 1966171168
          %v7476 = vunpack.c.0.s8 %v7475
          %v7477 = vlaneseq
          %v7478 = vshrl.u32 %v7477, 7
          %v7479 = vsub.s32 %v7476, %v7478
          %v7480 = vrot.slane %v7466, %v7479
          %v7481 = vcombine.high %v7473, %v7473
          %v7482 = vcombine.high %v7480, %v7480
          %v7484 = vunpack.c.l.s4 1966171168
          %v7485 = vunpack.c.0.s8 %v7484
          %v7486 = vlaneseq
          %v7487 = vshrl.u32 %v7486, 7
          %v7488 = vsub.s32 %v7485, %v7487
          %v7489 = vrot.slane %v7473, %v7488
          %v7491 = vunpack.c.l.s4 1966171168
          %v7492 = vunpack.c.0.s8 %v7491
          %v7493 = vlaneseq
          %v7494 = vshrl.u32 %v7493, 7
          %v7495 = vsub.s32 %v7492, %v7494
          %v7496 = vrot.slane %v7480, %v7495
          %v7498 = vunpack.c.l.s4 1966171168
          %v7499 = vunpack.c.0.s8 %v7498
          %v7500 = vlaneseq
          %v7501 = vshrl.u32 %v7500, 7
          %v7502 = vsub.s32 %v7499, %v7501
          %v7503 = vrot.slane %v7481, %v7502
          %v7505 = vunpack.c.l.s4 1966171168
          %v7506 = vunpack.c.0.s8 %v7505
          %v7507 = vlaneseq
          %v7508 = vshrl.u32 %v7507, 7
          %v7509 = vsub.s32 %v7506, %v7508
          %v7510 = vrot.slane %v7482, %v7509
          %v7511 = vcombine.high %v7489, %v7489
          %v7512 = vcombine.high %v7496, %v7496
          %v7513 = vcombine.high %v7503, %v7503
          %v7514 = vcombine.high %v7510, %v7510
          %v7515 = vcombine.high %v7457, %v7457
          %v7517 = vunpack.c.l.s4 1966171168
          %v7518 = vunpack.c.0.s8 %v7517
          %v7519 = vlaneseq
          %v7520 = vshrl.u32 %v7519, 7
          %v7521 = vsub.s32 %v7518, %v7520
          %v7522 = vrot.slane %v7457, %v7521
          %v7524 = vunpack.c.l.s4 1966171168
          %v7525 = vunpack.c.0.s8 %v7524
          %v7526 = vlaneseq
          %v7527 = vshrl.u32 %v7526, 7
          %v7528 = vsub.s32 %v7525, %v7527
          %v7529 = vrot.slane %v7515, %v7528
          %v7530 = vcombine.high %v7522, %v7522
          %v7531 = vcombine.high %v7529, %v7529
          %v7533 = vunpack.c.l.s4 1966171168
          %v7534 = vunpack.c.0.s8 %v7533
          %v7535 = vlaneseq
          %v7536 = vshrl.u32 %v7535, 7
          %v7537 = vsub.s32 %v7534, %v7536
          %v7538 = vrot.slane %v7522, %v7537
          %v7540 = vunpack.c.l.s4 1966171168
          %v7541 = vunpack.c.0.s8 %v7540
          %v7542 = vlaneseq
          %v7543 = vshrl.u32 %v7542, 7
          %v7544 = vsub.s32 %v7541, %v7543
          %v7545 = vrot.slane %v7529, %v7544
          %v7547 = vunpack.c.l.s4 1966171168
          %v7548 = vunpack.c.0.s8 %v7547
          %v7549 = vlaneseq
          %v7550 = vshrl.u32 %v7549, 7
          %v7551 = vsub.s32 %v7548, %v7550
          %v7552 = vrot.slane %v7530, %v7551
          %v7554 = vunpack.c.l.s4 1966171168
          %v7555 = vunpack.c.0.s8 %v7554
          %v7556 = vlaneseq
          %v7557 = vshrl.u32 %v7556, 7
          %v7558 = vsub.s32 %v7555, %v7557
          %v7559 = vrot.slane %v7531, %v7558
          %v7560 = vcombine.high %v7538, %v7538
          %v7561 = vcombine.high %v7545, %v7545
          %v7562 = vcombine.high %v7552, %v7552
          %v7563 = vcombine.high %v7559, %v7559
          %7580 = vst [vmem:[#allocation6] sm:$0x1] %v7489
          %7581 = vst [vmem:[#allocation6 + $0x4] sm:$0x1] %v7503
          %7582 = vst [vmem:[#allocation6 + $0x8] sm:$0x1] %v7511
          %7583 = vst [vmem:[#allocation6 + $0xc] sm:$0x1] %v7513
          %7584 = vst [vmem:[#allocation6 + $0x10] sm:$0x1] %v7496
          %7585 = vst [vmem:[#allocation6 + $0x14] sm:$0x1] %v7510
          %7586 = vst [vmem:[#allocation6 + $0x18] sm:$0x1] %v7512
          %7587 = vst [vmem:[#allocation6 + $0x1c] sm:$0x1] %v7514
          %7588 = vst [vmem:[#allocation6 + $0x20] sm:$0x1] %v7538
          %7589 = vst [vmem:[#allocation6 + $0x24] sm:$0x1] %v7552
          %7590 = vst [vmem:[#allocation6 + $0x28] sm:$0x1] %v7560
          %7591 = vst [vmem:[#allocation6 + $0x2c] sm:$0x1] %v7562
          %7592 = vst [vmem:[#allocation6 + $0x30] sm:$0x1] %v7545
          %7593 = vst [vmem:[#allocation6 + $0x34] sm:$0x1] %v7559
          %7594 = vst [vmem:[#allocation6 + $0x38] sm:$0x1] %v7561
          %7595 = vst [vmem:[#allocation6 + $0x3c] sm:$0x1] %v7563
          %v7598 = vcombine.high %v7458, %v7458
          %v7600 = vunpack.c.l.s4 1966171168
          %v7601 = vunpack.c.0.s8 %v7600
          %v7602 = vlaneseq
          %v7603 = vshrl.u32 %v7602, 7
          %v7604 = vsub.s32 %v7601, %v7603
          %v7605 = vrot.slane %v7458, %v7604
          %v7607 = vunpack.c.l.s4 1966171168
          %v7608 = vunpack.c.0.s8 %v7607
          %v7609 = vlaneseq
          %v7610 = vshrl.u32 %v7609, 7
          %v7611 = vsub.s32 %v7608, %v7610
          %v7612 = vrot.slane %v7598, %v7611
          %v7613 = vcombine.high %v7605, %v7605
          %v7614 = vcombine.high %v7612, %v7612
          %v7616 = vunpack.c.l.s4 1966171168
          %v7617 = vunpack.c.0.s8 %v7616
          %v7618 = vlaneseq
          %v7619 = vshrl.u32 %v7618, 7
          %v7620 = vsub.s32 %v7617, %v7619
          %v7621 = vrot.slane %v7605, %v7620
          %v7623 = vunpack.c.l.s4 1966171168
          %v7624 = vunpack.c.0.s8 %v7623
          %v7625 = vlaneseq
          %v7626 = vshrl.u32 %v7625, 7
          %v7627 = vsub.s32 %v7624, %v7626
          %v7628 = vrot.slane %v7612, %v7627
          %v7630 = vunpack.c.l.s4 1966171168
          %v7631 = vunpack.c.0.s8 %v7630
          %v7632 = vlaneseq
          %v7633 = vshrl.u32 %v7632, 7
          %v7634 = vsub.s32 %v7631, %v7633
          %v7635 = vrot.slane %v7613, %v7634
          %v7637 = vunpack.c.l.s4 1966171168
          %v7638 = vunpack.c.0.s8 %v7637
          %v7639 = vlaneseq
          %v7640 = vshrl.u32 %v7639, 7
          %v7641 = vsub.s32 %v7638, %v7640
          %v7642 = vrot.slane %v7614, %v7641
          %v7643 = vcombine.high %v7621, %v7621
          %v7644 = vcombine.high %v7628, %v7628
          %v7645 = vcombine.high %v7635, %v7635
          %v7646 = vcombine.high %v7642, %v7642
          %v7647 = vcombine.high %v7459, %v7459
          %v7649 = vunpack.c.l.s4 1966171168
          %v7650 = vunpack.c.0.s8 %v7649
          %v7651 = vlaneseq
          %v7652 = vshrl.u32 %v7651, 7
          %v7653 = vsub.s32 %v7650, %v7652
          %v7654 = vrot.slane %v7459, %v7653
          %v7656 = vunpack.c.l.s4 1966171168
          %v7657 = vunpack.c.0.s8 %v7656
          %v7658 = vlaneseq
          %v7659 = vshrl.u32 %v7658, 7
          %v7660 = vsub.s32 %v7657, %v7659
          %v7661 = vrot.slane %v7647, %v7660
          %v7662 = vcombine.high %v7654, %v7654
          %v7663 = vcombine.high %v7661, %v7661
          %v7665 = vunpack.c.l.s4 1966171168
          %v7666 = vunpack.c.0.s8 %v7665
          %v7667 = vlaneseq
          %v7668 = vshrl.u32 %v7667, 7
          %v7669 = vsub.s32 %v7666, %v7668
          %v7670 = vrot.slane %v7654, %v7669
          %v7672 = vunpack.c.l.s4 1966171168
          %v7673 = vunpack.c.0.s8 %v7672
          %v7674 = vlaneseq
          %v7675 = vshrl.u32 %v7674, 7
          %v7676 = vsub.s32 %v7673, %v7675
          %v7677 = vrot.slane %v7661, %v7676
          %v7679 = vunpack.c.l.s4 1966171168
          %v7680 = vunpack.c.0.s8 %v7679
          %v7681 = vlaneseq
          %v7682 = vshrl.u32 %v7681, 7
          %v7683 = vsub.s32 %v7680, %v7682
          %v7684 = vrot.slane %v7662, %v7683
          %v7686 = vunpack.c.l.s4 1966171168
          %v7687 = vunpack.c.0.s8 %v7686
          %v7688 = vlaneseq
          %v7689 = vshrl.u32 %v7688, 7
          %v7690 = vsub.s32 %v7687, %v7689
          %v7691 = vrot.slane %v7663, %v7690
          %v7692 = vcombine.high %v7670, %v7670
          %v7693 = vcombine.high %v7677, %v7677
          %v7694 = vcombine.high %v7684, %v7684
          %v7695 = vcombine.high %v7691, %v7691
          %7712 = vst [vmem:[#allocation6 + $0x1] sm:$0x1] %v7621
          %7713 = vst [vmem:[#allocation6 + $0x5] sm:$0x1] %v7635
          %7714 = vst [vmem:[#allocation6 + $0x9] sm:$0x1] %v7643
          %7715 = vst [vmem:[#allocation6 + $0xd] sm:$0x1] %v7645
          %7716 = vst [vmem:[#allocation6 + $0x11] sm:$0x1] %v7628
          %7717 = vst [vmem:[#allocation6 + $0x15] sm:$0x1] %v7642
          %7718 = vst [vmem:[#allocation6 + $0x19] sm:$0x1] %v7644
          %7719 = vst [vmem:[#allocation6 + $0x1d] sm:$0x1] %v7646
          %7720 = vst [vmem:[#allocation6 + $0x21] sm:$0x1] %v7670
          %7721 = vst [vmem:[#allocation6 + $0x25] sm:$0x1] %v7684
          %7722 = vst [vmem:[#allocation6 + $0x29] sm:$0x1] %v7692
          %7723 = vst [vmem:[#allocation6 + $0x2d] sm:$0x1] %v7694
          %7724 = vst [vmem:[#allocation6 + $0x31] sm:$0x1] %v7677
          %7725 = vst [vmem:[#allocation6 + $0x35] sm:$0x1] %v7691
          %7726 = vst [vmem:[#allocation6 + $0x39] sm:$0x1] %v7693
          %7727 = vst [vmem:[#allocation6 + $0x3d] sm:$0x1] %v7695
          %v7730 = vcombine.high %v7460, %v7460
          %v7732 = vunpack.c.l.s4 1966171168
          %v7733 = vunpack.c.0.s8 %v7732
          %v7734 = vlaneseq
          %v7735 = vshrl.u32 %v7734, 7
          %v7736 = vsub.s32 %v7733, %v7735
          %v7737 = vrot.slane %v7460, %v7736
          %v7739 = vunpack.c.l.s4 1966171168
          %v7740 = vunpack.c.0.s8 %v7739
          %v7741 = vlaneseq
          %v7742 = vshrl.u32 %v7741, 7
          %v7743 = vsub.s32 %v7740, %v7742
          %v7744 = vrot.slane %v7730, %v7743
          %v7745 = vcombine.high %v7737, %v7737
          %v7746 = vcombine.high %v7744, %v7744
          %v7748 = vunpack.c.l.s4 1966171168
          %v7749 = vunpack.c.0.s8 %v7748
          %v7750 = vlaneseq
          %v7751 = vshrl.u32 %v7750, 7
          %v7752 = vsub.s32 %v7749, %v7751
          %v7753 = vrot.slane %v7737, %v7752
          %v7755 = vunpack.c.l.s4 1966171168
          %v7756 = vunpack.c.0.s8 %v7755
          %v7757 = vlaneseq
          %v7758 = vshrl.u32 %v7757, 7
          %v7759 = vsub.s32 %v7756, %v7758
          %v7760 = vrot.slane %v7744, %v7759
          %v7762 = vunpack.c.l.s4 1966171168
          %v7763 = vunpack.c.0.s8 %v7762
          %v7764 = vlaneseq
          %v7765 = vshrl.u32 %v7764, 7
          %v7766 = vsub.s32 %v7763, %v7765
          %v7767 = vrot.slane %v7745, %v7766
          %v7769 = vunpack.c.l.s4 1966171168
          %v7770 = vunpack.c.0.s8 %v7769
          %v7771 = vlaneseq
          %v7772 = vshrl.u32 %v7771, 7
          %v7773 = vsub.s32 %v7770, %v7772
          %v7774 = vrot.slane %v7746, %v7773
          %v7775 = vcombine.high %v7753, %v7753
          %v7776 = vcombine.high %v7760, %v7760
          %v7777 = vcombine.high %v7767, %v7767
          %v7778 = vcombine.high %v7774, %v7774
          %v7779 = vcombine.high %v7461, %v7461
          %v7781 = vunpack.c.l.s4 1966171168
          %v7782 = vunpack.c.0.s8 %v7781
          %v7783 = vlaneseq
          %v7784 = vshrl.u32 %v7783, 7
          %v7785 = vsub.s32 %v7782, %v7784
          %v7786 = vrot.slane %v7461, %v7785
          %v7788 = vunpack.c.l.s4 1966171168
          %v7789 = vunpack.c.0.s8 %v7788
          %v7790 = vlaneseq
          %v7791 = vshrl.u32 %v7790, 7
          %v7792 = vsub.s32 %v7789, %v7791
          %v7793 = vrot.slane %v7779, %v7792
          %v7794 = vcombine.high %v7786, %v7786
          %v7795 = vcombine.high %v7793, %v7793
          %v7797 = vunpack.c.l.s4 1966171168
          %v7798 = vunpack.c.0.s8 %v7797
          %v7799 = vlaneseq
          %v7800 = vshrl.u32 %v7799, 7
          %v7801 = vsub.s32 %v7798, %v7800
          %v7802 = vrot.slane %v7786, %v7801
          %v7804 = vunpack.c.l.s4 1966171168
          %v7805 = vunpack.c.0.s8 %v7804
          %v7806 = vlaneseq
          %v7807 = vshrl.u32 %v7806, 7
          %v7808 = vsub.s32 %v7805, %v7807
          %v7809 = vrot.slane %v7793, %v7808
          %v7811 = vunpack.c.l.s4 1966171168
          %v7812 = vunpack.c.0.s8 %v7811
          %v7813 = vlaneseq
          %v7814 = vshrl.u32 %v7813, 7
          %v7815 = vsub.s32 %v7812, %v7814
          %v7816 = vrot.slane %v7794, %v7815
          %v7818 = vunpack.c.l.s4 1966171168
          %v7819 = vunpack.c.0.s8 %v7818
          %v7820 = vlaneseq
          %v7821 = vshrl.u32 %v7820, 7
          %v7822 = vsub.s32 %v7819, %v7821
          %v7823 = vrot.slane %v7795, %v7822
          %v7824 = vcombine.high %v7802, %v7802
          %v7825 = vcombine.high %v7809, %v7809
          %v7826 = vcombine.high %v7816, %v7816
          %v7827 = vcombine.high %v7823, %v7823
          %7844 = vst [vmem:[#allocation6 + $0x2] sm:$0x1] %v7753
          %7845 = vst [vmem:[#allocation6 + $0x6] sm:$0x1] %v7767
          %7846 = vst [vmem:[#allocation6 + $0xa] sm:$0x1] %v7775
          %7847 = vst [vmem:[#allocation6 + $0xe] sm:$0x1] %v7777
          %7848 = vst [vmem:[#allocation6 + $0x12] sm:$0x1] %v7760
          %7849 = vst [vmem:[#allocation6 + $0x16] sm:$0x1] %v7774
          %7850 = vst [vmem:[#allocation6 + $0x1a] sm:$0x1] %v7776
          %7851 = vst [vmem:[#allocation6 + $0x1e] sm:$0x1] %v7778
          %7852 = vst [vmem:[#allocation6 + $0x22] sm:$0x1] %v7802
          %7853 = vst [vmem:[#allocation6 + $0x26] sm:$0x1] %v7816
          %7854 = vst [vmem:[#allocation6 + $0x2a] sm:$0x1] %v7824
          %7855 = vst [vmem:[#allocation6 + $0x2e] sm:$0x1] %v7826
          %7856 = vst [vmem:[#allocation6 + $0x32] sm:$0x1] %v7809
          %7857 = vst [vmem:[#allocation6 + $0x36] sm:$0x1] %v7823
          %7858 = vst [vmem:[#allocation6 + $0x3a] sm:$0x1] %v7825
          %7859 = vst [vmem:[#allocation6 + $0x3e] sm:$0x1] %v7827
          %v7862 = vcombine.high %v7462, %v7462
          %v7864 = vunpack.c.l.s4 1966171168
          %v7865 = vunpack.c.0.s8 %v7864
          %v7866 = vlaneseq
          %v7867 = vshrl.u32 %v7866, 7
          %v7868 = vsub.s32 %v7865, %v7867
          %v7869 = vrot.slane %v7462, %v7868
          %v7871 = vunpack.c.l.s4 1966171168
          %v7872 = vunpack.c.0.s8 %v7871
          %v7873 = vlaneseq
          %v7874 = vshrl.u32 %v7873, 7
          %v7875 = vsub.s32 %v7872, %v7874
          %v7876 = vrot.slane %v7862, %v7875
          %v7877 = vcombine.high %v7869, %v7869
          %v7878 = vcombine.high %v7876, %v7876
          %v7880 = vunpack.c.l.s4 1966171168
          %v7881 = vunpack.c.0.s8 %v7880
          %v7882 = vlaneseq
          %v7883 = vshrl.u32 %v7882, 7
          %v7884 = vsub.s32 %v7881, %v7883
          %v7885 = vrot.slane %v7869, %v7884
          %v7887 = vunpack.c.l.s4 1966171168
          %v7888 = vunpack.c.0.s8 %v7887
          %v7889 = vlaneseq
          %v7890 = vshrl.u32 %v7889, 7
          %v7891 = vsub.s32 %v7888, %v7890
          %v7892 = vrot.slane %v7876, %v7891
          %v7894 = vunpack.c.l.s4 1966171168
          %v7895 = vunpack.c.0.s8 %v7894
          %v7896 = vlaneseq
          %v7897 = vshrl.u32 %v7896, 7
          %v7898 = vsub.s32 %v7895, %v7897
          %v7899 = vrot.slane %v7877, %v7898
          %v7901 = vunpack.c.l.s4 1966171168
          %v7902 = vunpack.c.0.s8 %v7901
          %v7903 = vlaneseq
          %v7904 = vshrl.u32 %v7903, 7
          %v7905 = vsub.s32 %v7902, %v7904
          %v7906 = vrot.slane %v7878, %v7905
          %v7907 = vcombine.high %v7885, %v7885
          %v7908 = vcombine.high %v7892, %v7892
          %v7909 = vcombine.high %v7899, %v7899
          %v7910 = vcombine.high %v7906, %v7906
          %v7911 = vcombine.high %v7463, %v7463
          %v7913 = vunpack.c.l.s4 1966171168
          %v7914 = vunpack.c.0.s8 %v7913
          %v7915 = vlaneseq
          %v7916 = vshrl.u32 %v7915, 7
          %v7917 = vsub.s32 %v7914, %v7916
          %v7918 = vrot.slane %v7463, %v7917
          %v7920 = vunpack.c.l.s4 1966171168
          %v7921 = vunpack.c.0.s8 %v7920
          %v7922 = vlaneseq
          %v7923 = vshrl.u32 %v7922, 7
          %v7924 = vsub.s32 %v7921, %v7923
          %v7925 = vrot.slane %v7911, %v7924
          %v7926 = vcombine.high %v7918, %v7918
          %v7927 = vcombine.high %v7925, %v7925
          %v7929 = vunpack.c.l.s4 1966171168
          %v7930 = vunpack.c.0.s8 %v7929
          %v7931 = vlaneseq
          %v7932 = vshrl.u32 %v7931, 7
          %v7933 = vsub.s32 %v7930, %v7932
          %v7934 = vrot.slane %v7918, %v7933
          %v7936 = vunpack.c.l.s4 1966171168
          %v7937 = vunpack.c.0.s8 %v7936
          %v7938 = vlaneseq
          %v7939 = vshrl.u32 %v7938, 7
          %v7940 = vsub.s32 %v7937, %v7939
          %v7941 = vrot.slane %v7925, %v7940
          %v7943 = vunpack.c.l.s4 1966171168
          %v7944 = vunpack.c.0.s8 %v7943
          %v7945 = vlaneseq
          %v7946 = vshrl.u32 %v7945, 7
          %v7947 = vsub.s32 %v7944, %v7946
          %v7948 = vrot.slane %v7926, %v7947
          %v7950 = vunpack.c.l.s4 1966171168
          %v7951 = vunpack.c.0.s8 %v7950
          %v7952 = vlaneseq
          %v7953 = vshrl.u32 %v7952, 7
          %v7954 = vsub.s32 %v7951, %v7953
          %v7955 = vrot.slane %v7927, %v7954
          %v7956 = vcombine.high %v7934, %v7934
          %v7957 = vcombine.high %v7941, %v7941
          %v7958 = vcombine.high %v7948, %v7948
          %v7959 = vcombine.high %v7955, %v7955
          %7976 = vst [vmem:[#allocation6 + $0x3] sm:$0x1] %v7885
          %7977 = vst [vmem:[#allocation6 + $0x7] sm:$0x1] %v7899
          %7978 = vst [vmem:[#allocation6 + $0xb] sm:$0x1] %v7907
          %7979 = vst [vmem:[#allocation6 + $0xf] sm:$0x1] %v7909
          %7980 = vst [vmem:[#allocation6 + $0x13] sm:$0x1] %v7892
          %7981 = vst [vmem:[#allocation6 + $0x17] sm:$0x1] %v7906
          %7982 = vst [vmem:[#allocation6 + $0x1b] sm:$0x1] %v7908
          %7983 = vst [vmem:[#allocation6 + $0x1f] sm:$0x1] %v7910
          %7984 = vst [vmem:[#allocation6 + $0x23] sm:$0x1] %v7934
          %7985 = vst [vmem:[#allocation6 + $0x27] sm:$0x1] %v7948
          %7986 = vst [vmem:[#allocation6 + $0x2b] sm:$0x1] %v7956
          %7987 = vst [vmem:[#allocation6 + $0x2f] sm:$0x1] %v7958
          %7988 = vst [vmem:[#allocation6 + $0x33] sm:$0x1] %v7941
          %7989 = vst [vmem:[#allocation6 + $0x37] sm:$0x1] %v7955
          %7990 = vst [vmem:[#allocation6 + $0x3b] sm:$0x1] %v7957
          %7991 = vst [vmem:[#allocation6 + $0x3f] sm:$0x1] %v7959
        $region52: #{sr_model_forward.1} parent=47 // pred_fallthru
          _
        %p7992 = scmp.lt.s32.totalorder %s33, 1
        %s7993 = scalar_select %p7992, %s33, 1
        %s7994 = smul.addr %s7993, 2
        %s7995 = smul.addr %s7994, 8
        %s7996 = scalar_lea.vmem %s9, %s7995
        // Predicated region
        $region53: #{sr_model_forward.1} parent=47 // pred_check
          %p7997 = pneg %p203
        $region54: #{sr_model_forward.1} parent=47 // pred_check_branch
          %7999 = sbr.rel (%p7997) target = $region56
        $region55: #{sr_model_forward.1} parent=47 // pred_region
          _
        $region56: #{sr_model_forward.1} parent=47 // pred_fallthru
          _
        // Predicated region
        $region57: #{sr_model_forward.1} parent=47 // pred_check
          %p8000 = pneg %p224
        $region58: #{sr_model_forward.1} parent=47 // pred_check_branch
          %8002 = sbr.rel (%p8000) target = $region60
        $region59: #{sr_model_forward.1} parent=47 // pred_region
          %s8004 = ssub.s32 1024, 1024
          %8005 = vsyncadd [#allocation7], %s8004
          %s8006 = sshll.u32 [#allocation6], 4
          %s8007 = int_to_ptr.vmem [resolvable:$true] %s8006
          %8012 = dma.vmem_to_hbm [thread:$0]  %s8007, 1024, %s10, [#allocation7], 64, 64, 4
        $region60: #{sr_model_forward.1} parent=47 // pred_fallthru
          _
        // Predicated region
        $region61: #{sr_model_forward.1} parent=47 // pred_check
          %p8013 = pneg %p224
        $region62: #{sr_model_forward.1} parent=47 // pred_check_branch
          %8015 = sbr.rel (%p8013) target = $region64
        $region63: #{sr_model_forward.1} parent=47 // pred_region
          %8016 = dma.done [#allocation7], 1024
        $region64: #{sr_model_forward.1} parent=47 // pred_fallthru
          _
      $region48: #{sr_model_forward.1} parent=5 // pred_fallthru
        _
      %p8017 = scmp.le.s32.totalorder 2, %s28
      // Predicated region
      $region65: #{sr_model_forward.1} parent=5 // pred_check
        %p8018 = pneg %p8017
      $region66: #{sr_model_forward.1} parent=5 // pred_check_branch
        %8020 = sbr.rel (%p8018) target = $region68
      $region67: #{sr_model_forward.1} parent=5 // pred_region
        %s8021 = ssub.s32 %s28, 2
        // Predicated region
        $region69: #{sr_model_forward.1} parent=67 // pred_check
          %p8022 = pneg %p209
        $region70: #{sr_model_forward.1} parent=67 // pred_check_branch
          %8024 = sbr.rel (%p8022) target = $region72
        $region71: #{sr_model_forward.1} parent=67 // pred_region
          %p8025 = scmp.lt.s32.totalorder %s34, 1
          %s8026 = scalar_select %p8025, %s34, 1
          %s8027 = smul.addr %s8026, 2
          %s8028 = smul.addr %s8027, 8
          %s8029 = scalar_lea.vmem %s9, %s8028
        $region72: #{sr_model_forward.1} parent=67 // pred_fallthru
          _
      $region68: #{sr_model_forward.1} parent=5 // pred_fallthru
        _
    $region6: #{sr_model_forward.1} parent=1 // loop_footer
      %s32 = sadd.s32 1, %s28
    $region7: #{sr_model_forward.1} parent=1 // loop_footer_branch
      %27 = sbr.rel target = $region3
    $region8: #{sr_model_forward.1} parent=1 // loop_exit
      _
    %8030 = vsyncpa [#allocation7], 1
    %s8031 = scalar_lea.sflag [#allocation7], 1
    %8032 = vsyncpa %s8031, 1

</llo_original>
